<compile_context>
chip_gen: v7x
topology: tpu7x:2x2x1
jax: 0.10.0
libtpu: 0.0.40
codegen_flags: <defaults>
</compile_context>

<pallas_src>
import functools

import jax
import jax.numpy as jnp
from jax.experimental import pallas as pl
from jax.experimental.pallas import tpu as pltpu


# ------------------------------ small helpers ------------------------------


def _round_up(x, m):
    return (x + m - 1) // m * m


def _full_spec(shape):
    """Whole-array BlockSpec (no grid -> zero-arg index_map)."""
    ndim = len(shape)
    return pl.BlockSpec(shape, lambda *_: (0,) * ndim)


def _init_linear(key, fan_in, fan_out, dtype=jnp.float32):
    # deterministic nn.Linear-style init: U(-1/sqrt(fan_in), 1/sqrt(fan_in))
    kw, kb = jax.random.split(key)
    bound = 1.0 / jnp.sqrt(jnp.float32(fan_in))
    w = jax.random.uniform(kw, (fan_in, fan_out), dtype, -bound, bound)
    b = jax.random.uniform(kb, (fan_out,), dtype, -bound, bound)
    return w, b


# ------------------------------- fused kernel ------------------------------


def _fused_forward_kernel(
    x_ref, y_ref, eps_ref,
    enc_w_ref, enc_b_ref,
    mlw_h_ref, mlw_y_ref, ml_b_ref,
    cls_w_ref, cls_b_ref,
    dec_wz_ref, dec_wy_ref, dec_b_ref,
    small_ref, recon_ref,
    *, z_dim,
):
    f32 = jnp.float32
    bf16 = jnp.bfloat16

    # --- encoder: flatten -> Linear(in_dim, 2048) -> ReLU (stand-in module) ---
    x16 = x_ref[...].astype(bf16)
    h = jnp.dot(x16, enc_w_ref[...], preferred_element_type=f32)
    h = jnp.maximum(h + enc_b_ref[...], 0.0)

    # --- fused fc_mu / fc_logvar: one [., 2*z_dim]=128-lane projection --------
    # [h, y] concat realized as split-weight matmul: h @ W_h + y_pad @ W_y.
    h16 = h.astype(bf16)
    y16 = y_ref[...].astype(bf16)
    ml = (jnp.dot(h16, mlw_h_ref[...], preferred_element_type=f32)
          + jnp.dot(y16, mlw_y_ref[...], preferred_element_type=f32)
          + ml_b_ref[...])                        # [B, 2*z_dim]  (mu | logvar)
    mu = ml[:, :z_dim]
    logvar = ml[:, z_dim:]

    # --- reparameterize: z = eps * sqrt(exp(clamp(logvar,-50,50)) + 1e-8) + mu -
    lv = jnp.clip(logvar, -50.0, 50.0)
    std = jnp.sqrt(jnp.exp(lv) + 1e-8)
    z = eps_ref[...] * std + mu                   # f32

    # --- classifier (output zero-padded to a lane-friendly width) -------------
    z16 = z.astype(bf16)
    logits = (jnp.dot(z16, cls_w_ref[...], preferred_element_type=f32)
              + cls_b_ref[...])

    # --- decoder: Linear(z_dim + num_classes, in_dim) (stand-in module) -------
    rec = (jnp.dot(z16, dec_wz_ref[...], preferred_element_type=f32)
           + jnp.dot(y16, dec_wy_ref[...], preferred_element_type=f32)
           + dec_b_ref[...])

    # lane-dense output slab: [mu | logvar | z | logits_pad]
    small_ref[...] = jnp.concatenate([ml, z, logits], axis=-1).astype(small_ref.dtype)
    recon_ref[...] = rec.astype(recon_ref.dtype)


# ------------------------------- model wrapper -----------------------------


class Network3Pallas:
    """JAX/Pallas port of Network3.forward(x, y) — single fused TPU kernel."""

    def __init__(self, key, *, in_shape, num_classes, h_dim, z_dim,
                 generative=True, mlp_dim=None, training=True):
        assert h_dim == 2048
        assert mlp_dim is None  # simple Linear classifier head
        self.generative = generative
        self.training = training
        self.num_classes = num_classes
        self.in_shape = tuple(in_shape)               # (C, H, W)
        self.h_dim = h_dim
        self.z_dim = z_dim
        in_dim = in_shape[0] * in_shape[1] * in_shape[2]
        self.in_dim = in_dim
        h_in = h_dim + num_classes if generative else h_dim

        # lane padding: y padded to a 128-multiple; classifier output padded so
        # the small output slab (2*z + z + cls_pad) is a multiple of 128 lanes.
        self.ypad = _round_up(num_classes, 128)
        self.cls_pad = _round_up(3 * z_dim + num_classes, 128) - 3 * z_dim

        ks = jax.random.split(key, 5)
        enc_w, enc_b = _init_linear(ks[0], in_dim, h_dim)
        mu_w, mu_b = _init_linear(ks[1], h_in, z_dim)
        lv_w, lv_b = _init_linear(ks[2], h_in, z_dim)
        cls_w, cls_b = _init_linear(ks[3], z_dim, num_classes)
        dec_w, dec_b = _init_linear(ks[4], z_dim + num_classes, in_dim)

        wdt = jnp.bfloat16  # weights streamed bf16; matmul accumulation stays f32

        # encoder
        self.enc_w = enc_w.astype(wdt)                               # [in_dim, h]
        self.enc_b = enc_b.reshape(1, h_dim)

        # fused mu/logvar projection, split into h-part and (padded) y-part
        mulv_w = jnp.concatenate([mu_w, lv_w], axis=1)               # [h_in, 2z]
        self.mlw_h = mulv_w[:h_dim].astype(wdt)                      # [h, 2z]
        mlw_y = jnp.zeros((self.ypad, 2 * z_dim), jnp.float32)
        if generative:
            mlw_y = mlw_y.at[:num_classes].set(mulv_w[h_dim:])
        self.mlw_y = mlw_y.astype(wdt)                               # [ypad, 2z]
        self.ml_b = jnp.concatenate([mu_b, lv_b]).reshape(1, 2 * z_dim)

        # classifier, output zero-padded to cls_pad lanes
        cls_w_pad = (jnp.zeros((z_dim, self.cls_pad), jnp.float32)
                     .at[:, :num_classes].set(cls_w))
        self.cls_w = cls_w_pad.astype(wdt)
        self.cls_b = (jnp.zeros((1, self.cls_pad), jnp.float32)
                      .at[:, :num_classes].set(cls_b))

        # decoder, split into z-part and (padded) y-part
        self.dec_wz = dec_w[:z_dim].astype(wdt)                      # [z, in_dim]
        dec_wy = (jnp.zeros((self.ypad, in_dim), jnp.float32)
                  .at[:num_classes].set(dec_w[z_dim:]))
        self.dec_wy = dec_wy.astype(wdt)                             # [ypad, in_dim]
        self.dec_b = dec_b.reshape(1, in_dim)

    # -------------------------------------------------------------------- #

    def forward(self, x, y, rng=None):
        if self.generative:
            assert y is not None
        B = x.shape[0]
        zd = self.z_dim
        x_flat = x.reshape(B, self.in_dim).astype(jnp.float32)

        y_pad = jnp.zeros((B, self.ypad), jnp.float32)
        if y is not None:
            y_pad = y_pad.at[:, :self.num_classes].set(y.astype(jnp.float32))

        if self.training:
            assert rng is not None, "pass a PRNG key: eps is resampled per call"
            eps = jax.random.normal(rng, (B, zd), jnp.float32)
        else:
            eps = jnp.zeros((B, zd), jnp.float32)   # eval: z == mu exactly

        small_width = 3 * zd + self.cls_pad
        operands = (x_flat, y_pad, eps,
                    self.enc_w, self.enc_b,
                    self.mlw_h, self.mlw_y, self.ml_b,
                    self.cls_w, self.cls_b,
                    self.dec_wz, self.dec_wy, self.dec_b)

        small, recon = pl.pallas_call(
            functools.partial(_fused_forward_kernel, z_dim=zd),
            out_shape=(jax.ShapeDtypeStruct((B, small_width), jnp.float32),
                       jax.ShapeDtypeStruct((B, self.in_dim), jnp.float32)),
            in_specs=[_full_spec(a.shape) for a in operands],
            out_specs=(_full_spec((B, small_width)),
                       _full_spec((B, self.in_dim))),
            compiler_params=pltpu.CompilerParams(
                vmem_limit_bytes=32 * 1024 * 1024),
        )(*operands)

        mu = small[:, :zd]
        logvar = small[:, zd:2 * zd]
        z = small[:, 2 * zd:3 * zd]
        logits = small[:, 3 * zd:3 * zd + self.num_classes]
        C, H, W = self.in_shape
        x_reconst = recon.reshape(B, C, H, W)
        return mu, logvar, z, logits, x_reconst


# ----------------------------------- main -----------------------------------

if __name__ == "__main__":
    key = jax.random.PRNGKey(0)
    k_model, k_x, k_y, k_eps = jax.random.split(key, 4)

    B, C, H, W = 2, 4, 16, 16
    num_classes = 10
    h_dim = 2048          # asserted by the original module
    z_dim = 64

    model = Network3Pallas(
        k_model, in_shape=(C, H, W), num_classes=num_classes,
        h_dim=h_dim, z_dim=z_dim, generative=True, mlp_dim=None, training=True)

    x = jax.random.normal(k_x, (B, C, H, W), jnp.float32)       # NCHW
    labels = jax.random.randint(k_y, (B,), 0, num_classes)
    y = jax.nn.one_hot(labels, num_classes, dtype=jnp.float32)  # [B, num_classes]

    mu, logvar, z, logits, x_reconst = model.forward(x, y, rng=k_eps)
    for out in (mu, logvar, z, logits, x_reconst):
        jax.block_until_ready(out)

    assert mu.shape == (B, z_dim)
    assert logvar.shape == (B, z_dim)
    assert z.shape == (B, z_dim)
    assert logits.shape == (B, num_classes)
    assert x_reconst.shape == (B, C, H, W)
    assert bool(jnp.all(jnp.isfinite(mu)))
    assert bool(jnp.all(jnp.isfinite(x_reconst)))
    print("KERNEL_OK")
</pallas_src>

<mosaic_0001>
module attributes {stable_mosaic.version = 11 : i64} {
  func.func @_fused_forward_kernel(%arg0: memref<2x1024xf32, #tpu.memory_space<vmem>>, %arg1: memref<2x128xf32, #tpu.memory_space<vmem>>, %arg2: memref<2x64xf32, #tpu.memory_space<vmem>>, %arg3: memref<1024x2048xbf16, #tpu.memory_space<vmem>>, %arg4: memref<1x2048xf32, #tpu.memory_space<vmem>>, %arg5: memref<2048x128xbf16, #tpu.memory_space<vmem>>, %arg6: memref<128x128xbf16, #tpu.memory_space<vmem>>, %arg7: memref<1x128xf32, #tpu.memory_space<vmem>>, %arg8: memref<64x64xbf16, #tpu.memory_space<vmem>>, %arg9: memref<1x64xf32, #tpu.memory_space<vmem>>, %arg10: memref<64x1024xbf16, #tpu.memory_space<vmem>>, %arg11: memref<128x1024xbf16, #tpu.memory_space<vmem>>, %arg12: memref<1x1024xf32, #tpu.memory_space<vmem>>, %arg13: memref<2x256xf32, #tpu.memory_space<vmem>>, %arg14: memref<2x1024xf32, #tpu.memory_space<vmem>>) attributes {dimension_semantics = [], scalar_prefetch = 0 : i64, scratch_operands = 0 : i64, tpu.core_type = #tpu.core_type<tc>} {
    %c0 = arith.constant 0 : index
    %c0_0 = arith.constant 0 : index
    %0 = vector.load %arg0[%c0, %c0_0] : memref<2x1024xf32, #tpu.memory_space<vmem>>, vector<2x1024xf32>
    %1 = arith.truncf %0 : vector<2x1024xf32> to vector<2x1024xbf16>
    %c0_1 = arith.constant 0 : index
    %c0_2 = arith.constant 0 : index
    %2 = vector.load %arg3[%c0_1, %c0_2] : memref<1024x2048xbf16, #tpu.memory_space<vmem>>, vector<1024x2048xbf16>
    %cst = arith.constant dense<0.000000e+00> : vector<2x2048xf32>
    %3 = tpu.matmul %1, %2, %cst {dimension_numbers = #tpu.dot_dimension_numbers<[1], [0], [0], [1], [0, 0, 1, 1], [], []>} : vector<2x1024xbf16>, vector<1024x2048xbf16>, vector<2x2048xf32> -> vector<2x2048xf32>
    %c0_3 = arith.constant 0 : index
    %c0_4 = arith.constant 0 : index
    %4 = vector.load %arg4[%c0_3, %c0_4] : memref<1x2048xf32, #tpu.memory_space<vmem>>, vector<1x2048xf32>
    %5 = vector.broadcast %4 : vector<1x2048xf32> to vector<2x2048xf32>
    %6 = arith.addf %3, %5 : vector<2x2048xf32>
    %cst_5 = arith.constant 0.000000e+00 : f32
    %7 = vector.broadcast %cst_5 : f32 to vector<2x2048xf32>
    %8 = arith.maximumf %6, %7 : vector<2x2048xf32>
    %9 = arith.truncf %8 : vector<2x2048xf32> to vector<2x2048xbf16>
    %c0_6 = arith.constant 0 : index
    %c0_7 = arith.constant 0 : index
    %10 = vector.load %arg1[%c0_6, %c0_7] : memref<2x128xf32, #tpu.memory_space<vmem>>, vector<2x128xf32>
    %11 = arith.truncf %10 : vector<2x128xf32> to vector<2x128xbf16>
    %c0_8 = arith.constant 0 : index
    %c0_9 = arith.constant 0 : index
    %12 = vector.load %arg5[%c0_8, %c0_9] : memref<2048x128xbf16, #tpu.memory_space<vmem>>, vector<2048x128xbf16>
    %cst_10 = arith.constant dense<0.000000e+00> : vector<2x128xf32>
    %13 = tpu.matmul %9, %12, %cst_10 {dimension_numbers = #tpu.dot_dimension_numbers<[1], [0], [0], [1], [0, 0, 1, 1], [], []>} : vector<2x2048xbf16>, vector<2048x128xbf16>, vector<2x128xf32> -> vector<2x128xf32>
    %c0_11 = arith.constant 0 : index
    %c0_12 = arith.constant 0 : index
    %14 = vector.load %arg6[%c0_11, %c0_12] : memref<128x128xbf16, #tpu.memory_space<vmem>>, vector<128x128xbf16>
    %cst_13 = arith.constant dense<0.000000e+00> : vector<2x128xf32>
    %15 = tpu.matmul %11, %14, %cst_13 {dimension_numbers = #tpu.dot_dimension_numbers<[1], [0], [0], [1], [0, 0, 1, 1], [], []>} : vector<2x128xbf16>, vector<128x128xbf16>, vector<2x128xf32> -> vector<2x128xf32>
    %16 = arith.addf %13, %15 : vector<2x128xf32>
    %c0_14 = arith.constant 0 : index
    %c0_15 = arith.constant 0 : index
    %17 = vector.load %arg7[%c0_14, %c0_15] : memref<1x128xf32, #tpu.memory_space<vmem>>, vector<1x128xf32>
    %18 = vector.broadcast %17 : vector<1x128xf32> to vector<2x128xf32>
    %19 = arith.addf %16, %18 : vector<2x128xf32>
    %20 = vector.extract_strided_slice %19 {offsets = [0, 0], sizes = [2, 64], strides = [1, 1]} : vector<2x128xf32> to vector<2x64xf32>
    %21 = vector.extract_strided_slice %19 {offsets = [0, 64], sizes = [2, 64], strides = [1, 1]} : vector<2x128xf32> to vector<2x64xf32>
    %cst_16 = arith.constant -5.000000e+01 : f32
    %cst_17 = arith.constant 5.000000e+01 : f32
    %22 = vector.broadcast %cst_16 : f32 to vector<2x64xf32>
    %23 = arith.maximumf %22, %21 : vector<2x64xf32>
    %24 = vector.broadcast %cst_17 : f32 to vector<2x64xf32>
    %25 = arith.minimumf %24, %23 : vector<2x64xf32>
    %26 = math.exp %25 : vector<2x64xf32>
    %cst_18 = arith.constant 9.99999993E-9 : f32
    %27 = vector.broadcast %cst_18 : f32 to vector<2x64xf32>
    %28 = arith.addf %26, %27 : vector<2x64xf32>
    %29 = math.sqrt %28 : vector<2x64xf32>
    %c0_19 = arith.constant 0 : index
    %c0_20 = arith.constant 0 : index
    %30 = vector.load %arg2[%c0_19, %c0_20] : memref<2x64xf32, #tpu.memory_space<vmem>>, vector<2x64xf32>
    %31 = arith.mulf %30, %29 : vector<2x64xf32>
    %32 = arith.addf %31, %20 : vector<2x64xf32>
    %33 = arith.truncf %32 : vector<2x64xf32> to vector<2x64xbf16>
    %c0_21 = arith.constant 0 : index
    %c0_22 = arith.constant 0 : index
    %34 = vector.load %arg8[%c0_21, %c0_22] : memref<64x64xbf16, #tpu.memory_space<vmem>>, vector<64x64xbf16>
    %cst_23 = arith.constant dense<0.000000e+00> : vector<2x64xf32>
    %35 = tpu.matmul %33, %34, %cst_23 {dimension_numbers = #tpu.dot_dimension_numbers<[1], [0], [0], [1], [0, 0, 1, 1], [], []>} : vector<2x64xbf16>, vector<64x64xbf16>, vector<2x64xf32> -> vector<2x64xf32>
    %c0_24 = arith.constant 0 : index
    %c0_25 = arith.constant 0 : index
    %36 = vector.load %arg9[%c0_24, %c0_25] : memref<1x64xf32, #tpu.memory_space<vmem>>, vector<1x64xf32>
    %37 = vector.broadcast %36 : vector<1x64xf32> to vector<2x64xf32>
    %38 = arith.addf %35, %37 : vector<2x64xf32>
    %c0_26 = arith.constant 0 : index
    %c0_27 = arith.constant 0 : index
    %39 = vector.load %arg10[%c0_26, %c0_27] : memref<64x1024xbf16, #tpu.memory_space<vmem>>, vector<64x1024xbf16>
    %cst_28 = arith.constant dense<0.000000e+00> : vector<2x1024xf32>
    %40 = tpu.matmul %33, %39, %cst_28 {dimension_numbers = #tpu.dot_dimension_numbers<[1], [0], [0], [1], [0, 0, 1, 1], [], []>} : vector<2x64xbf16>, vector<64x1024xbf16>, vector<2x1024xf32> -> vector<2x1024xf32>
    %c0_29 = arith.constant 0 : index
    %c0_30 = arith.constant 0 : index
    %41 = vector.load %arg11[%c0_29, %c0_30] : memref<128x1024xbf16, #tpu.memory_space<vmem>>, vector<128x1024xbf16>
    %cst_31 = arith.constant dense<0.000000e+00> : vector<2x1024xf32>
    %42 = tpu.matmul %11, %41, %cst_31 {dimension_numbers = #tpu.dot_dimension_numbers<[1], [0], [0], [1], [0, 0, 1, 1], [], []>} : vector<2x128xbf16>, vector<128x1024xbf16>, vector<2x1024xf32> -> vector<2x1024xf32>
    %43 = arith.addf %40, %42 : vector<2x1024xf32>
    %c0_32 = arith.constant 0 : index
    %c0_33 = arith.constant 0 : index
    %44 = vector.load %arg12[%c0_32, %c0_33] : memref<1x1024xf32, #tpu.memory_space<vmem>>, vector<1x1024xf32>
    %45 = vector.broadcast %44 : vector<1x1024xf32> to vector<2x1024xf32>
    %46 = arith.addf %43, %45 : vector<2x1024xf32>
    %47 = tpu.concatenate %19, %32, %38 in 1 : vector<2x128xf32>, vector<2x64xf32>, vector<2x64xf32> -> vector<2x256xf32>
    %c0_34 = arith.constant 0 : index
    %c0_35 = arith.constant 0 : index
    %48 = vector.load %arg13[%c0_34, %c0_35] : memref<2x256xf32, #tpu.memory_space<vmem>>, vector<2x256xf32>
    tpu.vector_store %arg13[%c0_34, %c0_35], %47 {strides = array<i32>} : memref<2x256xf32, #tpu.memory_space<vmem>>, vector<2x256xf32>,
    %c0_36 = arith.constant 0 : index
    %c0_37 = arith.constant 0 : index
    %49 = vector.load %arg14[%c0_36, %c0_37] : memref<2x1024xf32, #tpu.memory_space<vmem>>, vector<2x1024xf32>
    tpu.vector_store %arg14[%c0_36, %c0_37], %46 {strides = array<i32>} : memref<2x1024xf32, #tpu.memory_space<vmem>>, vector<2x1024xf32>,
    return
  }
}

</mosaic_0001>

<llo_original>
// kernel: tpu_custom_call.1
$region0: #{tpu_custom_call.1}
  #allocation0 [shape = 'u32[]', space=smem, size = 0x4, offset = 0x4, fixed_abs, tag = 'smem constant byte address 0x4 - core index']
  #allocation1 [shape = 'u32[144,128]{1,0:T(1,128)}', space=vmem, size = 0x12000, scoped, tag = 'internal scratch']
  %s0 = inlined_call_operand.hbm [shape: f32[2,1024], index: 0, kind: input, shape index: {}]
  %s1 = inlined_call_operand.hbm [shape: f32[2,128], index: 1, kind: input, shape index: {}]
  %s2 = inlined_call_operand.hbm [shape: f32[2,64], index: 2, kind: input, shape index: {}]
  %s3 = inlined_call_operand.hbm [shape: bf16[1024,2048], index: 3, kind: input, shape index: {}]
  %s4 = inlined_call_operand.hbm [shape: f32[1,2048], index: 4, kind: input, shape index: {}]
  %s5 = inlined_call_operand.hbm [shape: bf16[2048,128], index: 5, kind: input, shape index: {}]
  %s6 = inlined_call_operand.hbm [shape: bf16[128,128], index: 6, kind: input, shape index: {}]
  %s7 = inlined_call_operand.hbm [shape: f32[1,128], index: 7, kind: input, shape index: {}]
  %s8 = inlined_call_operand.hbm [shape: bf16[64,64], index: 8, kind: input, shape index: {}]
  %s9 = inlined_call_operand.hbm [shape: f32[1,64], index: 9, kind: input, shape index: {}]
  %s10 = inlined_call_operand.hbm [shape: bf16[64,1024], index: 10, kind: input, shape index: {}]
  %s11 = inlined_call_operand.hbm [shape: bf16[128,1024], index: 11, kind: input, shape index: {}]
  %s12 = inlined_call_operand.hbm [shape: f32[1,1024], index: 12, kind: input, shape index: {}]
  %s13 = inlined_call_operand.hbm [shape: f32[2,256], index: 13, kind: output, shape index: {0}]
  %s14 = inlined_call_operand.hbm [shape: f32[2,1024], index: 14, kind: output, shape index: {1}]
  %15 = xla_tuple %s13, %s14
  %s16 = sld [smem:[#allocation0]]
  $region122: #{tpu_custom_call.1} parent=0
    _
  %s18 = ssub.s32 1, %s16
  %s19 = scalar_select 0, %s18, %s16
  $region1: #{tpu_custom_call.1} parent=0
    #allocation2 [shape = 'u8[8192]{0}', space=vmem, size = 0x2000, scoped, tag = 'input window, operand 0, single buffered']
    #allocation3 [shape = 's32[1]{0}', space=sflag, size = 0x4, scoped, tag = 'scoped memory for tpu_custom_call.1']
    #allocation4 [shape = 's32[1]{0}', space=sflag, size = 0x4, scoped, tag = 'scoped memory for tpu_custom_call.1']
    #allocation5 [shape = 'u8[1024]{0}', space=vmem, size = 0x400, scoped, tag = 'input window, operand 1, single buffered']
    #allocation6 [shape = 's32[1]{0}', space=sflag, size = 0x4, scoped, tag = 'scoped memory for tpu_custom_call.1']
    #allocation7 [shape = 'u8[1024]{0}', space=vmem, size = 0x400, scoped, tag = 'input window, operand 2, single buffered']
    #allocation8 [shape = 'u8[4194304]{0}', space=vmem, size = 0x400000, scoped, tag = 'input window, operand 3, single buffered']
    #allocation9 [shape = 's32[1]{0}', space=sflag, size = 0x4, scoped, tag = 'scoped memory for tpu_custom_call.1']
    #allocation10 [shape = 'u8[8192]{0}', space=vmem, size = 0x2000, scoped, tag = 'input window, operand 4, single buffered']
    #allocation11 [shape = 'u8[524288]{0}', space=vmem, size = 0x80000, scoped, tag = 'input window, operand 5, single buffered']
    #allocation12 [shape = 's32[1]{0}', space=sflag, size = 0x4, scoped, tag = 'scoped memory for tpu_custom_call.1']
    #allocation13 [shape = 'u8[32768]{0}', space=vmem, size = 0x8000, scoped, tag = 'input window, operand 6, single buffered']
    #allocation14 [shape = 'u8[512]{0}', space=vmem, size = 0x400, scoped, tag = 'input window, operand 7, single buffered']
    #allocation15 [shape = 's32[1]{0}', space=sflag, size = 0x4, scoped, tag = 'scoped memory for tpu_custom_call.1']
    #allocation16 [shape = 'u8[16384]{0}', space=vmem, size = 0x4000, scoped, tag = 'input window, operand 8, single buffered']
    #allocation17 [shape = 'u8[512]{0}', space=vmem, size = 0x400, scoped, tag = 'input window, operand 9, single buffered']
    #allocation18 [shape = 's32[1]{0}', space=sflag, size = 0x4, scoped, tag = 'scoped memory for tpu_custom_call.1']
    #allocation19 [shape = 'u8[131072]{0}', space=vmem, size = 0x20000, scoped, tag = 'input window, operand 10, single buffered']
    #allocation20 [shape = 'u8[262144]{0}', space=vmem, size = 0x40000, scoped, tag = 'input window, operand 11, single buffered']
    #allocation21 [shape = 's32[1]{0}', space=sflag, size = 0x4, scoped, tag = 'scoped memory for tpu_custom_call.1']
    #allocation22 [shape = 'u8[4096]{0}', space=vmem, size = 0x1000, scoped, tag = 'input window, operand 12, single buffered']
    #allocation23 [shape = 'u8[2048]{0}', space=vmem, size = 0x800, scoped, tag = 'output window, operand 0, single buffered']
    #allocation24 [shape = 'u8[8192]{0}', space=vmem, size = 0x2000, scoped, tag = 'output window, operand 1, single buffered']
    #allocation25 [shape = 's32[1]{0}', space=sflag, size = 0x4, scoped, tag = 'scoped memory for tpu_custom_call.1']
    %20 = vsyncpa [#allocation3], 0
    %21 = vsyncpa [#allocation6], 0
    %22 = vsyncpa [#allocation9], 0
    %23 = vsyncpa [#allocation12], 0
    %24 = vsyncpa [#allocation15], 0
    %25 = vsyncpa [#allocation18], 0
    %26 = vsyncpa [#allocation21], 0
    %27 = vsyncpa [#allocation4], 0
    %28 = vsyncpa [#allocation25], 0
    // Predicated region
    $region2: #{tpu_custom_call.1} parent=1 // pred_check
      _
    $region3: #{tpu_custom_call.1} parent=1 // pred_check_branch
      %30 = sbr.rel (0) target = $region5
    $region4: #{tpu_custom_call.1} parent=1 // pred_region
      %s32 = ssub.s32 256, 256
      %33 = vsyncadd [#allocation3], %s32
      %s35 = sshll.u32 [#allocation2], 4
      %s36 = int_to_ptr.vmem [resolvable:$true] %s35
      %38 = dma.hbm_to_vmem [thread:$0]  %s0, 256, %s36, [#allocation3]
    $region5: #{tpu_custom_call.1} parent=1 // pred_fallthru
      _
    // Predicated region
    $region6: #{tpu_custom_call.1} parent=1 // pred_check
      _
    $region7: #{tpu_custom_call.1} parent=1 // pred_check_branch
      %40 = sbr.rel (0) target = $region9
    $region8: #{tpu_custom_call.1} parent=1 // pred_region
      %s42 = ssub.s32 32, 32
      %43 = vsyncadd [#allocation6], %s42
      %s45 = sshll.u32 [#allocation5], 4
      %s46 = int_to_ptr.vmem [resolvable:$true] %s45
      %48 = dma.hbm_to_vmem [thread:$0]  %s1, 32, %s46, [#allocation6]
    $region9: #{tpu_custom_call.1} parent=1 // pred_fallthru
      _
    // Predicated region
    $region10: #{tpu_custom_call.1} parent=1 // pred_check
      _
    $region11: #{tpu_custom_call.1} parent=1 // pred_check_branch
      %50 = sbr.rel (0) target = $region13
    $region12: #{tpu_custom_call.1} parent=1 // pred_region
      %s52 = ssub.s32 32, 32
      %53 = vsyncadd [#allocation6], %s52
      %s55 = sshll.u32 [#allocation7], 4
      %s56 = int_to_ptr.vmem [resolvable:$true] %s55
      %58 = dma.hbm_to_vmem [thread:$0]  %s2, 32, %s56, [#allocation6]
    $region13: #{tpu_custom_call.1} parent=1 // pred_fallthru
      _
    // Predicated region
    $region14: #{tpu_custom_call.1} parent=1 // pred_check
      _
    $region15: #{tpu_custom_call.1} parent=1 // pred_check_branch
      %60 = sbr.rel (0) target = $region17
    $region16: #{tpu_custom_call.1} parent=1 // pred_region
      %s62 = ssub.s32 131072, 131072
      %63 = vsyncadd [#allocation9], %s62
      %s64 = sshll.u32 [#allocation8], 4
      %s65 = int_to_ptr.vmem [resolvable:$true] %s64
      %70 = dma.hbm_to_vmem [thread:$0]  %s3, 131072, %s65, [#allocation9], 1024, 1024, 64
    $region17: #{tpu_custom_call.1} parent=1 // pred_fallthru
      _
    // Predicated region
    $region18: #{tpu_custom_call.1} parent=1 // pred_check
      _
    $region19: #{tpu_custom_call.1} parent=1 // pred_check_branch
      %72 = sbr.rel (0) target = $region21
    $region20: #{tpu_custom_call.1} parent=1 // pred_region
      %s74 = ssub.s32 256, 256
      %75 = vsyncadd [#allocation9], %s74
      %s77 = sshll.u32 [#allocation10], 4
      %s78 = int_to_ptr.vmem [resolvable:$true] %s77
      %80 = dma.hbm_to_vmem [thread:$0]  %s4, 256, %s78, [#allocation9]
    $region21: #{tpu_custom_call.1} parent=1 // pred_fallthru
      _
    // Predicated region
    $region22: #{tpu_custom_call.1} parent=1 // pred_check
      _
    $region23: #{tpu_custom_call.1} parent=1 // pred_check_branch
      %82 = sbr.rel (0) target = $region25
    $region24: #{tpu_custom_call.1} parent=1 // pred_region
      %s84 = ssub.s32 16384, 16384
      %85 = vsyncadd [#allocation12], %s84
      %s86 = sshll.u32 [#allocation11], 4
      %s87 = int_to_ptr.vmem [resolvable:$true] %s86
      %92 = dma.hbm_to_vmem [thread:$0]  %s5, 16384, %s87, [#allocation12], 64, 64, 4
    $region25: #{tpu_custom_call.1} parent=1 // pred_fallthru
      _
    // Predicated region
    $region26: #{tpu_custom_call.1} parent=1 // pred_check
      _
    $region27: #{tpu_custom_call.1} parent=1 // pred_check_branch
      %94 = sbr.rel (0) target = $region29
    $region28: #{tpu_custom_call.1} parent=1 // pred_region
      %s96 = ssub.s32 1024, 1024
      %97 = vsyncadd [#allocation12], %s96
      %s98 = sshll.u32 [#allocation13], 4
      %s99 = int_to_ptr.vmem [resolvable:$true] %s98
      %104 = dma.hbm_to_vmem [thread:$0]  %s6, 1024, %s99, [#allocation12], 64, 64, 4
    $region29: #{tpu_custom_call.1} parent=1 // pred_fallthru
      _
    // Predicated region
    $region30: #{tpu_custom_call.1} parent=1 // pred_check
      _
    $region31: #{tpu_custom_call.1} parent=1 // pred_check_branch
      %106 = sbr.rel (0) target = $region33
    $region32: #{tpu_custom_call.1} parent=1 // pred_region
      %s108 = ssub.s32 16, 16
      %109 = vsyncadd [#allocation15], %s108
      %s111 = sshll.u32 [#allocation14], 4
      %s112 = int_to_ptr.vmem [resolvable:$true] %s111
      %114 = dma.hbm_to_vmem [thread:$0]  %s7, 16, %s112, [#allocation15]
    $region33: #{tpu_custom_call.1} parent=1 // pred_fallthru
      _
    // Predicated region
    $region34: #{tpu_custom_call.1} parent=1 // pred_check
      _
    $region35: #{tpu_custom_call.1} parent=1 // pred_check_branch
      %116 = sbr.rel (0) target = $region37
    $region36: #{tpu_custom_call.1} parent=1 // pred_region
      %s118 = ssub.s32 512, 512
      %119 = vsyncadd [#allocation15], %s118
      %s120 = sshll.u32 [#allocation16], 4
      %s121 = int_to_ptr.vmem [resolvable:$true] %s120
      %126 = dma.hbm_to_vmem [thread:$0]  %s8, 512, %s121, [#allocation15], 64, 64, 4
    $region37: #{tpu_custom_call.1} parent=1 // pred_fallthru
      _
    // Predicated region
    $region38: #{tpu_custom_call.1} parent=1 // pred_check
      _
    $region39: #{tpu_custom_call.1} parent=1 // pred_check_branch
      %128 = sbr.rel (0) target = $region41
    $region40: #{tpu_custom_call.1} parent=1 // pred_region
      %s130 = ssub.s32 16, 16
      %131 = vsyncadd [#allocation18], %s130
      %s133 = sshll.u32 [#allocation17], 4
      %s134 = int_to_ptr.vmem [resolvable:$true] %s133
      %136 = dma.hbm_to_vmem [thread:$0]  %s9, 16, %s134, [#allocation18]
    $region41: #{tpu_custom_call.1} parent=1 // pred_fallthru
      _
    // Predicated region
    $region42: #{tpu_custom_call.1} parent=1 // pred_check
      _
    $region43: #{tpu_custom_call.1} parent=1 // pred_check_branch
      %138 = sbr.rel (0) target = $region45
    $region44: #{tpu_custom_call.1} parent=1 // pred_region
      %s140 = ssub.s32 4096, 4096
      %141 = vsyncadd [#allocation18], %s140
      %s142 = sshll.u32 [#allocation19], 4
      %s143 = int_to_ptr.vmem [resolvable:$true] %s142
      %148 = dma.hbm_to_vmem [thread:$0]  %s10, 4096, %s143, [#allocation18], 512, 512, 32
    $region45: #{tpu_custom_call.1} parent=1 // pred_fallthru
      _
    // Predicated region
    $region46: #{tpu_custom_call.1} parent=1 // pred_check
      _
    $region47: #{tpu_custom_call.1} parent=1 // pred_check_branch
      %150 = sbr.rel (0) target = $region49
    $region48: #{tpu_custom_call.1} parent=1 // pred_region
      %s152 = ssub.s32 8192, 8192
      %153 = vsyncadd [#allocation21], %s152
      %s154 = sshll.u32 [#allocation20], 4
      %s155 = int_to_ptr.vmem [resolvable:$true] %s154
      %160 = dma.hbm_to_vmem [thread:$0]  %s11, 8192, %s155, [#allocation21], 512, 512, 32
    $region49: #{tpu_custom_call.1} parent=1 // pred_fallthru
      _
    // Predicated region
    $region50: #{tpu_custom_call.1} parent=1 // pred_check
      _
    $region51: #{tpu_custom_call.1} parent=1 // pred_check_branch
      %162 = sbr.rel (0) target = $region53
    $region52: #{tpu_custom_call.1} parent=1 // pred_region
      %s164 = ssub.s32 128, 128
      %165 = vsyncadd [#allocation21], %s164
      %s167 = sshll.u32 [#allocation22], 4
      %s168 = int_to_ptr.vmem [resolvable:$true] %s167
      %170 = dma.hbm_to_vmem [thread:$0]  %s12, 128, %s168, [#allocation21]
    $region53: #{tpu_custom_call.1} parent=1 // pred_fallthru
      _
    // Predicated region
    $region54: #{tpu_custom_call.1} parent=1 // pred_check
      _
    $region55: #{tpu_custom_call.1} parent=1 // pred_check_branch
      %172 = sbr.rel (0) target = $region57
    $region56: #{tpu_custom_call.1} parent=1 // pred_region
      %173 = dma.done [#allocation3], 256
    $region57: #{tpu_custom_call.1} parent=1 // pred_fallthru
      _
    // Predicated region
    $region58: #{tpu_custom_call.1} parent=1 // pred_check
      _
    $region59: #{tpu_custom_call.1} parent=1 // pred_check_branch
      %175 = sbr.rel (0) target = $region61
    $region60: #{tpu_custom_call.1} parent=1 // pred_region
      %176 = dma.done [#allocation6], 32
    $region61: #{tpu_custom_call.1} parent=1 // pred_fallthru
      _
    // Predicated region
    $region62: #{tpu_custom_call.1} parent=1 // pred_check
      _
    $region63: #{tpu_custom_call.1} parent=1 // pred_check_branch
      %178 = sbr.rel (0) target = $region65
    $region64: #{tpu_custom_call.1} parent=1 // pred_region
      %179 = dma.done [#allocation6], 32
    $region65: #{tpu_custom_call.1} parent=1 // pred_fallthru
      _
    // Predicated region
    $region66: #{tpu_custom_call.1} parent=1 // pred_check
      _
    $region67: #{tpu_custom_call.1} parent=1 // pred_check_branch
      %181 = sbr.rel (0) target = $region69
    $region68: #{tpu_custom_call.1} parent=1 // pred_region
      %182 = dma.done [#allocation9], 131072
    $region69: #{tpu_custom_call.1} parent=1 // pred_fallthru
      _
    // Predicated region
    $region70: #{tpu_custom_call.1} parent=1 // pred_check
      _
    $region71: #{tpu_custom_call.1} parent=1 // pred_check_branch
      %184 = sbr.rel (0) target = $region73
    $region72: #{tpu_custom_call.1} parent=1 // pred_region
      %185 = dma.done [#allocation9], 256
    $region73: #{tpu_custom_call.1} parent=1 // pred_fallthru
      _
    // Predicated region
    $region74: #{tpu_custom_call.1} parent=1 // pred_check
      _
    $region75: #{tpu_custom_call.1} parent=1 // pred_check_branch
      %187 = sbr.rel (0) target = $region77
    $region76: #{tpu_custom_call.1} parent=1 // pred_region
      %188 = dma.done [#allocation12], 16384
    $region77: #{tpu_custom_call.1} parent=1 // pred_fallthru
      _
    // Predicated region
    $region78: #{tpu_custom_call.1} parent=1 // pred_check
      _
    $region79: #{tpu_custom_call.1} parent=1 // pred_check_branch
      %190 = sbr.rel (0) target = $region81
    $region80: #{tpu_custom_call.1} parent=1 // pred_region
      %191 = dma.done [#allocation12], 1024
    $region81: #{tpu_custom_call.1} parent=1 // pred_fallthru
      _
    // Predicated region
    $region82: #{tpu_custom_call.1} parent=1 // pred_check
      _
    $region83: #{tpu_custom_call.1} parent=1 // pred_check_branch
      %193 = sbr.rel (0) target = $region85
    $region84: #{tpu_custom_call.1} parent=1 // pred_region
      %194 = dma.done [#allocation15], 16
    $region85: #{tpu_custom_call.1} parent=1 // pred_fallthru
      _
    // Predicated region
    $region86: #{tpu_custom_call.1} parent=1 // pred_check
      _
    $region87: #{tpu_custom_call.1} parent=1 // pred_check_branch
      %196 = sbr.rel (0) target = $region89
    $region88: #{tpu_custom_call.1} parent=1 // pred_region
      %197 = dma.done [#allocation15], 512
    $region89: #{tpu_custom_call.1} parent=1 // pred_fallthru
      _
    // Predicated region
    $region90: #{tpu_custom_call.1} parent=1 // pred_check
      _
    $region91: #{tpu_custom_call.1} parent=1 // pred_check_branch
      %199 = sbr.rel (0) target = $region93
    $region92: #{tpu_custom_call.1} parent=1 // pred_region
      %200 = dma.done [#allocation18], 16
    $region93: #{tpu_custom_call.1} parent=1 // pred_fallthru
      _
    // Predicated region
    $region94: #{tpu_custom_call.1} parent=1 // pred_check
      _
    $region95: #{tpu_custom_call.1} parent=1 // pred_check_branch
      %202 = sbr.rel (0) target = $region97
    $region96: #{tpu_custom_call.1} parent=1 // pred_region
      %203 = dma.done [#allocation18], 4096
    $region97: #{tpu_custom_call.1} parent=1 // pred_fallthru
      _
    // Predicated region
    $region98: #{tpu_custom_call.1} parent=1 // pred_check
      _
    $region99: #{tpu_custom_call.1} parent=1 // pred_check_branch
      %205 = sbr.rel (0) target = $region101
    $region100: #{tpu_custom_call.1} parent=1 // pred_region
      %206 = dma.done [#allocation21], 8192
    $region101: #{tpu_custom_call.1} parent=1 // pred_fallthru
      _
    // Predicated region
    $region102: #{tpu_custom_call.1} parent=1 // pred_check
      _
    $region103: #{tpu_custom_call.1} parent=1 // pred_check_branch
      %208 = sbr.rel (0) target = $region105
    $region104: #{tpu_custom_call.1} parent=1 // pred_region
      %209 = dma.done [#allocation21], 128
    $region105: #{tpu_custom_call.1} parent=1 // pred_fallthru
      _
    %v211 = vld [vmem:[#allocation2] sm:$0xff]
    %v212 = vld [vmem:[#allocation2 + $0x8] sm:$0xff]
    %v215 = vcombine.high %v211, %v211
    %v217 = vunpack.c.l.s4 1983009808
    %v218 = vunpack.c.0.s8 %v217
    %v219 = vlaneseq
    %v220 = vshrl.u32 %v219, 7
    %v221 = vsub.s32 %v218, %v220
    %v222 = vrot.slane %v211, %v221
    %v224 = vunpack.c.l.s4 1983009808
    %v225 = vunpack.c.0.s8 %v224
    %v226 = vlaneseq
    %v227 = vshrl.u32 %v226, 7
    %v228 = vsub.s32 %v225, %v227
    %v229 = vrot.slane %v215, %v228
    %v230 = vcombine.high %v222, %v222
    %v231 = vcombine.high %v229, %v229
    %v232 = vcombine.high %v212, %v212
    %v234 = vunpack.c.l.s4 1983009808
    %v235 = vunpack.c.0.s8 %v234
    %v236 = vlaneseq
    %v237 = vshrl.u32 %v236, 7
    %v238 = vsub.s32 %v235, %v237
    %v239 = vrot.slane %v212, %v238
    %v241 = vunpack.c.l.s4 1983009808
    %v242 = vunpack.c.0.s8 %v241
    %v243 = vlaneseq
    %v244 = vshrl.u32 %v243, 7
    %v245 = vsub.s32 %v242, %v244
    %v246 = vrot.slane %v232, %v245
    %v247 = vcombine.high %v239, %v239
    %v248 = vcombine.high %v246, %v246
    %v257 = vpack.c.bf16 %v222, %v222
    %v258 = vpack.c.bf16 %v230, %v230
    %v259 = vpack.c.bf16 %v229, %v229
    %v260 = vpack.c.bf16 %v231, %v231
    %v261 = vpack.c.bf16 %v239, %v239
    %v262 = vpack.c.bf16 %v247, %v247
    %v263 = vpack.c.bf16 %v246, %v246
    %v264 = vpack.c.bf16 %v248, %v248
    %v265 = vld [vmem:[#allocation8] sm:$0xff]
    %v266 = vld [vmem:[#allocation8 + $0x8] sm:$0xff]
    %v267 = vld [vmem:[#allocation8 + $0x10] sm:$0xff]
    %v268 = vld [vmem:[#allocation8 + $0x18] sm:$0xff]
    %v269 = vld [vmem:[#allocation8 + $0x20] sm:$0xff]
    %v270 = vld [vmem:[#allocation8 + $0x28] sm:$0xff]
    %v271 = vld [vmem:[#allocation8 + $0x30] sm:$0xff]
    %v272 = vld [vmem:[#allocation8 + $0x38] sm:$0xff]
    %v273 = vld [vmem:[#allocation8 + $0x40] sm:$0xff]
    %v274 = vld [vmem:[#allocation8 + $0x48] sm:$0xff]
    %v275 = vld [vmem:[#allocation8 + $0x50] sm:$0xff]
    %v276 = vld [vmem:[#allocation8 + $0x58] sm:$0xff]
    %v277 = vld [vmem:[#allocation8 + $0x60] sm:$0xff]
    %v278 = vld [vmem:[#allocation8 + $0x68] sm:$0xff]
    %v279 = vld [vmem:[#allocation8 + $0x70] sm:$0xff]
    %v280 = vld [vmem:[#allocation8 + $0x78] sm:$0xff]
    %v281 = vld [vmem:[#allocation8 + $0x80] sm:$0xff]
    %v282 = vld [vmem:[#allocation8 + $0x88] sm:$0xff]
    %v283 = vld [vmem:[#allocation8 + $0x90] sm:$0xff]
    %v284 = vld [vmem:[#allocation8 + $0x98] sm:$0xff]
    %v285 = vld [vmem:[#allocation8 + $0xa0] sm:$0xff]
    %v286 = vld [vmem:[#allocation8 + $0xa8] sm:$0xff]
    %v287 = vld [vmem:[#allocation8 + $0xb0] sm:$0xff]
    %v288 = vld [vmem:[#allocation8 + $0xb8] sm:$0xff]
    %v289 = vld [vmem:[#allocation8 + $0xc0] sm:$0xff]
    %v290 = vld [vmem:[#allocation8 + $0xc8] sm:$0xff]
    %v291 = vld [vmem:[#allocation8 + $0xd0] sm:$0xff]
    %v292 = vld [vmem:[#allocation8 + $0xd8] sm:$0xff]
    %v293 = vld [vmem:[#allocation8 + $0xe0] sm:$0xff]
    %v294 = vld [vmem:[#allocation8 + $0xe8] sm:$0xff]
    %v295 = vld [vmem:[#allocation8 + $0xf0] sm:$0xff]
    %v296 = vld [vmem:[#allocation8 + $0xf8] sm:$0xff]
    %v297 = vld [vmem:[#allocation8 + $0x100] sm:$0xff]
    %v298 = vld [vmem:[#allocation8 + $0x108] sm:$0xff]
    %v299 = vld [vmem:[#allocation8 + $0x110] sm:$0xff]
    %v300 = vld [vmem:[#allocation8 + $0x118] sm:$0xff]
    %v301 = vld [vmem:[#allocation8 + $0x120] sm:$0xff]
    %v302 = vld [vmem:[#allocation8 + $0x128] sm:$0xff]
    %v303 = vld [vmem:[#allocation8 + $0x130] sm:$0xff]
    %v304 = vld [vmem:[#allocation8 + $0x138] sm:$0xff]
    %v305 = vld [vmem:[#allocation8 + $0x140] sm:$0xff]
    %v306 = vld [vmem:[#allocation8 + $0x148] sm:$0xff]
    %v307 = vld [vmem:[#allocation8 + $0x150] sm:$0xff]
    %v308 = vld [vmem:[#allocation8 + $0x158] sm:$0xff]
    %v309 = vld [vmem:[#allocation8 + $0x160] sm:$0xff]
    %v310 = vld [vmem:[#allocation8 + $0x168] sm:$0xff]
    %v311 = vld [vmem:[#allocation8 + $0x170] sm:$0xff]
    %v312 = vld [vmem:[#allocation8 + $0x178] sm:$0xff]
    %v313 = vld [vmem:[#allocation8 + $0x180] sm:$0xff]
    %v314 = vld [vmem:[#allocation8 + $0x188] sm:$0xff]
    %v315 = vld [vmem:[#allocation8 + $0x190] sm:$0xff]
    %v316 = vld [vmem:[#allocation8 + $0x198] sm:$0xff]
    %v317 = vld [vmem:[#allocation8 + $0x1a0] sm:$0xff]
    %v318 = vld [vmem:[#allocation8 + $0x1a8] sm:$0xff]
    %v319 = vld [vmem:[#allocation8 + $0x1b0] sm:$0xff]
    %v320 = vld [vmem:[#allocation8 + $0x1b8] sm:$0xff]
    %v321 = vld [vmem:[#allocation8 + $0x1c0] sm:$0xff]
    %v322 = vld [vmem:[#allocation8 + $0x1c8] sm:$0xff]
    %v323 = vld [vmem:[#allocation8 + $0x1d0] sm:$0xff]
    %v324 = vld [vmem:[#allocation8 + $0x1d8] sm:$0xff]
    %v325 = vld [vmem:[#allocation8 + $0x1e0] sm:$0xff]
    %v326 = vld [vmem:[#allocation8 + $0x1e8] sm:$0xff]
    %v327 = vld [vmem:[#allocation8 + $0x1f0] sm:$0xff]
    %v328 = vld [vmem:[#allocation8 + $0x1f8] sm:$0xff]
    %v329 = vld [vmem:[#allocation8 + $0x200] sm:$0xff]
    %v330 = vld [vmem:[#allocation8 + $0x208] sm:$0xff]
    %v331 = vld [vmem:[#allocation8 + $0x210] sm:$0xff]
    %v332 = vld [vmem:[#allocation8 + $0x218] sm:$0xff]
    %v333 = vld [vmem:[#allocation8 + $0x220] sm:$0xff]
    %v334 = vld [vmem:[#allocation8 + $0x228] sm:$0xff]
    %v335 = vld [vmem:[#allocation8 + $0x230] sm:$0xff]
    %v336 = vld [vmem:[#allocation8 + $0x238] sm:$0xff]
    %v337 = vld [vmem:[#allocation8 + $0x240] sm:$0xff]
    %v338 = vld [vmem:[#allocation8 + $0x248] sm:$0xff]
    %v339 = vld [vmem:[#allocation8 + $0x250] sm:$0xff]
    %v340 = vld [vmem:[#allocation8 + $0x258] sm:$0xff]
    %v341 = vld [vmem:[#allocation8 + $0x260] sm:$0xff]
    %v342 = vld [vmem:[#allocation8 + $0x268] sm:$0xff]
    %v343 = vld [vmem:[#allocation8 + $0x270] sm:$0xff]
    %v344 = vld [vmem:[#allocation8 + $0x278] sm:$0xff]
    %v345 = vld [vmem:[#allocation8 + $0x280] sm:$0xff]
    %v346 = vld [vmem:[#allocation8 + $0x288] sm:$0xff]
    %v347 = vld [vmem:[#allocation8 + $0x290] sm:$0xff]
    %v348 = vld [vmem:[#allocation8 + $0x298] sm:$0xff]
    %v349 = vld [vmem:[#allocation8 + $0x2a0] sm:$0xff]
    %v350 = vld [vmem:[#allocation8 + $0x2a8] sm:$0xff]
    %v351 = vld [vmem:[#allocation8 + $0x2b0] sm:$0xff]
    %v352 = vld [vmem:[#allocation8 + $0x2b8] sm:$0xff]
    %v353 = vld [vmem:[#allocation8 + $0x2c0] sm:$0xff]
    %v354 = vld [vmem:[#allocation8 + $0x2c8] sm:$0xff]
    %v355 = vld [vmem:[#allocation8 + $0x2d0] sm:$0xff]
    %v356 = vld [vmem:[#allocation8 + $0x2d8] sm:$0xff]
    %v357 = vld [vmem:[#allocation8 + $0x2e0] sm:$0xff]
    %v358 = vld [vmem:[#allocation8 + $0x2e8] sm:$0xff]
    %v359 = vld [vmem:[#allocation8 + $0x2f0] sm:$0xff]
    %v360 = vld [vmem:[#allocation8 + $0x2f8] sm:$0xff]
    %v361 = vld [vmem:[#allocation8 + $0x300] sm:$0xff]
    %v362 = vld [vmem:[#allocation8 + $0x308] sm:$0xff]
    %v363 = vld [vmem:[#allocation8 + $0x310] sm:$0xff]
    %v364 = vld [vmem:[#allocation8 + $0x318] sm:$0xff]
    %v365 = vld [vmem:[#allocation8 + $0x320] sm:$0xff]
    %v366 = vld [vmem:[#allocation8 + $0x328] sm:$0xff]
    %v367 = vld [vmem:[#allocation8 + $0x330] sm:$0xff]
    %v368 = vld [vmem:[#allocation8 + $0x338] sm:$0xff]
    %v369 = vld [vmem:[#allocation8 + $0x340] sm:$0xff]
    %v370 = vld [vmem:[#allocation8 + $0x348] sm:$0xff]
    %v371 = vld [vmem:[#allocation8 + $0x350] sm:$0xff]
    %v372 = vld [vmem:[#allocation8 + $0x358] sm:$0xff]
    %v373 = vld [vmem:[#allocation8 + $0x360] sm:$0xff]
    %v374 = vld [vmem:[#allocation8 + $0x368] sm:$0xff]
    %v375 = vld [vmem:[#allocation8 + $0x370] sm:$0xff]
    %v376 = vld [vmem:[#allocation8 + $0x378] sm:$0xff]
    %v377 = vld [vmem:[#allocation8 + $0x380] sm:$0xff]
    %v378 = vld [vmem:[#allocation8 + $0x388] sm:$0xff]
    %v379 = vld [vmem:[#allocation8 + $0x390] sm:$0xff]
    %v380 = vld [vmem:[#allocation8 + $0x398] sm:$0xff]
    %v381 = vld [vmem:[#allocation8 + $0x3a0] sm:$0xff]
    %v382 = vld [vmem:[#allocation8 + $0x3a8] sm:$0xff]
    %v383 = vld [vmem:[#allocation8 + $0x3b0] sm:$0xff]
    %v384 = vld [vmem:[#allocation8 + $0x3b8] sm:$0xff]
    %v385 = vld [vmem:[#allocation8 + $0x3c0] sm:$0xff]
    %v386 = vld [vmem:[#allocation8 + $0x3c8] sm:$0xff]
    %v387 = vld [vmem:[#allocation8 + $0x3d0] sm:$0xff]
    %v388 = vld [vmem:[#allocation8 + $0x3d8] sm:$0xff]
    %v389 = vld [vmem:[#allocation8 + $0x3e0] sm:$0xff]
    %v390 = vld [vmem:[#allocation8 + $0x3e8] sm:$0xff]
    %v391 = vld [vmem:[#allocation8 + $0x3f0] sm:$0xff]
    %v392 = vld [vmem:[#allocation8 + $0x3f8] sm:$0xff]
    %v393 = vld [vmem:[#allocation8 + $0x400] sm:$0xff]
    %v394 = vld [vmem:[#allocation8 + $0x408] sm:$0xff]
    %v395 = vld [vmem:[#allocation8 + $0x410] sm:$0xff]
    %v396 = vld [vmem:[#allocation8 + $0x418] sm:$0xff]
    %v397 = vld [vmem:[#allocation8 + $0x420] sm:$0xff]
    %v398 = vld [vmem:[#allocation8 + $0x428] sm:$0xff]
    %v399 = vld [vmem:[#allocation8 + $0x430] sm:$0xff]
    %v400 = vld [vmem:[#allocation8 + $0x438] sm:$0xff]
    %v401 = vld [vmem:[#allocation8 + $0x440] sm:$0xff]
    %v402 = vld [vmem:[#allocation8 + $0x448] sm:$0xff]
    %v403 = vld [vmem:[#allocation8 + $0x450] sm:$0xff]
    %v404 = vld [vmem:[#allocation8 + $0x458] sm:$0xff]
    %v405 = vld [vmem:[#allocation8 + $0x460] sm:$0xff]
    %v406 = vld [vmem:[#allocation8 + $0x468] sm:$0xff]
    %v407 = vld [vmem:[#allocation8 + $0x470] sm:$0xff]
    %v408 = vld [vmem:[#allocation8 + $0x478] sm:$0xff]
    %v409 = vld [vmem:[#allocation8 + $0x480] sm:$0xff]
    %v410 = vld [vmem:[#allocation8 + $0x488] sm:$0xff]
    %v411 = vld [vmem:[#allocation8 + $0x490] sm:$0xff]
    %v412 = vld [vmem:[#allocation8 + $0x498] sm:$0xff]
    %v413 = vld [vmem:[#allocation8 + $0x4a0] sm:$0xff]
    %v414 = vld [vmem:[#allocation8 + $0x4a8] sm:$0xff]
    %v415 = vld [vmem:[#allocation8 + $0x4b0] sm:$0xff]
    %v416 = vld [vmem:[#allocation8 + $0x4b8] sm:$0xff]
    %v417 = vld [vmem:[#allocation8 + $0x4c0] sm:$0xff]
    %v418 = vld [vmem:[#allocation8 + $0x4c8] sm:$0xff]
    %v419 = vld [vmem:[#allocation8 + $0x4d0] sm:$0xff]
    %v420 = vld [vmem:[#allocation8 + $0x4d8] sm:$0xff]
    %v421 = vld [vmem:[#allocation8 + $0x4e0] sm:$0xff]
    %v422 = vld [vmem:[#allocation8 + $0x4e8] sm:$0xff]
    %v423 = vld [vmem:[#allocation8 + $0x4f0] sm:$0xff]
    %v424 = vld [vmem:[#allocation8 + $0x4f8] sm:$0xff]
    %v425 = vld [vmem:[#allocation8 + $0x500] sm:$0xff]
    %v426 = vld [vmem:[#allocation8 + $0x508] sm:$0xff]
    %v427 = vld [vmem:[#allocation8 + $0x510] sm:$0xff]
    %v428 = vld [vmem:[#allocation8 + $0x518] sm:$0xff]
    %v429 = vld [vmem:[#allocation8 + $0x520] sm:$0xff]
    %v430 = vld [vmem:[#allocation8 + $0x528] sm:$0xff]
    %v431 = vld [vmem:[#allocation8 + $0x530] sm:$0xff]
    %v432 = vld [vmem:[#allocation8 + $0x538] sm:$0xff]
    %v433 = vld [vmem:[#allocation8 + $0x540] sm:$0xff]
    %v434 = vld [vmem:[#allocation8 + $0x548] sm:$0xff]
    %v435 = vld [vmem:[#allocation8 + $0x550] sm:$0xff]
    %v436 = vld [vmem:[#allocation8 + $0x558] sm:$0xff]
    %v437 = vld [vmem:[#allocation8 + $0x560] sm:$0xff]
    %v438 = vld [vmem:[#allocation8 + $0x568] sm:$0xff]
    %v439 = vld [vmem:[#allocation8 + $0x570] sm:$0xff]
    %v440 = vld [vmem:[#allocation8 + $0x578] sm:$0xff]
    %v441 = vld [vmem:[#allocation8 + $0x580] sm:$0xff]
    %v442 = vld [vmem:[#allocation8 + $0x588] sm:$0xff]
    %v443 = vld [vmem:[#allocation8 + $0x590] sm:$0xff]
    %v444 = vld [vmem:[#allocation8 + $0x598] sm:$0xff]
    %v445 = vld [vmem:[#allocation8 + $0x5a0] sm:$0xff]
    %v446 = vld [vmem:[#allocation8 + $0x5a8] sm:$0xff]
    %v447 = vld [vmem:[#allocation8 + $0x5b0] sm:$0xff]
    %v448 = vld [vmem:[#allocation8 + $0x5b8] sm:$0xff]
    %v449 = vld [vmem:[#allocation8 + $0x5c0] sm:$0xff]
    %v450 = vld [vmem:[#allocation8 + $0x5c8] sm:$0xff]
    %v451 = vld [vmem:[#allocation8 + $0x5d0] sm:$0xff]
    %v452 = vld [vmem:[#allocation8 + $0x5d8] sm:$0xff]
    %v453 = vld [vmem:[#allocation8 + $0x5e0] sm:$0xff]
    %v454 = vld [vmem:[#allocation8 + $0x5e8] sm:$0xff]
    %v455 = vld [vmem:[#allocation8 + $0x5f0] sm:$0xff]
    %v456 = vld [vmem:[#allocation8 + $0x5f8] sm:$0xff]
    %v457 = vld [vmem:[#allocation8 + $0x600] sm:$0xff]
    %v458 = vld [vmem:[#allocation8 + $0x608] sm:$0xff]
    %v459 = vld [vmem:[#allocation8 + $0x610] sm:$0xff]
    %v460 = vld [vmem:[#allocation8 + $0x618] sm:$0xff]
    %v461 = vld [vmem:[#allocation8 + $0x620] sm:$0xff]
    %v462 = vld [vmem:[#allocation8 + $0x628] sm:$0xff]
    %v463 = vld [vmem:[#allocation8 + $0x630] sm:$0xff]
    %v464 = vld [vmem:[#allocation8 + $0x638] sm:$0xff]
    %v465 = vld [vmem:[#allocation8 + $0x640] sm:$0xff]
    %v466 = vld [vmem:[#allocation8 + $0x648] sm:$0xff]
    %v467 = vld [vmem:[#allocation8 + $0x650] sm:$0xff]
    %v468 = vld [vmem:[#allocation8 + $0x658] sm:$0xff]
    %v469 = vld [vmem:[#allocation8 + $0x660] sm:$0xff]
    %v470 = vld [vmem:[#allocation8 + $0x668] sm:$0xff]
    %v471 = vld [vmem:[#allocation8 + $0x670] sm:$0xff]
    %v472 = vld [vmem:[#allocation8 + $0x678] sm:$0xff]
    %v473 = vld [vmem:[#allocation8 + $0x680] sm:$0xff]
    %v474 = vld [vmem:[#allocation8 + $0x688] sm:$0xff]
    %v475 = vld [vmem:[#allocation8 + $0x690] sm:$0xff]
    %v476 = vld [vmem:[#allocation8 + $0x698] sm:$0xff]
    %v477 = vld [vmem:[#allocation8 + $0x6a0] sm:$0xff]
    %v478 = vld [vmem:[#allocation8 + $0x6a8] sm:$0xff]
    %v479 = vld [vmem:[#allocation8 + $0x6b0] sm:$0xff]
    %v480 = vld [vmem:[#allocation8 + $0x6b8] sm:$0xff]
    %v481 = vld [vmem:[#allocation8 + $0x6c0] sm:$0xff]
    %v482 = vld [vmem:[#allocation8 + $0x6c8] sm:$0xff]
    %v483 = vld [vmem:[#allocation8 + $0x6d0] sm:$0xff]
    %v484 = vld [vmem:[#allocation8 + $0x6d8] sm:$0xff]
    %v485 = vld [vmem:[#allocation8 + $0x6e0] sm:$0xff]
    %v486 = vld [vmem:[#allocation8 + $0x6e8] sm:$0xff]
    %v487 = vld [vmem:[#allocation8 + $0x6f0] sm:$0xff]
    %v488 = vld [vmem:[#allocation8 + $0x6f8] sm:$0xff]
    %v489 = vld [vmem:[#allocation8 + $0x700] sm:$0xff]
    %v490 = vld [vmem:[#allocation8 + $0x708] sm:$0xff]
    %v491 = vld [vmem:[#allocation8 + $0x710] sm:$0xff]
    %v492 = vld [vmem:[#allocation8 + $0x718] sm:$0xff]
    %v493 = vld [vmem:[#allocation8 + $0x720] sm:$0xff]
    %v494 = vld [vmem:[#allocation8 + $0x728] sm:$0xff]
    %v495 = vld [vmem:[#allocation8 + $0x730] sm:$0xff]
    %v496 = vld [vmem:[#allocation8 + $0x738] sm:$0xff]
    %v497 = vld [vmem:[#allocation8 + $0x740] sm:$0xff]
    %v498 = vld [vmem:[#allocation8 + $0x748] sm:$0xff]
    %v499 = vld [vmem:[#allocation8 + $0x750] sm:$0xff]
    %v500 = vld [vmem:[#allocation8 + $0x758] sm:$0xff]
    %v501 = vld [vmem:[#allocation8 + $0x760] sm:$0xff]
    %v502 = vld [vmem:[#allocation8 + $0x768] sm:$0xff]
    %v503 = vld [vmem:[#allocation8 + $0x770] sm:$0xff]
    %v504 = vld [vmem:[#allocation8 + $0x778] sm:$0xff]
    %v505 = vld [vmem:[#allocation8 + $0x780] sm:$0xff]
    %v506 = vld [vmem:[#allocation8 + $0x788] sm:$0xff]
    %v507 = vld [vmem:[#allocation8 + $0x790] sm:$0xff]
    %v508 = vld [vmem:[#allocation8 + $0x798] sm:$0xff]
    %v509 = vld [vmem:[#allocation8 + $0x7a0] sm:$0xff]
    %v510 = vld [vmem:[#allocation8 + $0x7a8] sm:$0xff]
    %v511 = vld [vmem:[#allocation8 + $0x7b0] sm:$0xff]
    %v512 = vld [vmem:[#allocation8 + $0x7b8] sm:$0xff]
    %v513 = vld [vmem:[#allocation8 + $0x7c0] sm:$0xff]
    %v514 = vld [vmem:[#allocation8 + $0x7c8] sm:$0xff]
    %v515 = vld [vmem:[#allocation8 + $0x7d0] sm:$0xff]
    %v516 = vld [vmem:[#allocation8 + $0x7d8] sm:$0xff]
    %v517 = vld [vmem:[#allocation8 + $0x7e0] sm:$0xff]
    %v518 = vld [vmem:[#allocation8 + $0x7e8] sm:$0xff]
    %v519 = vld [vmem:[#allocation8 + $0x7f0] sm:$0xff]
    %v520 = vld [vmem:[#allocation8 + $0x7f8] sm:$0xff]
    %v521 = vld [vmem:[#allocation8 + $0x800] sm:$0xff]
    %v522 = vld [vmem:[#allocation8 + $0x808] sm:$0xff]
    %v523 = vld [vmem:[#allocation8 + $0x810] sm:$0xff]
    %v524 = vld [vmem:[#allocation8 + $0x818] sm:$0xff]
    %v525 = vld [vmem:[#allocation8 + $0x820] sm:$0xff]
    %v526 = vld [vmem:[#allocation8 + $0x828] sm:$0xff]
    %v527 = vld [vmem:[#allocation8 + $0x830] sm:$0xff]
    %v528 = vld [vmem:[#allocation8 + $0x838] sm:$0xff]
    %v529 = vld [vmem:[#allocation8 + $0x840] sm:$0xff]
    %v530 = vld [vmem:[#allocation8 + $0x848] sm:$0xff]
    %v531 = vld [vmem:[#allocation8 + $0x850] sm:$0xff]
    %v532 = vld [vmem:[#allocation8 + $0x858] sm:$0xff]
    %v533 = vld [vmem:[#allocation8 + $0x860] sm:$0xff]
    %v534 = vld [vmem:[#allocation8 + $0x868] sm:$0xff]
    %v535 = vld [vmem:[#allocation8 + $0x870] sm:$0xff]
    %v536 = vld [vmem:[#allocation8 + $0x878] sm:$0xff]
    %v537 = vld [vmem:[#allocation8 + $0x880] sm:$0xff]
    %v538 = vld [vmem:[#allocation8 + $0x888] sm:$0xff]
    %v539 = vld [vmem:[#allocation8 + $0x890] sm:$0xff]
    %v540 = vld [vmem:[#allocation8 + $0x898] sm:$0xff]
    %v541 = vld [vmem:[#allocation8 + $0x8a0] sm:$0xff]
    %v542 = vld [vmem:[#allocation8 + $0x8a8] sm:$0xff]
    %v543 = vld [vmem:[#allocation8 + $0x8b0] sm:$0xff]
    %v544 = vld [vmem:[#allocation8 + $0x8b8] sm:$0xff]
    %v545 = vld [vmem:[#allocation8 + $0x8c0] sm:$0xff]
    %v546 = vld [vmem:[#allocation8 + $0x8c8] sm:$0xff]
    %v547 = vld [vmem:[#allocation8 + $0x8d0] sm:$0xff]
    %v548 = vld [vmem:[#allocation8 + $0x8d8] sm:$0xff]
    %v549 = vld [vmem:[#allocation8 + $0x8e0] sm:$0xff]
    %v550 = vld [vmem:[#allocation8 + $0x8e8] sm:$0xff]
    %v551 = vld [vmem:[#allocation8 + $0x8f0] sm:$0xff]
    %v552 = vld [vmem:[#allocation8 + $0x8f8] sm:$0xff]
    %v553 = vld [vmem:[#allocation8 + $0x900] sm:$0xff]
    %v554 = vld [vmem:[#allocation8 + $0x908] sm:$0xff]
    %v555 = vld [vmem:[#allocation8 + $0x910] sm:$0xff]
    %v556 = vld [vmem:[#allocation8 + $0x918] sm:$0xff]
    %v557 = vld [vmem:[#allocation8 + $0x920] sm:$0xff]
    %v558 = vld [vmem:[#allocation8 + $0x928] sm:$0xff]
    %v559 = vld [vmem:[#allocation8 + $0x930] sm:$0xff]
    %v560 = vld [vmem:[#allocation8 + $0x938] sm:$0xff]
    %v561 = vld [vmem:[#allocation8 + $0x940] sm:$0xff]
    %v562 = vld [vmem:[#allocation8 + $0x948] sm:$0xff]
    %v563 = vld [vmem:[#allocation8 + $0x950] sm:$0xff]
    %v564 = vld [vmem:[#allocation8 + $0x958] sm:$0xff]
    %v565 = vld [vmem:[#allocation8 + $0x960] sm:$0xff]
    %v566 = vld [vmem:[#allocation8 + $0x968] sm:$0xff]
    %v567 = vld [vmem:[#allocation8 + $0x970] sm:$0xff]
    %v568 = vld [vmem:[#allocation8 + $0x978] sm:$0xff]
    %v569 = vld [vmem:[#allocation8 + $0x980] sm:$0xff]
    %v570 = vld [vmem:[#allocation8 + $0x988] sm:$0xff]
    %v571 = vld [vmem:[#allocation8 + $0x990] sm:$0xff]
    %v572 = vld [vmem:[#allocation8 + $0x998] sm:$0xff]
    %v573 = vld [vmem:[#allocation8 + $0x9a0] sm:$0xff]
    %v574 = vld [vmem:[#allocation8 + $0x9a8] sm:$0xff]
    %v575 = vld [vmem:[#allocation8 + $0x9b0] sm:$0xff]
    %v576 = vld [vmem:[#allocation8 + $0x9b8] sm:$0xff]
    %v577 = vld [vmem:[#allocation8 + $0x9c0] sm:$0xff]
    %v578 = vld [vmem:[#allocation8 + $0x9c8] sm:$0xff]
    %v579 = vld [vmem:[#allocation8 + $0x9d0] sm:$0xff]
    %v580 = vld [vmem:[#allocation8 + $0x9d8] sm:$0xff]
    %v581 = vld [vmem:[#allocation8 + $0x9e0] sm:$0xff]
    %v582 = vld [vmem:[#allocation8 + $0x9e8] sm:$0xff]
    %v583 = vld [vmem:[#allocation8 + $0x9f0] sm:$0xff]
    %v584 = vld [vmem:[#allocation8 + $0x9f8] sm:$0xff]
    %v585 = vld [vmem:[#allocation8 + $0xa00] sm:$0xff]
    %v586 = vld [vmem:[#allocation8 + $0xa08] sm:$0xff]
    %v587 = vld [vmem:[#allocation8 + $0xa10] sm:$0xff]
    %v588 = vld [vmem:[#allocation8 + $0xa18] sm:$0xff]
    %v589 = vld [vmem:[#allocation8 + $0xa20] sm:$0xff]
    %v590 = vld [vmem:[#allocation8 + $0xa28] sm:$0xff]
    %v591 = vld [vmem:[#allocation8 + $0xa30] sm:$0xff]
    %v592 = vld [vmem:[#allocation8 + $0xa38] sm:$0xff]
    %v593 = vld [vmem:[#allocation8 + $0xa40] sm:$0xff]
    %v594 = vld [vmem:[#allocation8 + $0xa48] sm:$0xff]
    %v595 = vld [vmem:[#allocation8 + $0xa50] sm:$0xff]
    %v596 = vld [vmem:[#allocation8 + $0xa58] sm:$0xff]
    %v597 = vld [vmem:[#allocation8 + $0xa60] sm:$0xff]
    %v598 = vld [vmem:[#allocation8 + $0xa68] sm:$0xff]
    %v599 = vld [vmem:[#allocation8 + $0xa70] sm:$0xff]
    %v600 = vld [vmem:[#allocation8 + $0xa78] sm:$0xff]
    %v601 = vld [vmem:[#allocation8 + $0xa80] sm:$0xff]
    %v602 = vld [vmem:[#allocation8 + $0xa88] sm:$0xff]
    %v603 = vld [vmem:[#allocation8 + $0xa90] sm:$0xff]
    %v604 = vld [vmem:[#allocation8 + $0xa98] sm:$0xff]
    %v605 = vld [vmem:[#allocation8 + $0xaa0] sm:$0xff]
    %v606 = vld [vmem:[#allocation8 + $0xaa8] sm:$0xff]
    %v607 = vld [vmem:[#allocation8 + $0xab0] sm:$0xff]
    %v608 = vld [vmem:[#allocation8 + $0xab8] sm:$0xff]
    %v609 = vld [vmem:[#allocation8 + $0xac0] sm:$0xff]
    %v610 = vld [vmem:[#allocation8 + $0xac8] sm:$0xff]
    %v611 = vld [vmem:[#allocation8 + $0xad0] sm:$0xff]
    %v612 = vld [vmem:[#allocation8 + $0xad8] sm:$0xff]
    %v613 = vld [vmem:[#allocation8 + $0xae0] sm:$0xff]
    %v614 = vld [vmem:[#allocation8 + $0xae8] sm:$0xff]
    %v615 = vld [vmem:[#allocation8 + $0xaf0] sm:$0xff]
    %v616 = vld [vmem:[#allocation8 + $0xaf8] sm:$0xff]
    %v617 = vld [vmem:[#allocation8 + $0xb00] sm:$0xff]
    %v618 = vld [vmem:[#allocation8 + $0xb08] sm:$0xff]
    %v619 = vld [vmem:[#allocation8 + $0xb10] sm:$0xff]
    %v620 = vld [vmem:[#allocation8 + $0xb18] sm:$0xff]
    %v621 = vld [vmem:[#allocation8 + $0xb20] sm:$0xff]
    %v622 = vld [vmem:[#allocation8 + $0xb28] sm:$0xff]
    %v623 = vld [vmem:[#allocation8 + $0xb30] sm:$0xff]
    %v624 = vld [vmem:[#allocation8 + $0xb38] sm:$0xff]
    %v625 = vld [vmem:[#allocation8 + $0xb40] sm:$0xff]
    %v626 = vld [vmem:[#allocation8 + $0xb48] sm:$0xff]
    %v627 = vld [vmem:[#allocation8 + $0xb50] sm:$0xff]
    %v628 = vld [vmem:[#allocation8 + $0xb58] sm:$0xff]
    %v629 = vld [vmem:[#allocation8 + $0xb60] sm:$0xff]
    %v630 = vld [vmem:[#allocation8 + $0xb68] sm:$0xff]
    %v631 = vld [vmem:[#allocation8 + $0xb70] sm:$0xff]
    %v632 = vld [vmem:[#allocation8 + $0xb78] sm:$0xff]
    %v633 = vld [vmem:[#allocation8 + $0xb80] sm:$0xff]
    %v634 = vld [vmem:[#allocation8 + $0xb88] sm:$0xff]
    %v635 = vld [vmem:[#allocation8 + $0xb90] sm:$0xff]
    %v636 = vld [vmem:[#allocation8 + $0xb98] sm:$0xff]
    %v637 = vld [vmem:[#allocation8 + $0xba0] sm:$0xff]
    %v638 = vld [vmem:[#allocation8 + $0xba8] sm:$0xff]
    %v639 = vld [vmem:[#allocation8 + $0xbb0] sm:$0xff]
    %v640 = vld [vmem:[#allocation8 + $0xbb8] sm:$0xff]
    %v641 = vld [vmem:[#allocation8 + $0xbc0] sm:$0xff]
    %v642 = vld [vmem:[#allocation8 + $0xbc8] sm:$0xff]
    %v643 = vld [vmem:[#allocation8 + $0xbd0] sm:$0xff]
    %v644 = vld [vmem:[#allocation8 + $0xbd8] sm:$0xff]
    %v645 = vld [vmem:[#allocation8 + $0xbe0] sm:$0xff]
    %v646 = vld [vmem:[#allocation8 + $0xbe8] sm:$0xff]
    %v647 = vld [vmem:[#allocation8 + $0xbf0] sm:$0xff]
    %v648 = vld [vmem:[#allocation8 + $0xbf8] sm:$0xff]
    %v649 = vld [vmem:[#allocation8 + $0xc00] sm:$0xff]
    %v650 = vld [vmem:[#allocation8 + $0xc08] sm:$0xff]
    %v651 = vld [vmem:[#allocation8 + $0xc10] sm:$0xff]
    %v652 = vld [vmem:[#allocation8 + $0xc18] sm:$0xff]
    %v653 = vld [vmem:[#allocation8 + $0xc20] sm:$0xff]
    %v654 = vld [vmem:[#allocation8 + $0xc28] sm:$0xff]
    %v655 = vld [vmem:[#allocation8 + $0xc30] sm:$0xff]
    %v656 = vld [vmem:[#allocation8 + $0xc38] sm:$0xff]
    %v657 = vld [vmem:[#allocation8 + $0xc40] sm:$0xff]
    %v658 = vld [vmem:[#allocation8 + $0xc48] sm:$0xff]
    %v659 = vld [vmem:[#allocation8 + $0xc50] sm:$0xff]
    %v660 = vld [vmem:[#allocation8 + $0xc58] sm:$0xff]
    %v661 = vld [vmem:[#allocation8 + $0xc60] sm:$0xff]
    %v662 = vld [vmem:[#allocation8 + $0xc68] sm:$0xff]
    %v663 = vld [vmem:[#allocation8 + $0xc70] sm:$0xff]
    %v664 = vld [vmem:[#allocation8 + $0xc78] sm:$0xff]
    %v665 = vld [vmem:[#allocation8 + $0xc80] sm:$0xff]
    %v666 = vld [vmem:[#allocation8 + $0xc88] sm:$0xff]
    %v667 = vld [vmem:[#allocation8 + $0xc90] sm:$0xff]
    %v668 = vld [vmem:[#allocation8 + $0xc98] sm:$0xff]
    %v669 = vld [vmem:[#allocation8 + $0xca0] sm:$0xff]
    %v670 = vld [vmem:[#allocation8 + $0xca8] sm:$0xff]
    %v671 = vld [vmem:[#allocation8 + $0xcb0] sm:$0xff]
    %v672 = vld [vmem:[#allocation8 + $0xcb8] sm:$0xff]
    %v673 = vld [vmem:[#allocation8 + $0xcc0] sm:$0xff]
    %v674 = vld [vmem:[#allocation8 + $0xcc8] sm:$0xff]
    %v675 = vld [vmem:[#allocation8 + $0xcd0] sm:$0xff]
    %v676 = vld [vmem:[#allocation8 + $0xcd8] sm:$0xff]
    %v677 = vld [vmem:[#allocation8 + $0xce0] sm:$0xff]
    %v678 = vld [vmem:[#allocation8 + $0xce8] sm:$0xff]
    %v679 = vld [vmem:[#allocation8 + $0xcf0] sm:$0xff]
    %v680 = vld [vmem:[#allocation8 + $0xcf8] sm:$0xff]
    %v681 = vld [vmem:[#allocation8 + $0xd00] sm:$0xff]
    %v682 = vld [vmem:[#allocation8 + $0xd08] sm:$0xff]
    %v683 = vld [vmem:[#allocation8 + $0xd10] sm:$0xff]
    %v684 = vld [vmem:[#allocation8 + $0xd18] sm:$0xff]
    %v685 = vld [vmem:[#allocation8 + $0xd20] sm:$0xff]
    %v686 = vld [vmem:[#allocation8 + $0xd28] sm:$0xff]
    %v687 = vld [vmem:[#allocation8 + $0xd30] sm:$0xff]
    %v688 = vld [vmem:[#allocation8 + $0xd38] sm:$0xff]
    %v689 = vld [vmem:[#allocation8 + $0xd40] sm:$0xff]
    %v690 = vld [vmem:[#allocation8 + $0xd48] sm:$0xff]
    %v691 = vld [vmem:[#allocation8 + $0xd50] sm:$0xff]
    %v692 = vld [vmem:[#allocation8 + $0xd58] sm:$0xff]
    %v693 = vld [vmem:[#allocation8 + $0xd60] sm:$0xff]
    %v694 = vld [vmem:[#allocation8 + $0xd68] sm:$0xff]
    %v695 = vld [vmem:[#allocation8 + $0xd70] sm:$0xff]
    %v696 = vld [vmem:[#allocation8 + $0xd78] sm:$0xff]
    %v697 = vld [vmem:[#allocation8 + $0xd80] sm:$0xff]
    %v698 = vld [vmem:[#allocation8 + $0xd88] sm:$0xff]
    %v699 = vld [vmem:[#allocation8 + $0xd90] sm:$0xff]
    %v700 = vld [vmem:[#allocation8 + $0xd98] sm:$0xff]
    %v701 = vld [vmem:[#allocation8 + $0xda0] sm:$0xff]
    %v702 = vld [vmem:[#allocation8 + $0xda8] sm:$0xff]
    %v703 = vld [vmem:[#allocation8 + $0xdb0] sm:$0xff]
    %v704 = vld [vmem:[#allocation8 + $0xdb8] sm:$0xff]
    %v705 = vld [vmem:[#allocation8 + $0xdc0] sm:$0xff]
    %v706 = vld [vmem:[#allocation8 + $0xdc8] sm:$0xff]
    %v707 = vld [vmem:[#allocation8 + $0xdd0] sm:$0xff]
    %v708 = vld [vmem:[#allocation8 + $0xdd8] sm:$0xff]
    %v709 = vld [vmem:[#allocation8 + $0xde0] sm:$0xff]
    %v710 = vld [vmem:[#allocation8 + $0xde8] sm:$0xff]
    %v711 = vld [vmem:[#allocation8 + $0xdf0] sm:$0xff]
    %v712 = vld [vmem:[#allocation8 + $0xdf8] sm:$0xff]
    %v713 = vld [vmem:[#allocation8 + $0xe00] sm:$0xff]
    %v714 = vld [vmem:[#allocation8 + $0xe08] sm:$0xff]
    %v715 = vld [vmem:[#allocation8 + $0xe10] sm:$0xff]
    %v716 = vld [vmem:[#allocation8 + $0xe18] sm:$0xff]
    %v717 = vld [vmem:[#allocation8 + $0xe20] sm:$0xff]
    %v718 = vld [vmem:[#allocation8 + $0xe28] sm:$0xff]
    %v719 = vld [vmem:[#allocation8 + $0xe30] sm:$0xff]
    %v720 = vld [vmem:[#allocation8 + $0xe38] sm:$0xff]
    %v721 = vld [vmem:[#allocation8 + $0xe40] sm:$0xff]
    %v722 = vld [vmem:[#allocation8 + $0xe48] sm:$0xff]
    %v723 = vld [vmem:[#allocation8 + $0xe50] sm:$0xff]
    %v724 = vld [vmem:[#allocation8 + $0xe58] sm:$0xff]
    %v725 = vld [vmem:[#allocation8 + $0xe60] sm:$0xff]
    %v726 = vld [vmem:[#allocation8 + $0xe68] sm:$0xff]
    %v727 = vld [vmem:[#allocation8 + $0xe70] sm:$0xff]
    %v728 = vld [vmem:[#allocation8 + $0xe78] sm:$0xff]
    %v729 = vld [vmem:[#allocation8 + $0xe80] sm:$0xff]
    %v730 = vld [vmem:[#allocation8 + $0xe88] sm:$0xff]
    %v731 = vld [vmem:[#allocation8 + $0xe90] sm:$0xff]
    %v732 = vld [vmem:[#allocation8 + $0xe98] sm:$0xff]
    %v733 = vld [vmem:[#allocation8 + $0xea0] sm:$0xff]
    %v734 = vld [vmem:[#allocation8 + $0xea8] sm:$0xff]
    %v735 = vld [vmem:[#allocation8 + $0xeb0] sm:$0xff]
    %v736 = vld [vmem:[#allocation8 + $0xeb8] sm:$0xff]
    %v737 = vld [vmem:[#allocation8 + $0xec0] sm:$0xff]
    %v738 = vld [vmem:[#allocation8 + $0xec8] sm:$0xff]
    %v739 = vld [vmem:[#allocation8 + $0xed0] sm:$0xff]
    %v740 = vld [vmem:[#allocation8 + $0xed8] sm:$0xff]
    %v741 = vld [vmem:[#allocation8 + $0xee0] sm:$0xff]
    %v742 = vld [vmem:[#allocation8 + $0xee8] sm:$0xff]
    %v743 = vld [vmem:[#allocation8 + $0xef0] sm:$0xff]
    %v744 = vld [vmem:[#allocation8 + $0xef8] sm:$0xff]
    %v745 = vld [vmem:[#allocation8 + $0xf00] sm:$0xff]
    %v746 = vld [vmem:[#allocation8 + $0xf08] sm:$0xff]
    %v747 = vld [vmem:[#allocation8 + $0xf10] sm:$0xff]
    %v748 = vld [vmem:[#allocation8 + $0xf18] sm:$0xff]
    %v749 = vld [vmem:[#allocation8 + $0xf20] sm:$0xff]
    %v750 = vld [vmem:[#allocation8 + $0xf28] sm:$0xff]
    %v751 = vld [vmem:[#allocation8 + $0xf30] sm:$0xff]
    %v752 = vld [vmem:[#allocation8 + $0xf38] sm:$0xff]
    %v753 = vld [vmem:[#allocation8 + $0xf40] sm:$0xff]
    %v754 = vld [vmem:[#allocation8 + $0xf48] sm:$0xff]
    %v755 = vld [vmem:[#allocation8 + $0xf50] sm:$0xff]
    %v756 = vld [vmem:[#allocation8 + $0xf58] sm:$0xff]
    %v757 = vld [vmem:[#allocation8 + $0xf60] sm:$0xff]
    %v758 = vld [vmem:[#allocation8 + $0xf68] sm:$0xff]
    %v759 = vld [vmem:[#allocation8 + $0xf70] sm:$0xff]
    %v760 = vld [vmem:[#allocation8 + $0xf78] sm:$0xff]
    %v761 = vld [vmem:[#allocation8 + $0xf80] sm:$0xff]
    %v762 = vld [vmem:[#allocation8 + $0xf88] sm:$0xff]
    %v763 = vld [vmem:[#allocation8 + $0xf90] sm:$0xff]
    %v764 = vld [vmem:[#allocation8 + $0xf98] sm:$0xff]
    %v765 = vld [vmem:[#allocation8 + $0xfa0] sm:$0xff]
    %v766 = vld [vmem:[#allocation8 + $0xfa8] sm:$0xff]
    %v767 = vld [vmem:[#allocation8 + $0xfb0] sm:$0xff]
    %v768 = vld [vmem:[#allocation8 + $0xfb8] sm:$0xff]
    %v769 = vld [vmem:[#allocation8 + $0xfc0] sm:$0xff]
    %v770 = vld [vmem:[#allocation8 + $0xfc8] sm:$0xff]
    %v771 = vld [vmem:[#allocation8 + $0xfd0] sm:$0xff]
    %v772 = vld [vmem:[#allocation8 + $0xfd8] sm:$0xff]
    %v773 = vld [vmem:[#allocation8 + $0xfe0] sm:$0xff]
    %v774 = vld [vmem:[#allocation8 + $0xfe8] sm:$0xff]
    %v775 = vld [vmem:[#allocation8 + $0xff0] sm:$0xff]
    %v776 = vld [vmem:[#allocation8 + $0xff8] sm:$0xff]
    %v777 = vld [vmem:[#allocation8 + $0x1000] sm:$0xff]
    %v778 = vld [vmem:[#allocation8 + $0x1008] sm:$0xff]
    %v779 = vld [vmem:[#allocation8 + $0x1010] sm:$0xff]
    %v780 = vld [vmem:[#allocation8 + $0x1018] sm:$0xff]
    %v781 = vld [vmem:[#allocation8 + $0x1020] sm:$0xff]
    %v782 = vld [vmem:[#allocation8 + $0x1028] sm:$0xff]
    %v783 = vld [vmem:[#allocation8 + $0x1030] sm:$0xff]
    %v784 = vld [vmem:[#allocation8 + $0x1038] sm:$0xff]
    %v785 = vld [vmem:[#allocation8 + $0x1040] sm:$0xff]
    %v786 = vld [vmem:[#allocation8 + $0x1048] sm:$0xff]
    %v787 = vld [vmem:[#allocation8 + $0x1050] sm:$0xff]
    %v788 = vld [vmem:[#allocation8 + $0x1058] sm:$0xff]
    %v789 = vld [vmem:[#allocation8 + $0x1060] sm:$0xff]
    %v790 = vld [vmem:[#allocation8 + $0x1068] sm:$0xff]
    %v791 = vld [vmem:[#allocation8 + $0x1070] sm:$0xff]
    %v792 = vld [vmem:[#allocation8 + $0x1078] sm:$0xff]
    %v793 = vld [vmem:[#allocation8 + $0x1080] sm:$0xff]
    %v794 = vld [vmem:[#allocation8 + $0x1088] sm:$0xff]
    %v795 = vld [vmem:[#allocation8 + $0x1090] sm:$0xff]
    %v796 = vld [vmem:[#allocation8 + $0x1098] sm:$0xff]
    %v797 = vld [vmem:[#allocation8 + $0x10a0] sm:$0xff]
    %v798 = vld [vmem:[#allocation8 + $0x10a8] sm:$0xff]
    %v799 = vld [vmem:[#allocation8 + $0x10b0] sm:$0xff]
    %v800 = vld [vmem:[#allocation8 + $0x10b8] sm:$0xff]
    %v801 = vld [vmem:[#allocation8 + $0x10c0] sm:$0xff]
    %v802 = vld [vmem:[#allocation8 + $0x10c8] sm:$0xff]
    %v803 = vld [vmem:[#allocation8 + $0x10d0] sm:$0xff]
    %v804 = vld [vmem:[#allocation8 + $0x10d8] sm:$0xff]
    %v805 = vld [vmem:[#allocation8 + $0x10e0] sm:$0xff]
    %v806 = vld [vmem:[#allocation8 + $0x10e8] sm:$0xff]
    %v807 = vld [vmem:[#allocation8 + $0x10f0] sm:$0xff]
    %v808 = vld [vmem:[#allocation8 + $0x10f8] sm:$0xff]
    %v809 = vld [vmem:[#allocation8 + $0x1100] sm:$0xff]
    %v810 = vld [vmem:[#allocation8 + $0x1108] sm:$0xff]
    %v811 = vld [vmem:[#allocation8 + $0x1110] sm:$0xff]
    %v812 = vld [vmem:[#allocation8 + $0x1118] sm:$0xff]
    %v813 = vld [vmem:[#allocation8 + $0x1120] sm:$0xff]
    %v814 = vld [vmem:[#allocation8 + $0x1128] sm:$0xff]
    %v815 = vld [vmem:[#allocation8 + $0x1130] sm:$0xff]
    %v816 = vld [vmem:[#allocation8 + $0x1138] sm:$0xff]
    %v817 = vld [vmem:[#allocation8 + $0x1140] sm:$0xff]
    %v818 = vld [vmem:[#allocation8 + $0x1148] sm:$0xff]
    %v819 = vld [vmem:[#allocation8 + $0x1150] sm:$0xff]
    %v820 = vld [vmem:[#allocation8 + $0x1158] sm:$0xff]
    %v821 = vld [vmem:[#allocation8 + $0x1160] sm:$0xff]
    %v822 = vld [vmem:[#allocation8 + $0x1168] sm:$0xff]
    %v823 = vld [vmem:[#allocation8 + $0x1170] sm:$0xff]
    %v824 = vld [vmem:[#allocation8 + $0x1178] sm:$0xff]
    %v825 = vld [vmem:[#allocation8 + $0x1180] sm:$0xff]
    %v826 = vld [vmem:[#allocation8 + $0x1188] sm:$0xff]
    %v827 = vld [vmem:[#allocation8 + $0x1190] sm:$0xff]
    %v828 = vld [vmem:[#allocation8 + $0x1198] sm:$0xff]
    %v829 = vld [vmem:[#allocation8 + $0x11a0] sm:$0xff]
    %v830 = vld [vmem:[#allocation8 + $0x11a8] sm:$0xff]
    %v831 = vld [vmem:[#allocation8 + $0x11b0] sm:$0xff]
    %v832 = vld [vmem:[#allocation8 + $0x11b8] sm:$0xff]
    %v833 = vld [vmem:[#allocation8 + $0x11c0] sm:$0xff]
    %v834 = vld [vmem:[#allocation8 + $0x11c8] sm:$0xff]
    %v835 = vld [vmem:[#allocation8 + $0x11d0] sm:$0xff]
    %v836 = vld [vmem:[#allocation8 + $0x11d8] sm:$0xff]
    %v837 = vld [vmem:[#allocation8 + $0x11e0] sm:$0xff]
    %v838 = vld [vmem:[#allocation8 + $0x11e8] sm:$0xff]
    %v839 = vld [vmem:[#allocation8 + $0x11f0] sm:$0xff]
    %v840 = vld [vmem:[#allocation8 + $0x11f8] sm:$0xff]
    %v841 = vld [vmem:[#allocation8 + $0x1200] sm:$0xff]
    %v842 = vld [vmem:[#allocation8 + $0x1208] sm:$0xff]
    %v843 = vld [vmem:[#allocation8 + $0x1210] sm:$0xff]
    %v844 = vld [vmem:[#allocation8 + $0x1218] sm:$0xff]
    %v845 = vld [vmem:[#allocation8 + $0x1220] sm:$0xff]
    %v846 = vld [vmem:[#allocation8 + $0x1228] sm:$0xff]
    %v847 = vld [vmem:[#allocation8 + $0x1230] sm:$0xff]
    %v848 = vld [vmem:[#allocation8 + $0x1238] sm:$0xff]
    %v849 = vld [vmem:[#allocation8 + $0x1240] sm:$0xff]
    %v850 = vld [vmem:[#allocation8 + $0x1248] sm:$0xff]
    %v851 = vld [vmem:[#allocation8 + $0x1250] sm:$0xff]
    %v852 = vld [vmem:[#allocation8 + $0x1258] sm:$0xff]
    %v853 = vld [vmem:[#allocation8 + $0x1260] sm:$0xff]
    %v854 = vld [vmem:[#allocation8 + $0x1268] sm:$0xff]
    %v855 = vld [vmem:[#allocation8 + $0x1270] sm:$0xff]
    %v856 = vld [vmem:[#allocation8 + $0x1278] sm:$0xff]
    %v857 = vld [vmem:[#allocation8 + $0x1280] sm:$0xff]
    %v858 = vld [vmem:[#allocation8 + $0x1288] sm:$0xff]
    %v859 = vld [vmem:[#allocation8 + $0x1290] sm:$0xff]
    %v860 = vld [vmem:[#allocation8 + $0x1298] sm:$0xff]
    %v861 = vld [vmem:[#allocation8 + $0x12a0] sm:$0xff]
    %v862 = vld [vmem:[#allocation8 + $0x12a8] sm:$0xff]
    %v863 = vld [vmem:[#allocation8 + $0x12b0] sm:$0xff]
    %v864 = vld [vmem:[#allocation8 + $0x12b8] sm:$0xff]
    %v865 = vld [vmem:[#allocation8 + $0x12c0] sm:$0xff]
    %v866 = vld [vmem:[#allocation8 + $0x12c8] sm:$0xff]
    %v867 = vld [vmem:[#allocation8 + $0x12d0] sm:$0xff]
    %v868 = vld [vmem:[#allocation8 + $0x12d8] sm:$0xff]
    %v869 = vld [vmem:[#allocation8 + $0x12e0] sm:$0xff]
    %v870 = vld [vmem:[#allocation8 + $0x12e8] sm:$0xff]
    %v871 = vld [vmem:[#allocation8 + $0x12f0] sm:$0xff]
    %v872 = vld [vmem:[#allocation8 + $0x12f8] sm:$0xff]
    %v873 = vld [vmem:[#allocation8 + $0x1300] sm:$0xff]
    %v874 = vld [vmem:[#allocation8 + $0x1308] sm:$0xff]
    %v875 = vld [vmem:[#allocation8 + $0x1310] sm:$0xff]
    %v876 = vld [vmem:[#allocation8 + $0x1318] sm:$0xff]
    %v877 = vld [vmem:[#allocation8 + $0x1320] sm:$0xff]
    %v878 = vld [vmem:[#allocation8 + $0x1328] sm:$0xff]
    %v879 = vld [vmem:[#allocation8 + $0x1330] sm:$0xff]
    %v880 = vld [vmem:[#allocation8 + $0x1338] sm:$0xff]
    %v881 = vld [vmem:[#allocation8 + $0x1340] sm:$0xff]
    %v882 = vld [vmem:[#allocation8 + $0x1348] sm:$0xff]
    %v883 = vld [vmem:[#allocation8 + $0x1350] sm:$0xff]
    %v884 = vld [vmem:[#allocation8 + $0x1358] sm:$0xff]
    %v885 = vld [vmem:[#allocation8 + $0x1360] sm:$0xff]
    %v886 = vld [vmem:[#allocation8 + $0x1368] sm:$0xff]
    %v887 = vld [vmem:[#allocation8 + $0x1370] sm:$0xff]
    %v888 = vld [vmem:[#allocation8 + $0x1378] sm:$0xff]
    %v889 = vld [vmem:[#allocation8 + $0x1380] sm:$0xff]
    %v890 = vld [vmem:[#allocation8 + $0x1388] sm:$0xff]
    %v891 = vld [vmem:[#allocation8 + $0x1390] sm:$0xff]
    %v892 = vld [vmem:[#allocation8 + $0x1398] sm:$0xff]
    %v893 = vld [vmem:[#allocation8 + $0x13a0] sm:$0xff]
    %v894 = vld [vmem:[#allocation8 + $0x13a8] sm:$0xff]
    %v895 = vld [vmem:[#allocation8 + $0x13b0] sm:$0xff]
    %v896 = vld [vmem:[#allocation8 + $0x13b8] sm:$0xff]
    %v897 = vld [vmem:[#allocation8 + $0x13c0] sm:$0xff]
    %v898 = vld [vmem:[#allocation8 + $0x13c8] sm:$0xff]
    %v899 = vld [vmem:[#allocation8 + $0x13d0] sm:$0xff]
    %v900 = vld [vmem:[#allocation8 + $0x13d8] sm:$0xff]
    %v901 = vld [vmem:[#allocation8 + $0x13e0] sm:$0xff]
    %v902 = vld [vmem:[#allocation8 + $0x13e8] sm:$0xff]
    %v903 = vld [vmem:[#allocation8 + $0x13f0] sm:$0xff]
    %v904 = vld [vmem:[#allocation8 + $0x13f8] sm:$0xff]
    %v905 = vld [vmem:[#allocation8 + $0x1400] sm:$0xff]
    %v906 = vld [vmem:[#allocation8 + $0x1408] sm:$0xff]
    %v907 = vld [vmem:[#allocation8 + $0x1410] sm:$0xff]
    %v908 = vld [vmem:[#allocation8 + $0x1418] sm:$0xff]
    %v909 = vld [vmem:[#allocation8 + $0x1420] sm:$0xff]
    %v910 = vld [vmem:[#allocation8 + $0x1428] sm:$0xff]
    %v911 = vld [vmem:[#allocation8 + $0x1430] sm:$0xff]
    %v912 = vld [vmem:[#allocation8 + $0x1438] sm:$0xff]
    %v913 = vld [vmem:[#allocation8 + $0x1440] sm:$0xff]
    %v914 = vld [vmem:[#allocation8 + $0x1448] sm:$0xff]
    %v915 = vld [vmem:[#allocation8 + $0x1450] sm:$0xff]
    %v916 = vld [vmem:[#allocation8 + $0x1458] sm:$0xff]
    %v917 = vld [vmem:[#allocation8 + $0x1460] sm:$0xff]
    %v918 = vld [vmem:[#allocation8 + $0x1468] sm:$0xff]
    %v919 = vld [vmem:[#allocation8 + $0x1470] sm:$0xff]
    %v920 = vld [vmem:[#allocation8 + $0x1478] sm:$0xff]
    %v921 = vld [vmem:[#allocation8 + $0x1480] sm:$0xff]
    %v922 = vld [vmem:[#allocation8 + $0x1488] sm:$0xff]
    %v923 = vld [vmem:[#allocation8 + $0x1490] sm:$0xff]
    %v924 = vld [vmem:[#allocation8 + $0x1498] sm:$0xff]
    %v925 = vld [vmem:[#allocation8 + $0x14a0] sm:$0xff]
    %v926 = vld [vmem:[#allocation8 + $0x14a8] sm:$0xff]
    %v927 = vld [vmem:[#allocation8 + $0x14b0] sm:$0xff]
    %v928 = vld [vmem:[#allocation8 + $0x14b8] sm:$0xff]
    %v929 = vld [vmem:[#allocation8 + $0x14c0] sm:$0xff]
    %v930 = vld [vmem:[#allocation8 + $0x14c8] sm:$0xff]
    %v931 = vld [vmem:[#allocation8 + $0x14d0] sm:$0xff]
    %v932 = vld [vmem:[#allocation8 + $0x14d8] sm:$0xff]
    %v933 = vld [vmem:[#allocation8 + $0x14e0] sm:$0xff]
    %v934 = vld [vmem:[#allocation8 + $0x14e8] sm:$0xff]
    %v935 = vld [vmem:[#allocation8 + $0x14f0] sm:$0xff]
    %v936 = vld [vmem:[#allocation8 + $0x14f8] sm:$0xff]
    %v937 = vld [vmem:[#allocation8 + $0x1500] sm:$0xff]
    %v938 = vld [vmem:[#allocation8 + $0x1508] sm:$0xff]
    %v939 = vld [vmem:[#allocation8 + $0x1510] sm:$0xff]
    %v940 = vld [vmem:[#allocation8 + $0x1518] sm:$0xff]
    %v941 = vld [vmem:[#allocation8 + $0x1520] sm:$0xff]
    %v942 = vld [vmem:[#allocation8 + $0x1528] sm:$0xff]
    %v943 = vld [vmem:[#allocation8 + $0x1530] sm:$0xff]
    %v944 = vld [vmem:[#allocation8 + $0x1538] sm:$0xff]
    %v945 = vld [vmem:[#allocation8 + $0x1540] sm:$0xff]
    %v946 = vld [vmem:[#allocation8 + $0x1548] sm:$0xff]
    %v947 = vld [vmem:[#allocation8 + $0x1550] sm:$0xff]
    %v948 = vld [vmem:[#allocation8 + $0x1558] sm:$0xff]
    %v949 = vld [vmem:[#allocation8 + $0x1560] sm:$0xff]
    %v950 = vld [vmem:[#allocation8 + $0x1568] sm:$0xff]
    %v951 = vld [vmem:[#allocation8 + $0x1570] sm:$0xff]
    %v952 = vld [vmem:[#allocation8 + $0x1578] sm:$0xff]
    %v953 = vld [vmem:[#allocation8 + $0x1580] sm:$0xff]
    %v954 = vld [vmem:[#allocation8 + $0x1588] sm:$0xff]
    %v955 = vld [vmem:[#allocation8 + $0x1590] sm:$0xff]
    %v956 = vld [vmem:[#allocation8 + $0x1598] sm:$0xff]
    %v957 = vld [vmem:[#allocation8 + $0x15a0] sm:$0xff]
    %v958 = vld [vmem:[#allocation8 + $0x15a8] sm:$0xff]
    %v959 = vld [vmem:[#allocation8 + $0x15b0] sm:$0xff]
    %v960 = vld [vmem:[#allocation8 + $0x15b8] sm:$0xff]
    %v961 = vld [vmem:[#allocation8 + $0x15c0] sm:$0xff]
    %v962 = vld [vmem:[#allocation8 + $0x15c8] sm:$0xff]
    %v963 = vld [vmem:[#allocation8 + $0x15d0] sm:$0xff]
    %v964 = vld [vmem:[#allocation8 + $0x15d8] sm:$0xff]
    %v965 = vld [vmem:[#allocation8 + $0x15e0] sm:$0xff]
    %v966 = vld [vmem:[#allocation8 + $0x15e8] sm:$0xff]
    %v967 = vld [vmem:[#allocation8 + $0x15f0] sm:$0xff]
    %v968 = vld [vmem:[#allocation8 + $0x15f8] sm:$0xff]
    %v969 = vld [vmem:[#allocation8 + $0x1600] sm:$0xff]
    %v970 = vld [vmem:[#allocation8 + $0x1608] sm:$0xff]
    %v971 = vld [vmem:[#allocation8 + $0x1610] sm:$0xff]
    %v972 = vld [vmem:[#allocation8 + $0x1618] sm:$0xff]
    %v973 = vld [vmem:[#allocation8 + $0x1620] sm:$0xff]
    %v974 = vld [vmem:[#allocation8 + $0x1628] sm:$0xff]
    %v975 = vld [vmem:[#allocation8 + $0x1630] sm:$0xff]
    %v976 = vld [vmem:[#allocation8 + $0x1638] sm:$0xff]
    %v977 = vld [vmem:[#allocation8 + $0x1640] sm:$0xff]
    %v978 = vld [vmem:[#allocation8 + $0x1648] sm:$0xff]
    %v979 = vld [vmem:[#allocation8 + $0x1650] sm:$0xff]
    %v980 = vld [vmem:[#allocation8 + $0x1658] sm:$0xff]
    %v981 = vld [vmem:[#allocation8 + $0x1660] sm:$0xff]
    %v982 = vld [vmem:[#allocation8 + $0x1668] sm:$0xff]
    %v983 = vld [vmem:[#allocation8 + $0x1670] sm:$0xff]
    %v984 = vld [vmem:[#allocation8 + $0x1678] sm:$0xff]
    %v985 = vld [vmem:[#allocation8 + $0x1680] sm:$0xff]
    %v986 = vld [vmem:[#allocation8 + $0x1688] sm:$0xff]
    %v987 = vld [vmem:[#allocation8 + $0x1690] sm:$0xff]
    %v988 = vld [vmem:[#allocation8 + $0x1698] sm:$0xff]
    %v989 = vld [vmem:[#allocation8 + $0x16a0] sm:$0xff]
    %v990 = vld [vmem:[#allocation8 + $0x16a8] sm:$0xff]
    %v991 = vld [vmem:[#allocation8 + $0x16b0] sm:$0xff]
    %v992 = vld [vmem:[#allocation8 + $0x16b8] sm:$0xff]
    %v993 = vld [vmem:[#allocation8 + $0x16c0] sm:$0xff]
    %v994 = vld [vmem:[#allocation8 + $0x16c8] sm:$0xff]
    %v995 = vld [vmem:[#allocation8 + $0x16d0] sm:$0xff]
    %v996 = vld [vmem:[#allocation8 + $0x16d8] sm:$0xff]
    %v997 = vld [vmem:[#allocation8 + $0x16e0] sm:$0xff]
    %v998 = vld [vmem:[#allocation8 + $0x16e8] sm:$0xff]
    %v999 = vld [vmem:[#allocation8 + $0x16f0] sm:$0xff]
    %v1000 = vld [vmem:[#allocation8 + $0x16f8] sm:$0xff]
    %v1001 = vld [vmem:[#allocation8 + $0x1700] sm:$0xff]
    %v1002 = vld [vmem:[#allocation8 + $0x1708] sm:$0xff]
    %v1003 = vld [vmem:[#allocation8 + $0x1710] sm:$0xff]
    %v1004 = vld [vmem:[#allocation8 + $0x1718] sm:$0xff]
    %v1005 = vld [vmem:[#allocation8 + $0x1720] sm:$0xff]
    %v1006 = vld [vmem:[#allocation8 + $0x1728] sm:$0xff]
    %v1007 = vld [vmem:[#allocation8 + $0x1730] sm:$0xff]
    %v1008 = vld [vmem:[#allocation8 + $0x1738] sm:$0xff]
    %v1009 = vld [vmem:[#allocation8 + $0x1740] sm:$0xff]
    %v1010 = vld [vmem:[#allocation8 + $0x1748] sm:$0xff]
    %v1011 = vld [vmem:[#allocation8 + $0x1750] sm:$0xff]
    %v1012 = vld [vmem:[#allocation8 + $0x1758] sm:$0xff]
    %v1013 = vld [vmem:[#allocation8 + $0x1760] sm:$0xff]
    %v1014 = vld [vmem:[#allocation8 + $0x1768] sm:$0xff]
    %v1015 = vld [vmem:[#allocation8 + $0x1770] sm:$0xff]
    %v1016 = vld [vmem:[#allocation8 + $0x1778] sm:$0xff]
    %v1017 = vld [vmem:[#allocation8 + $0x1780] sm:$0xff]
    %v1018 = vld [vmem:[#allocation8 + $0x1788] sm:$0xff]
    %v1019 = vld [vmem:[#allocation8 + $0x1790] sm:$0xff]
    %v1020 = vld [vmem:[#allocation8 + $0x1798] sm:$0xff]
    %v1021 = vld [vmem:[#allocation8 + $0x17a0] sm:$0xff]
    %v1022 = vld [vmem:[#allocation8 + $0x17a8] sm:$0xff]
    %v1023 = vld [vmem:[#allocation8 + $0x17b0] sm:$0xff]
    %v1024 = vld [vmem:[#allocation8 + $0x17b8] sm:$0xff]
    %v1025 = vld [vmem:[#allocation8 + $0x17c0] sm:$0xff]
    %v1026 = vld [vmem:[#allocation8 + $0x17c8] sm:$0xff]
    %v1027 = vld [vmem:[#allocation8 + $0x17d0] sm:$0xff]
    %v1028 = vld [vmem:[#allocation8 + $0x17d8] sm:$0xff]
    %v1029 = vld [vmem:[#allocation8 + $0x17e0] sm:$0xff]
    %v1030 = vld [vmem:[#allocation8 + $0x17e8] sm:$0xff]
    %v1031 = vld [vmem:[#allocation8 + $0x17f0] sm:$0xff]
    %v1032 = vld [vmem:[#allocation8 + $0x17f8] sm:$0xff]
    %v1033 = vld [vmem:[#allocation8 + $0x1800] sm:$0xff]
    %v1034 = vld [vmem:[#allocation8 + $0x1808] sm:$0xff]
    %v1035 = vld [vmem:[#allocation8 + $0x1810] sm:$0xff]
    %v1036 = vld [vmem:[#allocation8 + $0x1818] sm:$0xff]
    %v1037 = vld [vmem:[#allocation8 + $0x1820] sm:$0xff]
    %v1038 = vld [vmem:[#allocation8 + $0x1828] sm:$0xff]
    %v1039 = vld [vmem:[#allocation8 + $0x1830] sm:$0xff]
    %v1040 = vld [vmem:[#allocation8 + $0x1838] sm:$0xff]
    %v1041 = vld [vmem:[#allocation8 + $0x1840] sm:$0xff]
    %v1042 = vld [vmem:[#allocation8 + $0x1848] sm:$0xff]
    %v1043 = vld [vmem:[#allocation8 + $0x1850] sm:$0xff]
    %v1044 = vld [vmem:[#allocation8 + $0x1858] sm:$0xff]
    %v1045 = vld [vmem:[#allocation8 + $0x1860] sm:$0xff]
    %v1046 = vld [vmem:[#allocation8 + $0x1868] sm:$0xff]
    %v1047 = vld [vmem:[#allocation8 + $0x1870] sm:$0xff]
    %v1048 = vld [vmem:[#allocation8 + $0x1878] sm:$0xff]
    %v1049 = vld [vmem:[#allocation8 + $0x1880] sm:$0xff]
    %v1050 = vld [vmem:[#allocation8 + $0x1888] sm:$0xff]
    %v1051 = vld [vmem:[#allocation8 + $0x1890] sm:$0xff]
    %v1052 = vld [vmem:[#allocation8 + $0x1898] sm:$0xff]
    %v1053 = vld [vmem:[#allocation8 + $0x18a0] sm:$0xff]
    %v1054 = vld [vmem:[#allocation8 + $0x18a8] sm:$0xff]
    %v1055 = vld [vmem:[#allocation8 + $0x18b0] sm:$0xff]
    %v1056 = vld [vmem:[#allocation8 + $0x18b8] sm:$0xff]
    %v1057 = vld [vmem:[#allocation8 + $0x18c0] sm:$0xff]
    %v1058 = vld [vmem:[#allocation8 + $0x18c8] sm:$0xff]
    %v1059 = vld [vmem:[#allocation8 + $0x18d0] sm:$0xff]
    %v1060 = vld [vmem:[#allocation8 + $0x18d8] sm:$0xff]
    %v1061 = vld [vmem:[#allocation8 + $0x18e0] sm:$0xff]
    %v1062 = vld [vmem:[#allocation8 + $0x18e8] sm:$0xff]
    %v1063 = vld [vmem:[#allocation8 + $0x18f0] sm:$0xff]
    %v1064 = vld [vmem:[#allocation8 + $0x18f8] sm:$0xff]
    %v1065 = vld [vmem:[#allocation8 + $0x1900] sm:$0xff]
    %v1066 = vld [vmem:[#allocation8 + $0x1908] sm:$0xff]
    %v1067 = vld [vmem:[#allocation8 + $0x1910] sm:$0xff]
    %v1068 = vld [vmem:[#allocation8 + $0x1918] sm:$0xff]
    %v1069 = vld [vmem:[#allocation8 + $0x1920] sm:$0xff]
    %v1070 = vld [vmem:[#allocation8 + $0x1928] sm:$0xff]
    %v1071 = vld [vmem:[#allocation8 + $0x1930] sm:$0xff]
    %v1072 = vld [vmem:[#allocation8 + $0x1938] sm:$0xff]
    %v1073 = vld [vmem:[#allocation8 + $0x1940] sm:$0xff]
    %v1074 = vld [vmem:[#allocation8 + $0x1948] sm:$0xff]
    %v1075 = vld [vmem:[#allocation8 + $0x1950] sm:$0xff]
    %v1076 = vld [vmem:[#allocation8 + $0x1958] sm:$0xff]
    %v1077 = vld [vmem:[#allocation8 + $0x1960] sm:$0xff]
    %v1078 = vld [vmem:[#allocation8 + $0x1968] sm:$0xff]
    %v1079 = vld [vmem:[#allocation8 + $0x1970] sm:$0xff]
    %v1080 = vld [vmem:[#allocation8 + $0x1978] sm:$0xff]
    %v1081 = vld [vmem:[#allocation8 + $0x1980] sm:$0xff]
    %v1082 = vld [vmem:[#allocation8 + $0x1988] sm:$0xff]
    %v1083 = vld [vmem:[#allocation8 + $0x1990] sm:$0xff]
    %v1084 = vld [vmem:[#allocation8 + $0x1998] sm:$0xff]
    %v1085 = vld [vmem:[#allocation8 + $0x19a0] sm:$0xff]
    %v1086 = vld [vmem:[#allocation8 + $0x19a8] sm:$0xff]
    %v1087 = vld [vmem:[#allocation8 + $0x19b0] sm:$0xff]
    %v1088 = vld [vmem:[#allocation8 + $0x19b8] sm:$0xff]
    %v1089 = vld [vmem:[#allocation8 + $0x19c0] sm:$0xff]
    %v1090 = vld [vmem:[#allocation8 + $0x19c8] sm:$0xff]
    %v1091 = vld [vmem:[#allocation8 + $0x19d0] sm:$0xff]
    %v1092 = vld [vmem:[#allocation8 + $0x19d8] sm:$0xff]
    %v1093 = vld [vmem:[#allocation8 + $0x19e0] sm:$0xff]
    %v1094 = vld [vmem:[#allocation8 + $0x19e8] sm:$0xff]
    %v1095 = vld [vmem:[#allocation8 + $0x19f0] sm:$0xff]
    %v1096 = vld [vmem:[#allocation8 + $0x19f8] sm:$0xff]
    %v1097 = vld [vmem:[#allocation8 + $0x1a00] sm:$0xff]
    %v1098 = vld [vmem:[#allocation8 + $0x1a08] sm:$0xff]
    %v1099 = vld [vmem:[#allocation8 + $0x1a10] sm:$0xff]
    %v1100 = vld [vmem:[#allocation8 + $0x1a18] sm:$0xff]
    %v1101 = vld [vmem:[#allocation8 + $0x1a20] sm:$0xff]
    %v1102 = vld [vmem:[#allocation8 + $0x1a28] sm:$0xff]
    %v1103 = vld [vmem:[#allocation8 + $0x1a30] sm:$0xff]
    %v1104 = vld [vmem:[#allocation8 + $0x1a38] sm:$0xff]
    %v1105 = vld [vmem:[#allocation8 + $0x1a40] sm:$0xff]
    %v1106 = vld [vmem:[#allocation8 + $0x1a48] sm:$0xff]
    %v1107 = vld [vmem:[#allocation8 + $0x1a50] sm:$0xff]
    %v1108 = vld [vmem:[#allocation8 + $0x1a58] sm:$0xff]
    %v1109 = vld [vmem:[#allocation8 + $0x1a60] sm:$0xff]
    %v1110 = vld [vmem:[#allocation8 + $0x1a68] sm:$0xff]
    %v1111 = vld [vmem:[#allocation8 + $0x1a70] sm:$0xff]
    %v1112 = vld [vmem:[#allocation8 + $0x1a78] sm:$0xff]
    %v1113 = vld [vmem:[#allocation8 + $0x1a80] sm:$0xff]
    %v1114 = vld [vmem:[#allocation8 + $0x1a88] sm:$0xff]
    %v1115 = vld [vmem:[#allocation8 + $0x1a90] sm:$0xff]
    %v1116 = vld [vmem:[#allocation8 + $0x1a98] sm:$0xff]
    %v1117 = vld [vmem:[#allocation8 + $0x1aa0] sm:$0xff]
    %v1118 = vld [vmem:[#allocation8 + $0x1aa8] sm:$0xff]
    %v1119 = vld [vmem:[#allocation8 + $0x1ab0] sm:$0xff]
    %v1120 = vld [vmem:[#allocation8 + $0x1ab8] sm:$0xff]
    %v1121 = vld [vmem:[#allocation8 + $0x1ac0] sm:$0xff]
    %v1122 = vld [vmem:[#allocation8 + $0x1ac8] sm:$0xff]
    %v1123 = vld [vmem:[#allocation8 + $0x1ad0] sm:$0xff]
    %v1124 = vld [vmem:[#allocation8 + $0x1ad8] sm:$0xff]
    %v1125 = vld [vmem:[#allocation8 + $0x1ae0] sm:$0xff]
    %v1126 = vld [vmem:[#allocation8 + $0x1ae8] sm:$0xff]
    %v1127 = vld [vmem:[#allocation8 + $0x1af0] sm:$0xff]
    %v1128 = vld [vmem:[#allocation8 + $0x1af8] sm:$0xff]
    %v1129 = vld [vmem:[#allocation8 + $0x1b00] sm:$0xff]
    %v1130 = vld [vmem:[#allocation8 + $0x1b08] sm:$0xff]
    %v1131 = vld [vmem:[#allocation8 + $0x1b10] sm:$0xff]
    %v1132 = vld [vmem:[#allocation8 + $0x1b18] sm:$0xff]
    %v1133 = vld [vmem:[#allocation8 + $0x1b20] sm:$0xff]
    %v1134 = vld [vmem:[#allocation8 + $0x1b28] sm:$0xff]
    %v1135 = vld [vmem:[#allocation8 + $0x1b30] sm:$0xff]
    %v1136 = vld [vmem:[#allocation8 + $0x1b38] sm:$0xff]
    %v1137 = vld [vmem:[#allocation8 + $0x1b40] sm:$0xff]
    %v1138 = vld [vmem:[#allocation8 + $0x1b48] sm:$0xff]
    %v1139 = vld [vmem:[#allocation8 + $0x1b50] sm:$0xff]
    %v1140 = vld [vmem:[#allocation8 + $0x1b58] sm:$0xff]
    %v1141 = vld [vmem:[#allocation8 + $0x1b60] sm:$0xff]
    %v1142 = vld [vmem:[#allocation8 + $0x1b68] sm:$0xff]
    %v1143 = vld [vmem:[#allocation8 + $0x1b70] sm:$0xff]
    %v1144 = vld [vmem:[#allocation8 + $0x1b78] sm:$0xff]
    %v1145 = vld [vmem:[#allocation8 + $0x1b80] sm:$0xff]
    %v1146 = vld [vmem:[#allocation8 + $0x1b88] sm:$0xff]
    %v1147 = vld [vmem:[#allocation8 + $0x1b90] sm:$0xff]
    %v1148 = vld [vmem:[#allocation8 + $0x1b98] sm:$0xff]
    %v1149 = vld [vmem:[#allocation8 + $0x1ba0] sm:$0xff]
    %v1150 = vld [vmem:[#allocation8 + $0x1ba8] sm:$0xff]
    %v1151 = vld [vmem:[#allocation8 + $0x1bb0] sm:$0xff]
    %v1152 = vld [vmem:[#allocation8 + $0x1bb8] sm:$0xff]
    %v1153 = vld [vmem:[#allocation8 + $0x1bc0] sm:$0xff]
    %v1154 = vld [vmem:[#allocation8 + $0x1bc8] sm:$0xff]
    %v1155 = vld [vmem:[#allocation8 + $0x1bd0] sm:$0xff]
    %v1156 = vld [vmem:[#allocation8 + $0x1bd8] sm:$0xff]
    %v1157 = vld [vmem:[#allocation8 + $0x1be0] sm:$0xff]
    %v1158 = vld [vmem:[#allocation8 + $0x1be8] sm:$0xff]
    %v1159 = vld [vmem:[#allocation8 + $0x1bf0] sm:$0xff]
    %v1160 = vld [vmem:[#allocation8 + $0x1bf8] sm:$0xff]
    %v1161 = vld [vmem:[#allocation8 + $0x1c00] sm:$0xff]
    %v1162 = vld [vmem:[#allocation8 + $0x1c08] sm:$0xff]
    %v1163 = vld [vmem:[#allocation8 + $0x1c10] sm:$0xff]
    %v1164 = vld [vmem:[#allocation8 + $0x1c18] sm:$0xff]
    %v1165 = vld [vmem:[#allocation8 + $0x1c20] sm:$0xff]
    %v1166 = vld [vmem:[#allocation8 + $0x1c28] sm:$0xff]
    %v1167 = vld [vmem:[#allocation8 + $0x1c30] sm:$0xff]
    %v1168 = vld [vmem:[#allocation8 + $0x1c38] sm:$0xff]
    %v1169 = vld [vmem:[#allocation8 + $0x1c40] sm:$0xff]
    %v1170 = vld [vmem:[#allocation8 + $0x1c48] sm:$0xff]
    %v1171 = vld [vmem:[#allocation8 + $0x1c50] sm:$0xff]
    %v1172 = vld [vmem:[#allocation8 + $0x1c58] sm:$0xff]
    %v1173 = vld [vmem:[#allocation8 + $0x1c60] sm:$0xff]
    %v1174 = vld [vmem:[#allocation8 + $0x1c68] sm:$0xff]
    %v1175 = vld [vmem:[#allocation8 + $0x1c70] sm:$0xff]
    %v1176 = vld [vmem:[#allocation8 + $0x1c78] sm:$0xff]
    %v1177 = vld [vmem:[#allocation8 + $0x1c80] sm:$0xff]
    %v1178 = vld [vmem:[#allocation8 + $0x1c88] sm:$0xff]
    %v1179 = vld [vmem:[#allocation8 + $0x1c90] sm:$0xff]
    %v1180 = vld [vmem:[#allocation8 + $0x1c98] sm:$0xff]
    %v1181 = vld [vmem:[#allocation8 + $0x1ca0] sm:$0xff]
    %v1182 = vld [vmem:[#allocation8 + $0x1ca8] sm:$0xff]
    %v1183 = vld [vmem:[#allocation8 + $0x1cb0] sm:$0xff]
    %v1184 = vld [vmem:[#allocation8 + $0x1cb8] sm:$0xff]
    %v1185 = vld [vmem:[#allocation8 + $0x1cc0] sm:$0xff]
    %v1186 = vld [vmem:[#allocation8 + $0x1cc8] sm:$0xff]
    %v1187 = vld [vmem:[#allocation8 + $0x1cd0] sm:$0xff]
    %v1188 = vld [vmem:[#allocation8 + $0x1cd8] sm:$0xff]
    %v1189 = vld [vmem:[#allocation8 + $0x1ce0] sm:$0xff]
    %v1190 = vld [vmem:[#allocation8 + $0x1ce8] sm:$0xff]
    %v1191 = vld [vmem:[#allocation8 + $0x1cf0] sm:$0xff]
    %v1192 = vld [vmem:[#allocation8 + $0x1cf8] sm:$0xff]
    %v1193 = vld [vmem:[#allocation8 + $0x1d00] sm:$0xff]
    %v1194 = vld [vmem:[#allocation8 + $0x1d08] sm:$0xff]
    %v1195 = vld [vmem:[#allocation8 + $0x1d10] sm:$0xff]
    %v1196 = vld [vmem:[#allocation8 + $0x1d18] sm:$0xff]
    %v1197 = vld [vmem:[#allocation8 + $0x1d20] sm:$0xff]
    %v1198 = vld [vmem:[#allocation8 + $0x1d28] sm:$0xff]
    %v1199 = vld [vmem:[#allocation8 + $0x1d30] sm:$0xff]
    %v1200 = vld [vmem:[#allocation8 + $0x1d38] sm:$0xff]
    %v1201 = vld [vmem:[#allocation8 + $0x1d40] sm:$0xff]
    %v1202 = vld [vmem:[#allocation8 + $0x1d48] sm:$0xff]
    %v1203 = vld [vmem:[#allocation8 + $0x1d50] sm:$0xff]
    %v1204 = vld [vmem:[#allocation8 + $0x1d58] sm:$0xff]
    %v1205 = vld [vmem:[#allocation8 + $0x1d60] sm:$0xff]
    %v1206 = vld [vmem:[#allocation8 + $0x1d68] sm:$0xff]
    %v1207 = vld [vmem:[#allocation8 + $0x1d70] sm:$0xff]
    %v1208 = vld [vmem:[#allocation8 + $0x1d78] sm:$0xff]
    %v1209 = vld [vmem:[#allocation8 + $0x1d80] sm:$0xff]
    %v1210 = vld [vmem:[#allocation8 + $0x1d88] sm:$0xff]
    %v1211 = vld [vmem:[#allocation8 + $0x1d90] sm:$0xff]
    %v1212 = vld [vmem:[#allocation8 + $0x1d98] sm:$0xff]
    %v1213 = vld [vmem:[#allocation8 + $0x1da0] sm:$0xff]
    %v1214 = vld [vmem:[#allocation8 + $0x1da8] sm:$0xff]
    %v1215 = vld [vmem:[#allocation8 + $0x1db0] sm:$0xff]
    %v1216 = vld [vmem:[#allocation8 + $0x1db8] sm:$0xff]
    %v1217 = vld [vmem:[#allocation8 + $0x1dc0] sm:$0xff]
    %v1218 = vld [vmem:[#allocation8 + $0x1dc8] sm:$0xff]
    %v1219 = vld [vmem:[#allocation8 + $0x1dd0] sm:$0xff]
    %v1220 = vld [vmem:[#allocation8 + $0x1dd8] sm:$0xff]
    %v1221 = vld [vmem:[#allocation8 + $0x1de0] sm:$0xff]
    %v1222 = vld [vmem:[#allocation8 + $0x1de8] sm:$0xff]
    %v1223 = vld [vmem:[#allocation8 + $0x1df0] sm:$0xff]
    %v1224 = vld [vmem:[#allocation8 + $0x1df8] sm:$0xff]
    %v1225 = vld [vmem:[#allocation8 + $0x1e00] sm:$0xff]
    %v1226 = vld [vmem:[#allocation8 + $0x1e08] sm:$0xff]
    %v1227 = vld [vmem:[#allocation8 + $0x1e10] sm:$0xff]
    %v1228 = vld [vmem:[#allocation8 + $0x1e18] sm:$0xff]
    %v1229 = vld [vmem:[#allocation8 + $0x1e20] sm:$0xff]
    %v1230 = vld [vmem:[#allocation8 + $0x1e28] sm:$0xff]
    %v1231 = vld [vmem:[#allocation8 + $0x1e30] sm:$0xff]
    %v1232 = vld [vmem:[#allocation8 + $0x1e38] sm:$0xff]
    %v1233 = vld [vmem:[#allocation8 + $0x1e40] sm:$0xff]
    %v1234 = vld [vmem:[#allocation8 + $0x1e48] sm:$0xff]
    %v1235 = vld [vmem:[#allocation8 + $0x1e50] sm:$0xff]
    %v1236 = vld [vmem:[#allocation8 + $0x1e58] sm:$0xff]
    %v1237 = vld [vmem:[#allocation8 + $0x1e60] sm:$0xff]
    %v1238 = vld [vmem:[#allocation8 + $0x1e68] sm:$0xff]
    %v1239 = vld [vmem:[#allocation8 + $0x1e70] sm:$0xff]
    %v1240 = vld [vmem:[#allocation8 + $0x1e78] sm:$0xff]
    %v1241 = vld [vmem:[#allocation8 + $0x1e80] sm:$0xff]
    %v1242 = vld [vmem:[#allocation8 + $0x1e88] sm:$0xff]
    %v1243 = vld [vmem:[#allocation8 + $0x1e90] sm:$0xff]
    %v1244 = vld [vmem:[#allocation8 + $0x1e98] sm:$0xff]
    %v1245 = vld [vmem:[#allocation8 + $0x1ea0] sm:$0xff]
    %v1246 = vld [vmem:[#allocation8 + $0x1ea8] sm:$0xff]
    %v1247 = vld [vmem:[#allocation8 + $0x1eb0] sm:$0xff]
    %v1248 = vld [vmem:[#allocation8 + $0x1eb8] sm:$0xff]
    %v1249 = vld [vmem:[#allocation8 + $0x1ec0] sm:$0xff]
    %v1250 = vld [vmem:[#allocation8 + $0x1ec8] sm:$0xff]
    %v1251 = vld [vmem:[#allocation8 + $0x1ed0] sm:$0xff]
    %v1252 = vld [vmem:[#allocation8 + $0x1ed8] sm:$0xff]
    %v1253 = vld [vmem:[#allocation8 + $0x1ee0] sm:$0xff]
    %v1254 = vld [vmem:[#allocation8 + $0x1ee8] sm:$0xff]
    %v1255 = vld [vmem:[#allocation8 + $0x1ef0] sm:$0xff]
    %v1256 = vld [vmem:[#allocation8 + $0x1ef8] sm:$0xff]
    %v1257 = vld [vmem:[#allocation8 + $0x1f00] sm:$0xff]
    %v1258 = vld [vmem:[#allocation8 + $0x1f08] sm:$0xff]
    %v1259 = vld [vmem:[#allocation8 + $0x1f10] sm:$0xff]
    %v1260 = vld [vmem:[#allocation8 + $0x1f18] sm:$0xff]
    %v1261 = vld [vmem:[#allocation8 + $0x1f20] sm:$0xff]
    %v1262 = vld [vmem:[#allocation8 + $0x1f28] sm:$0xff]
    %v1263 = vld [vmem:[#allocation8 + $0x1f30] sm:$0xff]
    %v1264 = vld [vmem:[#allocation8 + $0x1f38] sm:$0xff]
    %v1265 = vld [vmem:[#allocation8 + $0x1f40] sm:$0xff]
    %v1266 = vld [vmem:[#allocation8 + $0x1f48] sm:$0xff]
    %v1267 = vld [vmem:[#allocation8 + $0x1f50] sm:$0xff]
    %v1268 = vld [vmem:[#allocation8 + $0x1f58] sm:$0xff]
    %v1269 = vld [vmem:[#allocation8 + $0x1f60] sm:$0xff]
    %v1270 = vld [vmem:[#allocation8 + $0x1f68] sm:$0xff]
    %v1271 = vld [vmem:[#allocation8 + $0x1f70] sm:$0xff]
    %v1272 = vld [vmem:[#allocation8 + $0x1f78] sm:$0xff]
    %v1273 = vld [vmem:[#allocation8 + $0x1f80] sm:$0xff]
    %v1274 = vld [vmem:[#allocation8 + $0x1f88] sm:$0xff]
    %v1275 = vld [vmem:[#allocation8 + $0x1f90] sm:$0xff]
    %v1276 = vld [vmem:[#allocation8 + $0x1f98] sm:$0xff]
    %v1277 = vld [vmem:[#allocation8 + $0x1fa0] sm:$0xff]
    %v1278 = vld [vmem:[#allocation8 + $0x1fa8] sm:$0xff]
    %v1279 = vld [vmem:[#allocation8 + $0x1fb0] sm:$0xff]
    %v1280 = vld [vmem:[#allocation8 + $0x1fb8] sm:$0xff]
    %v1281 = vld [vmem:[#allocation8 + $0x1fc0] sm:$0xff]
    %v1282 = vld [vmem:[#allocation8 + $0x1fc8] sm:$0xff]
    %v1283 = vld [vmem:[#allocation8 + $0x1fd0] sm:$0xff]
    %v1284 = vld [vmem:[#allocation8 + $0x1fd8] sm:$0xff]
    %v1285 = vld [vmem:[#allocation8 + $0x1fe0] sm:$0xff]
    %v1286 = vld [vmem:[#allocation8 + $0x1fe8] sm:$0xff]
    %v1287 = vld [vmem:[#allocation8 + $0x1ff0] sm:$0xff]
    %v1288 = vld [vmem:[#allocation8 + $0x1ff8] sm:$0xff]
    %v1289 = vld [vmem:[#allocation10] sm:$0xff]
    %v1290 = vld [vmem:[#allocation10 + $0x8] sm:$0xff]
    %v1293 = vlaneseq
    %v1294 = vshrl.u32 %v1293, 7
    %v1295 = vsub.s32 0, %v1294
    %v1296 = vrot.slane %v1289, %v1295
    %v1297 = vlaneseq
    %v1298 = vshrl.u32 %v1297, 7
    %v1299 = vsub.s32 1, %v1298
    %v1300 = vrot.slane %v1289, %v1299
    %v1301 = vlaneseq
    %v1302 = vshrl.u32 %v1301, 7
    %v1303 = vsub.s32 2, %v1302
    %v1304 = vrot.slane %v1289, %v1303
    %v1305 = vlaneseq
    %v1306 = vshrl.u32 %v1305, 7
    %v1307 = vsub.s32 3, %v1306
    %v1308 = vrot.slane %v1289, %v1307
    %v1309 = vlaneseq
    %v1310 = vshrl.u32 %v1309, 7
    %v1311 = vsub.s32 4, %v1310
    %v1312 = vrot.slane %v1289, %v1311
    %v1313 = vlaneseq
    %v1314 = vshrl.u32 %v1313, 7
    %v1315 = vsub.s32 5, %v1314
    %v1316 = vrot.slane %v1289, %v1315
    %v1317 = vlaneseq
    %v1318 = vshrl.u32 %v1317, 7
    %v1319 = vsub.s32 6, %v1318
    %v1320 = vrot.slane %v1289, %v1319
    %v1321 = vlaneseq
    %v1322 = vshrl.u32 %v1321, 7
    %v1323 = vsub.s32 7, %v1322
    %v1324 = vrot.slane %v1289, %v1323
    %v1325 = vlaneseq
    %v1326 = vshrl.u32 %v1325, 7
    %v1327 = vsub.s32 0, %v1326
    %v1328 = vrot.slane %v1290, %v1327
    %v1329 = vlaneseq
    %v1330 = vshrl.u32 %v1329, 7
    %v1331 = vsub.s32 1, %v1330
    %v1332 = vrot.slane %v1290, %v1331
    %v1333 = vlaneseq
    %v1334 = vshrl.u32 %v1333, 7
    %v1335 = vsub.s32 2, %v1334
    %v1336 = vrot.slane %v1290, %v1335
    %v1337 = vlaneseq
    %v1338 = vshrl.u32 %v1337, 7
    %v1339 = vsub.s32 3, %v1338
    %v1340 = vrot.slane %v1290, %v1339
    %v1341 = vlaneseq
    %v1342 = vshrl.u32 %v1341, 7
    %v1343 = vsub.s32 4, %v1342
    %v1344 = vrot.slane %v1290, %v1343
    %v1345 = vlaneseq
    %v1346 = vshrl.u32 %v1345, 7
    %v1347 = vsub.s32 5, %v1346
    %v1348 = vrot.slane %v1290, %v1347
    %v1349 = vlaneseq
    %v1350 = vshrl.u32 %v1349, 7
    %v1351 = vsub.s32 6, %v1350
    %v1352 = vrot.slane %v1290, %v1351
    %v1353 = vlaneseq
    %v1354 = vshrl.u32 %v1353, 7
    %v1355 = vsub.s32 7, %v1354
    %v1356 = vrot.slane %v1290, %v1355
    %v2397 = vunpack.c.l.b16 %v265
    %v2398 = vunpack.c.h.b16 %v265
    %v2399 = vunpack.c.l.b16 %v266
    %v2400 = vunpack.c.h.b16 %v266
    %v2401 = vunpack.c.l.b16 %v267
    %v2402 = vunpack.c.h.b16 %v267
    %v2403 = vunpack.c.l.b16 %v268
    %v2404 = vunpack.c.h.b16 %v268
    %v2405 = vunpack.c.l.b16 %v269
    %v2406 = vunpack.c.h.b16 %v269
    %v2407 = vunpack.c.l.b16 %v270
    %v2408 = vunpack.c.h.b16 %v270
    %v2409 = vunpack.c.l.b16 %v271
    %v2410 = vunpack.c.h.b16 %v271
    %v2411 = vunpack.c.l.b16 %v272
    %v2412 = vunpack.c.h.b16 %v272
    %v2413 = vunpack.c.l.b16 %v273
    %v2414 = vunpack.c.h.b16 %v273
    %v2415 = vunpack.c.l.b16 %v274
    %v2416 = vunpack.c.h.b16 %v274
    %v2417 = vunpack.c.l.b16 %v275
    %v2418 = vunpack.c.h.b16 %v275
    %v2419 = vunpack.c.l.b16 %v276
    %v2420 = vunpack.c.h.b16 %v276
    %v2421 = vunpack.c.l.b16 %v277
    %v2422 = vunpack.c.h.b16 %v277
    %v2423 = vunpack.c.l.b16 %v278
    %v2424 = vunpack.c.h.b16 %v278
    %v2425 = vunpack.c.l.b16 %v279
    %v2426 = vunpack.c.h.b16 %v279
    %v2427 = vunpack.c.l.b16 %v280
    %v2428 = vunpack.c.h.b16 %v280
    %v2429 = vunpack.c.l.b16 %v281
    %v2430 = vunpack.c.h.b16 %v281
    %v2431 = vunpack.c.l.b16 %v282
    %v2432 = vunpack.c.h.b16 %v282
    %v2433 = vunpack.c.l.b16 %v283
    %v2434 = vunpack.c.h.b16 %v283
    %v2435 = vunpack.c.l.b16 %v284
    %v2436 = vunpack.c.h.b16 %v284
    %v2437 = vunpack.c.l.b16 %v285
    %v2438 = vunpack.c.h.b16 %v285
    %v2439 = vunpack.c.l.b16 %v286
    %v2440 = vunpack.c.h.b16 %v286
    %v2441 = vunpack.c.l.b16 %v287
    %v2442 = vunpack.c.h.b16 %v287
    %v2443 = vunpack.c.l.b16 %v288
    %v2444 = vunpack.c.h.b16 %v288
    %v2445 = vunpack.c.l.b16 %v289
    %v2446 = vunpack.c.h.b16 %v289
    %v2447 = vunpack.c.l.b16 %v290
    %v2448 = vunpack.c.h.b16 %v290
    %v2449 = vunpack.c.l.b16 %v291
    %v2450 = vunpack.c.h.b16 %v291
    %v2451 = vunpack.c.l.b16 %v292
    %v2452 = vunpack.c.h.b16 %v292
    %v2453 = vunpack.c.l.b16 %v293
    %v2454 = vunpack.c.h.b16 %v293
    %v2455 = vunpack.c.l.b16 %v294
    %v2456 = vunpack.c.h.b16 %v294
    %v2457 = vunpack.c.l.b16 %v295
    %v2458 = vunpack.c.h.b16 %v295
    %v2459 = vunpack.c.l.b16 %v296
    %v2460 = vunpack.c.h.b16 %v296
    %v2461 = vunpack.c.l.b16 %v297
    %v2462 = vunpack.c.h.b16 %v297
    %v2463 = vunpack.c.l.b16 %v298
    %v2464 = vunpack.c.h.b16 %v298
    %v2465 = vunpack.c.l.b16 %v299
    %v2466 = vunpack.c.h.b16 %v299
    %v2467 = vunpack.c.l.b16 %v300
    %v2468 = vunpack.c.h.b16 %v300
    %v2469 = vunpack.c.l.b16 %v301
    %v2470 = vunpack.c.h.b16 %v301
    %v2471 = vunpack.c.l.b16 %v302
    %v2472 = vunpack.c.h.b16 %v302
    %v2473 = vunpack.c.l.b16 %v303
    %v2474 = vunpack.c.h.b16 %v303
    %v2475 = vunpack.c.l.b16 %v304
    %v2476 = vunpack.c.h.b16 %v304
    %v2477 = vunpack.c.l.b16 %v305
    %v2478 = vunpack.c.h.b16 %v305
    %v2479 = vunpack.c.l.b16 %v306
    %v2480 = vunpack.c.h.b16 %v306
    %v2481 = vunpack.c.l.b16 %v307
    %v2482 = vunpack.c.h.b16 %v307
    %v2483 = vunpack.c.l.b16 %v308
    %v2484 = vunpack.c.h.b16 %v308
    %v2485 = vunpack.c.l.b16 %v309
    %v2486 = vunpack.c.h.b16 %v309
    %v2487 = vunpack.c.l.b16 %v310
    %v2488 = vunpack.c.h.b16 %v310
    %v2489 = vunpack.c.l.b16 %v311
    %v2490 = vunpack.c.h.b16 %v311
    %v2491 = vunpack.c.l.b16 %v312
    %v2492 = vunpack.c.h.b16 %v312
    %v2493 = vunpack.c.l.b16 %v313
    %v2494 = vunpack.c.h.b16 %v313
    %v2495 = vunpack.c.l.b16 %v314
    %v2496 = vunpack.c.h.b16 %v314
    %v2497 = vunpack.c.l.b16 %v315
    %v2498 = vunpack.c.h.b16 %v315
    %v2499 = vunpack.c.l.b16 %v316
    %v2500 = vunpack.c.h.b16 %v316
    %v2501 = vunpack.c.l.b16 %v317
    %v2502 = vunpack.c.h.b16 %v317
    %v2503 = vunpack.c.l.b16 %v318
    %v2504 = vunpack.c.h.b16 %v318
    %v2505 = vunpack.c.l.b16 %v319
    %v2506 = vunpack.c.h.b16 %v319
    %v2507 = vunpack.c.l.b16 %v320
    %v2508 = vunpack.c.h.b16 %v320
    %v2509 = vunpack.c.l.b16 %v321
    %v2510 = vunpack.c.h.b16 %v321
    %v2511 = vunpack.c.l.b16 %v322
    %v2512 = vunpack.c.h.b16 %v322
    %v2513 = vunpack.c.l.b16 %v323
    %v2514 = vunpack.c.h.b16 %v323
    %v2515 = vunpack.c.l.b16 %v324
    %v2516 = vunpack.c.h.b16 %v324
    %v2517 = vunpack.c.l.b16 %v325
    %v2518 = vunpack.c.h.b16 %v325
    %v2519 = vunpack.c.l.b16 %v326
    %v2520 = vunpack.c.h.b16 %v326
    %v2521 = vunpack.c.l.b16 %v327
    %v2522 = vunpack.c.h.b16 %v327
    %v2523 = vunpack.c.l.b16 %v328
    %v2524 = vunpack.c.h.b16 %v328
    %v2525 = vunpack.c.l.b16 %v329
    %v2526 = vunpack.c.h.b16 %v329
    %v2527 = vunpack.c.l.b16 %v330
    %v2528 = vunpack.c.h.b16 %v330
    %v2529 = vunpack.c.l.b16 %v331
    %v2530 = vunpack.c.h.b16 %v331
    %v2531 = vunpack.c.l.b16 %v332
    %v2532 = vunpack.c.h.b16 %v332
    %v2533 = vunpack.c.l.b16 %v333
    %v2534 = vunpack.c.h.b16 %v333
    %v2535 = vunpack.c.l.b16 %v334
    %v2536 = vunpack.c.h.b16 %v334
    %v2537 = vunpack.c.l.b16 %v335
    %v2538 = vunpack.c.h.b16 %v335
    %v2539 = vunpack.c.l.b16 %v336
    %v2540 = vunpack.c.h.b16 %v336
    %v2541 = vunpack.c.l.b16 %v337
    %v2542 = vunpack.c.h.b16 %v337
    %v2543 = vunpack.c.l.b16 %v338
    %v2544 = vunpack.c.h.b16 %v338
    %v2545 = vunpack.c.l.b16 %v339
    %v2546 = vunpack.c.h.b16 %v339
    %v2547 = vunpack.c.l.b16 %v340
    %v2548 = vunpack.c.h.b16 %v340
    %v2549 = vunpack.c.l.b16 %v341
    %v2550 = vunpack.c.h.b16 %v341
    %v2551 = vunpack.c.l.b16 %v342
    %v2552 = vunpack.c.h.b16 %v342
    %v2553 = vunpack.c.l.b16 %v343
    %v2554 = vunpack.c.h.b16 %v343
    %v2555 = vunpack.c.l.b16 %v344
    %v2556 = vunpack.c.h.b16 %v344
    %v2557 = vunpack.c.l.b16 %v345
    %v2558 = vunpack.c.h.b16 %v345
    %v2559 = vunpack.c.l.b16 %v346
    %v2560 = vunpack.c.h.b16 %v346
    %v2561 = vunpack.c.l.b16 %v347
    %v2562 = vunpack.c.h.b16 %v347
    %v2563 = vunpack.c.l.b16 %v348
    %v2564 = vunpack.c.h.b16 %v348
    %v2565 = vunpack.c.l.b16 %v349
    %v2566 = vunpack.c.h.b16 %v349
    %v2567 = vunpack.c.l.b16 %v350
    %v2568 = vunpack.c.h.b16 %v350
    %v2569 = vunpack.c.l.b16 %v351
    %v2570 = vunpack.c.h.b16 %v351
    %v2571 = vunpack.c.l.b16 %v352
    %v2572 = vunpack.c.h.b16 %v352
    %v2573 = vunpack.c.l.b16 %v353
    %v2574 = vunpack.c.h.b16 %v353
    %v2575 = vunpack.c.l.b16 %v354
    %v2576 = vunpack.c.h.b16 %v354
    %v2577 = vunpack.c.l.b16 %v355
    %v2578 = vunpack.c.h.b16 %v355
    %v2579 = vunpack.c.l.b16 %v356
    %v2580 = vunpack.c.h.b16 %v356
    %v2581 = vunpack.c.l.b16 %v357
    %v2582 = vunpack.c.h.b16 %v357
    %v2583 = vunpack.c.l.b16 %v358
    %v2584 = vunpack.c.h.b16 %v358
    %v2585 = vunpack.c.l.b16 %v359
    %v2586 = vunpack.c.h.b16 %v359
    %v2587 = vunpack.c.l.b16 %v360
    %v2588 = vunpack.c.h.b16 %v360
    %v2589 = vunpack.c.l.b16 %v361
    %v2590 = vunpack.c.h.b16 %v361
    %v2591 = vunpack.c.l.b16 %v362
    %v2592 = vunpack.c.h.b16 %v362
    %v2593 = vunpack.c.l.b16 %v363
    %v2594 = vunpack.c.h.b16 %v363
    %v2595 = vunpack.c.l.b16 %v364
    %v2596 = vunpack.c.h.b16 %v364
    %v2597 = vunpack.c.l.b16 %v365
    %v2598 = vunpack.c.h.b16 %v365
    %v2599 = vunpack.c.l.b16 %v366
    %v2600 = vunpack.c.h.b16 %v366
    %v2601 = vunpack.c.l.b16 %v367
    %v2602 = vunpack.c.h.b16 %v367
    %v2603 = vunpack.c.l.b16 %v368
    %v2604 = vunpack.c.h.b16 %v368
    %v2605 = vunpack.c.l.b16 %v369
    %v2606 = vunpack.c.h.b16 %v369
    %v2607 = vunpack.c.l.b16 %v370
    %v2608 = vunpack.c.h.b16 %v370
    %v2609 = vunpack.c.l.b16 %v371
    %v2610 = vunpack.c.h.b16 %v371
    %v2611 = vunpack.c.l.b16 %v372
    %v2612 = vunpack.c.h.b16 %v372
    %v2613 = vunpack.c.l.b16 %v373
    %v2614 = vunpack.c.h.b16 %v373
    %v2615 = vunpack.c.l.b16 %v374
    %v2616 = vunpack.c.h.b16 %v374
    %v2617 = vunpack.c.l.b16 %v375
    %v2618 = vunpack.c.h.b16 %v375
    %v2619 = vunpack.c.l.b16 %v376
    %v2620 = vunpack.c.h.b16 %v376
    %v2621 = vunpack.c.l.b16 %v377
    %v2622 = vunpack.c.h.b16 %v377
    %v2623 = vunpack.c.l.b16 %v378
    %v2624 = vunpack.c.h.b16 %v378
    %v2625 = vunpack.c.l.b16 %v379
    %v2626 = vunpack.c.h.b16 %v379
    %v2627 = vunpack.c.l.b16 %v380
    %v2628 = vunpack.c.h.b16 %v380
    %v2629 = vunpack.c.l.b16 %v381
    %v2630 = vunpack.c.h.b16 %v381
    %v2631 = vunpack.c.l.b16 %v382
    %v2632 = vunpack.c.h.b16 %v382
    %v2633 = vunpack.c.l.b16 %v383
    %v2634 = vunpack.c.h.b16 %v383
    %v2635 = vunpack.c.l.b16 %v384
    %v2636 = vunpack.c.h.b16 %v384
    %v2637 = vunpack.c.l.b16 %v385
    %v2638 = vunpack.c.h.b16 %v385
    %v2639 = vunpack.c.l.b16 %v386
    %v2640 = vunpack.c.h.b16 %v386
    %v2641 = vunpack.c.l.b16 %v387
    %v2642 = vunpack.c.h.b16 %v387
    %v2643 = vunpack.c.l.b16 %v388
    %v2644 = vunpack.c.h.b16 %v388
    %v2645 = vunpack.c.l.b16 %v389
    %v2646 = vunpack.c.h.b16 %v389
    %v2647 = vunpack.c.l.b16 %v390
    %v2648 = vunpack.c.h.b16 %v390
    %v2649 = vunpack.c.l.b16 %v391
    %v2650 = vunpack.c.h.b16 %v391
    %v2651 = vunpack.c.l.b16 %v392
    %v2652 = vunpack.c.h.b16 %v392
    %v2653 = vunpack.c.l.b16 %v393
    %v2654 = vunpack.c.h.b16 %v393
    %v2655 = vunpack.c.l.b16 %v394
    %v2656 = vunpack.c.h.b16 %v394
    %v2657 = vunpack.c.l.b16 %v395
    %v2658 = vunpack.c.h.b16 %v395
    %v2659 = vunpack.c.l.b16 %v396
    %v2660 = vunpack.c.h.b16 %v396
    %v2661 = vunpack.c.l.b16 %v397
    %v2662 = vunpack.c.h.b16 %v397
    %v2663 = vunpack.c.l.b16 %v398
    %v2664 = vunpack.c.h.b16 %v398
    %v2665 = vunpack.c.l.b16 %v399
    %v2666 = vunpack.c.h.b16 %v399
    %v2667 = vunpack.c.l.b16 %v400
    %v2668 = vunpack.c.h.b16 %v400
    %v2669 = vunpack.c.l.b16 %v401
    %v2670 = vunpack.c.h.b16 %v401
    %v2671 = vunpack.c.l.b16 %v402
    %v2672 = vunpack.c.h.b16 %v402
    %v2673 = vunpack.c.l.b16 %v403
    %v2674 = vunpack.c.h.b16 %v403
    %v2675 = vunpack.c.l.b16 %v404
    %v2676 = vunpack.c.h.b16 %v404
    %v2677 = vunpack.c.l.b16 %v405
    %v2678 = vunpack.c.h.b16 %v405
    %v2679 = vunpack.c.l.b16 %v406
    %v2680 = vunpack.c.h.b16 %v406
    %v2681 = vunpack.c.l.b16 %v407
    %v2682 = vunpack.c.h.b16 %v407
    %v2683 = vunpack.c.l.b16 %v408
    %v2684 = vunpack.c.h.b16 %v408
    %v2685 = vunpack.c.l.b16 %v409
    %v2686 = vunpack.c.h.b16 %v409
    %v2687 = vunpack.c.l.b16 %v410
    %v2688 = vunpack.c.h.b16 %v410
    %v2689 = vunpack.c.l.b16 %v411
    %v2690 = vunpack.c.h.b16 %v411
    %v2691 = vunpack.c.l.b16 %v412
    %v2692 = vunpack.c.h.b16 %v412
    %v2693 = vunpack.c.l.b16 %v413
    %v2694 = vunpack.c.h.b16 %v413
    %v2695 = vunpack.c.l.b16 %v414
    %v2696 = vunpack.c.h.b16 %v414
    %v2697 = vunpack.c.l.b16 %v415
    %v2698 = vunpack.c.h.b16 %v415
    %v2699 = vunpack.c.l.b16 %v416
    %v2700 = vunpack.c.h.b16 %v416
    %v2701 = vunpack.c.l.b16 %v417
    %v2702 = vunpack.c.h.b16 %v417
    %v2703 = vunpack.c.l.b16 %v418
    %v2704 = vunpack.c.h.b16 %v418
    %v2705 = vunpack.c.l.b16 %v419
    %v2706 = vunpack.c.h.b16 %v419
    %v2707 = vunpack.c.l.b16 %v420
    %v2708 = vunpack.c.h.b16 %v420
    %v2709 = vunpack.c.l.b16 %v421
    %v2710 = vunpack.c.h.b16 %v421
    %v2711 = vunpack.c.l.b16 %v422
    %v2712 = vunpack.c.h.b16 %v422
    %v2713 = vunpack.c.l.b16 %v423
    %v2714 = vunpack.c.h.b16 %v423
    %v2715 = vunpack.c.l.b16 %v424
    %v2716 = vunpack.c.h.b16 %v424
    %v2717 = vunpack.c.l.b16 %v425
    %v2718 = vunpack.c.h.b16 %v425
    %v2719 = vunpack.c.l.b16 %v426
    %v2720 = vunpack.c.h.b16 %v426
    %v2721 = vunpack.c.l.b16 %v427
    %v2722 = vunpack.c.h.b16 %v427
    %v2723 = vunpack.c.l.b16 %v428
    %v2724 = vunpack.c.h.b16 %v428
    %v2725 = vunpack.c.l.b16 %v429
    %v2726 = vunpack.c.h.b16 %v429
    %v2727 = vunpack.c.l.b16 %v430
    %v2728 = vunpack.c.h.b16 %v430
    %v2729 = vunpack.c.l.b16 %v431
    %v2730 = vunpack.c.h.b16 %v431
    %v2731 = vunpack.c.l.b16 %v432
    %v2732 = vunpack.c.h.b16 %v432
    %v2733 = vunpack.c.l.b16 %v433
    %v2734 = vunpack.c.h.b16 %v433
    %v2735 = vunpack.c.l.b16 %v434
    %v2736 = vunpack.c.h.b16 %v434
    %v2737 = vunpack.c.l.b16 %v435
    %v2738 = vunpack.c.h.b16 %v435
    %v2739 = vunpack.c.l.b16 %v436
    %v2740 = vunpack.c.h.b16 %v436
    %v2741 = vunpack.c.l.b16 %v437
    %v2742 = vunpack.c.h.b16 %v437
    %v2743 = vunpack.c.l.b16 %v438
    %v2744 = vunpack.c.h.b16 %v438
    %v2745 = vunpack.c.l.b16 %v439
    %v2746 = vunpack.c.h.b16 %v439
    %v2747 = vunpack.c.l.b16 %v440
    %v2748 = vunpack.c.h.b16 %v440
    %v2749 = vunpack.c.l.b16 %v441
    %v2750 = vunpack.c.h.b16 %v441
    %v2751 = vunpack.c.l.b16 %v442
    %v2752 = vunpack.c.h.b16 %v442
    %v2753 = vunpack.c.l.b16 %v443
    %v2754 = vunpack.c.h.b16 %v443
    %v2755 = vunpack.c.l.b16 %v444
    %v2756 = vunpack.c.h.b16 %v444
    %v2757 = vunpack.c.l.b16 %v445
    %v2758 = vunpack.c.h.b16 %v445
    %v2759 = vunpack.c.l.b16 %v446
    %v2760 = vunpack.c.h.b16 %v446
    %v2761 = vunpack.c.l.b16 %v447
    %v2762 = vunpack.c.h.b16 %v447
    %v2763 = vunpack.c.l.b16 %v448
    %v2764 = vunpack.c.h.b16 %v448
    %v2765 = vunpack.c.l.b16 %v449
    %v2766 = vunpack.c.h.b16 %v449
    %v2767 = vunpack.c.l.b16 %v450
    %v2768 = vunpack.c.h.b16 %v450
    %v2769 = vunpack.c.l.b16 %v451
    %v2770 = vunpack.c.h.b16 %v451
    %v2771 = vunpack.c.l.b16 %v452
    %v2772 = vunpack.c.h.b16 %v452
    %v2773 = vunpack.c.l.b16 %v453
    %v2774 = vunpack.c.h.b16 %v453
    %v2775 = vunpack.c.l.b16 %v454
    %v2776 = vunpack.c.h.b16 %v454
    %v2777 = vunpack.c.l.b16 %v455
    %v2778 = vunpack.c.h.b16 %v455
    %v2779 = vunpack.c.l.b16 %v456
    %v2780 = vunpack.c.h.b16 %v456
    %v2781 = vunpack.c.l.b16 %v457
    %v2782 = vunpack.c.h.b16 %v457
    %v2783 = vunpack.c.l.b16 %v458
    %v2784 = vunpack.c.h.b16 %v458
    %v2785 = vunpack.c.l.b16 %v459
    %v2786 = vunpack.c.h.b16 %v459
    %v2787 = vunpack.c.l.b16 %v460
    %v2788 = vunpack.c.h.b16 %v460
    %v2789 = vunpack.c.l.b16 %v461
    %v2790 = vunpack.c.h.b16 %v461
    %v2791 = vunpack.c.l.b16 %v462
    %v2792 = vunpack.c.h.b16 %v462
    %v2793 = vunpack.c.l.b16 %v463
    %v2794 = vunpack.c.h.b16 %v463
    %v2795 = vunpack.c.l.b16 %v464
    %v2796 = vunpack.c.h.b16 %v464
    %v2797 = vunpack.c.l.b16 %v465
    %v2798 = vunpack.c.h.b16 %v465
    %v2799 = vunpack.c.l.b16 %v466
    %v2800 = vunpack.c.h.b16 %v466
    %v2801 = vunpack.c.l.b16 %v467
    %v2802 = vunpack.c.h.b16 %v467
    %v2803 = vunpack.c.l.b16 %v468
    %v2804 = vunpack.c.h.b16 %v468
    %v2805 = vunpack.c.l.b16 %v469
    %v2806 = vunpack.c.h.b16 %v469
    %v2807 = vunpack.c.l.b16 %v470
    %v2808 = vunpack.c.h.b16 %v470
    %v2809 = vunpack.c.l.b16 %v471
    %v2810 = vunpack.c.h.b16 %v471
    %v2811 = vunpack.c.l.b16 %v472
    %v2812 = vunpack.c.h.b16 %v472
    %v2813 = vunpack.c.l.b16 %v473
    %v2814 = vunpack.c.h.b16 %v473
    %v2815 = vunpack.c.l.b16 %v474
    %v2816 = vunpack.c.h.b16 %v474
    %v2817 = vunpack.c.l.b16 %v475
    %v2818 = vunpack.c.h.b16 %v475
    %v2819 = vunpack.c.l.b16 %v476
    %v2820 = vunpack.c.h.b16 %v476
    %v2821 = vunpack.c.l.b16 %v477
    %v2822 = vunpack.c.h.b16 %v477
    %v2823 = vunpack.c.l.b16 %v478
    %v2824 = vunpack.c.h.b16 %v478
    %v2825 = vunpack.c.l.b16 %v479
    %v2826 = vunpack.c.h.b16 %v479
    %v2827 = vunpack.c.l.b16 %v480
    %v2828 = vunpack.c.h.b16 %v480
    %v2829 = vunpack.c.l.b16 %v481
    %v2830 = vunpack.c.h.b16 %v481
    %v2831 = vunpack.c.l.b16 %v482
    %v2832 = vunpack.c.h.b16 %v482
    %v2833 = vunpack.c.l.b16 %v483
    %v2834 = vunpack.c.h.b16 %v483
    %v2835 = vunpack.c.l.b16 %v484
    %v2836 = vunpack.c.h.b16 %v484
    %v2837 = vunpack.c.l.b16 %v485
    %v2838 = vunpack.c.h.b16 %v485
    %v2839 = vunpack.c.l.b16 %v486
    %v2840 = vunpack.c.h.b16 %v486
    %v2841 = vunpack.c.l.b16 %v487
    %v2842 = vunpack.c.h.b16 %v487
    %v2843 = vunpack.c.l.b16 %v488
    %v2844 = vunpack.c.h.b16 %v488
    %v2845 = vunpack.c.l.b16 %v489
    %v2846 = vunpack.c.h.b16 %v489
    %v2847 = vunpack.c.l.b16 %v490
    %v2848 = vunpack.c.h.b16 %v490
    %v2849 = vunpack.c.l.b16 %v491
    %v2850 = vunpack.c.h.b16 %v491
    %v2851 = vunpack.c.l.b16 %v492
    %v2852 = vunpack.c.h.b16 %v492
    %v2853 = vunpack.c.l.b16 %v493
    %v2854 = vunpack.c.h.b16 %v493
    %v2855 = vunpack.c.l.b16 %v494
    %v2856 = vunpack.c.h.b16 %v494
    %v2857 = vunpack.c.l.b16 %v495
    %v2858 = vunpack.c.h.b16 %v495
    %v2859 = vunpack.c.l.b16 %v496
    %v2860 = vunpack.c.h.b16 %v496
    %v2861 = vunpack.c.l.b16 %v497
    %v2862 = vunpack.c.h.b16 %v497
    %v2863 = vunpack.c.l.b16 %v498
    %v2864 = vunpack.c.h.b16 %v498
    %v2865 = vunpack.c.l.b16 %v499
    %v2866 = vunpack.c.h.b16 %v499
    %v2867 = vunpack.c.l.b16 %v500
    %v2868 = vunpack.c.h.b16 %v500
    %v2869 = vunpack.c.l.b16 %v501
    %v2870 = vunpack.c.h.b16 %v501
    %v2871 = vunpack.c.l.b16 %v502
    %v2872 = vunpack.c.h.b16 %v502
    %v2873 = vunpack.c.l.b16 %v503
    %v2874 = vunpack.c.h.b16 %v503
    %v2875 = vunpack.c.l.b16 %v504
    %v2876 = vunpack.c.h.b16 %v504
    %v2877 = vunpack.c.l.b16 %v505
    %v2878 = vunpack.c.h.b16 %v505
    %v2879 = vunpack.c.l.b16 %v506
    %v2880 = vunpack.c.h.b16 %v506
    %v2881 = vunpack.c.l.b16 %v507
    %v2882 = vunpack.c.h.b16 %v507
    %v2883 = vunpack.c.l.b16 %v508
    %v2884 = vunpack.c.h.b16 %v508
    %v2885 = vunpack.c.l.b16 %v509
    %v2886 = vunpack.c.h.b16 %v509
    %v2887 = vunpack.c.l.b16 %v510
    %v2888 = vunpack.c.h.b16 %v510
    %v2889 = vunpack.c.l.b16 %v511
    %v2890 = vunpack.c.h.b16 %v511
    %v2891 = vunpack.c.l.b16 %v512
    %v2892 = vunpack.c.h.b16 %v512
    %v2893 = vunpack.c.l.b16 %v513
    %v2894 = vunpack.c.h.b16 %v513
    %v2895 = vunpack.c.l.b16 %v514
    %v2896 = vunpack.c.h.b16 %v514
    %v2897 = vunpack.c.l.b16 %v515
    %v2898 = vunpack.c.h.b16 %v515
    %v2899 = vunpack.c.l.b16 %v516
    %v2900 = vunpack.c.h.b16 %v516
    %v2901 = vunpack.c.l.b16 %v517
    %v2902 = vunpack.c.h.b16 %v517
    %v2903 = vunpack.c.l.b16 %v518
    %v2904 = vunpack.c.h.b16 %v518
    %v2905 = vunpack.c.l.b16 %v519
    %v2906 = vunpack.c.h.b16 %v519
    %v2907 = vunpack.c.l.b16 %v520
    %v2908 = vunpack.c.h.b16 %v520
    %v2909 = vunpack.c.l.b16 %v521
    %v2910 = vunpack.c.h.b16 %v521
    %v2911 = vunpack.c.l.b16 %v522
    %v2912 = vunpack.c.h.b16 %v522
    %v2913 = vunpack.c.l.b16 %v523
    %v2914 = vunpack.c.h.b16 %v523
    %v2915 = vunpack.c.l.b16 %v524
    %v2916 = vunpack.c.h.b16 %v524
    %v2917 = vunpack.c.l.b16 %v525
    %v2918 = vunpack.c.h.b16 %v525
    %v2919 = vunpack.c.l.b16 %v526
    %v2920 = vunpack.c.h.b16 %v526
    %v2921 = vunpack.c.l.b16 %v527
    %v2922 = vunpack.c.h.b16 %v527
    %v2923 = vunpack.c.l.b16 %v528
    %v2924 = vunpack.c.h.b16 %v528
    %v2925 = vunpack.c.l.b16 %v529
    %v2926 = vunpack.c.h.b16 %v529
    %v2927 = vunpack.c.l.b16 %v530
    %v2928 = vunpack.c.h.b16 %v530
    %v2929 = vunpack.c.l.b16 %v531
    %v2930 = vunpack.c.h.b16 %v531
    %v2931 = vunpack.c.l.b16 %v532
    %v2932 = vunpack.c.h.b16 %v532
    %v2933 = vunpack.c.l.b16 %v533
    %v2934 = vunpack.c.h.b16 %v533
    %v2935 = vunpack.c.l.b16 %v534
    %v2936 = vunpack.c.h.b16 %v534
    %v2937 = vunpack.c.l.b16 %v535
    %v2938 = vunpack.c.h.b16 %v535
    %v2939 = vunpack.c.l.b16 %v536
    %v2940 = vunpack.c.h.b16 %v536
    %v2941 = vunpack.c.l.b16 %v537
    %v2942 = vunpack.c.h.b16 %v537
    %v2943 = vunpack.c.l.b16 %v538
    %v2944 = vunpack.c.h.b16 %v538
    %v2945 = vunpack.c.l.b16 %v539
    %v2946 = vunpack.c.h.b16 %v539
    %v2947 = vunpack.c.l.b16 %v540
    %v2948 = vunpack.c.h.b16 %v540
    %v2949 = vunpack.c.l.b16 %v541
    %v2950 = vunpack.c.h.b16 %v541
    %v2951 = vunpack.c.l.b16 %v542
    %v2952 = vunpack.c.h.b16 %v542
    %v2953 = vunpack.c.l.b16 %v543
    %v2954 = vunpack.c.h.b16 %v543
    %v2955 = vunpack.c.l.b16 %v544
    %v2956 = vunpack.c.h.b16 %v544
    %v2957 = vunpack.c.l.b16 %v545
    %v2958 = vunpack.c.h.b16 %v545
    %v2959 = vunpack.c.l.b16 %v546
    %v2960 = vunpack.c.h.b16 %v546
    %v2961 = vunpack.c.l.b16 %v547
    %v2962 = vunpack.c.h.b16 %v547
    %v2963 = vunpack.c.l.b16 %v548
    %v2964 = vunpack.c.h.b16 %v548
    %v2965 = vunpack.c.l.b16 %v549
    %v2966 = vunpack.c.h.b16 %v549
    %v2967 = vunpack.c.l.b16 %v550
    %v2968 = vunpack.c.h.b16 %v550
    %v2969 = vunpack.c.l.b16 %v551
    %v2970 = vunpack.c.h.b16 %v551
    %v2971 = vunpack.c.l.b16 %v552
    %v2972 = vunpack.c.h.b16 %v552
    %v2973 = vunpack.c.l.b16 %v553
    %v2974 = vunpack.c.h.b16 %v553
    %v2975 = vunpack.c.l.b16 %v554
    %v2976 = vunpack.c.h.b16 %v554
    %v2977 = vunpack.c.l.b16 %v555
    %v2978 = vunpack.c.h.b16 %v555
    %v2979 = vunpack.c.l.b16 %v556
    %v2980 = vunpack.c.h.b16 %v556
    %v2981 = vunpack.c.l.b16 %v557
    %v2982 = vunpack.c.h.b16 %v557
    %v2983 = vunpack.c.l.b16 %v558
    %v2984 = vunpack.c.h.b16 %v558
    %v2985 = vunpack.c.l.b16 %v559
    %v2986 = vunpack.c.h.b16 %v559
    %v2987 = vunpack.c.l.b16 %v560
    %v2988 = vunpack.c.h.b16 %v560
    %v2989 = vunpack.c.l.b16 %v561
    %v2990 = vunpack.c.h.b16 %v561
    %v2991 = vunpack.c.l.b16 %v562
    %v2992 = vunpack.c.h.b16 %v562
    %v2993 = vunpack.c.l.b16 %v563
    %v2994 = vunpack.c.h.b16 %v563
    %v2995 = vunpack.c.l.b16 %v564
    %v2996 = vunpack.c.h.b16 %v564
    %v2997 = vunpack.c.l.b16 %v565
    %v2998 = vunpack.c.h.b16 %v565
    %v2999 = vunpack.c.l.b16 %v566
    %v3000 = vunpack.c.h.b16 %v566
    %v3001 = vunpack.c.l.b16 %v567
    %v3002 = vunpack.c.h.b16 %v567
    %v3003 = vunpack.c.l.b16 %v568
    %v3004 = vunpack.c.h.b16 %v568
    %v3005 = vunpack.c.l.b16 %v569
    %v3006 = vunpack.c.h.b16 %v569
    %v3007 = vunpack.c.l.b16 %v570
    %v3008 = vunpack.c.h.b16 %v570
    %v3009 = vunpack.c.l.b16 %v571
    %v3010 = vunpack.c.h.b16 %v571
    %v3011 = vunpack.c.l.b16 %v572
    %v3012 = vunpack.c.h.b16 %v572
    %v3013 = vunpack.c.l.b16 %v573
    %v3014 = vunpack.c.h.b16 %v573
    %v3015 = vunpack.c.l.b16 %v574
    %v3016 = vunpack.c.h.b16 %v574
    %v3017 = vunpack.c.l.b16 %v575
    %v3018 = vunpack.c.h.b16 %v575
    %v3019 = vunpack.c.l.b16 %v576
    %v3020 = vunpack.c.h.b16 %v576
    %v3021 = vunpack.c.l.b16 %v577
    %v3022 = vunpack.c.h.b16 %v577
    %v3023 = vunpack.c.l.b16 %v578
    %v3024 = vunpack.c.h.b16 %v578
    %v3025 = vunpack.c.l.b16 %v579
    %v3026 = vunpack.c.h.b16 %v579
    %v3027 = vunpack.c.l.b16 %v580
    %v3028 = vunpack.c.h.b16 %v580
    %v3029 = vunpack.c.l.b16 %v581
    %v3030 = vunpack.c.h.b16 %v581
    %v3031 = vunpack.c.l.b16 %v582
    %v3032 = vunpack.c.h.b16 %v582
    %v3033 = vunpack.c.l.b16 %v583
    %v3034 = vunpack.c.h.b16 %v583
    %v3035 = vunpack.c.l.b16 %v584
    %v3036 = vunpack.c.h.b16 %v584
    %v3037 = vunpack.c.l.b16 %v585
    %v3038 = vunpack.c.h.b16 %v585
    %v3039 = vunpack.c.l.b16 %v586
    %v3040 = vunpack.c.h.b16 %v586
    %v3041 = vunpack.c.l.b16 %v587
    %v3042 = vunpack.c.h.b16 %v587
    %v3043 = vunpack.c.l.b16 %v588
    %v3044 = vunpack.c.h.b16 %v588
    %v3045 = vunpack.c.l.b16 %v589
    %v3046 = vunpack.c.h.b16 %v589
    %v3047 = vunpack.c.l.b16 %v590
    %v3048 = vunpack.c.h.b16 %v590
    %v3049 = vunpack.c.l.b16 %v591
    %v3050 = vunpack.c.h.b16 %v591
    %v3051 = vunpack.c.l.b16 %v592
    %v3052 = vunpack.c.h.b16 %v592
    %v3053 = vunpack.c.l.b16 %v593
    %v3054 = vunpack.c.h.b16 %v593
    %v3055 = vunpack.c.l.b16 %v594
    %v3056 = vunpack.c.h.b16 %v594
    %v3057 = vunpack.c.l.b16 %v595
    %v3058 = vunpack.c.h.b16 %v595
    %v3059 = vunpack.c.l.b16 %v596
    %v3060 = vunpack.c.h.b16 %v596
    %v3061 = vunpack.c.l.b16 %v597
    %v3062 = vunpack.c.h.b16 %v597
    %v3063 = vunpack.c.l.b16 %v598
    %v3064 = vunpack.c.h.b16 %v598
    %v3065 = vunpack.c.l.b16 %v599
    %v3066 = vunpack.c.h.b16 %v599
    %v3067 = vunpack.c.l.b16 %v600
    %v3068 = vunpack.c.h.b16 %v600
    %v3069 = vunpack.c.l.b16 %v601
    %v3070 = vunpack.c.h.b16 %v601
    %v3071 = vunpack.c.l.b16 %v602
    %v3072 = vunpack.c.h.b16 %v602
    %v3073 = vunpack.c.l.b16 %v603
    %v3074 = vunpack.c.h.b16 %v603
    %v3075 = vunpack.c.l.b16 %v604
    %v3076 = vunpack.c.h.b16 %v604
    %v3077 = vunpack.c.l.b16 %v605
    %v3078 = vunpack.c.h.b16 %v605
    %v3079 = vunpack.c.l.b16 %v606
    %v3080 = vunpack.c.h.b16 %v606
    %v3081 = vunpack.c.l.b16 %v607
    %v3082 = vunpack.c.h.b16 %v607
    %v3083 = vunpack.c.l.b16 %v608
    %v3084 = vunpack.c.h.b16 %v608
    %v3085 = vunpack.c.l.b16 %v609
    %v3086 = vunpack.c.h.b16 %v609
    %v3087 = vunpack.c.l.b16 %v610
    %v3088 = vunpack.c.h.b16 %v610
    %v3089 = vunpack.c.l.b16 %v611
    %v3090 = vunpack.c.h.b16 %v611
    %v3091 = vunpack.c.l.b16 %v612
    %v3092 = vunpack.c.h.b16 %v612
    %v3093 = vunpack.c.l.b16 %v613
    %v3094 = vunpack.c.h.b16 %v613
    %v3095 = vunpack.c.l.b16 %v614
    %v3096 = vunpack.c.h.b16 %v614
    %v3097 = vunpack.c.l.b16 %v615
    %v3098 = vunpack.c.h.b16 %v615
    %v3099 = vunpack.c.l.b16 %v616
    %v3100 = vunpack.c.h.b16 %v616
    %v3101 = vunpack.c.l.b16 %v617
    %v3102 = vunpack.c.h.b16 %v617
    %v3103 = vunpack.c.l.b16 %v618
    %v3104 = vunpack.c.h.b16 %v618
    %v3105 = vunpack.c.l.b16 %v619
    %v3106 = vunpack.c.h.b16 %v619
    %v3107 = vunpack.c.l.b16 %v620
    %v3108 = vunpack.c.h.b16 %v620
    %v3109 = vunpack.c.l.b16 %v621
    %v3110 = vunpack.c.h.b16 %v621
    %v3111 = vunpack.c.l.b16 %v622
    %v3112 = vunpack.c.h.b16 %v622
    %v3113 = vunpack.c.l.b16 %v623
    %v3114 = vunpack.c.h.b16 %v623
    %v3115 = vunpack.c.l.b16 %v624
    %v3116 = vunpack.c.h.b16 %v624
    %v3117 = vunpack.c.l.b16 %v625
    %v3118 = vunpack.c.h.b16 %v625
    %v3119 = vunpack.c.l.b16 %v626
    %v3120 = vunpack.c.h.b16 %v626
    %v3121 = vunpack.c.l.b16 %v627
    %v3122 = vunpack.c.h.b16 %v627
    %v3123 = vunpack.c.l.b16 %v628
    %v3124 = vunpack.c.h.b16 %v628
    %v3125 = vunpack.c.l.b16 %v629
    %v3126 = vunpack.c.h.b16 %v629
    %v3127 = vunpack.c.l.b16 %v630
    %v3128 = vunpack.c.h.b16 %v630
    %v3129 = vunpack.c.l.b16 %v631
    %v3130 = vunpack.c.h.b16 %v631
    %v3131 = vunpack.c.l.b16 %v632
    %v3132 = vunpack.c.h.b16 %v632
    %v3133 = vunpack.c.l.b16 %v633
    %v3134 = vunpack.c.h.b16 %v633
    %v3135 = vunpack.c.l.b16 %v634
    %v3136 = vunpack.c.h.b16 %v634
    %v3137 = vunpack.c.l.b16 %v635
    %v3138 = vunpack.c.h.b16 %v635
    %v3139 = vunpack.c.l.b16 %v636
    %v3140 = vunpack.c.h.b16 %v636
    %v3141 = vunpack.c.l.b16 %v637
    %v3142 = vunpack.c.h.b16 %v637
    %v3143 = vunpack.c.l.b16 %v638
    %v3144 = vunpack.c.h.b16 %v638
    %v3145 = vunpack.c.l.b16 %v639
    %v3146 = vunpack.c.h.b16 %v639
    %v3147 = vunpack.c.l.b16 %v640
    %v3148 = vunpack.c.h.b16 %v640
    %v3149 = vunpack.c.l.b16 %v641
    %v3150 = vunpack.c.h.b16 %v641
    %v3151 = vunpack.c.l.b16 %v642
    %v3152 = vunpack.c.h.b16 %v642
    %v3153 = vunpack.c.l.b16 %v643
    %v3154 = vunpack.c.h.b16 %v643
    %v3155 = vunpack.c.l.b16 %v644
    %v3156 = vunpack.c.h.b16 %v644
    %v3157 = vunpack.c.l.b16 %v645
    %v3158 = vunpack.c.h.b16 %v645
    %v3159 = vunpack.c.l.b16 %v646
    %v3160 = vunpack.c.h.b16 %v646
    %v3161 = vunpack.c.l.b16 %v647
    %v3162 = vunpack.c.h.b16 %v647
    %v3163 = vunpack.c.l.b16 %v648
    %v3164 = vunpack.c.h.b16 %v648
    %v3165 = vunpack.c.l.b16 %v649
    %v3166 = vunpack.c.h.b16 %v649
    %v3167 = vunpack.c.l.b16 %v650
    %v3168 = vunpack.c.h.b16 %v650
    %v3169 = vunpack.c.l.b16 %v651
    %v3170 = vunpack.c.h.b16 %v651
    %v3171 = vunpack.c.l.b16 %v652
    %v3172 = vunpack.c.h.b16 %v652
    %v3173 = vunpack.c.l.b16 %v653
    %v3174 = vunpack.c.h.b16 %v653
    %v3175 = vunpack.c.l.b16 %v654
    %v3176 = vunpack.c.h.b16 %v654
    %v3177 = vunpack.c.l.b16 %v655
    %v3178 = vunpack.c.h.b16 %v655
    %v3179 = vunpack.c.l.b16 %v656
    %v3180 = vunpack.c.h.b16 %v656
    %v3181 = vunpack.c.l.b16 %v657
    %v3182 = vunpack.c.h.b16 %v657
    %v3183 = vunpack.c.l.b16 %v658
    %v3184 = vunpack.c.h.b16 %v658
    %v3185 = vunpack.c.l.b16 %v659
    %v3186 = vunpack.c.h.b16 %v659
    %v3187 = vunpack.c.l.b16 %v660
    %v3188 = vunpack.c.h.b16 %v660
    %v3189 = vunpack.c.l.b16 %v661
    %v3190 = vunpack.c.h.b16 %v661
    %v3191 = vunpack.c.l.b16 %v662
    %v3192 = vunpack.c.h.b16 %v662
    %v3193 = vunpack.c.l.b16 %v663
    %v3194 = vunpack.c.h.b16 %v663
    %v3195 = vunpack.c.l.b16 %v664
    %v3196 = vunpack.c.h.b16 %v664
    %v3197 = vunpack.c.l.b16 %v665
    %v3198 = vunpack.c.h.b16 %v665
    %v3199 = vunpack.c.l.b16 %v666
    %v3200 = vunpack.c.h.b16 %v666
    %v3201 = vunpack.c.l.b16 %v667
    %v3202 = vunpack.c.h.b16 %v667
    %v3203 = vunpack.c.l.b16 %v668
    %v3204 = vunpack.c.h.b16 %v668
    %v3205 = vunpack.c.l.b16 %v669
    %v3206 = vunpack.c.h.b16 %v669
    %v3207 = vunpack.c.l.b16 %v670
    %v3208 = vunpack.c.h.b16 %v670
    %v3209 = vunpack.c.l.b16 %v671
    %v3210 = vunpack.c.h.b16 %v671
    %v3211 = vunpack.c.l.b16 %v672
    %v3212 = vunpack.c.h.b16 %v672
    %v3213 = vunpack.c.l.b16 %v673
    %v3214 = vunpack.c.h.b16 %v673
    %v3215 = vunpack.c.l.b16 %v674
    %v3216 = vunpack.c.h.b16 %v674
    %v3217 = vunpack.c.l.b16 %v675
    %v3218 = vunpack.c.h.b16 %v675
    %v3219 = vunpack.c.l.b16 %v676
    %v3220 = vunpack.c.h.b16 %v676
    %v3221 = vunpack.c.l.b16 %v677
    %v3222 = vunpack.c.h.b16 %v677
    %v3223 = vunpack.c.l.b16 %v678
    %v3224 = vunpack.c.h.b16 %v678
    %v3225 = vunpack.c.l.b16 %v679
    %v3226 = vunpack.c.h.b16 %v679
    %v3227 = vunpack.c.l.b16 %v680
    %v3228 = vunpack.c.h.b16 %v680
    %v3229 = vunpack.c.l.b16 %v681
    %v3230 = vunpack.c.h.b16 %v681
    %v3231 = vunpack.c.l.b16 %v682
    %v3232 = vunpack.c.h.b16 %v682
    %v3233 = vunpack.c.l.b16 %v683
    %v3234 = vunpack.c.h.b16 %v683
    %v3235 = vunpack.c.l.b16 %v684
    %v3236 = vunpack.c.h.b16 %v684
    %v3237 = vunpack.c.l.b16 %v685
    %v3238 = vunpack.c.h.b16 %v685
    %v3239 = vunpack.c.l.b16 %v686
    %v3240 = vunpack.c.h.b16 %v686
    %v3241 = vunpack.c.l.b16 %v687
    %v3242 = vunpack.c.h.b16 %v687
    %v3243 = vunpack.c.l.b16 %v688
    %v3244 = vunpack.c.h.b16 %v688
    %v3245 = vunpack.c.l.b16 %v689
    %v3246 = vunpack.c.h.b16 %v689
    %v3247 = vunpack.c.l.b16 %v690
    %v3248 = vunpack.c.h.b16 %v690
    %v3249 = vunpack.c.l.b16 %v691
    %v3250 = vunpack.c.h.b16 %v691
    %v3251 = vunpack.c.l.b16 %v692
    %v3252 = vunpack.c.h.b16 %v692
    %v3253 = vunpack.c.l.b16 %v693
    %v3254 = vunpack.c.h.b16 %v693
    %v3255 = vunpack.c.l.b16 %v694
    %v3256 = vunpack.c.h.b16 %v694
    %v3257 = vunpack.c.l.b16 %v695
    %v3258 = vunpack.c.h.b16 %v695
    %v3259 = vunpack.c.l.b16 %v696
    %v3260 = vunpack.c.h.b16 %v696
    %v3261 = vunpack.c.l.b16 %v697
    %v3262 = vunpack.c.h.b16 %v697
    %v3263 = vunpack.c.l.b16 %v698
    %v3264 = vunpack.c.h.b16 %v698
    %v3265 = vunpack.c.l.b16 %v699
    %v3266 = vunpack.c.h.b16 %v699
    %v3267 = vunpack.c.l.b16 %v700
    %v3268 = vunpack.c.h.b16 %v700
    %v3269 = vunpack.c.l.b16 %v701
    %v3270 = vunpack.c.h.b16 %v701
    %v3271 = vunpack.c.l.b16 %v702
    %v3272 = vunpack.c.h.b16 %v702
    %v3273 = vunpack.c.l.b16 %v703
    %v3274 = vunpack.c.h.b16 %v703
    %v3275 = vunpack.c.l.b16 %v704
    %v3276 = vunpack.c.h.b16 %v704
    %v3277 = vunpack.c.l.b16 %v705
    %v3278 = vunpack.c.h.b16 %v705
    %v3279 = vunpack.c.l.b16 %v706
    %v3280 = vunpack.c.h.b16 %v706
    %v3281 = vunpack.c.l.b16 %v707
    %v3282 = vunpack.c.h.b16 %v707
    %v3283 = vunpack.c.l.b16 %v708
    %v3284 = vunpack.c.h.b16 %v708
    %v3285 = vunpack.c.l.b16 %v709
    %v3286 = vunpack.c.h.b16 %v709
    %v3287 = vunpack.c.l.b16 %v710
    %v3288 = vunpack.c.h.b16 %v710
    %v3289 = vunpack.c.l.b16 %v711
    %v3290 = vunpack.c.h.b16 %v711
    %v3291 = vunpack.c.l.b16 %v712
    %v3292 = vunpack.c.h.b16 %v712
    %v3293 = vunpack.c.l.b16 %v713
    %v3294 = vunpack.c.h.b16 %v713
    %v3295 = vunpack.c.l.b16 %v714
    %v3296 = vunpack.c.h.b16 %v714
    %v3297 = vunpack.c.l.b16 %v715
    %v3298 = vunpack.c.h.b16 %v715
    %v3299 = vunpack.c.l.b16 %v716
    %v3300 = vunpack.c.h.b16 %v716
    %v3301 = vunpack.c.l.b16 %v717
    %v3302 = vunpack.c.h.b16 %v717
    %v3303 = vunpack.c.l.b16 %v718
    %v3304 = vunpack.c.h.b16 %v718
    %v3305 = vunpack.c.l.b16 %v719
    %v3306 = vunpack.c.h.b16 %v719
    %v3307 = vunpack.c.l.b16 %v720
    %v3308 = vunpack.c.h.b16 %v720
    %v3309 = vunpack.c.l.b16 %v721
    %v3310 = vunpack.c.h.b16 %v721
    %v3311 = vunpack.c.l.b16 %v722
    %v3312 = vunpack.c.h.b16 %v722
    %v3313 = vunpack.c.l.b16 %v723
    %v3314 = vunpack.c.h.b16 %v723
    %v3315 = vunpack.c.l.b16 %v724
    %v3316 = vunpack.c.h.b16 %v724
    %v3317 = vunpack.c.l.b16 %v725
    %v3318 = vunpack.c.h.b16 %v725
    %v3319 = vunpack.c.l.b16 %v726
    %v3320 = vunpack.c.h.b16 %v726
    %v3321 = vunpack.c.l.b16 %v727
    %v3322 = vunpack.c.h.b16 %v727
    %v3323 = vunpack.c.l.b16 %v728
    %v3324 = vunpack.c.h.b16 %v728
    %v3325 = vunpack.c.l.b16 %v729
    %v3326 = vunpack.c.h.b16 %v729
    %v3327 = vunpack.c.l.b16 %v730
    %v3328 = vunpack.c.h.b16 %v730
    %v3329 = vunpack.c.l.b16 %v731
    %v3330 = vunpack.c.h.b16 %v731
    %v3331 = vunpack.c.l.b16 %v732
    %v3332 = vunpack.c.h.b16 %v732
    %v3333 = vunpack.c.l.b16 %v733
    %v3334 = vunpack.c.h.b16 %v733
    %v3335 = vunpack.c.l.b16 %v734
    %v3336 = vunpack.c.h.b16 %v734
    %v3337 = vunpack.c.l.b16 %v735
    %v3338 = vunpack.c.h.b16 %v735
    %v3339 = vunpack.c.l.b16 %v736
    %v3340 = vunpack.c.h.b16 %v736
    %v3341 = vunpack.c.l.b16 %v737
    %v3342 = vunpack.c.h.b16 %v737
    %v3343 = vunpack.c.l.b16 %v738
    %v3344 = vunpack.c.h.b16 %v738
    %v3345 = vunpack.c.l.b16 %v739
    %v3346 = vunpack.c.h.b16 %v739
    %v3347 = vunpack.c.l.b16 %v740
    %v3348 = vunpack.c.h.b16 %v740
    %v3349 = vunpack.c.l.b16 %v741
    %v3350 = vunpack.c.h.b16 %v741
    %v3351 = vunpack.c.l.b16 %v742
    %v3352 = vunpack.c.h.b16 %v742
    %v3353 = vunpack.c.l.b16 %v743
    %v3354 = vunpack.c.h.b16 %v743
    %v3355 = vunpack.c.l.b16 %v744
    %v3356 = vunpack.c.h.b16 %v744
    %v3357 = vunpack.c.l.b16 %v745
    %v3358 = vunpack.c.h.b16 %v745
    %v3359 = vunpack.c.l.b16 %v746
    %v3360 = vunpack.c.h.b16 %v746
    %v3361 = vunpack.c.l.b16 %v747
    %v3362 = vunpack.c.h.b16 %v747
    %v3363 = vunpack.c.l.b16 %v748
    %v3364 = vunpack.c.h.b16 %v748
    %v3365 = vunpack.c.l.b16 %v749
    %v3366 = vunpack.c.h.b16 %v749
    %v3367 = vunpack.c.l.b16 %v750
    %v3368 = vunpack.c.h.b16 %v750
    %v3369 = vunpack.c.l.b16 %v751
    %v3370 = vunpack.c.h.b16 %v751
    %v3371 = vunpack.c.l.b16 %v752
    %v3372 = vunpack.c.h.b16 %v752
    %v3373 = vunpack.c.l.b16 %v753
    %v3374 = vunpack.c.h.b16 %v753
    %v3375 = vunpack.c.l.b16 %v754
    %v3376 = vunpack.c.h.b16 %v754
    %v3377 = vunpack.c.l.b16 %v755
    %v3378 = vunpack.c.h.b16 %v755
    %v3379 = vunpack.c.l.b16 %v756
    %v3380 = vunpack.c.h.b16 %v756
    %v3381 = vunpack.c.l.b16 %v757
    %v3382 = vunpack.c.h.b16 %v757
    %v3383 = vunpack.c.l.b16 %v758
    %v3384 = vunpack.c.h.b16 %v758
    %v3385 = vunpack.c.l.b16 %v759
    %v3386 = vunpack.c.h.b16 %v759
    %v3387 = vunpack.c.l.b16 %v760
    %v3388 = vunpack.c.h.b16 %v760
    %v3389 = vunpack.c.l.b16 %v761
    %v3390 = vunpack.c.h.b16 %v761
    %v3391 = vunpack.c.l.b16 %v762
    %v3392 = vunpack.c.h.b16 %v762
    %v3393 = vunpack.c.l.b16 %v763
    %v3394 = vunpack.c.h.b16 %v763
    %v3395 = vunpack.c.l.b16 %v764
    %v3396 = vunpack.c.h.b16 %v764
    %v3397 = vunpack.c.l.b16 %v765
    %v3398 = vunpack.c.h.b16 %v765
    %v3399 = vunpack.c.l.b16 %v766
    %v3400 = vunpack.c.h.b16 %v766
    %v3401 = vunpack.c.l.b16 %v767
    %v3402 = vunpack.c.h.b16 %v767
    %v3403 = vunpack.c.l.b16 %v768
    %v3404 = vunpack.c.h.b16 %v768
    %v3405 = vunpack.c.l.b16 %v769
    %v3406 = vunpack.c.h.b16 %v769
    %v3407 = vunpack.c.l.b16 %v770
    %v3408 = vunpack.c.h.b16 %v770
    %v3409 = vunpack.c.l.b16 %v771
    %v3410 = vunpack.c.h.b16 %v771
    %v3411 = vunpack.c.l.b16 %v772
    %v3412 = vunpack.c.h.b16 %v772
    %v3413 = vunpack.c.l.b16 %v773
    %v3414 = vunpack.c.h.b16 %v773
    %v3415 = vunpack.c.l.b16 %v774
    %v3416 = vunpack.c.h.b16 %v774
    %v3417 = vunpack.c.l.b16 %v775
    %v3418 = vunpack.c.h.b16 %v775
    %v3419 = vunpack.c.l.b16 %v776
    %v3420 = vunpack.c.h.b16 %v776
    %v3421 = vunpack.c.l.b16 %v777
    %v3422 = vunpack.c.h.b16 %v777
    %v3423 = vunpack.c.l.b16 %v778
    %v3424 = vunpack.c.h.b16 %v778
    %v3425 = vunpack.c.l.b16 %v779
    %v3426 = vunpack.c.h.b16 %v779
    %v3427 = vunpack.c.l.b16 %v780
    %v3428 = vunpack.c.h.b16 %v780
    %v3429 = vunpack.c.l.b16 %v781
    %v3430 = vunpack.c.h.b16 %v781
    %v3431 = vunpack.c.l.b16 %v782
    %v3432 = vunpack.c.h.b16 %v782
    %v3433 = vunpack.c.l.b16 %v783
    %v3434 = vunpack.c.h.b16 %v783
    %v3435 = vunpack.c.l.b16 %v784
    %v3436 = vunpack.c.h.b16 %v784
    %v3437 = vunpack.c.l.b16 %v785
    %v3438 = vunpack.c.h.b16 %v785
    %v3439 = vunpack.c.l.b16 %v786
    %v3440 = vunpack.c.h.b16 %v786
    %v3441 = vunpack.c.l.b16 %v787
    %v3442 = vunpack.c.h.b16 %v787
    %v3443 = vunpack.c.l.b16 %v788
    %v3444 = vunpack.c.h.b16 %v788
    %v3445 = vunpack.c.l.b16 %v789
    %v3446 = vunpack.c.h.b16 %v789
    %v3447 = vunpack.c.l.b16 %v790
    %v3448 = vunpack.c.h.b16 %v790
    %v3449 = vunpack.c.l.b16 %v791
    %v3450 = vunpack.c.h.b16 %v791
    %v3451 = vunpack.c.l.b16 %v792
    %v3452 = vunpack.c.h.b16 %v792
    %v3453 = vunpack.c.l.b16 %v793
    %v3454 = vunpack.c.h.b16 %v793
    %v3455 = vunpack.c.l.b16 %v794
    %v3456 = vunpack.c.h.b16 %v794
    %v3457 = vunpack.c.l.b16 %v795
    %v3458 = vunpack.c.h.b16 %v795
    %v3459 = vunpack.c.l.b16 %v796
    %v3460 = vunpack.c.h.b16 %v796
    %v3461 = vunpack.c.l.b16 %v797
    %v3462 = vunpack.c.h.b16 %v797
    %v3463 = vunpack.c.l.b16 %v798
    %v3464 = vunpack.c.h.b16 %v798
    %v3465 = vunpack.c.l.b16 %v799
    %v3466 = vunpack.c.h.b16 %v799
    %v3467 = vunpack.c.l.b16 %v800
    %v3468 = vunpack.c.h.b16 %v800
    %v3469 = vunpack.c.l.b16 %v801
    %v3470 = vunpack.c.h.b16 %v801
    %v3471 = vunpack.c.l.b16 %v802
    %v3472 = vunpack.c.h.b16 %v802
    %v3473 = vunpack.c.l.b16 %v803
    %v3474 = vunpack.c.h.b16 %v803
    %v3475 = vunpack.c.l.b16 %v804
    %v3476 = vunpack.c.h.b16 %v804
    %v3477 = vunpack.c.l.b16 %v805
    %v3478 = vunpack.c.h.b16 %v805
    %v3479 = vunpack.c.l.b16 %v806
    %v3480 = vunpack.c.h.b16 %v806
    %v3481 = vunpack.c.l.b16 %v807
    %v3482 = vunpack.c.h.b16 %v807
    %v3483 = vunpack.c.l.b16 %v808
    %v3484 = vunpack.c.h.b16 %v808
    %v3485 = vunpack.c.l.b16 %v809
    %v3486 = vunpack.c.h.b16 %v809
    %v3487 = vunpack.c.l.b16 %v810
    %v3488 = vunpack.c.h.b16 %v810
    %v3489 = vunpack.c.l.b16 %v811
    %v3490 = vunpack.c.h.b16 %v811
    %v3491 = vunpack.c.l.b16 %v812
    %v3492 = vunpack.c.h.b16 %v812
    %v3493 = vunpack.c.l.b16 %v813
    %v3494 = vunpack.c.h.b16 %v813
    %v3495 = vunpack.c.l.b16 %v814
    %v3496 = vunpack.c.h.b16 %v814
    %v3497 = vunpack.c.l.b16 %v815
    %v3498 = vunpack.c.h.b16 %v815
    %v3499 = vunpack.c.l.b16 %v816
    %v3500 = vunpack.c.h.b16 %v816
    %v3501 = vunpack.c.l.b16 %v817
    %v3502 = vunpack.c.h.b16 %v817
    %v3503 = vunpack.c.l.b16 %v818
    %v3504 = vunpack.c.h.b16 %v818
    %v3505 = vunpack.c.l.b16 %v819
    %v3506 = vunpack.c.h.b16 %v819
    %v3507 = vunpack.c.l.b16 %v820
    %v3508 = vunpack.c.h.b16 %v820
    %v3509 = vunpack.c.l.b16 %v821
    %v3510 = vunpack.c.h.b16 %v821
    %v3511 = vunpack.c.l.b16 %v822
    %v3512 = vunpack.c.h.b16 %v822
    %v3513 = vunpack.c.l.b16 %v823
    %v3514 = vunpack.c.h.b16 %v823
    %v3515 = vunpack.c.l.b16 %v824
    %v3516 = vunpack.c.h.b16 %v824
    %v3517 = vunpack.c.l.b16 %v825
    %v3518 = vunpack.c.h.b16 %v825
    %v3519 = vunpack.c.l.b16 %v826
    %v3520 = vunpack.c.h.b16 %v826
    %v3521 = vunpack.c.l.b16 %v827
    %v3522 = vunpack.c.h.b16 %v827
    %v3523 = vunpack.c.l.b16 %v828
    %v3524 = vunpack.c.h.b16 %v828
    %v3525 = vunpack.c.l.b16 %v829
    %v3526 = vunpack.c.h.b16 %v829
    %v3527 = vunpack.c.l.b16 %v830
    %v3528 = vunpack.c.h.b16 %v830
    %v3529 = vunpack.c.l.b16 %v831
    %v3530 = vunpack.c.h.b16 %v831
    %v3531 = vunpack.c.l.b16 %v832
    %v3532 = vunpack.c.h.b16 %v832
    %v3533 = vunpack.c.l.b16 %v833
    %v3534 = vunpack.c.h.b16 %v833
    %v3535 = vunpack.c.l.b16 %v834
    %v3536 = vunpack.c.h.b16 %v834
    %v3537 = vunpack.c.l.b16 %v835
    %v3538 = vunpack.c.h.b16 %v835
    %v3539 = vunpack.c.l.b16 %v836
    %v3540 = vunpack.c.h.b16 %v836
    %v3541 = vunpack.c.l.b16 %v837
    %v3542 = vunpack.c.h.b16 %v837
    %v3543 = vunpack.c.l.b16 %v838
    %v3544 = vunpack.c.h.b16 %v838
    %v3545 = vunpack.c.l.b16 %v839
    %v3546 = vunpack.c.h.b16 %v839
    %v3547 = vunpack.c.l.b16 %v840
    %v3548 = vunpack.c.h.b16 %v840
    %v3549 = vunpack.c.l.b16 %v841
    %v3550 = vunpack.c.h.b16 %v841
    %v3551 = vunpack.c.l.b16 %v842
    %v3552 = vunpack.c.h.b16 %v842
    %v3553 = vunpack.c.l.b16 %v843
    %v3554 = vunpack.c.h.b16 %v843
    %v3555 = vunpack.c.l.b16 %v844
    %v3556 = vunpack.c.h.b16 %v844
    %v3557 = vunpack.c.l.b16 %v845
    %v3558 = vunpack.c.h.b16 %v845
    %v3559 = vunpack.c.l.b16 %v846
    %v3560 = vunpack.c.h.b16 %v846
    %v3561 = vunpack.c.l.b16 %v847
    %v3562 = vunpack.c.h.b16 %v847
    %v3563 = vunpack.c.l.b16 %v848
    %v3564 = vunpack.c.h.b16 %v848
    %v3565 = vunpack.c.l.b16 %v849
    %v3566 = vunpack.c.h.b16 %v849
    %v3567 = vunpack.c.l.b16 %v850
    %v3568 = vunpack.c.h.b16 %v850
    %v3569 = vunpack.c.l.b16 %v851
    %v3570 = vunpack.c.h.b16 %v851
    %v3571 = vunpack.c.l.b16 %v852
    %v3572 = vunpack.c.h.b16 %v852
    %v3573 = vunpack.c.l.b16 %v853
    %v3574 = vunpack.c.h.b16 %v853
    %v3575 = vunpack.c.l.b16 %v854
    %v3576 = vunpack.c.h.b16 %v854
    %v3577 = vunpack.c.l.b16 %v855
    %v3578 = vunpack.c.h.b16 %v855
    %v3579 = vunpack.c.l.b16 %v856
    %v3580 = vunpack.c.h.b16 %v856
    %v3581 = vunpack.c.l.b16 %v857
    %v3582 = vunpack.c.h.b16 %v857
    %v3583 = vunpack.c.l.b16 %v858
    %v3584 = vunpack.c.h.b16 %v858
    %v3585 = vunpack.c.l.b16 %v859
    %v3586 = vunpack.c.h.b16 %v859
    %v3587 = vunpack.c.l.b16 %v860
    %v3588 = vunpack.c.h.b16 %v860
    %v3589 = vunpack.c.l.b16 %v861
    %v3590 = vunpack.c.h.b16 %v861
    %v3591 = vunpack.c.l.b16 %v862
    %v3592 = vunpack.c.h.b16 %v862
    %v3593 = vunpack.c.l.b16 %v863
    %v3594 = vunpack.c.h.b16 %v863
    %v3595 = vunpack.c.l.b16 %v864
    %v3596 = vunpack.c.h.b16 %v864
    %v3597 = vunpack.c.l.b16 %v865
    %v3598 = vunpack.c.h.b16 %v865
    %v3599 = vunpack.c.l.b16 %v866
    %v3600 = vunpack.c.h.b16 %v866
    %v3601 = vunpack.c.l.b16 %v867
    %v3602 = vunpack.c.h.b16 %v867
    %v3603 = vunpack.c.l.b16 %v868
    %v3604 = vunpack.c.h.b16 %v868
    %v3605 = vunpack.c.l.b16 %v869
    %v3606 = vunpack.c.h.b16 %v869
    %v3607 = vunpack.c.l.b16 %v870
    %v3608 = vunpack.c.h.b16 %v870
    %v3609 = vunpack.c.l.b16 %v871
    %v3610 = vunpack.c.h.b16 %v871
    %v3611 = vunpack.c.l.b16 %v872
    %v3612 = vunpack.c.h.b16 %v872
    %v3613 = vunpack.c.l.b16 %v873
    %v3614 = vunpack.c.h.b16 %v873
    %v3615 = vunpack.c.l.b16 %v874
    %v3616 = vunpack.c.h.b16 %v874
    %v3617 = vunpack.c.l.b16 %v875
    %v3618 = vunpack.c.h.b16 %v875
    %v3619 = vunpack.c.l.b16 %v876
    %v3620 = vunpack.c.h.b16 %v876
    %v3621 = vunpack.c.l.b16 %v877
    %v3622 = vunpack.c.h.b16 %v877
    %v3623 = vunpack.c.l.b16 %v878
    %v3624 = vunpack.c.h.b16 %v878
    %v3625 = vunpack.c.l.b16 %v879
    %v3626 = vunpack.c.h.b16 %v879
    %v3627 = vunpack.c.l.b16 %v880
    %v3628 = vunpack.c.h.b16 %v880
    %v3629 = vunpack.c.l.b16 %v881
    %v3630 = vunpack.c.h.b16 %v881
    %v3631 = vunpack.c.l.b16 %v882
    %v3632 = vunpack.c.h.b16 %v882
    %v3633 = vunpack.c.l.b16 %v883
    %v3634 = vunpack.c.h.b16 %v883
    %v3635 = vunpack.c.l.b16 %v884
    %v3636 = vunpack.c.h.b16 %v884
    %v3637 = vunpack.c.l.b16 %v885
    %v3638 = vunpack.c.h.b16 %v885
    %v3639 = vunpack.c.l.b16 %v886
    %v3640 = vunpack.c.h.b16 %v886
    %v3641 = vunpack.c.l.b16 %v887
    %v3642 = vunpack.c.h.b16 %v887
    %v3643 = vunpack.c.l.b16 %v888
    %v3644 = vunpack.c.h.b16 %v888
    %v3645 = vunpack.c.l.b16 %v889
    %v3646 = vunpack.c.h.b16 %v889
    %v3647 = vunpack.c.l.b16 %v890
    %v3648 = vunpack.c.h.b16 %v890
    %v3649 = vunpack.c.l.b16 %v891
    %v3650 = vunpack.c.h.b16 %v891
    %v3651 = vunpack.c.l.b16 %v892
    %v3652 = vunpack.c.h.b16 %v892
    %v3653 = vunpack.c.l.b16 %v893
    %v3654 = vunpack.c.h.b16 %v893
    %v3655 = vunpack.c.l.b16 %v894
    %v3656 = vunpack.c.h.b16 %v894
    %v3657 = vunpack.c.l.b16 %v895
    %v3658 = vunpack.c.h.b16 %v895
    %v3659 = vunpack.c.l.b16 %v896
    %v3660 = vunpack.c.h.b16 %v896
    %v3661 = vunpack.c.l.b16 %v897
    %v3662 = vunpack.c.h.b16 %v897
    %v3663 = vunpack.c.l.b16 %v898
    %v3664 = vunpack.c.h.b16 %v898
    %v3665 = vunpack.c.l.b16 %v899
    %v3666 = vunpack.c.h.b16 %v899
    %v3667 = vunpack.c.l.b16 %v900
    %v3668 = vunpack.c.h.b16 %v900
    %v3669 = vunpack.c.l.b16 %v901
    %v3670 = vunpack.c.h.b16 %v901
    %v3671 = vunpack.c.l.b16 %v902
    %v3672 = vunpack.c.h.b16 %v902
    %v3673 = vunpack.c.l.b16 %v903
    %v3674 = vunpack.c.h.b16 %v903
    %v3675 = vunpack.c.l.b16 %v904
    %v3676 = vunpack.c.h.b16 %v904
    %v3677 = vunpack.c.l.b16 %v905
    %v3678 = vunpack.c.h.b16 %v905
    %v3679 = vunpack.c.l.b16 %v906
    %v3680 = vunpack.c.h.b16 %v906
    %v3681 = vunpack.c.l.b16 %v907
    %v3682 = vunpack.c.h.b16 %v907
    %v3683 = vunpack.c.l.b16 %v908
    %v3684 = vunpack.c.h.b16 %v908
    %v3685 = vunpack.c.l.b16 %v909
    %v3686 = vunpack.c.h.b16 %v909
    %v3687 = vunpack.c.l.b16 %v910
    %v3688 = vunpack.c.h.b16 %v910
    %v3689 = vunpack.c.l.b16 %v911
    %v3690 = vunpack.c.h.b16 %v911
    %v3691 = vunpack.c.l.b16 %v912
    %v3692 = vunpack.c.h.b16 %v912
    %v3693 = vunpack.c.l.b16 %v913
    %v3694 = vunpack.c.h.b16 %v913
    %v3695 = vunpack.c.l.b16 %v914
    %v3696 = vunpack.c.h.b16 %v914
    %v3697 = vunpack.c.l.b16 %v915
    %v3698 = vunpack.c.h.b16 %v915
    %v3699 = vunpack.c.l.b16 %v916
    %v3700 = vunpack.c.h.b16 %v916
    %v3701 = vunpack.c.l.b16 %v917
    %v3702 = vunpack.c.h.b16 %v917
    %v3703 = vunpack.c.l.b16 %v918
    %v3704 = vunpack.c.h.b16 %v918
    %v3705 = vunpack.c.l.b16 %v919
    %v3706 = vunpack.c.h.b16 %v919
    %v3707 = vunpack.c.l.b16 %v920
    %v3708 = vunpack.c.h.b16 %v920
    %v3709 = vunpack.c.l.b16 %v921
    %v3710 = vunpack.c.h.b16 %v921
    %v3711 = vunpack.c.l.b16 %v922
    %v3712 = vunpack.c.h.b16 %v922
    %v3713 = vunpack.c.l.b16 %v923
    %v3714 = vunpack.c.h.b16 %v923
    %v3715 = vunpack.c.l.b16 %v924
    %v3716 = vunpack.c.h.b16 %v924
    %v3717 = vunpack.c.l.b16 %v925
    %v3718 = vunpack.c.h.b16 %v925
    %v3719 = vunpack.c.l.b16 %v926
    %v3720 = vunpack.c.h.b16 %v926
    %v3721 = vunpack.c.l.b16 %v927
    %v3722 = vunpack.c.h.b16 %v927
    %v3723 = vunpack.c.l.b16 %v928
    %v3724 = vunpack.c.h.b16 %v928
    %v3725 = vunpack.c.l.b16 %v929
    %v3726 = vunpack.c.h.b16 %v929
    %v3727 = vunpack.c.l.b16 %v930
    %v3728 = vunpack.c.h.b16 %v930
    %v3729 = vunpack.c.l.b16 %v931
    %v3730 = vunpack.c.h.b16 %v931
    %v3731 = vunpack.c.l.b16 %v932
    %v3732 = vunpack.c.h.b16 %v932
    %v3733 = vunpack.c.l.b16 %v933
    %v3734 = vunpack.c.h.b16 %v933
    %v3735 = vunpack.c.l.b16 %v934
    %v3736 = vunpack.c.h.b16 %v934
    %v3737 = vunpack.c.l.b16 %v935
    %v3738 = vunpack.c.h.b16 %v935
    %v3739 = vunpack.c.l.b16 %v936
    %v3740 = vunpack.c.h.b16 %v936
    %v3741 = vunpack.c.l.b16 %v937
    %v3742 = vunpack.c.h.b16 %v937
    %v3743 = vunpack.c.l.b16 %v938
    %v3744 = vunpack.c.h.b16 %v938
    %v3745 = vunpack.c.l.b16 %v939
    %v3746 = vunpack.c.h.b16 %v939
    %v3747 = vunpack.c.l.b16 %v940
    %v3748 = vunpack.c.h.b16 %v940
    %v3749 = vunpack.c.l.b16 %v941
    %v3750 = vunpack.c.h.b16 %v941
    %v3751 = vunpack.c.l.b16 %v942
    %v3752 = vunpack.c.h.b16 %v942
    %v3753 = vunpack.c.l.b16 %v943
    %v3754 = vunpack.c.h.b16 %v943
    %v3755 = vunpack.c.l.b16 %v944
    %v3756 = vunpack.c.h.b16 %v944
    %v3757 = vunpack.c.l.b16 %v945
    %v3758 = vunpack.c.h.b16 %v945
    %v3759 = vunpack.c.l.b16 %v946
    %v3760 = vunpack.c.h.b16 %v946
    %v3761 = vunpack.c.l.b16 %v947
    %v3762 = vunpack.c.h.b16 %v947
    %v3763 = vunpack.c.l.b16 %v948
    %v3764 = vunpack.c.h.b16 %v948
    %v3765 = vunpack.c.l.b16 %v949
    %v3766 = vunpack.c.h.b16 %v949
    %v3767 = vunpack.c.l.b16 %v950
    %v3768 = vunpack.c.h.b16 %v950
    %v3769 = vunpack.c.l.b16 %v951
    %v3770 = vunpack.c.h.b16 %v951
    %v3771 = vunpack.c.l.b16 %v952
    %v3772 = vunpack.c.h.b16 %v952
    %v3773 = vunpack.c.l.b16 %v953
    %v3774 = vunpack.c.h.b16 %v953
    %v3775 = vunpack.c.l.b16 %v954
    %v3776 = vunpack.c.h.b16 %v954
    %v3777 = vunpack.c.l.b16 %v955
    %v3778 = vunpack.c.h.b16 %v955
    %v3779 = vunpack.c.l.b16 %v956
    %v3780 = vunpack.c.h.b16 %v956
    %v3781 = vunpack.c.l.b16 %v957
    %v3782 = vunpack.c.h.b16 %v957
    %v3783 = vunpack.c.l.b16 %v958
    %v3784 = vunpack.c.h.b16 %v958
    %v3785 = vunpack.c.l.b16 %v959
    %v3786 = vunpack.c.h.b16 %v959
    %v3787 = vunpack.c.l.b16 %v960
    %v3788 = vunpack.c.h.b16 %v960
    %v3789 = vunpack.c.l.b16 %v961
    %v3790 = vunpack.c.h.b16 %v961
    %v3791 = vunpack.c.l.b16 %v962
    %v3792 = vunpack.c.h.b16 %v962
    %v3793 = vunpack.c.l.b16 %v963
    %v3794 = vunpack.c.h.b16 %v963
    %v3795 = vunpack.c.l.b16 %v964
    %v3796 = vunpack.c.h.b16 %v964
    %v3797 = vunpack.c.l.b16 %v965
    %v3798 = vunpack.c.h.b16 %v965
    %v3799 = vunpack.c.l.b16 %v966
    %v3800 = vunpack.c.h.b16 %v966
    %v3801 = vunpack.c.l.b16 %v967
    %v3802 = vunpack.c.h.b16 %v967
    %v3803 = vunpack.c.l.b16 %v968
    %v3804 = vunpack.c.h.b16 %v968
    %v3805 = vunpack.c.l.b16 %v969
    %v3806 = vunpack.c.h.b16 %v969
    %v3807 = vunpack.c.l.b16 %v970
    %v3808 = vunpack.c.h.b16 %v970
    %v3809 = vunpack.c.l.b16 %v971
    %v3810 = vunpack.c.h.b16 %v971
    %v3811 = vunpack.c.l.b16 %v972
    %v3812 = vunpack.c.h.b16 %v972
    %v3813 = vunpack.c.l.b16 %v973
    %v3814 = vunpack.c.h.b16 %v973
    %v3815 = vunpack.c.l.b16 %v974
    %v3816 = vunpack.c.h.b16 %v974
    %v3817 = vunpack.c.l.b16 %v975
    %v3818 = vunpack.c.h.b16 %v975
    %v3819 = vunpack.c.l.b16 %v976
    %v3820 = vunpack.c.h.b16 %v976
    %v3821 = vunpack.c.l.b16 %v977
    %v3822 = vunpack.c.h.b16 %v977
    %v3823 = vunpack.c.l.b16 %v978
    %v3824 = vunpack.c.h.b16 %v978
    %v3825 = vunpack.c.l.b16 %v979
    %v3826 = vunpack.c.h.b16 %v979
    %v3827 = vunpack.c.l.b16 %v980
    %v3828 = vunpack.c.h.b16 %v980
    %v3829 = vunpack.c.l.b16 %v981
    %v3830 = vunpack.c.h.b16 %v981
    %v3831 = vunpack.c.l.b16 %v982
    %v3832 = vunpack.c.h.b16 %v982
    %v3833 = vunpack.c.l.b16 %v983
    %v3834 = vunpack.c.h.b16 %v983
    %v3835 = vunpack.c.l.b16 %v984
    %v3836 = vunpack.c.h.b16 %v984
    %v3837 = vunpack.c.l.b16 %v985
    %v3838 = vunpack.c.h.b16 %v985
    %v3839 = vunpack.c.l.b16 %v986
    %v3840 = vunpack.c.h.b16 %v986
    %v3841 = vunpack.c.l.b16 %v987
    %v3842 = vunpack.c.h.b16 %v987
    %v3843 = vunpack.c.l.b16 %v988
    %v3844 = vunpack.c.h.b16 %v988
    %v3845 = vunpack.c.l.b16 %v989
    %v3846 = vunpack.c.h.b16 %v989
    %v3847 = vunpack.c.l.b16 %v990
    %v3848 = vunpack.c.h.b16 %v990
    %v3849 = vunpack.c.l.b16 %v991
    %v3850 = vunpack.c.h.b16 %v991
    %v3851 = vunpack.c.l.b16 %v992
    %v3852 = vunpack.c.h.b16 %v992
    %v3853 = vunpack.c.l.b16 %v993
    %v3854 = vunpack.c.h.b16 %v993
    %v3855 = vunpack.c.l.b16 %v994
    %v3856 = vunpack.c.h.b16 %v994
    %v3857 = vunpack.c.l.b16 %v995
    %v3858 = vunpack.c.h.b16 %v995
    %v3859 = vunpack.c.l.b16 %v996
    %v3860 = vunpack.c.h.b16 %v996
    %v3861 = vunpack.c.l.b16 %v997
    %v3862 = vunpack.c.h.b16 %v997
    %v3863 = vunpack.c.l.b16 %v998
    %v3864 = vunpack.c.h.b16 %v998
    %v3865 = vunpack.c.l.b16 %v999
    %v3866 = vunpack.c.h.b16 %v999
    %v3867 = vunpack.c.l.b16 %v1000
    %v3868 = vunpack.c.h.b16 %v1000
    %v3869 = vunpack.c.l.b16 %v1001
    %v3870 = vunpack.c.h.b16 %v1001
    %v3871 = vunpack.c.l.b16 %v1002
    %v3872 = vunpack.c.h.b16 %v1002
    %v3873 = vunpack.c.l.b16 %v1003
    %v3874 = vunpack.c.h.b16 %v1003
    %v3875 = vunpack.c.l.b16 %v1004
    %v3876 = vunpack.c.h.b16 %v1004
    %v3877 = vunpack.c.l.b16 %v1005
    %v3878 = vunpack.c.h.b16 %v1005
    %v3879 = vunpack.c.l.b16 %v1006
    %v3880 = vunpack.c.h.b16 %v1006
    %v3881 = vunpack.c.l.b16 %v1007
    %v3882 = vunpack.c.h.b16 %v1007
    %v3883 = vunpack.c.l.b16 %v1008
    %v3884 = vunpack.c.h.b16 %v1008
    %v3885 = vunpack.c.l.b16 %v1009
    %v3886 = vunpack.c.h.b16 %v1009
    %v3887 = vunpack.c.l.b16 %v1010
    %v3888 = vunpack.c.h.b16 %v1010
    %v3889 = vunpack.c.l.b16 %v1011
    %v3890 = vunpack.c.h.b16 %v1011
    %v3891 = vunpack.c.l.b16 %v1012
    %v3892 = vunpack.c.h.b16 %v1012
    %v3893 = vunpack.c.l.b16 %v1013
    %v3894 = vunpack.c.h.b16 %v1013
    %v3895 = vunpack.c.l.b16 %v1014
    %v3896 = vunpack.c.h.b16 %v1014
    %v3897 = vunpack.c.l.b16 %v1015
    %v3898 = vunpack.c.h.b16 %v1015
    %v3899 = vunpack.c.l.b16 %v1016
    %v3900 = vunpack.c.h.b16 %v1016
    %v3901 = vunpack.c.l.b16 %v1017
    %v3902 = vunpack.c.h.b16 %v1017
    %v3903 = vunpack.c.l.b16 %v1018
    %v3904 = vunpack.c.h.b16 %v1018
    %v3905 = vunpack.c.l.b16 %v1019
    %v3906 = vunpack.c.h.b16 %v1019
    %v3907 = vunpack.c.l.b16 %v1020
    %v3908 = vunpack.c.h.b16 %v1020
    %v3909 = vunpack.c.l.b16 %v1021
    %v3910 = vunpack.c.h.b16 %v1021
    %v3911 = vunpack.c.l.b16 %v1022
    %v3912 = vunpack.c.h.b16 %v1022
    %v3913 = vunpack.c.l.b16 %v1023
    %v3914 = vunpack.c.h.b16 %v1023
    %v3915 = vunpack.c.l.b16 %v1024
    %v3916 = vunpack.c.h.b16 %v1024
    %v3917 = vunpack.c.l.b16 %v1025
    %v3918 = vunpack.c.h.b16 %v1025
    %v3919 = vunpack.c.l.b16 %v1026
    %v3920 = vunpack.c.h.b16 %v1026
    %v3921 = vunpack.c.l.b16 %v1027
    %v3922 = vunpack.c.h.b16 %v1027
    %v3923 = vunpack.c.l.b16 %v1028
    %v3924 = vunpack.c.h.b16 %v1028
    %v3925 = vunpack.c.l.b16 %v1029
    %v3926 = vunpack.c.h.b16 %v1029
    %v3927 = vunpack.c.l.b16 %v1030
    %v3928 = vunpack.c.h.b16 %v1030
    %v3929 = vunpack.c.l.b16 %v1031
    %v3930 = vunpack.c.h.b16 %v1031
    %v3931 = vunpack.c.l.b16 %v1032
    %v3932 = vunpack.c.h.b16 %v1032
    %v3933 = vunpack.c.l.b16 %v1033
    %v3934 = vunpack.c.h.b16 %v1033
    %v3935 = vunpack.c.l.b16 %v1034
    %v3936 = vunpack.c.h.b16 %v1034
    %v3937 = vunpack.c.l.b16 %v1035
    %v3938 = vunpack.c.h.b16 %v1035
    %v3939 = vunpack.c.l.b16 %v1036
    %v3940 = vunpack.c.h.b16 %v1036
    %v3941 = vunpack.c.l.b16 %v1037
    %v3942 = vunpack.c.h.b16 %v1037
    %v3943 = vunpack.c.l.b16 %v1038
    %v3944 = vunpack.c.h.b16 %v1038
    %v3945 = vunpack.c.l.b16 %v1039
    %v3946 = vunpack.c.h.b16 %v1039
    %v3947 = vunpack.c.l.b16 %v1040
    %v3948 = vunpack.c.h.b16 %v1040
    %v3949 = vunpack.c.l.b16 %v1041
    %v3950 = vunpack.c.h.b16 %v1041
    %v3951 = vunpack.c.l.b16 %v1042
    %v3952 = vunpack.c.h.b16 %v1042
    %v3953 = vunpack.c.l.b16 %v1043
    %v3954 = vunpack.c.h.b16 %v1043
    %v3955 = vunpack.c.l.b16 %v1044
    %v3956 = vunpack.c.h.b16 %v1044
    %v3957 = vunpack.c.l.b16 %v1045
    %v3958 = vunpack.c.h.b16 %v1045
    %v3959 = vunpack.c.l.b16 %v1046
    %v3960 = vunpack.c.h.b16 %v1046
    %v3961 = vunpack.c.l.b16 %v1047
    %v3962 = vunpack.c.h.b16 %v1047
    %v3963 = vunpack.c.l.b16 %v1048
    %v3964 = vunpack.c.h.b16 %v1048
    %v3965 = vunpack.c.l.b16 %v1049
    %v3966 = vunpack.c.h.b16 %v1049
    %v3967 = vunpack.c.l.b16 %v1050
    %v3968 = vunpack.c.h.b16 %v1050
    %v3969 = vunpack.c.l.b16 %v1051
    %v3970 = vunpack.c.h.b16 %v1051
    %v3971 = vunpack.c.l.b16 %v1052
    %v3972 = vunpack.c.h.b16 %v1052
    %v3973 = vunpack.c.l.b16 %v1053
    %v3974 = vunpack.c.h.b16 %v1053
    %v3975 = vunpack.c.l.b16 %v1054
    %v3976 = vunpack.c.h.b16 %v1054
    %v3977 = vunpack.c.l.b16 %v1055
    %v3978 = vunpack.c.h.b16 %v1055
    %v3979 = vunpack.c.l.b16 %v1056
    %v3980 = vunpack.c.h.b16 %v1056
    %v3981 = vunpack.c.l.b16 %v1057
    %v3982 = vunpack.c.h.b16 %v1057
    %v3983 = vunpack.c.l.b16 %v1058
    %v3984 = vunpack.c.h.b16 %v1058
    %v3985 = vunpack.c.l.b16 %v1059
    %v3986 = vunpack.c.h.b16 %v1059
    %v3987 = vunpack.c.l.b16 %v1060
    %v3988 = vunpack.c.h.b16 %v1060
    %v3989 = vunpack.c.l.b16 %v1061
    %v3990 = vunpack.c.h.b16 %v1061
    %v3991 = vunpack.c.l.b16 %v1062
    %v3992 = vunpack.c.h.b16 %v1062
    %v3993 = vunpack.c.l.b16 %v1063
    %v3994 = vunpack.c.h.b16 %v1063
    %v3995 = vunpack.c.l.b16 %v1064
    %v3996 = vunpack.c.h.b16 %v1064
    %v3997 = vunpack.c.l.b16 %v1065
    %v3998 = vunpack.c.h.b16 %v1065
    %v3999 = vunpack.c.l.b16 %v1066
    %v4000 = vunpack.c.h.b16 %v1066
    %v4001 = vunpack.c.l.b16 %v1067
    %v4002 = vunpack.c.h.b16 %v1067
    %v4003 = vunpack.c.l.b16 %v1068
    %v4004 = vunpack.c.h.b16 %v1068
    %v4005 = vunpack.c.l.b16 %v1069
    %v4006 = vunpack.c.h.b16 %v1069
    %v4007 = vunpack.c.l.b16 %v1070
    %v4008 = vunpack.c.h.b16 %v1070
    %v4009 = vunpack.c.l.b16 %v1071
    %v4010 = vunpack.c.h.b16 %v1071
    %v4011 = vunpack.c.l.b16 %v1072
    %v4012 = vunpack.c.h.b16 %v1072
    %v4013 = vunpack.c.l.b16 %v1073
    %v4014 = vunpack.c.h.b16 %v1073
    %v4015 = vunpack.c.l.b16 %v1074
    %v4016 = vunpack.c.h.b16 %v1074
    %v4017 = vunpack.c.l.b16 %v1075
    %v4018 = vunpack.c.h.b16 %v1075
    %v4019 = vunpack.c.l.b16 %v1076
    %v4020 = vunpack.c.h.b16 %v1076
    %v4021 = vunpack.c.l.b16 %v1077
    %v4022 = vunpack.c.h.b16 %v1077
    %v4023 = vunpack.c.l.b16 %v1078
    %v4024 = vunpack.c.h.b16 %v1078
    %v4025 = vunpack.c.l.b16 %v1079
    %v4026 = vunpack.c.h.b16 %v1079
    %v4027 = vunpack.c.l.b16 %v1080
    %v4028 = vunpack.c.h.b16 %v1080
    %v4029 = vunpack.c.l.b16 %v1081
    %v4030 = vunpack.c.h.b16 %v1081
    %v4031 = vunpack.c.l.b16 %v1082
    %v4032 = vunpack.c.h.b16 %v1082
    %v4033 = vunpack.c.l.b16 %v1083
    %v4034 = vunpack.c.h.b16 %v1083
    %v4035 = vunpack.c.l.b16 %v1084
    %v4036 = vunpack.c.h.b16 %v1084
    %v4037 = vunpack.c.l.b16 %v1085
    %v4038 = vunpack.c.h.b16 %v1085
    %v4039 = vunpack.c.l.b16 %v1086
    %v4040 = vunpack.c.h.b16 %v1086
    %v4041 = vunpack.c.l.b16 %v1087
    %v4042 = vunpack.c.h.b16 %v1087
    %v4043 = vunpack.c.l.b16 %v1088
    %v4044 = vunpack.c.h.b16 %v1088
    %v4045 = vunpack.c.l.b16 %v1089
    %v4046 = vunpack.c.h.b16 %v1089
    %v4047 = vunpack.c.l.b16 %v1090
    %v4048 = vunpack.c.h.b16 %v1090
    %v4049 = vunpack.c.l.b16 %v1091
    %v4050 = vunpack.c.h.b16 %v1091
    %v4051 = vunpack.c.l.b16 %v1092
    %v4052 = vunpack.c.h.b16 %v1092
    %v4053 = vunpack.c.l.b16 %v1093
    %v4054 = vunpack.c.h.b16 %v1093
    %v4055 = vunpack.c.l.b16 %v1094
    %v4056 = vunpack.c.h.b16 %v1094
    %v4057 = vunpack.c.l.b16 %v1095
    %v4058 = vunpack.c.h.b16 %v1095
    %v4059 = vunpack.c.l.b16 %v1096
    %v4060 = vunpack.c.h.b16 %v1096
    %v4061 = vunpack.c.l.b16 %v1097
    %v4062 = vunpack.c.h.b16 %v1097
    %v4063 = vunpack.c.l.b16 %v1098
    %v4064 = vunpack.c.h.b16 %v1098
    %v4065 = vunpack.c.l.b16 %v1099
    %v4066 = vunpack.c.h.b16 %v1099
    %v4067 = vunpack.c.l.b16 %v1100
    %v4068 = vunpack.c.h.b16 %v1100
    %v4069 = vunpack.c.l.b16 %v1101
    %v4070 = vunpack.c.h.b16 %v1101
    %v4071 = vunpack.c.l.b16 %v1102
    %v4072 = vunpack.c.h.b16 %v1102
    %v4073 = vunpack.c.l.b16 %v1103
    %v4074 = vunpack.c.h.b16 %v1103
    %v4075 = vunpack.c.l.b16 %v1104
    %v4076 = vunpack.c.h.b16 %v1104
    %v4077 = vunpack.c.l.b16 %v1105
    %v4078 = vunpack.c.h.b16 %v1105
    %v4079 = vunpack.c.l.b16 %v1106
    %v4080 = vunpack.c.h.b16 %v1106
    %v4081 = vunpack.c.l.b16 %v1107
    %v4082 = vunpack.c.h.b16 %v1107
    %v4083 = vunpack.c.l.b16 %v1108
    %v4084 = vunpack.c.h.b16 %v1108
    %v4085 = vunpack.c.l.b16 %v1109
    %v4086 = vunpack.c.h.b16 %v1109
    %v4087 = vunpack.c.l.b16 %v1110
    %v4088 = vunpack.c.h.b16 %v1110
    %v4089 = vunpack.c.l.b16 %v1111
    %v4090 = vunpack.c.h.b16 %v1111
    %v4091 = vunpack.c.l.b16 %v1112
    %v4092 = vunpack.c.h.b16 %v1112
    %v4093 = vunpack.c.l.b16 %v1113
    %v4094 = vunpack.c.h.b16 %v1113
    %v4095 = vunpack.c.l.b16 %v1114
    %v4096 = vunpack.c.h.b16 %v1114
    %v4097 = vunpack.c.l.b16 %v1115
    %v4098 = vunpack.c.h.b16 %v1115
    %v4099 = vunpack.c.l.b16 %v1116
    %v4100 = vunpack.c.h.b16 %v1116
    %v4101 = vunpack.c.l.b16 %v1117
    %v4102 = vunpack.c.h.b16 %v1117
    %v4103 = vunpack.c.l.b16 %v1118
    %v4104 = vunpack.c.h.b16 %v1118
    %v4105 = vunpack.c.l.b16 %v1119
    %v4106 = vunpack.c.h.b16 %v1119
    %v4107 = vunpack.c.l.b16 %v1120
    %v4108 = vunpack.c.h.b16 %v1120
    %v4109 = vunpack.c.l.b16 %v1121
    %v4110 = vunpack.c.h.b16 %v1121
    %v4111 = vunpack.c.l.b16 %v1122
    %v4112 = vunpack.c.h.b16 %v1122
    %v4113 = vunpack.c.l.b16 %v1123
    %v4114 = vunpack.c.h.b16 %v1123
    %v4115 = vunpack.c.l.b16 %v1124
    %v4116 = vunpack.c.h.b16 %v1124
    %v4117 = vunpack.c.l.b16 %v1125
    %v4118 = vunpack.c.h.b16 %v1125
    %v4119 = vunpack.c.l.b16 %v1126
    %v4120 = vunpack.c.h.b16 %v1126
    %v4121 = vunpack.c.l.b16 %v1127
    %v4122 = vunpack.c.h.b16 %v1127
    %v4123 = vunpack.c.l.b16 %v1128
    %v4124 = vunpack.c.h.b16 %v1128
    %v4125 = vunpack.c.l.b16 %v1129
    %v4126 = vunpack.c.h.b16 %v1129
    %v4127 = vunpack.c.l.b16 %v1130
    %v4128 = vunpack.c.h.b16 %v1130
    %v4129 = vunpack.c.l.b16 %v1131
    %v4130 = vunpack.c.h.b16 %v1131
    %v4131 = vunpack.c.l.b16 %v1132
    %v4132 = vunpack.c.h.b16 %v1132
    %v4133 = vunpack.c.l.b16 %v1133
    %v4134 = vunpack.c.h.b16 %v1133
    %v4135 = vunpack.c.l.b16 %v1134
    %v4136 = vunpack.c.h.b16 %v1134
    %v4137 = vunpack.c.l.b16 %v1135
    %v4138 = vunpack.c.h.b16 %v1135
    %v4139 = vunpack.c.l.b16 %v1136
    %v4140 = vunpack.c.h.b16 %v1136
    %v4141 = vunpack.c.l.b16 %v1137
    %v4142 = vunpack.c.h.b16 %v1137
    %v4143 = vunpack.c.l.b16 %v1138
    %v4144 = vunpack.c.h.b16 %v1138
    %v4145 = vunpack.c.l.b16 %v1139
    %v4146 = vunpack.c.h.b16 %v1139
    %v4147 = vunpack.c.l.b16 %v1140
    %v4148 = vunpack.c.h.b16 %v1140
    %v4149 = vunpack.c.l.b16 %v1141
    %v4150 = vunpack.c.h.b16 %v1141
    %v4151 = vunpack.c.l.b16 %v1142
    %v4152 = vunpack.c.h.b16 %v1142
    %v4153 = vunpack.c.l.b16 %v1143
    %v4154 = vunpack.c.h.b16 %v1143
    %v4155 = vunpack.c.l.b16 %v1144
    %v4156 = vunpack.c.h.b16 %v1144
    %v4157 = vunpack.c.l.b16 %v1145
    %v4158 = vunpack.c.h.b16 %v1145
    %v4159 = vunpack.c.l.b16 %v1146
    %v4160 = vunpack.c.h.b16 %v1146
    %v4161 = vunpack.c.l.b16 %v1147
    %v4162 = vunpack.c.h.b16 %v1147
    %v4163 = vunpack.c.l.b16 %v1148
    %v4164 = vunpack.c.h.b16 %v1148
    %v4165 = vunpack.c.l.b16 %v1149
    %v4166 = vunpack.c.h.b16 %v1149
    %v4167 = vunpack.c.l.b16 %v1150
    %v4168 = vunpack.c.h.b16 %v1150
    %v4169 = vunpack.c.l.b16 %v1151
    %v4170 = vunpack.c.h.b16 %v1151
    %v4171 = vunpack.c.l.b16 %v1152
    %v4172 = vunpack.c.h.b16 %v1152
    %v4173 = vunpack.c.l.b16 %v1153
    %v4174 = vunpack.c.h.b16 %v1153
    %v4175 = vunpack.c.l.b16 %v1154
    %v4176 = vunpack.c.h.b16 %v1154
    %v4177 = vunpack.c.l.b16 %v1155
    %v4178 = vunpack.c.h.b16 %v1155
    %v4179 = vunpack.c.l.b16 %v1156
    %v4180 = vunpack.c.h.b16 %v1156
    %v4181 = vunpack.c.l.b16 %v1157
    %v4182 = vunpack.c.h.b16 %v1157
    %v4183 = vunpack.c.l.b16 %v1158
    %v4184 = vunpack.c.h.b16 %v1158
    %v4185 = vunpack.c.l.b16 %v1159
    %v4186 = vunpack.c.h.b16 %v1159
    %v4187 = vunpack.c.l.b16 %v1160
    %v4188 = vunpack.c.h.b16 %v1160
    %v4189 = vunpack.c.l.b16 %v1161
    %v4190 = vunpack.c.h.b16 %v1161
    %v4191 = vunpack.c.l.b16 %v1162
    %v4192 = vunpack.c.h.b16 %v1162
    %v4193 = vunpack.c.l.b16 %v1163
    %v4194 = vunpack.c.h.b16 %v1163
    %v4195 = vunpack.c.l.b16 %v1164
    %v4196 = vunpack.c.h.b16 %v1164
    %v4197 = vunpack.c.l.b16 %v1165
    %v4198 = vunpack.c.h.b16 %v1165
    %v4199 = vunpack.c.l.b16 %v1166
    %v4200 = vunpack.c.h.b16 %v1166
    %v4201 = vunpack.c.l.b16 %v1167
    %v4202 = vunpack.c.h.b16 %v1167
    %v4203 = vunpack.c.l.b16 %v1168
    %v4204 = vunpack.c.h.b16 %v1168
    %v4205 = vunpack.c.l.b16 %v1169
    %v4206 = vunpack.c.h.b16 %v1169
    %v4207 = vunpack.c.l.b16 %v1170
    %v4208 = vunpack.c.h.b16 %v1170
    %v4209 = vunpack.c.l.b16 %v1171
    %v4210 = vunpack.c.h.b16 %v1171
    %v4211 = vunpack.c.l.b16 %v1172
    %v4212 = vunpack.c.h.b16 %v1172
    %v4213 = vunpack.c.l.b16 %v1173
    %v4214 = vunpack.c.h.b16 %v1173
    %v4215 = vunpack.c.l.b16 %v1174
    %v4216 = vunpack.c.h.b16 %v1174
    %v4217 = vunpack.c.l.b16 %v1175
    %v4218 = vunpack.c.h.b16 %v1175
    %v4219 = vunpack.c.l.b16 %v1176
    %v4220 = vunpack.c.h.b16 %v1176
    %v4221 = vunpack.c.l.b16 %v1177
    %v4222 = vunpack.c.h.b16 %v1177
    %v4223 = vunpack.c.l.b16 %v1178
    %v4224 = vunpack.c.h.b16 %v1178
    %v4225 = vunpack.c.l.b16 %v1179
    %v4226 = vunpack.c.h.b16 %v1179
    %v4227 = vunpack.c.l.b16 %v1180
    %v4228 = vunpack.c.h.b16 %v1180
    %v4229 = vunpack.c.l.b16 %v1181
    %v4230 = vunpack.c.h.b16 %v1181
    %v4231 = vunpack.c.l.b16 %v1182
    %v4232 = vunpack.c.h.b16 %v1182
    %v4233 = vunpack.c.l.b16 %v1183
    %v4234 = vunpack.c.h.b16 %v1183
    %v4235 = vunpack.c.l.b16 %v1184
    %v4236 = vunpack.c.h.b16 %v1184
    %v4237 = vunpack.c.l.b16 %v1185
    %v4238 = vunpack.c.h.b16 %v1185
    %v4239 = vunpack.c.l.b16 %v1186
    %v4240 = vunpack.c.h.b16 %v1186
    %v4241 = vunpack.c.l.b16 %v1187
    %v4242 = vunpack.c.h.b16 %v1187
    %v4243 = vunpack.c.l.b16 %v1188
    %v4244 = vunpack.c.h.b16 %v1188
    %v4245 = vunpack.c.l.b16 %v1189
    %v4246 = vunpack.c.h.b16 %v1189
    %v4247 = vunpack.c.l.b16 %v1190
    %v4248 = vunpack.c.h.b16 %v1190
    %v4249 = vunpack.c.l.b16 %v1191
    %v4250 = vunpack.c.h.b16 %v1191
    %v4251 = vunpack.c.l.b16 %v1192
    %v4252 = vunpack.c.h.b16 %v1192
    %v4253 = vunpack.c.l.b16 %v1193
    %v4254 = vunpack.c.h.b16 %v1193
    %v4255 = vunpack.c.l.b16 %v1194
    %v4256 = vunpack.c.h.b16 %v1194
    %v4257 = vunpack.c.l.b16 %v1195
    %v4258 = vunpack.c.h.b16 %v1195
    %v4259 = vunpack.c.l.b16 %v1196
    %v4260 = vunpack.c.h.b16 %v1196
    %v4261 = vunpack.c.l.b16 %v1197
    %v4262 = vunpack.c.h.b16 %v1197
    %v4263 = vunpack.c.l.b16 %v1198
    %v4264 = vunpack.c.h.b16 %v1198
    %v4265 = vunpack.c.l.b16 %v1199
    %v4266 = vunpack.c.h.b16 %v1199
    %v4267 = vunpack.c.l.b16 %v1200
    %v4268 = vunpack.c.h.b16 %v1200
    %v4269 = vunpack.c.l.b16 %v1201
    %v4270 = vunpack.c.h.b16 %v1201
    %v4271 = vunpack.c.l.b16 %v1202
    %v4272 = vunpack.c.h.b16 %v1202
    %v4273 = vunpack.c.l.b16 %v1203
    %v4274 = vunpack.c.h.b16 %v1203
    %v4275 = vunpack.c.l.b16 %v1204
    %v4276 = vunpack.c.h.b16 %v1204
    %v4277 = vunpack.c.l.b16 %v1205
    %v4278 = vunpack.c.h.b16 %v1205
    %v4279 = vunpack.c.l.b16 %v1206
    %v4280 = vunpack.c.h.b16 %v1206
    %v4281 = vunpack.c.l.b16 %v1207
    %v4282 = vunpack.c.h.b16 %v1207
    %v4283 = vunpack.c.l.b16 %v1208
    %v4284 = vunpack.c.h.b16 %v1208
    %v4285 = vunpack.c.l.b16 %v1209
    %v4286 = vunpack.c.h.b16 %v1209
    %v4287 = vunpack.c.l.b16 %v1210
    %v4288 = vunpack.c.h.b16 %v1210
    %v4289 = vunpack.c.l.b16 %v1211
    %v4290 = vunpack.c.h.b16 %v1211
    %v4291 = vunpack.c.l.b16 %v1212
    %v4292 = vunpack.c.h.b16 %v1212
    %v4293 = vunpack.c.l.b16 %v1213
    %v4294 = vunpack.c.h.b16 %v1213
    %v4295 = vunpack.c.l.b16 %v1214
    %v4296 = vunpack.c.h.b16 %v1214
    %v4297 = vunpack.c.l.b16 %v1215
    %v4298 = vunpack.c.h.b16 %v1215
    %v4299 = vunpack.c.l.b16 %v1216
    %v4300 = vunpack.c.h.b16 %v1216
    %v4301 = vunpack.c.l.b16 %v1217
    %v4302 = vunpack.c.h.b16 %v1217
    %v4303 = vunpack.c.l.b16 %v1218
    %v4304 = vunpack.c.h.b16 %v1218
    %v4305 = vunpack.c.l.b16 %v1219
    %v4306 = vunpack.c.h.b16 %v1219
    %v4307 = vunpack.c.l.b16 %v1220
    %v4308 = vunpack.c.h.b16 %v1220
    %v4309 = vunpack.c.l.b16 %v1221
    %v4310 = vunpack.c.h.b16 %v1221
    %v4311 = vunpack.c.l.b16 %v1222
    %v4312 = vunpack.c.h.b16 %v1222
    %v4313 = vunpack.c.l.b16 %v1223
    %v4314 = vunpack.c.h.b16 %v1223
    %v4315 = vunpack.c.l.b16 %v1224
    %v4316 = vunpack.c.h.b16 %v1224
    %v4317 = vunpack.c.l.b16 %v1225
    %v4318 = vunpack.c.h.b16 %v1225
    %v4319 = vunpack.c.l.b16 %v1226
    %v4320 = vunpack.c.h.b16 %v1226
    %v4321 = vunpack.c.l.b16 %v1227
    %v4322 = vunpack.c.h.b16 %v1227
    %v4323 = vunpack.c.l.b16 %v1228
    %v4324 = vunpack.c.h.b16 %v1228
    %v4325 = vunpack.c.l.b16 %v1229
    %v4326 = vunpack.c.h.b16 %v1229
    %v4327 = vunpack.c.l.b16 %v1230
    %v4328 = vunpack.c.h.b16 %v1230
    %v4329 = vunpack.c.l.b16 %v1231
    %v4330 = vunpack.c.h.b16 %v1231
    %v4331 = vunpack.c.l.b16 %v1232
    %v4332 = vunpack.c.h.b16 %v1232
    %v4333 = vunpack.c.l.b16 %v1233
    %v4334 = vunpack.c.h.b16 %v1233
    %v4335 = vunpack.c.l.b16 %v1234
    %v4336 = vunpack.c.h.b16 %v1234
    %v4337 = vunpack.c.l.b16 %v1235
    %v4338 = vunpack.c.h.b16 %v1235
    %v4339 = vunpack.c.l.b16 %v1236
    %v4340 = vunpack.c.h.b16 %v1236
    %v4341 = vunpack.c.l.b16 %v1237
    %v4342 = vunpack.c.h.b16 %v1237
    %v4343 = vunpack.c.l.b16 %v1238
    %v4344 = vunpack.c.h.b16 %v1238
    %v4345 = vunpack.c.l.b16 %v1239
    %v4346 = vunpack.c.h.b16 %v1239
    %v4347 = vunpack.c.l.b16 %v1240
    %v4348 = vunpack.c.h.b16 %v1240
    %v4349 = vunpack.c.l.b16 %v1241
    %v4350 = vunpack.c.h.b16 %v1241
    %v4351 = vunpack.c.l.b16 %v1242
    %v4352 = vunpack.c.h.b16 %v1242
    %v4353 = vunpack.c.l.b16 %v1243
    %v4354 = vunpack.c.h.b16 %v1243
    %v4355 = vunpack.c.l.b16 %v1244
    %v4356 = vunpack.c.h.b16 %v1244
    %v4357 = vunpack.c.l.b16 %v1245
    %v4358 = vunpack.c.h.b16 %v1245
    %v4359 = vunpack.c.l.b16 %v1246
    %v4360 = vunpack.c.h.b16 %v1246
    %v4361 = vunpack.c.l.b16 %v1247
    %v4362 = vunpack.c.h.b16 %v1247
    %v4363 = vunpack.c.l.b16 %v1248
    %v4364 = vunpack.c.h.b16 %v1248
    %v4365 = vunpack.c.l.b16 %v1249
    %v4366 = vunpack.c.h.b16 %v1249
    %v4367 = vunpack.c.l.b16 %v1250
    %v4368 = vunpack.c.h.b16 %v1250
    %v4369 = vunpack.c.l.b16 %v1251
    %v4370 = vunpack.c.h.b16 %v1251
    %v4371 = vunpack.c.l.b16 %v1252
    %v4372 = vunpack.c.h.b16 %v1252
    %v4373 = vunpack.c.l.b16 %v1253
    %v4374 = vunpack.c.h.b16 %v1253
    %v4375 = vunpack.c.l.b16 %v1254
    %v4376 = vunpack.c.h.b16 %v1254
    %v4377 = vunpack.c.l.b16 %v1255
    %v4378 = vunpack.c.h.b16 %v1255
    %v4379 = vunpack.c.l.b16 %v1256
    %v4380 = vunpack.c.h.b16 %v1256
    %v4381 = vunpack.c.l.b16 %v1257
    %v4382 = vunpack.c.h.b16 %v1257
    %v4383 = vunpack.c.l.b16 %v1258
    %v4384 = vunpack.c.h.b16 %v1258
    %v4385 = vunpack.c.l.b16 %v1259
    %v4386 = vunpack.c.h.b16 %v1259
    %v4387 = vunpack.c.l.b16 %v1260
    %v4388 = vunpack.c.h.b16 %v1260
    %v4389 = vunpack.c.l.b16 %v1261
    %v4390 = vunpack.c.h.b16 %v1261
    %v4391 = vunpack.c.l.b16 %v1262
    %v4392 = vunpack.c.h.b16 %v1262
    %v4393 = vunpack.c.l.b16 %v1263
    %v4394 = vunpack.c.h.b16 %v1263
    %v4395 = vunpack.c.l.b16 %v1264
    %v4396 = vunpack.c.h.b16 %v1264
    %v4397 = vunpack.c.l.b16 %v1265
    %v4398 = vunpack.c.h.b16 %v1265
    %v4399 = vunpack.c.l.b16 %v1266
    %v4400 = vunpack.c.h.b16 %v1266
    %v4401 = vunpack.c.l.b16 %v1267
    %v4402 = vunpack.c.h.b16 %v1267
    %v4403 = vunpack.c.l.b16 %v1268
    %v4404 = vunpack.c.h.b16 %v1268
    %v4405 = vunpack.c.l.b16 %v1269
    %v4406 = vunpack.c.h.b16 %v1269
    %v4407 = vunpack.c.l.b16 %v1270
    %v4408 = vunpack.c.h.b16 %v1270
    %v4409 = vunpack.c.l.b16 %v1271
    %v4410 = vunpack.c.h.b16 %v1271
    %v4411 = vunpack.c.l.b16 %v1272
    %v4412 = vunpack.c.h.b16 %v1272
    %v4413 = vunpack.c.l.b16 %v1273
    %v4414 = vunpack.c.h.b16 %v1273
    %v4415 = vunpack.c.l.b16 %v1274
    %v4416 = vunpack.c.h.b16 %v1274
    %v4417 = vunpack.c.l.b16 %v1275
    %v4418 = vunpack.c.h.b16 %v1275
    %v4419 = vunpack.c.l.b16 %v1276
    %v4420 = vunpack.c.h.b16 %v1276
    %v4421 = vunpack.c.l.b16 %v1277
    %v4422 = vunpack.c.h.b16 %v1277
    %v4423 = vunpack.c.l.b16 %v1278
    %v4424 = vunpack.c.h.b16 %v1278
    %v4425 = vunpack.c.l.b16 %v1279
    %v4426 = vunpack.c.h.b16 %v1279
    %v4427 = vunpack.c.l.b16 %v1280
    %v4428 = vunpack.c.h.b16 %v1280
    %v4429 = vunpack.c.l.b16 %v1281
    %v4430 = vunpack.c.h.b16 %v1281
    %v4431 = vunpack.c.l.b16 %v1282
    %v4432 = vunpack.c.h.b16 %v1282
    %v4433 = vunpack.c.l.b16 %v1283
    %v4434 = vunpack.c.h.b16 %v1283
    %v4435 = vunpack.c.l.b16 %v1284
    %v4436 = vunpack.c.h.b16 %v1284
    %v4437 = vunpack.c.l.b16 %v1285
    %v4438 = vunpack.c.h.b16 %v1285
    %v4439 = vunpack.c.l.b16 %v1286
    %v4440 = vunpack.c.h.b16 %v1286
    %v4441 = vunpack.c.l.b16 %v1287
    %v4442 = vunpack.c.h.b16 %v1287
    %v4443 = vunpack.c.l.b16 %v1288
    %v4444 = vunpack.c.h.b16 %v1288
    %v4445 = vpack.c.b16 %v2413, %v2397
    %v4446 = vpack.c.b16 %v2414, %v2398
    %v4447 = vpack.c.b16 %v2415, %v2399
    %v4448 = vpack.c.b16 %v2416, %v2400
    %v4449 = vpack.c.b16 %v2417, %v2401
    %v4450 = vpack.c.b16 %v2418, %v2402
    %v4451 = vpack.c.b16 %v2419, %v2403
    %v4452 = vpack.c.b16 %v2420, %v2404
    %v4453 = vpack.c.b16 %v2421, %v2405
    %v4454 = vpack.c.b16 %v2422, %v2406
    %v4455 = vpack.c.b16 %v2423, %v2407
    %v4456 = vpack.c.b16 %v2424, %v2408
    %v4457 = vpack.c.b16 %v2425, %v2409
    %v4458 = vpack.c.b16 %v2426, %v2410
    %v4459 = vpack.c.b16 %v2427, %v2411
    %v4460 = vpack.c.b16 %v2428, %v2412
    %v4461 = vpack.c.b16 %v2445, %v2429
    %v4462 = vpack.c.b16 %v2446, %v2430
    %v4463 = vpack.c.b16 %v2447, %v2431
    %v4464 = vpack.c.b16 %v2448, %v2432
    %v4465 = vpack.c.b16 %v2449, %v2433
    %v4466 = vpack.c.b16 %v2450, %v2434
    %v4467 = vpack.c.b16 %v2451, %v2435
    %v4468 = vpack.c.b16 %v2452, %v2436
    %v4469 = vpack.c.b16 %v2453, %v2437
    %v4470 = vpack.c.b16 %v2454, %v2438
    %v4471 = vpack.c.b16 %v2455, %v2439
    %v4472 = vpack.c.b16 %v2456, %v2440
    %v4473 = vpack.c.b16 %v2457, %v2441
    %v4474 = vpack.c.b16 %v2458, %v2442
    %v4475 = vpack.c.b16 %v2459, %v2443
    %v4476 = vpack.c.b16 %v2460, %v2444
    %v4477 = vpack.c.b16 %v2477, %v2461
    %v4478 = vpack.c.b16 %v2478, %v2462
    %v4479 = vpack.c.b16 %v2479, %v2463
    %v4480 = vpack.c.b16 %v2480, %v2464
    %v4481 = vpack.c.b16 %v2481, %v2465
    %v4482 = vpack.c.b16 %v2482, %v2466
    %v4483 = vpack.c.b16 %v2483, %v2467
    %v4484 = vpack.c.b16 %v2484, %v2468
    %v4485 = vpack.c.b16 %v2485, %v2469
    %v4486 = vpack.c.b16 %v2486, %v2470
    %v4487 = vpack.c.b16 %v2487, %v2471
    %v4488 = vpack.c.b16 %v2488, %v2472
    %v4489 = vpack.c.b16 %v2489, %v2473
    %v4490 = vpack.c.b16 %v2490, %v2474
    %v4491 = vpack.c.b16 %v2491, %v2475
    %v4492 = vpack.c.b16 %v2492, %v2476
    %v4493 = vpack.c.b16 %v2509, %v2493
    %v4494 = vpack.c.b16 %v2510, %v2494
    %v4495 = vpack.c.b16 %v2511, %v2495
    %v4496 = vpack.c.b16 %v2512, %v2496
    %v4497 = vpack.c.b16 %v2513, %v2497
    %v4498 = vpack.c.b16 %v2514, %v2498
    %v4499 = vpack.c.b16 %v2515, %v2499
    %v4500 = vpack.c.b16 %v2516, %v2500
    %v4501 = vpack.c.b16 %v2517, %v2501
    %v4502 = vpack.c.b16 %v2518, %v2502
    %v4503 = vpack.c.b16 %v2519, %v2503
    %v4504 = vpack.c.b16 %v2520, %v2504
    %v4505 = vpack.c.b16 %v2521, %v2505
    %v4506 = vpack.c.b16 %v2522, %v2506
    %v4507 = vpack.c.b16 %v2523, %v2507
    %v4508 = vpack.c.b16 %v2524, %v2508
    %v4509 = vpack.c.b16 %v2541, %v2525
    %v4510 = vpack.c.b16 %v2542, %v2526
    %v4511 = vpack.c.b16 %v2543, %v2527
    %v4512 = vpack.c.b16 %v2544, %v2528
    %v4513 = vpack.c.b16 %v2545, %v2529
    %v4514 = vpack.c.b16 %v2546, %v2530
    %v4515 = vpack.c.b16 %v2547, %v2531
    %v4516 = vpack.c.b16 %v2548, %v2532
    %v4517 = vpack.c.b16 %v2549, %v2533
    %v4518 = vpack.c.b16 %v2550, %v2534
    %v4519 = vpack.c.b16 %v2551, %v2535
    %v4520 = vpack.c.b16 %v2552, %v2536
    %v4521 = vpack.c.b16 %v2553, %v2537
    %v4522 = vpack.c.b16 %v2554, %v2538
    %v4523 = vpack.c.b16 %v2555, %v2539
    %v4524 = vpack.c.b16 %v2556, %v2540
    %v4525 = vpack.c.b16 %v2573, %v2557
    %v4526 = vpack.c.b16 %v2574, %v2558
    %v4527 = vpack.c.b16 %v2575, %v2559
    %v4528 = vpack.c.b16 %v2576, %v2560
    %v4529 = vpack.c.b16 %v2577, %v2561
    %v4530 = vpack.c.b16 %v2578, %v2562
    %v4531 = vpack.c.b16 %v2579, %v2563
    %v4532 = vpack.c.b16 %v2580, %v2564
    %v4533 = vpack.c.b16 %v2581, %v2565
    %v4534 = vpack.c.b16 %v2582, %v2566
    %v4535 = vpack.c.b16 %v2583, %v2567
    %v4536 = vpack.c.b16 %v2584, %v2568
    %v4537 = vpack.c.b16 %v2585, %v2569
    %v4538 = vpack.c.b16 %v2586, %v2570
    %v4539 = vpack.c.b16 %v2587, %v2571
    %v4540 = vpack.c.b16 %v2588, %v2572
    %v4541 = vpack.c.b16 %v2605, %v2589
    %v4542 = vpack.c.b16 %v2606, %v2590
    %v4543 = vpack.c.b16 %v2607, %v2591
    %v4544 = vpack.c.b16 %v2608, %v2592
    %v4545 = vpack.c.b16 %v2609, %v2593
    %v4546 = vpack.c.b16 %v2610, %v2594
    %v4547 = vpack.c.b16 %v2611, %v2595
    %v4548 = vpack.c.b16 %v2612, %v2596
    %v4549 = vpack.c.b16 %v2613, %v2597
    %v4550 = vpack.c.b16 %v2614, %v2598
    %v4551 = vpack.c.b16 %v2615, %v2599
    %v4552 = vpack.c.b16 %v2616, %v2600
    %v4553 = vpack.c.b16 %v2617, %v2601
    %v4554 = vpack.c.b16 %v2618, %v2602
    %v4555 = vpack.c.b16 %v2619, %v2603
    %v4556 = vpack.c.b16 %v2620, %v2604
    %v4557 = vpack.c.b16 %v2637, %v2621
    %v4558 = vpack.c.b16 %v2638, %v2622
    %v4559 = vpack.c.b16 %v2639, %v2623
    %v4560 = vpack.c.b16 %v2640, %v2624
    %v4561 = vpack.c.b16 %v2641, %v2625
    %v4562 = vpack.c.b16 %v2642, %v2626
    %v4563 = vpack.c.b16 %v2643, %v2627
    %v4564 = vpack.c.b16 %v2644, %v2628
    %v4565 = vpack.c.b16 %v2645, %v2629
    %v4566 = vpack.c.b16 %v2646, %v2630
    %v4567 = vpack.c.b16 %v2647, %v2631
    %v4568 = vpack.c.b16 %v2648, %v2632
    %v4569 = vpack.c.b16 %v2649, %v2633
    %v4570 = vpack.c.b16 %v2650, %v2634
    %v4571 = vpack.c.b16 %v2651, %v2635
    %v4572 = vpack.c.b16 %v2652, %v2636
    %v4573 = vpack.c.b16 %v2669, %v2653
    %v4574 = vpack.c.b16 %v2670, %v2654
    %v4575 = vpack.c.b16 %v2671, %v2655
    %v4576 = vpack.c.b16 %v2672, %v2656
    %v4577 = vpack.c.b16 %v2673, %v2657
    %v4578 = vpack.c.b16 %v2674, %v2658
    %v4579 = vpack.c.b16 %v2675, %v2659
    %v4580 = vpack.c.b16 %v2676, %v2660
    %v4581 = vpack.c.b16 %v2677, %v2661
    %v4582 = vpack.c.b16 %v2678, %v2662
    %v4583 = vpack.c.b16 %v2679, %v2663
    %v4584 = vpack.c.b16 %v2680, %v2664
    %v4585 = vpack.c.b16 %v2681, %v2665
    %v4586 = vpack.c.b16 %v2682, %v2666
    %v4587 = vpack.c.b16 %v2683, %v2667
    %v4588 = vpack.c.b16 %v2684, %v2668
    %v4589 = vpack.c.b16 %v2701, %v2685
    %v4590 = vpack.c.b16 %v2702, %v2686
    %v4591 = vpack.c.b16 %v2703, %v2687
    %v4592 = vpack.c.b16 %v2704, %v2688
    %v4593 = vpack.c.b16 %v2705, %v2689
    %v4594 = vpack.c.b16 %v2706, %v2690
    %v4595 = vpack.c.b16 %v2707, %v2691
    %v4596 = vpack.c.b16 %v2708, %v2692
    %v4597 = vpack.c.b16 %v2709, %v2693
    %v4598 = vpack.c.b16 %v2710, %v2694
    %v4599 = vpack.c.b16 %v2711, %v2695
    %v4600 = vpack.c.b16 %v2712, %v2696
    %v4601 = vpack.c.b16 %v2713, %v2697
    %v4602 = vpack.c.b16 %v2714, %v2698
    %v4603 = vpack.c.b16 %v2715, %v2699
    %v4604 = vpack.c.b16 %v2716, %v2700
    %v4605 = vpack.c.b16 %v2733, %v2717
    %v4606 = vpack.c.b16 %v2734, %v2718
    %v4607 = vpack.c.b16 %v2735, %v2719
    %v4608 = vpack.c.b16 %v2736, %v2720
    %v4609 = vpack.c.b16 %v2737, %v2721
    %v4610 = vpack.c.b16 %v2738, %v2722
    %v4611 = vpack.c.b16 %v2739, %v2723
    %v4612 = vpack.c.b16 %v2740, %v2724
    %v4613 = vpack.c.b16 %v2741, %v2725
    %v4614 = vpack.c.b16 %v2742, %v2726
    %v4615 = vpack.c.b16 %v2743, %v2727
    %v4616 = vpack.c.b16 %v2744, %v2728
    %v4617 = vpack.c.b16 %v2745, %v2729
    %v4618 = vpack.c.b16 %v2746, %v2730
    %v4619 = vpack.c.b16 %v2747, %v2731
    %v4620 = vpack.c.b16 %v2748, %v2732
    %v4621 = vpack.c.b16 %v2765, %v2749
    %v4622 = vpack.c.b16 %v2766, %v2750
    %v4623 = vpack.c.b16 %v2767, %v2751
    %v4624 = vpack.c.b16 %v2768, %v2752
    %v4625 = vpack.c.b16 %v2769, %v2753
    %v4626 = vpack.c.b16 %v2770, %v2754
    %v4627 = vpack.c.b16 %v2771, %v2755
    %v4628 = vpack.c.b16 %v2772, %v2756
    %v4629 = vpack.c.b16 %v2773, %v2757
    %v4630 = vpack.c.b16 %v2774, %v2758
    %v4631 = vpack.c.b16 %v2775, %v2759
    %v4632 = vpack.c.b16 %v2776, %v2760
    %v4633 = vpack.c.b16 %v2777, %v2761
    %v4634 = vpack.c.b16 %v2778, %v2762
    %v4635 = vpack.c.b16 %v2779, %v2763
    %v4636 = vpack.c.b16 %v2780, %v2764
    %v4637 = vpack.c.b16 %v2797, %v2781
    %v4638 = vpack.c.b16 %v2798, %v2782
    %v4639 = vpack.c.b16 %v2799, %v2783
    %v4640 = vpack.c.b16 %v2800, %v2784
    %v4641 = vpack.c.b16 %v2801, %v2785
    %v4642 = vpack.c.b16 %v2802, %v2786
    %v4643 = vpack.c.b16 %v2803, %v2787
    %v4644 = vpack.c.b16 %v2804, %v2788
    %v4645 = vpack.c.b16 %v2805, %v2789
    %v4646 = vpack.c.b16 %v2806, %v2790
    %v4647 = vpack.c.b16 %v2807, %v2791
    %v4648 = vpack.c.b16 %v2808, %v2792
    %v4649 = vpack.c.b16 %v2809, %v2793
    %v4650 = vpack.c.b16 %v2810, %v2794
    %v4651 = vpack.c.b16 %v2811, %v2795
    %v4652 = vpack.c.b16 %v2812, %v2796
    %v4653 = vpack.c.b16 %v2829, %v2813
    %v4654 = vpack.c.b16 %v2830, %v2814
    %v4655 = vpack.c.b16 %v2831, %v2815
    %v4656 = vpack.c.b16 %v2832, %v2816
    %v4657 = vpack.c.b16 %v2833, %v2817
    %v4658 = vpack.c.b16 %v2834, %v2818
    %v4659 = vpack.c.b16 %v2835, %v2819
    %v4660 = vpack.c.b16 %v2836, %v2820
    %v4661 = vpack.c.b16 %v2837, %v2821
    %v4662 = vpack.c.b16 %v2838, %v2822
    %v4663 = vpack.c.b16 %v2839, %v2823
    %v4664 = vpack.c.b16 %v2840, %v2824
    %v4665 = vpack.c.b16 %v2841, %v2825
    %v4666 = vpack.c.b16 %v2842, %v2826
    %v4667 = vpack.c.b16 %v2843, %v2827
    %v4668 = vpack.c.b16 %v2844, %v2828
    %v4669 = vpack.c.b16 %v2861, %v2845
    %v4670 = vpack.c.b16 %v2862, %v2846
    %v4671 = vpack.c.b16 %v2863, %v2847
    %v4672 = vpack.c.b16 %v2864, %v2848
    %v4673 = vpack.c.b16 %v2865, %v2849
    %v4674 = vpack.c.b16 %v2866, %v2850
    %v4675 = vpack.c.b16 %v2867, %v2851
    %v4676 = vpack.c.b16 %v2868, %v2852
    %v4677 = vpack.c.b16 %v2869, %v2853
    %v4678 = vpack.c.b16 %v2870, %v2854
    %v4679 = vpack.c.b16 %v2871, %v2855
    %v4680 = vpack.c.b16 %v2872, %v2856
    %v4681 = vpack.c.b16 %v2873, %v2857
    %v4682 = vpack.c.b16 %v2874, %v2858
    %v4683 = vpack.c.b16 %v2875, %v2859
    %v4684 = vpack.c.b16 %v2876, %v2860
    %v4685 = vpack.c.b16 %v2893, %v2877
    %v4686 = vpack.c.b16 %v2894, %v2878
    %v4687 = vpack.c.b16 %v2895, %v2879
    %v4688 = vpack.c.b16 %v2896, %v2880
    %v4689 = vpack.c.b16 %v2897, %v2881
    %v4690 = vpack.c.b16 %v2898, %v2882
    %v4691 = vpack.c.b16 %v2899, %v2883
    %v4692 = vpack.c.b16 %v2900, %v2884
    %v4693 = vpack.c.b16 %v2901, %v2885
    %v4694 = vpack.c.b16 %v2902, %v2886
    %v4695 = vpack.c.b16 %v2903, %v2887
    %v4696 = vpack.c.b16 %v2904, %v2888
    %v4697 = vpack.c.b16 %v2905, %v2889
    %v4698 = vpack.c.b16 %v2906, %v2890
    %v4699 = vpack.c.b16 %v2907, %v2891
    %v4700 = vpack.c.b16 %v2908, %v2892
    %v4701 = vpack.c.b16 %v2925, %v2909
    %v4702 = vpack.c.b16 %v2926, %v2910
    %v4703 = vpack.c.b16 %v2927, %v2911
    %v4704 = vpack.c.b16 %v2928, %v2912
    %v4705 = vpack.c.b16 %v2929, %v2913
    %v4706 = vpack.c.b16 %v2930, %v2914
    %v4707 = vpack.c.b16 %v2931, %v2915
    %v4708 = vpack.c.b16 %v2932, %v2916
    %v4709 = vpack.c.b16 %v2933, %v2917
    %v4710 = vpack.c.b16 %v2934, %v2918
    %v4711 = vpack.c.b16 %v2935, %v2919
    %v4712 = vpack.c.b16 %v2936, %v2920
    %v4713 = vpack.c.b16 %v2937, %v2921
    %v4714 = vpack.c.b16 %v2938, %v2922
    %v4715 = vpack.c.b16 %v2939, %v2923
    %v4716 = vpack.c.b16 %v2940, %v2924
    %v4717 = vpack.c.b16 %v2957, %v2941
    %v4718 = vpack.c.b16 %v2958, %v2942
    %v4719 = vpack.c.b16 %v2959, %v2943
    %v4720 = vpack.c.b16 %v2960, %v2944
    %v4721 = vpack.c.b16 %v2961, %v2945
    %v4722 = vpack.c.b16 %v2962, %v2946
    %v4723 = vpack.c.b16 %v2963, %v2947
    %v4724 = vpack.c.b16 %v2964, %v2948
    %v4725 = vpack.c.b16 %v2965, %v2949
    %v4726 = vpack.c.b16 %v2966, %v2950
    %v4727 = vpack.c.b16 %v2967, %v2951
    %v4728 = vpack.c.b16 %v2968, %v2952
    %v4729 = vpack.c.b16 %v2969, %v2953
    %v4730 = vpack.c.b16 %v2970, %v2954
    %v4731 = vpack.c.b16 %v2971, %v2955
    %v4732 = vpack.c.b16 %v2972, %v2956
    %v4733 = vpack.c.b16 %v2989, %v2973
    %v4734 = vpack.c.b16 %v2990, %v2974
    %v4735 = vpack.c.b16 %v2991, %v2975
    %v4736 = vpack.c.b16 %v2992, %v2976
    %v4737 = vpack.c.b16 %v2993, %v2977
    %v4738 = vpack.c.b16 %v2994, %v2978
    %v4739 = vpack.c.b16 %v2995, %v2979
    %v4740 = vpack.c.b16 %v2996, %v2980
    %v4741 = vpack.c.b16 %v2997, %v2981
    %v4742 = vpack.c.b16 %v2998, %v2982
    %v4743 = vpack.c.b16 %v2999, %v2983
    %v4744 = vpack.c.b16 %v3000, %v2984
    %v4745 = vpack.c.b16 %v3001, %v2985
    %v4746 = vpack.c.b16 %v3002, %v2986
    %v4747 = vpack.c.b16 %v3003, %v2987
    %v4748 = vpack.c.b16 %v3004, %v2988
    %v4749 = vpack.c.b16 %v3021, %v3005
    %v4750 = vpack.c.b16 %v3022, %v3006
    %v4751 = vpack.c.b16 %v3023, %v3007
    %v4752 = vpack.c.b16 %v3024, %v3008
    %v4753 = vpack.c.b16 %v3025, %v3009
    %v4754 = vpack.c.b16 %v3026, %v3010
    %v4755 = vpack.c.b16 %v3027, %v3011
    %v4756 = vpack.c.b16 %v3028, %v3012
    %v4757 = vpack.c.b16 %v3029, %v3013
    %v4758 = vpack.c.b16 %v3030, %v3014
    %v4759 = vpack.c.b16 %v3031, %v3015
    %v4760 = vpack.c.b16 %v3032, %v3016
    %v4761 = vpack.c.b16 %v3033, %v3017
    %v4762 = vpack.c.b16 %v3034, %v3018
    %v4763 = vpack.c.b16 %v3035, %v3019
    %v4764 = vpack.c.b16 %v3036, %v3020
    %v4765 = vpack.c.b16 %v3053, %v3037
    %v4766 = vpack.c.b16 %v3054, %v3038
    %v4767 = vpack.c.b16 %v3055, %v3039
    %v4768 = vpack.c.b16 %v3056, %v3040
    %v4769 = vpack.c.b16 %v3057, %v3041
    %v4770 = vpack.c.b16 %v3058, %v3042
    %v4771 = vpack.c.b16 %v3059, %v3043
    %v4772 = vpack.c.b16 %v3060, %v3044
    %v4773 = vpack.c.b16 %v3061, %v3045
    %v4774 = vpack.c.b16 %v3062, %v3046
    %v4775 = vpack.c.b16 %v3063, %v3047
    %v4776 = vpack.c.b16 %v3064, %v3048
    %v4777 = vpack.c.b16 %v3065, %v3049
    %v4778 = vpack.c.b16 %v3066, %v3050
    %v4779 = vpack.c.b16 %v3067, %v3051
    %v4780 = vpack.c.b16 %v3068, %v3052
    %v4781 = vpack.c.b16 %v3085, %v3069
    %v4782 = vpack.c.b16 %v3086, %v3070
    %v4783 = vpack.c.b16 %v3087, %v3071
    %v4784 = vpack.c.b16 %v3088, %v3072
    %v4785 = vpack.c.b16 %v3089, %v3073
    %v4786 = vpack.c.b16 %v3090, %v3074
    %v4787 = vpack.c.b16 %v3091, %v3075
    %v4788 = vpack.c.b16 %v3092, %v3076
    %v4789 = vpack.c.b16 %v3093, %v3077
    %v4790 = vpack.c.b16 %v3094, %v3078
    %v4791 = vpack.c.b16 %v3095, %v3079
    %v4792 = vpack.c.b16 %v3096, %v3080
    %v4793 = vpack.c.b16 %v3097, %v3081
    %v4794 = vpack.c.b16 %v3098, %v3082
    %v4795 = vpack.c.b16 %v3099, %v3083
    %v4796 = vpack.c.b16 %v3100, %v3084
    %v4797 = vpack.c.b16 %v3117, %v3101
    %v4798 = vpack.c.b16 %v3118, %v3102
    %v4799 = vpack.c.b16 %v3119, %v3103
    %v4800 = vpack.c.b16 %v3120, %v3104
    %v4801 = vpack.c.b16 %v3121, %v3105
    %v4802 = vpack.c.b16 %v3122, %v3106
    %v4803 = vpack.c.b16 %v3123, %v3107
    %v4804 = vpack.c.b16 %v3124, %v3108
    %v4805 = vpack.c.b16 %v3125, %v3109
    %v4806 = vpack.c.b16 %v3126, %v3110
    %v4807 = vpack.c.b16 %v3127, %v3111
    %v4808 = vpack.c.b16 %v3128, %v3112
    %v4809 = vpack.c.b16 %v3129, %v3113
    %v4810 = vpack.c.b16 %v3130, %v3114
    %v4811 = vpack.c.b16 %v3131, %v3115
    %v4812 = vpack.c.b16 %v3132, %v3116
    %v4813 = vpack.c.b16 %v3149, %v3133
    %v4814 = vpack.c.b16 %v3150, %v3134
    %v4815 = vpack.c.b16 %v3151, %v3135
    %v4816 = vpack.c.b16 %v3152, %v3136
    %v4817 = vpack.c.b16 %v3153, %v3137
    %v4818 = vpack.c.b16 %v3154, %v3138
    %v4819 = vpack.c.b16 %v3155, %v3139
    %v4820 = vpack.c.b16 %v3156, %v3140
    %v4821 = vpack.c.b16 %v3157, %v3141
    %v4822 = vpack.c.b16 %v3158, %v3142
    %v4823 = vpack.c.b16 %v3159, %v3143
    %v4824 = vpack.c.b16 %v3160, %v3144
    %v4825 = vpack.c.b16 %v3161, %v3145
    %v4826 = vpack.c.b16 %v3162, %v3146
    %v4827 = vpack.c.b16 %v3163, %v3147
    %v4828 = vpack.c.b16 %v3164, %v3148
    %v4829 = vpack.c.b16 %v3181, %v3165
    %v4830 = vpack.c.b16 %v3182, %v3166
    %v4831 = vpack.c.b16 %v3183, %v3167
    %v4832 = vpack.c.b16 %v3184, %v3168
    %v4833 = vpack.c.b16 %v3185, %v3169
    %v4834 = vpack.c.b16 %v3186, %v3170
    %v4835 = vpack.c.b16 %v3187, %v3171
    %v4836 = vpack.c.b16 %v3188, %v3172
    %v4837 = vpack.c.b16 %v3189, %v3173
    %v4838 = vpack.c.b16 %v3190, %v3174
    %v4839 = vpack.c.b16 %v3191, %v3175
    %v4840 = vpack.c.b16 %v3192, %v3176
    %v4841 = vpack.c.b16 %v3193, %v3177
    %v4842 = vpack.c.b16 %v3194, %v3178
    %v4843 = vpack.c.b16 %v3195, %v3179
    %v4844 = vpack.c.b16 %v3196, %v3180
    %v4845 = vpack.c.b16 %v3213, %v3197
    %v4846 = vpack.c.b16 %v3214, %v3198
    %v4847 = vpack.c.b16 %v3215, %v3199
    %v4848 = vpack.c.b16 %v3216, %v3200
    %v4849 = vpack.c.b16 %v3217, %v3201
    %v4850 = vpack.c.b16 %v3218, %v3202
    %v4851 = vpack.c.b16 %v3219, %v3203
    %v4852 = vpack.c.b16 %v3220, %v3204
    %v4853 = vpack.c.b16 %v3221, %v3205
    %v4854 = vpack.c.b16 %v3222, %v3206
    %v4855 = vpack.c.b16 %v3223, %v3207
    %v4856 = vpack.c.b16 %v3224, %v3208
    %v4857 = vpack.c.b16 %v3225, %v3209
    %v4858 = vpack.c.b16 %v3226, %v3210
    %v4859 = vpack.c.b16 %v3227, %v3211
    %v4860 = vpack.c.b16 %v3228, %v3212
    %v4861 = vpack.c.b16 %v3245, %v3229
    %v4862 = vpack.c.b16 %v3246, %v3230
    %v4863 = vpack.c.b16 %v3247, %v3231
    %v4864 = vpack.c.b16 %v3248, %v3232
    %v4865 = vpack.c.b16 %v3249, %v3233
    %v4866 = vpack.c.b16 %v3250, %v3234
    %v4867 = vpack.c.b16 %v3251, %v3235
    %v4868 = vpack.c.b16 %v3252, %v3236
    %v4869 = vpack.c.b16 %v3253, %v3237
    %v4870 = vpack.c.b16 %v3254, %v3238
    %v4871 = vpack.c.b16 %v3255, %v3239
    %v4872 = vpack.c.b16 %v3256, %v3240
    %v4873 = vpack.c.b16 %v3257, %v3241
    %v4874 = vpack.c.b16 %v3258, %v3242
    %v4875 = vpack.c.b16 %v3259, %v3243
    %v4876 = vpack.c.b16 %v3260, %v3244
    %v4877 = vpack.c.b16 %v3277, %v3261
    %v4878 = vpack.c.b16 %v3278, %v3262
    %v4879 = vpack.c.b16 %v3279, %v3263
    %v4880 = vpack.c.b16 %v3280, %v3264
    %v4881 = vpack.c.b16 %v3281, %v3265
    %v4882 = vpack.c.b16 %v3282, %v3266
    %v4883 = vpack.c.b16 %v3283, %v3267
    %v4884 = vpack.c.b16 %v3284, %v3268
    %v4885 = vpack.c.b16 %v3285, %v3269
    %v4886 = vpack.c.b16 %v3286, %v3270
    %v4887 = vpack.c.b16 %v3287, %v3271
    %v4888 = vpack.c.b16 %v3288, %v3272
    %v4889 = vpack.c.b16 %v3289, %v3273
    %v4890 = vpack.c.b16 %v3290, %v3274
    %v4891 = vpack.c.b16 %v3291, %v3275
    %v4892 = vpack.c.b16 %v3292, %v3276
    %v4893 = vpack.c.b16 %v3309, %v3293
    %v4894 = vpack.c.b16 %v3310, %v3294
    %v4895 = vpack.c.b16 %v3311, %v3295
    %v4896 = vpack.c.b16 %v3312, %v3296
    %v4897 = vpack.c.b16 %v3313, %v3297
    %v4898 = vpack.c.b16 %v3314, %v3298
    %v4899 = vpack.c.b16 %v3315, %v3299
    %v4900 = vpack.c.b16 %v3316, %v3300
    %v4901 = vpack.c.b16 %v3317, %v3301
    %v4902 = vpack.c.b16 %v3318, %v3302
    %v4903 = vpack.c.b16 %v3319, %v3303
    %v4904 = vpack.c.b16 %v3320, %v3304
    %v4905 = vpack.c.b16 %v3321, %v3305
    %v4906 = vpack.c.b16 %v3322, %v3306
    %v4907 = vpack.c.b16 %v3323, %v3307
    %v4908 = vpack.c.b16 %v3324, %v3308
    %v4909 = vpack.c.b16 %v3341, %v3325
    %v4910 = vpack.c.b16 %v3342, %v3326
    %v4911 = vpack.c.b16 %v3343, %v3327
    %v4912 = vpack.c.b16 %v3344, %v3328
    %v4913 = vpack.c.b16 %v3345, %v3329
    %v4914 = vpack.c.b16 %v3346, %v3330
    %v4915 = vpack.c.b16 %v3347, %v3331
    %v4916 = vpack.c.b16 %v3348, %v3332
    %v4917 = vpack.c.b16 %v3349, %v3333
    %v4918 = vpack.c.b16 %v3350, %v3334
    %v4919 = vpack.c.b16 %v3351, %v3335
    %v4920 = vpack.c.b16 %v3352, %v3336
    %v4921 = vpack.c.b16 %v3353, %v3337
    %v4922 = vpack.c.b16 %v3354, %v3338
    %v4923 = vpack.c.b16 %v3355, %v3339
    %v4924 = vpack.c.b16 %v3356, %v3340
    %v4925 = vpack.c.b16 %v3373, %v3357
    %v4926 = vpack.c.b16 %v3374, %v3358
    %v4927 = vpack.c.b16 %v3375, %v3359
    %v4928 = vpack.c.b16 %v3376, %v3360
    %v4929 = vpack.c.b16 %v3377, %v3361
    %v4930 = vpack.c.b16 %v3378, %v3362
    %v4931 = vpack.c.b16 %v3379, %v3363
    %v4932 = vpack.c.b16 %v3380, %v3364
    %v4933 = vpack.c.b16 %v3381, %v3365
    %v4934 = vpack.c.b16 %v3382, %v3366
    %v4935 = vpack.c.b16 %v3383, %v3367
    %v4936 = vpack.c.b16 %v3384, %v3368
    %v4937 = vpack.c.b16 %v3385, %v3369
    %v4938 = vpack.c.b16 %v3386, %v3370
    %v4939 = vpack.c.b16 %v3387, %v3371
    %v4940 = vpack.c.b16 %v3388, %v3372
    %v4941 = vpack.c.b16 %v3405, %v3389
    %v4942 = vpack.c.b16 %v3406, %v3390
    %v4943 = vpack.c.b16 %v3407, %v3391
    %v4944 = vpack.c.b16 %v3408, %v3392
    %v4945 = vpack.c.b16 %v3409, %v3393
    %v4946 = vpack.c.b16 %v3410, %v3394
    %v4947 = vpack.c.b16 %v3411, %v3395
    %v4948 = vpack.c.b16 %v3412, %v3396
    %v4949 = vpack.c.b16 %v3413, %v3397
    %v4950 = vpack.c.b16 %v3414, %v3398
    %v4951 = vpack.c.b16 %v3415, %v3399
    %v4952 = vpack.c.b16 %v3416, %v3400
    %v4953 = vpack.c.b16 %v3417, %v3401
    %v4954 = vpack.c.b16 %v3418, %v3402
    %v4955 = vpack.c.b16 %v3419, %v3403
    %v4956 = vpack.c.b16 %v3420, %v3404
    %v4957 = vpack.c.b16 %v3437, %v3421
    %v4958 = vpack.c.b16 %v3438, %v3422
    %v4959 = vpack.c.b16 %v3439, %v3423
    %v4960 = vpack.c.b16 %v3440, %v3424
    %v4961 = vpack.c.b16 %v3441, %v3425
    %v4962 = vpack.c.b16 %v3442, %v3426
    %v4963 = vpack.c.b16 %v3443, %v3427
    %v4964 = vpack.c.b16 %v3444, %v3428
    %v4965 = vpack.c.b16 %v3445, %v3429
    %v4966 = vpack.c.b16 %v3446, %v3430
    %v4967 = vpack.c.b16 %v3447, %v3431
    %v4968 = vpack.c.b16 %v3448, %v3432
    %v4969 = vpack.c.b16 %v3449, %v3433
    %v4970 = vpack.c.b16 %v3450, %v3434
    %v4971 = vpack.c.b16 %v3451, %v3435
    %v4972 = vpack.c.b16 %v3452, %v3436
    %v4973 = vpack.c.b16 %v3469, %v3453
    %v4974 = vpack.c.b16 %v3470, %v3454
    %v4975 = vpack.c.b16 %v3471, %v3455
    %v4976 = vpack.c.b16 %v3472, %v3456
    %v4977 = vpack.c.b16 %v3473, %v3457
    %v4978 = vpack.c.b16 %v3474, %v3458
    %v4979 = vpack.c.b16 %v3475, %v3459
    %v4980 = vpack.c.b16 %v3476, %v3460
    %v4981 = vpack.c.b16 %v3477, %v3461
    %v4982 = vpack.c.b16 %v3478, %v3462
    %v4983 = vpack.c.b16 %v3479, %v3463
    %v4984 = vpack.c.b16 %v3480, %v3464
    %v4985 = vpack.c.b16 %v3481, %v3465
    %v4986 = vpack.c.b16 %v3482, %v3466
    %v4987 = vpack.c.b16 %v3483, %v3467
    %v4988 = vpack.c.b16 %v3484, %v3468
    %v4989 = vpack.c.b16 %v3501, %v3485
    %v4990 = vpack.c.b16 %v3502, %v3486
    %v4991 = vpack.c.b16 %v3503, %v3487
    %v4992 = vpack.c.b16 %v3504, %v3488
    %v4993 = vpack.c.b16 %v3505, %v3489
    %v4994 = vpack.c.b16 %v3506, %v3490
    %v4995 = vpack.c.b16 %v3507, %v3491
    %v4996 = vpack.c.b16 %v3508, %v3492
    %v4997 = vpack.c.b16 %v3509, %v3493
    %v4998 = vpack.c.b16 %v3510, %v3494
    %v4999 = vpack.c.b16 %v3511, %v3495
    %v5000 = vpack.c.b16 %v3512, %v3496
    %v5001 = vpack.c.b16 %v3513, %v3497
    %v5002 = vpack.c.b16 %v3514, %v3498
    %v5003 = vpack.c.b16 %v3515, %v3499
    %v5004 = vpack.c.b16 %v3516, %v3500
    %v5005 = vpack.c.b16 %v3533, %v3517
    %v5006 = vpack.c.b16 %v3534, %v3518
    %v5007 = vpack.c.b16 %v3535, %v3519
    %v5008 = vpack.c.b16 %v3536, %v3520
    %v5009 = vpack.c.b16 %v3537, %v3521
    %v5010 = vpack.c.b16 %v3538, %v3522
    %v5011 = vpack.c.b16 %v3539, %v3523
    %v5012 = vpack.c.b16 %v3540, %v3524
    %v5013 = vpack.c.b16 %v3541, %v3525
    %v5014 = vpack.c.b16 %v3542, %v3526
    %v5015 = vpack.c.b16 %v3543, %v3527
    %v5016 = vpack.c.b16 %v3544, %v3528
    %v5017 = vpack.c.b16 %v3545, %v3529
    %v5018 = vpack.c.b16 %v3546, %v3530
    %v5019 = vpack.c.b16 %v3547, %v3531
    %v5020 = vpack.c.b16 %v3548, %v3532
    %v5021 = vpack.c.b16 %v3565, %v3549
    %v5022 = vpack.c.b16 %v3566, %v3550
    %v5023 = vpack.c.b16 %v3567, %v3551
    %v5024 = vpack.c.b16 %v3568, %v3552
    %v5025 = vpack.c.b16 %v3569, %v3553
    %v5026 = vpack.c.b16 %v3570, %v3554
    %v5027 = vpack.c.b16 %v3571, %v3555
    %v5028 = vpack.c.b16 %v3572, %v3556
    %v5029 = vpack.c.b16 %v3573, %v3557
    %v5030 = vpack.c.b16 %v3574, %v3558
    %v5031 = vpack.c.b16 %v3575, %v3559
    %v5032 = vpack.c.b16 %v3576, %v3560
    %v5033 = vpack.c.b16 %v3577, %v3561
    %v5034 = vpack.c.b16 %v3578, %v3562
    %v5035 = vpack.c.b16 %v3579, %v3563
    %v5036 = vpack.c.b16 %v3580, %v3564
    %v5037 = vpack.c.b16 %v3597, %v3581
    %v5038 = vpack.c.b16 %v3598, %v3582
    %v5039 = vpack.c.b16 %v3599, %v3583
    %v5040 = vpack.c.b16 %v3600, %v3584
    %v5041 = vpack.c.b16 %v3601, %v3585
    %v5042 = vpack.c.b16 %v3602, %v3586
    %v5043 = vpack.c.b16 %v3603, %v3587
    %v5044 = vpack.c.b16 %v3604, %v3588
    %v5045 = vpack.c.b16 %v3605, %v3589
    %v5046 = vpack.c.b16 %v3606, %v3590
    %v5047 = vpack.c.b16 %v3607, %v3591
    %v5048 = vpack.c.b16 %v3608, %v3592
    %v5049 = vpack.c.b16 %v3609, %v3593
    %v5050 = vpack.c.b16 %v3610, %v3594
    %v5051 = vpack.c.b16 %v3611, %v3595
    %v5052 = vpack.c.b16 %v3612, %v3596
    %v5053 = vpack.c.b16 %v3629, %v3613
    %v5054 = vpack.c.b16 %v3630, %v3614
    %v5055 = vpack.c.b16 %v3631, %v3615
    %v5056 = vpack.c.b16 %v3632, %v3616
    %v5057 = vpack.c.b16 %v3633, %v3617
    %v5058 = vpack.c.b16 %v3634, %v3618
    %v5059 = vpack.c.b16 %v3635, %v3619
    %v5060 = vpack.c.b16 %v3636, %v3620
    %v5061 = vpack.c.b16 %v3637, %v3621
    %v5062 = vpack.c.b16 %v3638, %v3622
    %v5063 = vpack.c.b16 %v3639, %v3623
    %v5064 = vpack.c.b16 %v3640, %v3624
    %v5065 = vpack.c.b16 %v3641, %v3625
    %v5066 = vpack.c.b16 %v3642, %v3626
    %v5067 = vpack.c.b16 %v3643, %v3627
    %v5068 = vpack.c.b16 %v3644, %v3628
    %v5069 = vpack.c.b16 %v3661, %v3645
    %v5070 = vpack.c.b16 %v3662, %v3646
    %v5071 = vpack.c.b16 %v3663, %v3647
    %v5072 = vpack.c.b16 %v3664, %v3648
    %v5073 = vpack.c.b16 %v3665, %v3649
    %v5074 = vpack.c.b16 %v3666, %v3650
    %v5075 = vpack.c.b16 %v3667, %v3651
    %v5076 = vpack.c.b16 %v3668, %v3652
    %v5077 = vpack.c.b16 %v3669, %v3653
    %v5078 = vpack.c.b16 %v3670, %v3654
    %v5079 = vpack.c.b16 %v3671, %v3655
    %v5080 = vpack.c.b16 %v3672, %v3656
    %v5081 = vpack.c.b16 %v3673, %v3657
    %v5082 = vpack.c.b16 %v3674, %v3658
    %v5083 = vpack.c.b16 %v3675, %v3659
    %v5084 = vpack.c.b16 %v3676, %v3660
    %v5085 = vpack.c.b16 %v3693, %v3677
    %v5086 = vpack.c.b16 %v3694, %v3678
    %v5087 = vpack.c.b16 %v3695, %v3679
    %v5088 = vpack.c.b16 %v3696, %v3680
    %v5089 = vpack.c.b16 %v3697, %v3681
    %v5090 = vpack.c.b16 %v3698, %v3682
    %v5091 = vpack.c.b16 %v3699, %v3683
    %v5092 = vpack.c.b16 %v3700, %v3684
    %v5093 = vpack.c.b16 %v3701, %v3685
    %v5094 = vpack.c.b16 %v3702, %v3686
    %v5095 = vpack.c.b16 %v3703, %v3687
    %v5096 = vpack.c.b16 %v3704, %v3688
    %v5097 = vpack.c.b16 %v3705, %v3689
    %v5098 = vpack.c.b16 %v3706, %v3690
    %v5099 = vpack.c.b16 %v3707, %v3691
    %v5100 = vpack.c.b16 %v3708, %v3692
    %v5101 = vpack.c.b16 %v3725, %v3709
    %v5102 = vpack.c.b16 %v3726, %v3710
    %v5103 = vpack.c.b16 %v3727, %v3711
    %v5104 = vpack.c.b16 %v3728, %v3712
    %v5105 = vpack.c.b16 %v3729, %v3713
    %v5106 = vpack.c.b16 %v3730, %v3714
    %v5107 = vpack.c.b16 %v3731, %v3715
    %v5108 = vpack.c.b16 %v3732, %v3716
    %v5109 = vpack.c.b16 %v3733, %v3717
    %v5110 = vpack.c.b16 %v3734, %v3718
    %v5111 = vpack.c.b16 %v3735, %v3719
    %v5112 = vpack.c.b16 %v3736, %v3720
    %v5113 = vpack.c.b16 %v3737, %v3721
    %v5114 = vpack.c.b16 %v3738, %v3722
    %v5115 = vpack.c.b16 %v3739, %v3723
    %v5116 = vpack.c.b16 %v3740, %v3724
    %v5117 = vpack.c.b16 %v3757, %v3741
    %v5118 = vpack.c.b16 %v3758, %v3742
    %v5119 = vpack.c.b16 %v3759, %v3743
    %v5120 = vpack.c.b16 %v3760, %v3744
    %v5121 = vpack.c.b16 %v3761, %v3745
    %v5122 = vpack.c.b16 %v3762, %v3746
    %v5123 = vpack.c.b16 %v3763, %v3747
    %v5124 = vpack.c.b16 %v3764, %v3748
    %v5125 = vpack.c.b16 %v3765, %v3749
    %v5126 = vpack.c.b16 %v3766, %v3750
    %v5127 = vpack.c.b16 %v3767, %v3751
    %v5128 = vpack.c.b16 %v3768, %v3752
    %v5129 = vpack.c.b16 %v3769, %v3753
    %v5130 = vpack.c.b16 %v3770, %v3754
    %v5131 = vpack.c.b16 %v3771, %v3755
    %v5132 = vpack.c.b16 %v3772, %v3756
    %v5133 = vpack.c.b16 %v3789, %v3773
    %v5134 = vpack.c.b16 %v3790, %v3774
    %v5135 = vpack.c.b16 %v3791, %v3775
    %v5136 = vpack.c.b16 %v3792, %v3776
    %v5137 = vpack.c.b16 %v3793, %v3777
    %v5138 = vpack.c.b16 %v3794, %v3778
    %v5139 = vpack.c.b16 %v3795, %v3779
    %v5140 = vpack.c.b16 %v3796, %v3780
    %v5141 = vpack.c.b16 %v3797, %v3781
    %v5142 = vpack.c.b16 %v3798, %v3782
    %v5143 = vpack.c.b16 %v3799, %v3783
    %v5144 = vpack.c.b16 %v3800, %v3784
    %v5145 = vpack.c.b16 %v3801, %v3785
    %v5146 = vpack.c.b16 %v3802, %v3786
    %v5147 = vpack.c.b16 %v3803, %v3787
    %v5148 = vpack.c.b16 %v3804, %v3788
    %v5149 = vpack.c.b16 %v3821, %v3805
    %v5150 = vpack.c.b16 %v3822, %v3806
    %v5151 = vpack.c.b16 %v3823, %v3807
    %v5152 = vpack.c.b16 %v3824, %v3808
    %v5153 = vpack.c.b16 %v3825, %v3809
    %v5154 = vpack.c.b16 %v3826, %v3810
    %v5155 = vpack.c.b16 %v3827, %v3811
    %v5156 = vpack.c.b16 %v3828, %v3812
    %v5157 = vpack.c.b16 %v3829, %v3813
    %v5158 = vpack.c.b16 %v3830, %v3814
    %v5159 = vpack.c.b16 %v3831, %v3815
    %v5160 = vpack.c.b16 %v3832, %v3816
    %v5161 = vpack.c.b16 %v3833, %v3817
    %v5162 = vpack.c.b16 %v3834, %v3818
    %v5163 = vpack.c.b16 %v3835, %v3819
    %v5164 = vpack.c.b16 %v3836, %v3820
    %v5165 = vpack.c.b16 %v3853, %v3837
    %v5166 = vpack.c.b16 %v3854, %v3838
    %v5167 = vpack.c.b16 %v3855, %v3839
    %v5168 = vpack.c.b16 %v3856, %v3840
    %v5169 = vpack.c.b16 %v3857, %v3841
    %v5170 = vpack.c.b16 %v3858, %v3842
    %v5171 = vpack.c.b16 %v3859, %v3843
    %v5172 = vpack.c.b16 %v3860, %v3844
    %v5173 = vpack.c.b16 %v3861, %v3845
    %v5174 = vpack.c.b16 %v3862, %v3846
    %v5175 = vpack.c.b16 %v3863, %v3847
    %v5176 = vpack.c.b16 %v3864, %v3848
    %v5177 = vpack.c.b16 %v3865, %v3849
    %v5178 = vpack.c.b16 %v3866, %v3850
    %v5179 = vpack.c.b16 %v3867, %v3851
    %v5180 = vpack.c.b16 %v3868, %v3852
    %v5181 = vpack.c.b16 %v3885, %v3869
    %v5182 = vpack.c.b16 %v3886, %v3870
    %v5183 = vpack.c.b16 %v3887, %v3871
    %v5184 = vpack.c.b16 %v3888, %v3872
    %v5185 = vpack.c.b16 %v3889, %v3873
    %v5186 = vpack.c.b16 %v3890, %v3874
    %v5187 = vpack.c.b16 %v3891, %v3875
    %v5188 = vpack.c.b16 %v3892, %v3876
    %v5189 = vpack.c.b16 %v3893, %v3877
    %v5190 = vpack.c.b16 %v3894, %v3878
    %v5191 = vpack.c.b16 %v3895, %v3879
    %v5192 = vpack.c.b16 %v3896, %v3880
    %v5193 = vpack.c.b16 %v3897, %v3881
    %v5194 = vpack.c.b16 %v3898, %v3882
    %v5195 = vpack.c.b16 %v3899, %v3883
    %v5196 = vpack.c.b16 %v3900, %v3884
    %v5197 = vpack.c.b16 %v3917, %v3901
    %v5198 = vpack.c.b16 %v3918, %v3902
    %v5199 = vpack.c.b16 %v3919, %v3903
    %v5200 = vpack.c.b16 %v3920, %v3904
    %v5201 = vpack.c.b16 %v3921, %v3905
    %v5202 = vpack.c.b16 %v3922, %v3906
    %v5203 = vpack.c.b16 %v3923, %v3907
    %v5204 = vpack.c.b16 %v3924, %v3908
    %v5205 = vpack.c.b16 %v3925, %v3909
    %v5206 = vpack.c.b16 %v3926, %v3910
    %v5207 = vpack.c.b16 %v3927, %v3911
    %v5208 = vpack.c.b16 %v3928, %v3912
    %v5209 = vpack.c.b16 %v3929, %v3913
    %v5210 = vpack.c.b16 %v3930, %v3914
    %v5211 = vpack.c.b16 %v3931, %v3915
    %v5212 = vpack.c.b16 %v3932, %v3916
    %v5213 = vpack.c.b16 %v3949, %v3933
    %v5214 = vpack.c.b16 %v3950, %v3934
    %v5215 = vpack.c.b16 %v3951, %v3935
    %v5216 = vpack.c.b16 %v3952, %v3936
    %v5217 = vpack.c.b16 %v3953, %v3937
    %v5218 = vpack.c.b16 %v3954, %v3938
    %v5219 = vpack.c.b16 %v3955, %v3939
    %v5220 = vpack.c.b16 %v3956, %v3940
    %v5221 = vpack.c.b16 %v3957, %v3941
    %v5222 = vpack.c.b16 %v3958, %v3942
    %v5223 = vpack.c.b16 %v3959, %v3943
    %v5224 = vpack.c.b16 %v3960, %v3944
    %v5225 = vpack.c.b16 %v3961, %v3945
    %v5226 = vpack.c.b16 %v3962, %v3946
    %v5227 = vpack.c.b16 %v3963, %v3947
    %v5228 = vpack.c.b16 %v3964, %v3948
    %v5229 = vpack.c.b16 %v3981, %v3965
    %v5230 = vpack.c.b16 %v3982, %v3966
    %v5231 = vpack.c.b16 %v3983, %v3967
    %v5232 = vpack.c.b16 %v3984, %v3968
    %v5233 = vpack.c.b16 %v3985, %v3969
    %v5234 = vpack.c.b16 %v3986, %v3970
    %v5235 = vpack.c.b16 %v3987, %v3971
    %v5236 = vpack.c.b16 %v3988, %v3972
    %v5237 = vpack.c.b16 %v3989, %v3973
    %v5238 = vpack.c.b16 %v3990, %v3974
    %v5239 = vpack.c.b16 %v3991, %v3975
    %v5240 = vpack.c.b16 %v3992, %v3976
    %v5241 = vpack.c.b16 %v3993, %v3977
    %v5242 = vpack.c.b16 %v3994, %v3978
    %v5243 = vpack.c.b16 %v3995, %v3979
    %v5244 = vpack.c.b16 %v3996, %v3980
    %v5245 = vpack.c.b16 %v4013, %v3997
    %v5246 = vpack.c.b16 %v4014, %v3998
    %v5247 = vpack.c.b16 %v4015, %v3999
    %v5248 = vpack.c.b16 %v4016, %v4000
    %v5249 = vpack.c.b16 %v4017, %v4001
    %v5250 = vpack.c.b16 %v4018, %v4002
    %v5251 = vpack.c.b16 %v4019, %v4003
    %v5252 = vpack.c.b16 %v4020, %v4004
    %v5253 = vpack.c.b16 %v4021, %v4005
    %v5254 = vpack.c.b16 %v4022, %v4006
    %v5255 = vpack.c.b16 %v4023, %v4007
    %v5256 = vpack.c.b16 %v4024, %v4008
    %v5257 = vpack.c.b16 %v4025, %v4009
    %v5258 = vpack.c.b16 %v4026, %v4010
    %v5259 = vpack.c.b16 %v4027, %v4011
    %v5260 = vpack.c.b16 %v4028, %v4012
    %v5261 = vpack.c.b16 %v4045, %v4029
    %v5262 = vpack.c.b16 %v4046, %v4030
    %v5263 = vpack.c.b16 %v4047, %v4031
    %v5264 = vpack.c.b16 %v4048, %v4032
    %v5265 = vpack.c.b16 %v4049, %v4033
    %v5266 = vpack.c.b16 %v4050, %v4034
    %v5267 = vpack.c.b16 %v4051, %v4035
    %v5268 = vpack.c.b16 %v4052, %v4036
    %v5269 = vpack.c.b16 %v4053, %v4037
    %v5270 = vpack.c.b16 %v4054, %v4038
    %v5271 = vpack.c.b16 %v4055, %v4039
    %v5272 = vpack.c.b16 %v4056, %v4040
    %v5273 = vpack.c.b16 %v4057, %v4041
    %v5274 = vpack.c.b16 %v4058, %v4042
    %v5275 = vpack.c.b16 %v4059, %v4043
    %v5276 = vpack.c.b16 %v4060, %v4044
    %v5277 = vpack.c.b16 %v4077, %v4061
    %v5278 = vpack.c.b16 %v4078, %v4062
    %v5279 = vpack.c.b16 %v4079, %v4063
    %v5280 = vpack.c.b16 %v4080, %v4064
    %v5281 = vpack.c.b16 %v4081, %v4065
    %v5282 = vpack.c.b16 %v4082, %v4066
    %v5283 = vpack.c.b16 %v4083, %v4067
    %v5284 = vpack.c.b16 %v4084, %v4068
    %v5285 = vpack.c.b16 %v4085, %v4069
    %v5286 = vpack.c.b16 %v4086, %v4070
    %v5287 = vpack.c.b16 %v4087, %v4071
    %v5288 = vpack.c.b16 %v4088, %v4072
    %v5289 = vpack.c.b16 %v4089, %v4073
    %v5290 = vpack.c.b16 %v4090, %v4074
    %v5291 = vpack.c.b16 %v4091, %v4075
    %v5292 = vpack.c.b16 %v4092, %v4076
    %v5293 = vpack.c.b16 %v4109, %v4093
    %v5294 = vpack.c.b16 %v4110, %v4094
    %v5295 = vpack.c.b16 %v4111, %v4095
    %v5296 = vpack.c.b16 %v4112, %v4096
    %v5297 = vpack.c.b16 %v4113, %v4097
    %v5298 = vpack.c.b16 %v4114, %v4098
    %v5299 = vpack.c.b16 %v4115, %v4099
    %v5300 = vpack.c.b16 %v4116, %v4100
    %v5301 = vpack.c.b16 %v4117, %v4101
    %v5302 = vpack.c.b16 %v4118, %v4102
    %v5303 = vpack.c.b16 %v4119, %v4103
    %v5304 = vpack.c.b16 %v4120, %v4104
    %v5305 = vpack.c.b16 %v4121, %v4105
    %v5306 = vpack.c.b16 %v4122, %v4106
    %v5307 = vpack.c.b16 %v4123, %v4107
    %v5308 = vpack.c.b16 %v4124, %v4108
    %v5309 = vpack.c.b16 %v4141, %v4125
    %v5310 = vpack.c.b16 %v4142, %v4126
    %v5311 = vpack.c.b16 %v4143, %v4127
    %v5312 = vpack.c.b16 %v4144, %v4128
    %v5313 = vpack.c.b16 %v4145, %v4129
    %v5314 = vpack.c.b16 %v4146, %v4130
    %v5315 = vpack.c.b16 %v4147, %v4131
    %v5316 = vpack.c.b16 %v4148, %v4132
    %v5317 = vpack.c.b16 %v4149, %v4133
    %v5318 = vpack.c.b16 %v4150, %v4134
    %v5319 = vpack.c.b16 %v4151, %v4135
    %v5320 = vpack.c.b16 %v4152, %v4136
    %v5321 = vpack.c.b16 %v4153, %v4137
    %v5322 = vpack.c.b16 %v4154, %v4138
    %v5323 = vpack.c.b16 %v4155, %v4139
    %v5324 = vpack.c.b16 %v4156, %v4140
    %v5325 = vpack.c.b16 %v4173, %v4157
    %v5326 = vpack.c.b16 %v4174, %v4158
    %v5327 = vpack.c.b16 %v4175, %v4159
    %v5328 = vpack.c.b16 %v4176, %v4160
    %v5329 = vpack.c.b16 %v4177, %v4161
    %v5330 = vpack.c.b16 %v4178, %v4162
    %v5331 = vpack.c.b16 %v4179, %v4163
    %v5332 = vpack.c.b16 %v4180, %v4164
    %v5333 = vpack.c.b16 %v4181, %v4165
    %v5334 = vpack.c.b16 %v4182, %v4166
    %v5335 = vpack.c.b16 %v4183, %v4167
    %v5336 = vpack.c.b16 %v4184, %v4168
    %v5337 = vpack.c.b16 %v4185, %v4169
    %v5338 = vpack.c.b16 %v4186, %v4170
    %v5339 = vpack.c.b16 %v4187, %v4171
    %v5340 = vpack.c.b16 %v4188, %v4172
    %v5341 = vpack.c.b16 %v4205, %v4189
    %v5342 = vpack.c.b16 %v4206, %v4190
    %v5343 = vpack.c.b16 %v4207, %v4191
    %v5344 = vpack.c.b16 %v4208, %v4192
    %v5345 = vpack.c.b16 %v4209, %v4193
    %v5346 = vpack.c.b16 %v4210, %v4194
    %v5347 = vpack.c.b16 %v4211, %v4195
    %v5348 = vpack.c.b16 %v4212, %v4196
    %v5349 = vpack.c.b16 %v4213, %v4197
    %v5350 = vpack.c.b16 %v4214, %v4198
    %v5351 = vpack.c.b16 %v4215, %v4199
    %v5352 = vpack.c.b16 %v4216, %v4200
    %v5353 = vpack.c.b16 %v4217, %v4201
    %v5354 = vpack.c.b16 %v4218, %v4202
    %v5355 = vpack.c.b16 %v4219, %v4203
    %v5356 = vpack.c.b16 %v4220, %v4204
    %v5357 = vpack.c.b16 %v4237, %v4221
    %v5358 = vpack.c.b16 %v4238, %v4222
    %v5359 = vpack.c.b16 %v4239, %v4223
    %v5360 = vpack.c.b16 %v4240, %v4224
    %v5361 = vpack.c.b16 %v4241, %v4225
    %v5362 = vpack.c.b16 %v4242, %v4226
    %v5363 = vpack.c.b16 %v4243, %v4227
    %v5364 = vpack.c.b16 %v4244, %v4228
    %v5365 = vpack.c.b16 %v4245, %v4229
    %v5366 = vpack.c.b16 %v4246, %v4230
    %v5367 = vpack.c.b16 %v4247, %v4231
    %v5368 = vpack.c.b16 %v4248, %v4232
    %v5369 = vpack.c.b16 %v4249, %v4233
    %v5370 = vpack.c.b16 %v4250, %v4234
    %v5371 = vpack.c.b16 %v4251, %v4235
    %v5372 = vpack.c.b16 %v4252, %v4236
    %v5373 = vpack.c.b16 %v4269, %v4253
    %v5374 = vpack.c.b16 %v4270, %v4254
    %v5375 = vpack.c.b16 %v4271, %v4255
    %v5376 = vpack.c.b16 %v4272, %v4256
    %v5377 = vpack.c.b16 %v4273, %v4257
    %v5378 = vpack.c.b16 %v4274, %v4258
    %v5379 = vpack.c.b16 %v4275, %v4259
    %v5380 = vpack.c.b16 %v4276, %v4260
    %v5381 = vpack.c.b16 %v4277, %v4261
    %v5382 = vpack.c.b16 %v4278, %v4262
    %v5383 = vpack.c.b16 %v4279, %v4263
    %v5384 = vpack.c.b16 %v4280, %v4264
    %v5385 = vpack.c.b16 %v4281, %v4265
    %v5386 = vpack.c.b16 %v4282, %v4266
    %v5387 = vpack.c.b16 %v4283, %v4267
    %v5388 = vpack.c.b16 %v4284, %v4268
    %v5389 = vpack.c.b16 %v4301, %v4285
    %v5390 = vpack.c.b16 %v4302, %v4286
    %v5391 = vpack.c.b16 %v4303, %v4287
    %v5392 = vpack.c.b16 %v4304, %v4288
    %v5393 = vpack.c.b16 %v4305, %v4289
    %v5394 = vpack.c.b16 %v4306, %v4290
    %v5395 = vpack.c.b16 %v4307, %v4291
    %v5396 = vpack.c.b16 %v4308, %v4292
    %v5397 = vpack.c.b16 %v4309, %v4293
    %v5398 = vpack.c.b16 %v4310, %v4294
    %v5399 = vpack.c.b16 %v4311, %v4295
    %v5400 = vpack.c.b16 %v4312, %v4296
    %v5401 = vpack.c.b16 %v4313, %v4297
    %v5402 = vpack.c.b16 %v4314, %v4298
    %v5403 = vpack.c.b16 %v4315, %v4299
    %v5404 = vpack.c.b16 %v4316, %v4300
    %v5405 = vpack.c.b16 %v4333, %v4317
    %v5406 = vpack.c.b16 %v4334, %v4318
    %v5407 = vpack.c.b16 %v4335, %v4319
    %v5408 = vpack.c.b16 %v4336, %v4320
    %v5409 = vpack.c.b16 %v4337, %v4321
    %v5410 = vpack.c.b16 %v4338, %v4322
    %v5411 = vpack.c.b16 %v4339, %v4323
    %v5412 = vpack.c.b16 %v4340, %v4324
    %v5413 = vpack.c.b16 %v4341, %v4325
    %v5414 = vpack.c.b16 %v4342, %v4326
    %v5415 = vpack.c.b16 %v4343, %v4327
    %v5416 = vpack.c.b16 %v4344, %v4328
    %v5417 = vpack.c.b16 %v4345, %v4329
    %v5418 = vpack.c.b16 %v4346, %v4330
    %v5419 = vpack.c.b16 %v4347, %v4331
    %v5420 = vpack.c.b16 %v4348, %v4332
    %v5421 = vpack.c.b16 %v4365, %v4349
    %v5422 = vpack.c.b16 %v4366, %v4350
    %v5423 = vpack.c.b16 %v4367, %v4351
    %v5424 = vpack.c.b16 %v4368, %v4352
    %v5425 = vpack.c.b16 %v4369, %v4353
    %v5426 = vpack.c.b16 %v4370, %v4354
    %v5427 = vpack.c.b16 %v4371, %v4355
    %v5428 = vpack.c.b16 %v4372, %v4356
    %v5429 = vpack.c.b16 %v4373, %v4357
    %v5430 = vpack.c.b16 %v4374, %v4358
    %v5431 = vpack.c.b16 %v4375, %v4359
    %v5432 = vpack.c.b16 %v4376, %v4360
    %v5433 = vpack.c.b16 %v4377, %v4361
    %v5434 = vpack.c.b16 %v4378, %v4362
    %v5435 = vpack.c.b16 %v4379, %v4363
    %v5436 = vpack.c.b16 %v4380, %v4364
    %v5437 = vpack.c.b16 %v4397, %v4381
    %v5438 = vpack.c.b16 %v4398, %v4382
    %v5439 = vpack.c.b16 %v4399, %v4383
    %v5440 = vpack.c.b16 %v4400, %v4384
    %v5441 = vpack.c.b16 %v4401, %v4385
    %v5442 = vpack.c.b16 %v4402, %v4386
    %v5443 = vpack.c.b16 %v4403, %v4387
    %v5444 = vpack.c.b16 %v4404, %v4388
    %v5445 = vpack.c.b16 %v4405, %v4389
    %v5446 = vpack.c.b16 %v4406, %v4390
    %v5447 = vpack.c.b16 %v4407, %v4391
    %v5448 = vpack.c.b16 %v4408, %v4392
    %v5449 = vpack.c.b16 %v4409, %v4393
    %v5450 = vpack.c.b16 %v4410, %v4394
    %v5451 = vpack.c.b16 %v4411, %v4395
    %v5452 = vpack.c.b16 %v4412, %v4396
    %v5453 = vpack.c.b16 %v4429, %v4413
    %v5454 = vpack.c.b16 %v4430, %v4414
    %v5455 = vpack.c.b16 %v4431, %v4415
    %v5456 = vpack.c.b16 %v4432, %v4416
    %v5457 = vpack.c.b16 %v4433, %v4417
    %v5458 = vpack.c.b16 %v4434, %v4418
    %v5459 = vpack.c.b16 %v4435, %v4419
    %v5460 = vpack.c.b16 %v4436, %v4420
    %v5461 = vpack.c.b16 %v4437, %v4421
    %v5462 = vpack.c.b16 %v4438, %v4422
    %v5463 = vpack.c.b16 %v4439, %v4423
    %v5464 = vpack.c.b16 %v4440, %v4424
    %v5465 = vpack.c.b16 %v4441, %v4425
    %v5466 = vpack.c.b16 %v4442, %v4426
    %v5467 = vpack.c.b16 %v4443, %v4427
    %v5468 = vpack.c.b16 %v4444, %v4428
    %6493 = vmatprep.subr.bf16.mxu0 %v4446
    %6494 = vmatpush1.bf16.msra.mxu0 %v4445
    %6495 = vmatprep.subr.bf16.mxu0 %v4462
    %6496 = vmatpush1.bf16.msra.mxu0 %v4461
    %6497 = vmatprep.subr.bf16.mxu0 %v4478
    %6498 = vmatpush1.bf16.msra.mxu0 %v4477
    %6499 = vmatprep.subr.bf16.mxu0 %v4494
    %6500 = vmatpush1.bf16.msra.mxu0 %v4493
    %6501 = vmatprep.subr.bf16.mxu0 %v4510
    %6502 = vmatpush1.bf16.msra.mxu0 %v4509
    %6503 = vmatprep.subr.bf16.mxu0 %v4526
    %6504 = vmatpush1.bf16.msra.mxu0 %v4525
    %6505 = vmatprep.subr.bf16.mxu0 %v4542
    %6506 = vmatpush1.bf16.msra.mxu0 %v4541
    %6507 = vmatprep.subr.bf16.mxu0 %v4558
    %6508 = vmatpush1.bf16.msra.mxu0 %v4557
    %6509 = vmatprep.subr.bf16.mxu0 %v4574
    %6510 = vmatpush1.bf16.msra.mxu0 %v4573
    %6511 = vmatprep.subr.bf16.mxu0 %v4590
    %6512 = vmatpush1.bf16.msra.mxu0 %v4589
    %6513 = vmatprep.subr.bf16.mxu0 %v4606
    %6514 = vmatpush1.bf16.msra.mxu0 %v4605
    %6515 = vmatprep.subr.bf16.mxu0 %v4622
    %6516 = vmatpush1.bf16.msra.mxu0 %v4621
    %6517 = vmatprep.subr.bf16.mxu0 %v4638
    %6518 = vmatpush1.bf16.msra.mxu0 %v4637
    %6519 = vmatprep.subr.bf16.mxu0 %v4654
    %6520 = vmatpush1.bf16.msra.mxu0 %v4653
    %6521 = vmatprep.subr.bf16.mxu0 %v4670
    %6522 = vmatpush1.bf16.msra.mxu0 %v4669
    %6523 = vmatprep.subr.bf16.mxu0 %v4686
    %6524 = vmatpush1.bf16.msra.mxu0 %v4685
    %6525 = vmatprep.mubr.bf16.mxu0 %v258
    %6526 = vmatmul.mubr.bf16.gmra.mrb[0].mxu0 %v257
    %v6527 = vpop.f32.mrb[0].mxu0
    %v6528 = vadd.f32 %v1296, %v6527
    %v6529 = vpop.f32.mrb[0].mxu0
    %v6530 = vadd.f32 %v1300, %v6529
    %v6531 = vpop.f32.mrb[0].mxu0
    %v6532 = vpop.f32.mrb[0].mxu0
    %6533 = vdwg.mxu0
    %6534 = vmatprep.subr.bf16.mxu0 %v4702
    %6535 = vmatpush1.bf16.msra.mxu0 %v4701
    %6536 = vmatprep.subr.bf16.mxu0 %v4718
    %6537 = vmatpush1.bf16.msra.mxu0 %v4717
    %6538 = vmatprep.subr.bf16.mxu0 %v4734
    %6539 = vmatpush1.bf16.msra.mxu0 %v4733
    %6540 = vmatprep.subr.bf16.mxu0 %v4750
    %6541 = vmatpush1.bf16.msra.mxu0 %v4749
    %6542 = vmatprep.subr.bf16.mxu0 %v4766
    %6543 = vmatpush1.bf16.msra.mxu0 %v4765
    %6544 = vmatprep.subr.bf16.mxu0 %v4782
    %6545 = vmatpush1.bf16.msra.mxu0 %v4781
    %6546 = vmatprep.subr.bf16.mxu0 %v4798
    %6547 = vmatpush1.bf16.msra.mxu0 %v4797
    %6548 = vmatprep.subr.bf16.mxu0 %v4814
    %6549 = vmatpush1.bf16.msra.mxu0 %v4813
    %6550 = vmatprep.subr.bf16.mxu0 %v4830
    %6551 = vmatpush1.bf16.msra.mxu0 %v4829
    %6552 = vmatprep.subr.bf16.mxu0 %v4846
    %6553 = vmatpush1.bf16.msra.mxu0 %v4845
    %6554 = vmatprep.subr.bf16.mxu0 %v4862
    %6555 = vmatpush1.bf16.msra.mxu0 %v4861
    %6556 = vmatprep.subr.bf16.mxu0 %v4878
    %6557 = vmatpush1.bf16.msra.mxu0 %v4877
    %6558 = vmatprep.subr.bf16.mxu0 %v4894
    %6559 = vmatpush1.bf16.msra.mxu0 %v4893
    %6560 = vmatprep.subr.bf16.mxu0 %v4910
    %6561 = vmatpush1.bf16.msra.mxu0 %v4909
    %6562 = vmatprep.subr.bf16.mxu0 %v4926
    %6563 = vmatpush1.bf16.msra.mxu0 %v4925
    %6564 = vmatprep.subr.bf16.mxu0 %v4942
    %6565 = vmatpush1.bf16.msra.mxu0 %v4941
    %6566 = vmatprep.mubr.bf16.mxu0 %v260
    %6567 = vmatmul.mubr.bf16.gmra.mrb[0].mxu0 %v259
    %v6568 = vpop.f32.mrb[0].mxu0
    %v6569 = vadd.f32 %v6528, %v6568
    %v6570 = vpop.f32.mrb[0].mxu0
    %v6571 = vadd.f32 %v6530, %v6570
    %v6572 = vpop.f32.mrb[0].mxu0
    %v6573 = vpop.f32.mrb[0].mxu0
    %6574 = vdwg.mxu0
    %6575 = vmatprep.subr.bf16.mxu0 %v4958
    %6576 = vmatpush1.bf16.msra.mxu0 %v4957
    %6577 = vmatprep.subr.bf16.mxu0 %v4974
    %6578 = vmatpush1.bf16.msra.mxu0 %v4973
    %6579 = vmatprep.subr.bf16.mxu0 %v4990
    %6580 = vmatpush1.bf16.msra.mxu0 %v4989
    %6581 = vmatprep.subr.bf16.mxu0 %v5006
    %6582 = vmatpush1.bf16.msra.mxu0 %v5005
    %6583 = vmatprep.subr.bf16.mxu0 %v5022
    %6584 = vmatpush1.bf16.msra.mxu0 %v5021
    %6585 = vmatprep.subr.bf16.mxu0 %v5038
    %6586 = vmatpush1.bf16.msra.mxu0 %v5037
    %6587 = vmatprep.subr.bf16.mxu0 %v5054
    %6588 = vmatpush1.bf16.msra.mxu0 %v5053
    %6589 = vmatprep.subr.bf16.mxu0 %v5070
    %6590 = vmatpush1.bf16.msra.mxu0 %v5069
    %6591 = vmatprep.subr.bf16.mxu0 %v5086
    %6592 = vmatpush1.bf16.msra.mxu0 %v5085
    %6593 = vmatprep.subr.bf16.mxu0 %v5102
    %6594 = vmatpush1.bf16.msra.mxu0 %v5101
    %6595 = vmatprep.subr.bf16.mxu0 %v5118
    %6596 = vmatpush1.bf16.msra.mxu0 %v5117
    %6597 = vmatprep.subr.bf16.mxu0 %v5134
    %6598 = vmatpush1.bf16.msra.mxu0 %v5133
    %6599 = vmatprep.subr.bf16.mxu0 %v5150
    %6600 = vmatpush1.bf16.msra.mxu0 %v5149
    %6601 = vmatprep.subr.bf16.mxu0 %v5166
    %6602 = vmatpush1.bf16.msra.mxu0 %v5165
    %6603 = vmatprep.subr.bf16.mxu0 %v5182
    %6604 = vmatpush1.bf16.msra.mxu0 %v5181
    %6605 = vmatprep.subr.bf16.mxu0 %v5198
    %6606 = vmatpush1.bf16.msra.mxu0 %v5197
    %6607 = vmatprep.mubr.bf16.mxu0 %v262
    %6608 = vmatmul.mubr.bf16.gmra.mrb[0].mxu0 %v261
    %v6609 = vpop.f32.mrb[0].mxu0
    %v6610 = vadd.f32 %v6569, %v6609
    %v6611 = vpop.f32.mrb[0].mxu0
    %v6612 = vadd.f32 %v6571, %v6611
    %v6613 = vpop.f32.mrb[0].mxu0
    %v6614 = vpop.f32.mrb[0].mxu0
    %6615 = vdwg.mxu0
    %6616 = vmatprep.subr.bf16.mxu0 %v5214
    %6617 = vmatpush1.bf16.msra.mxu0 %v5213
    %6618 = vmatprep.subr.bf16.mxu0 %v5230
    %6619 = vmatpush1.bf16.msra.mxu0 %v5229
    %6620 = vmatprep.subr.bf16.mxu0 %v5246
    %6621 = vmatpush1.bf16.msra.mxu0 %v5245
    %6622 = vmatprep.subr.bf16.mxu0 %v5262
    %6623 = vmatpush1.bf16.msra.mxu0 %v5261
    %6624 = vmatprep.subr.bf16.mxu0 %v5278
    %6625 = vmatpush1.bf16.msra.mxu0 %v5277
    %6626 = vmatprep.subr.bf16.mxu0 %v5294
    %6627 = vmatpush1.bf16.msra.mxu0 %v5293
    %6628 = vmatprep.subr.bf16.mxu0 %v5310
    %6629 = vmatpush1.bf16.msra.mxu0 %v5309
    %6630 = vmatprep.subr.bf16.mxu0 %v5326
    %6631 = vmatpush1.bf16.msra.mxu0 %v5325
    %6632 = vmatprep.subr.bf16.mxu0 %v5342
    %6633 = vmatpush1.bf16.msra.mxu0 %v5341
    %6634 = vmatprep.subr.bf16.mxu0 %v5358
    %6635 = vmatpush1.bf16.msra.mxu0 %v5357
    %6636 = vmatprep.subr.bf16.mxu0 %v5374
    %6637 = vmatpush1.bf16.msra.mxu0 %v5373
    %6638 = vmatprep.subr.bf16.mxu0 %v5390
    %6639 = vmatpush1.bf16.msra.mxu0 %v5389
    %6640 = vmatprep.subr.bf16.mxu0 %v5406
    %6641 = vmatpush1.bf16.msra.mxu0 %v5405
    %6642 = vmatprep.subr.bf16.mxu0 %v5422
    %6643 = vmatpush1.bf16.msra.mxu0 %v5421
    %6644 = vmatprep.subr.bf16.mxu0 %v5438
    %6645 = vmatpush1.bf16.msra.mxu0 %v5437
    %6646 = vmatprep.subr.bf16.mxu0 %v5454
    %6647 = vmatpush1.bf16.msra.mxu0 %v5453
    %6648 = vmatprep.mubr.bf16.mxu0 %v264
    %6649 = vmatmul.mubr.bf16.gmra.mrb[0].mxu0 %v263
    %v6650 = vpop.f32.mrb[0].mxu0
    %v6651 = vadd.f32 %v6610, %v6650
    %v6652 = vpop.f32.mrb[0].mxu0
    %v6653 = vadd.f32 %v6612, %v6652
    %v6654 = vpop.f32.mrb[0].mxu0
    %v6655 = vpop.f32.mrb[0].mxu0
    %6656 = vdwg.mxu0
    %6657 = vmatprep.subr.bf16.mxu0 %v4448
    %6658 = vmatpush1.bf16.msra.mxu0 %v4447
    %6659 = vmatprep.subr.bf16.mxu0 %v4464
    %6660 = vmatpush1.bf16.msra.mxu0 %v4463
    %6661 = vmatprep.subr.bf16.mxu0 %v4480
    %6662 = vmatpush1.bf16.msra.mxu0 %v4479
    %6663 = vmatprep.subr.bf16.mxu0 %v4496
    %6664 = vmatpush1.bf16.msra.mxu0 %v4495
    %6665 = vmatprep.subr.bf16.mxu0 %v4512
    %6666 = vmatpush1.bf16.msra.mxu0 %v4511
    %6667 = vmatprep.subr.bf16.mxu0 %v4528
    %6668 = vmatpush1.bf16.msra.mxu0 %v4527
    %6669 = vmatprep.subr.bf16.mxu0 %v4544
    %6670 = vmatpush1.bf16.msra.mxu0 %v4543
    %6671 = vmatprep.subr.bf16.mxu0 %v4560
    %6672 = vmatpush1.bf16.msra.mxu0 %v4559
    %6673 = vmatprep.subr.bf16.mxu0 %v4576
    %6674 = vmatpush1.bf16.msra.mxu0 %v4575
    %6675 = vmatprep.subr.bf16.mxu0 %v4592
    %6676 = vmatpush1.bf16.msra.mxu0 %v4591
    %6677 = vmatprep.subr.bf16.mxu0 %v4608
    %6678 = vmatpush1.bf16.msra.mxu0 %v4607
    %6679 = vmatprep.subr.bf16.mxu0 %v4624
    %6680 = vmatpush1.bf16.msra.mxu0 %v4623
    %6681 = vmatprep.subr.bf16.mxu0 %v4640
    %6682 = vmatpush1.bf16.msra.mxu0 %v4639
    %6683 = vmatprep.subr.bf16.mxu0 %v4656
    %6684 = vmatpush1.bf16.msra.mxu0 %v4655
    %6685 = vmatprep.subr.bf16.mxu0 %v4672
    %6686 = vmatpush1.bf16.msra.mxu0 %v4671
    %6687 = vmatprep.subr.bf16.mxu0 %v4688
    %6688 = vmatpush1.bf16.msra.mxu0 %v4687
    %6689 = vmatprep.mubr.bf16.mxu0 %v258
    %6690 = vmatmul.mubr.bf16.gmra.mrb[0].mxu0 %v257
    %v6691 = vpop.f32.mrb[0].mxu0
    %v6692 = vadd.f32 %v1304, %v6691
    %v6693 = vpop.f32.mrb[0].mxu0
    %v6694 = vadd.f32 %v1308, %v6693
    %v6695 = vpop.f32.mrb[0].mxu0
    %v6696 = vpop.f32.mrb[0].mxu0
    %6697 = vdwg.mxu0
    %6698 = vmatprep.subr.bf16.mxu0 %v4704
    %6699 = vmatpush1.bf16.msra.mxu0 %v4703
    %6700 = vmatprep.subr.bf16.mxu0 %v4720
    %6701 = vmatpush1.bf16.msra.mxu0 %v4719
    %6702 = vmatprep.subr.bf16.mxu0 %v4736
    %6703 = vmatpush1.bf16.msra.mxu0 %v4735
    %6704 = vmatprep.subr.bf16.mxu0 %v4752
    %6705 = vmatpush1.bf16.msra.mxu0 %v4751
    %6706 = vmatprep.subr.bf16.mxu0 %v4768
    %6707 = vmatpush1.bf16.msra.mxu0 %v4767
    %6708 = vmatprep.subr.bf16.mxu0 %v4784
    %6709 = vmatpush1.bf16.msra.mxu0 %v4783
    %6710 = vmatprep.subr.bf16.mxu0 %v4800
    %6711 = vmatpush1.bf16.msra.mxu0 %v4799
    %6712 = vmatprep.subr.bf16.mxu0 %v4816
    %6713 = vmatpush1.bf16.msra.mxu0 %v4815
    %6714 = vmatprep.subr.bf16.mxu0 %v4832
    %6715 = vmatpush1.bf16.msra.mxu0 %v4831
    %6716 = vmatprep.subr.bf16.mxu0 %v4848
    %6717 = vmatpush1.bf16.msra.mxu0 %v4847
    %6718 = vmatprep.subr.bf16.mxu0 %v4864
    %6719 = vmatpush1.bf16.msra.mxu0 %v4863
    %6720 = vmatprep.subr.bf16.mxu0 %v4880
    %6721 = vmatpush1.bf16.msra.mxu0 %v4879
    %6722 = vmatprep.subr.bf16.mxu0 %v4896
    %6723 = vmatpush1.bf16.msra.mxu0 %v4895
    %6724 = vmatprep.subr.bf16.mxu0 %v4912
    %6725 = vmatpush1.bf16.msra.mxu0 %v4911
    %6726 = vmatprep.subr.bf16.mxu0 %v4928
    %6727 = vmatpush1.bf16.msra.mxu0 %v4927
    %6728 = vmatprep.subr.bf16.mxu0 %v4944
    %6729 = vmatpush1.bf16.msra.mxu0 %v4943
    %6730 = vmatprep.mubr.bf16.mxu0 %v260
    %6731 = vmatmul.mubr.bf16.gmra.mrb[0].mxu0 %v259
    %v6732 = vpop.f32.mrb[0].mxu0
    %v6733 = vadd.f32 %v6692, %v6732
    %v6734 = vpop.f32.mrb[0].mxu0
    %v6735 = vadd.f32 %v6694, %v6734
    %v6736 = vpop.f32.mrb[0].mxu0
    %v6737 = vpop.f32.mrb[0].mxu0
    %6738 = vdwg.mxu0
    %6739 = vmatprep.subr.bf16.mxu0 %v4960
    %6740 = vmatpush1.bf16.msra.mxu0 %v4959
    %6741 = vmatprep.subr.bf16.mxu0 %v4976
    %6742 = vmatpush1.bf16.msra.mxu0 %v4975
    %6743 = vmatprep.subr.bf16.mxu0 %v4992
    %6744 = vmatpush1.bf16.msra.mxu0 %v4991
    %6745 = vmatprep.subr.bf16.mxu0 %v5008
    %6746 = vmatpush1.bf16.msra.mxu0 %v5007
    %6747 = vmatprep.subr.bf16.mxu0 %v5024
    %6748 = vmatpush1.bf16.msra.mxu0 %v5023
    %6749 = vmatprep.subr.bf16.mxu0 %v5040
    %6750 = vmatpush1.bf16.msra.mxu0 %v5039
    %6751 = vmatprep.subr.bf16.mxu0 %v5056
    %6752 = vmatpush1.bf16.msra.mxu0 %v5055
    %6753 = vmatprep.subr.bf16.mxu0 %v5072
    %6754 = vmatpush1.bf16.msra.mxu0 %v5071
    %6755 = vmatprep.subr.bf16.mxu0 %v5088
    %6756 = vmatpush1.bf16.msra.mxu0 %v5087
    %6757 = vmatprep.subr.bf16.mxu0 %v5104
    %6758 = vmatpush1.bf16.msra.mxu0 %v5103
    %6759 = vmatprep.subr.bf16.mxu0 %v5120
    %6760 = vmatpush1.bf16.msra.mxu0 %v5119
    %6761 = vmatprep.subr.bf16.mxu0 %v5136
    %6762 = vmatpush1.bf16.msra.mxu0 %v5135
    %6763 = vmatprep.subr.bf16.mxu0 %v5152
    %6764 = vmatpush1.bf16.msra.mxu0 %v5151
    %6765 = vmatprep.subr.bf16.mxu0 %v5168
    %6766 = vmatpush1.bf16.msra.mxu0 %v5167
    %6767 = vmatprep.subr.bf16.mxu0 %v5184
    %6768 = vmatpush1.bf16.msra.mxu0 %v5183
    %6769 = vmatprep.subr.bf16.mxu0 %v5200
    %6770 = vmatpush1.bf16.msra.mxu0 %v5199
    %6771 = vmatprep.mubr.bf16.mxu0 %v262
    %6772 = vmatmul.mubr.bf16.gmra.mrb[0].mxu0 %v261
    %v6773 = vpop.f32.mrb[0].mxu0
    %v6774 = vadd.f32 %v6733, %v6773
    %v6775 = vpop.f32.mrb[0].mxu0
    %v6776 = vadd.f32 %v6735, %v6775
    %v6777 = vpop.f32.mrb[0].mxu0
    %v6778 = vpop.f32.mrb[0].mxu0
    %6779 = vdwg.mxu0
    %6780 = vmatprep.subr.bf16.mxu0 %v5216
    %6781 = vmatpush1.bf16.msra.mxu0 %v5215
    %6782 = vmatprep.subr.bf16.mxu0 %v5232
    %6783 = vmatpush1.bf16.msra.mxu0 %v5231
    %6784 = vmatprep.subr.bf16.mxu0 %v5248
    %6785 = vmatpush1.bf16.msra.mxu0 %v5247
    %6786 = vmatprep.subr.bf16.mxu0 %v5264
    %6787 = vmatpush1.bf16.msra.mxu0 %v5263
    %6788 = vmatprep.subr.bf16.mxu0 %v5280
    %6789 = vmatpush1.bf16.msra.mxu0 %v5279
    %6790 = vmatprep.subr.bf16.mxu0 %v5296
    %6791 = vmatpush1.bf16.msra.mxu0 %v5295
    %6792 = vmatprep.subr.bf16.mxu0 %v5312
    %6793 = vmatpush1.bf16.msra.mxu0 %v5311
    %6794 = vmatprep.subr.bf16.mxu0 %v5328
    %6795 = vmatpush1.bf16.msra.mxu0 %v5327
    %6796 = vmatprep.subr.bf16.mxu0 %v5344
    %6797 = vmatpush1.bf16.msra.mxu0 %v5343
    %6798 = vmatprep.subr.bf16.mxu0 %v5360
    %6799 = vmatpush1.bf16.msra.mxu0 %v5359
    %6800 = vmatprep.subr.bf16.mxu0 %v5376
    %6801 = vmatpush1.bf16.msra.mxu0 %v5375
    %6802 = vmatprep.subr.bf16.mxu0 %v5392
    %6803 = vmatpush1.bf16.msra.mxu0 %v5391
    %6804 = vmatprep.subr.bf16.mxu0 %v5408
    %6805 = vmatpush1.bf16.msra.mxu0 %v5407
    %6806 = vmatprep.subr.bf16.mxu0 %v5424
    %6807 = vmatpush1.bf16.msra.mxu0 %v5423
    %6808 = vmatprep.subr.bf16.mxu0 %v5440
    %6809 = vmatpush1.bf16.msra.mxu0 %v5439
    %6810 = vmatprep.subr.bf16.mxu0 %v5456
    %6811 = vmatpush1.bf16.msra.mxu0 %v5455
    %6812 = vmatprep.mubr.bf16.mxu0 %v264
    %6813 = vmatmul.mubr.bf16.gmra.mrb[0].mxu0 %v263
    %v6814 = vpop.f32.mrb[0].mxu0
    %v6815 = vadd.f32 %v6774, %v6814
    %v6816 = vpop.f32.mrb[0].mxu0
    %v6817 = vadd.f32 %v6776, %v6816
    %v6818 = vpop.f32.mrb[0].mxu0
    %v6819 = vpop.f32.mrb[0].mxu0
    %6820 = vdwg.mxu0
    %6821 = vmatprep.subr.bf16.mxu0 %v4450
    %6822 = vmatpush1.bf16.msra.mxu0 %v4449
    %6823 = vmatprep.subr.bf16.mxu0 %v4466
    %6824 = vmatpush1.bf16.msra.mxu0 %v4465
    %6825 = vmatprep.subr.bf16.mxu0 %v4482
    %6826 = vmatpush1.bf16.msra.mxu0 %v4481
    %6827 = vmatprep.subr.bf16.mxu0 %v4498
    %6828 = vmatpush1.bf16.msra.mxu0 %v4497
    %6829 = vmatprep.subr.bf16.mxu0 %v4514
    %6830 = vmatpush1.bf16.msra.mxu0 %v4513
    %6831 = vmatprep.subr.bf16.mxu0 %v4530
    %6832 = vmatpush1.bf16.msra.mxu0 %v4529
    %6833 = vmatprep.subr.bf16.mxu0 %v4546
    %6834 = vmatpush1.bf16.msra.mxu0 %v4545
    %6835 = vmatprep.subr.bf16.mxu0 %v4562
    %6836 = vmatpush1.bf16.msra.mxu0 %v4561
    %6837 = vmatprep.subr.bf16.mxu0 %v4578
    %6838 = vmatpush1.bf16.msra.mxu0 %v4577
    %6839 = vmatprep.subr.bf16.mxu0 %v4594
    %6840 = vmatpush1.bf16.msra.mxu0 %v4593
    %6841 = vmatprep.subr.bf16.mxu0 %v4610
    %6842 = vmatpush1.bf16.msra.mxu0 %v4609
    %6843 = vmatprep.subr.bf16.mxu0 %v4626
    %6844 = vmatpush1.bf16.msra.mxu0 %v4625
    %6845 = vmatprep.subr.bf16.mxu0 %v4642
    %6846 = vmatpush1.bf16.msra.mxu0 %v4641
    %6847 = vmatprep.subr.bf16.mxu0 %v4658
    %6848 = vmatpush1.bf16.msra.mxu0 %v4657
    %6849 = vmatprep.subr.bf16.mxu0 %v4674
    %6850 = vmatpush1.bf16.msra.mxu0 %v4673
    %6851 = vmatprep.subr.bf16.mxu0 %v4690
    %6852 = vmatpush1.bf16.msra.mxu0 %v4689
    %6853 = vmatprep.mubr.bf16.mxu0 %v258
    %6854 = vmatmul.mubr.bf16.gmra.mrb[0].mxu0 %v257
    %v6855 = vpop.f32.mrb[0].mxu0
    %v6856 = vadd.f32 %v1312, %v6855
    %v6857 = vpop.f32.mrb[0].mxu0
    %v6858 = vadd.f32 %v1316, %v6857
    %v6859 = vpop.f32.mrb[0].mxu0
    %v6860 = vpop.f32.mrb[0].mxu0
    %6861 = vdwg.mxu0
    %6862 = vmatprep.subr.bf16.mxu0 %v4706
    %6863 = vmatpush1.bf16.msra.mxu0 %v4705
    %6864 = vmatprep.subr.bf16.mxu0 %v4722
    %6865 = vmatpush1.bf16.msra.mxu0 %v4721
    %6866 = vmatprep.subr.bf16.mxu0 %v4738
    %6867 = vmatpush1.bf16.msra.mxu0 %v4737
    %6868 = vmatprep.subr.bf16.mxu0 %v4754
    %6869 = vmatpush1.bf16.msra.mxu0 %v4753
    %6870 = vmatprep.subr.bf16.mxu0 %v4770
    %6871 = vmatpush1.bf16.msra.mxu0 %v4769
    %6872 = vmatprep.subr.bf16.mxu0 %v4786
    %6873 = vmatpush1.bf16.msra.mxu0 %v4785
    %6874 = vmatprep.subr.bf16.mxu0 %v4802
    %6875 = vmatpush1.bf16.msra.mxu0 %v4801
    %6876 = vmatprep.subr.bf16.mxu0 %v4818
    %6877 = vmatpush1.bf16.msra.mxu0 %v4817
    %6878 = vmatprep.subr.bf16.mxu0 %v4834
    %6879 = vmatpush1.bf16.msra.mxu0 %v4833
    %6880 = vmatprep.subr.bf16.mxu0 %v4850
    %6881 = vmatpush1.bf16.msra.mxu0 %v4849
    %6882 = vmatprep.subr.bf16.mxu0 %v4866
    %6883 = vmatpush1.bf16.msra.mxu0 %v4865
    %6884 = vmatprep.subr.bf16.mxu0 %v4882
    %6885 = vmatpush1.bf16.msra.mxu0 %v4881
    %6886 = vmatprep.subr.bf16.mxu0 %v4898
    %6887 = vmatpush1.bf16.msra.mxu0 %v4897
    %6888 = vmatprep.subr.bf16.mxu0 %v4914
    %6889 = vmatpush1.bf16.msra.mxu0 %v4913
    %6890 = vmatprep.subr.bf16.mxu0 %v4930
    %6891 = vmatpush1.bf16.msra.mxu0 %v4929
    %6892 = vmatprep.subr.bf16.mxu0 %v4946
    %6893 = vmatpush1.bf16.msra.mxu0 %v4945
    %6894 = vmatprep.mubr.bf16.mxu0 %v260
    %6895 = vmatmul.mubr.bf16.gmra.mrb[0].mxu0 %v259
    %v6896 = vpop.f32.mrb[0].mxu0
    %v6897 = vadd.f32 %v6856, %v6896
    %v6898 = vpop.f32.mrb[0].mxu0
    %v6899 = vadd.f32 %v6858, %v6898
    %v6900 = vpop.f32.mrb[0].mxu0
    %v6901 = vpop.f32.mrb[0].mxu0
    %6902 = vdwg.mxu0
    %6903 = vmatprep.subr.bf16.mxu0 %v4962
    %6904 = vmatpush1.bf16.msra.mxu0 %v4961
    %6905 = vmatprep.subr.bf16.mxu0 %v4978
    %6906 = vmatpush1.bf16.msra.mxu0 %v4977
    %6907 = vmatprep.subr.bf16.mxu0 %v4994
    %6908 = vmatpush1.bf16.msra.mxu0 %v4993
    %6909 = vmatprep.subr.bf16.mxu0 %v5010
    %6910 = vmatpush1.bf16.msra.mxu0 %v5009
    %6911 = vmatprep.subr.bf16.mxu0 %v5026
    %6912 = vmatpush1.bf16.msra.mxu0 %v5025
    %6913 = vmatprep.subr.bf16.mxu0 %v5042
    %6914 = vmatpush1.bf16.msra.mxu0 %v5041
    %6915 = vmatprep.subr.bf16.mxu0 %v5058
    %6916 = vmatpush1.bf16.msra.mxu0 %v5057
    %6917 = vmatprep.subr.bf16.mxu0 %v5074
    %6918 = vmatpush1.bf16.msra.mxu0 %v5073
    %6919 = vmatprep.subr.bf16.mxu0 %v5090
    %6920 = vmatpush1.bf16.msra.mxu0 %v5089
    %6921 = vmatprep.subr.bf16.mxu0 %v5106
    %6922 = vmatpush1.bf16.msra.mxu0 %v5105
    %6923 = vmatprep.subr.bf16.mxu0 %v5122
    %6924 = vmatpush1.bf16.msra.mxu0 %v5121
    %6925 = vmatprep.subr.bf16.mxu0 %v5138
    %6926 = vmatpush1.bf16.msra.mxu0 %v5137
    %6927 = vmatprep.subr.bf16.mxu0 %v5154
    %6928 = vmatpush1.bf16.msra.mxu0 %v5153
    %6929 = vmatprep.subr.bf16.mxu0 %v5170
    %6930 = vmatpush1.bf16.msra.mxu0 %v5169
    %6931 = vmatprep.subr.bf16.mxu0 %v5186
    %6932 = vmatpush1.bf16.msra.mxu0 %v5185
    %6933 = vmatprep.subr.bf16.mxu0 %v5202
    %6934 = vmatpush1.bf16.msra.mxu0 %v5201
    %6935 = vmatprep.mubr.bf16.mxu0 %v262
    %6936 = vmatmul.mubr.bf16.gmra.mrb[0].mxu0 %v261
    %v6937 = vpop.f32.mrb[0].mxu0
    %v6938 = vadd.f32 %v6897, %v6937
    %v6939 = vpop.f32.mrb[0].mxu0
    %v6940 = vadd.f32 %v6899, %v6939
    %v6941 = vpop.f32.mrb[0].mxu0
    %v6942 = vpop.f32.mrb[0].mxu0
    %6943 = vdwg.mxu0
    %6944 = vmatprep.subr.bf16.mxu0 %v5218
    %6945 = vmatpush1.bf16.msra.mxu0 %v5217
    %6946 = vmatprep.subr.bf16.mxu0 %v5234
    %6947 = vmatpush1.bf16.msra.mxu0 %v5233
    %6948 = vmatprep.subr.bf16.mxu0 %v5250
    %6949 = vmatpush1.bf16.msra.mxu0 %v5249
    %6950 = vmatprep.subr.bf16.mxu0 %v5266
    %6951 = vmatpush1.bf16.msra.mxu0 %v5265
    %6952 = vmatprep.subr.bf16.mxu0 %v5282
    %6953 = vmatpush1.bf16.msra.mxu0 %v5281
    %6954 = vmatprep.subr.bf16.mxu0 %v5298
    %6955 = vmatpush1.bf16.msra.mxu0 %v5297
    %6956 = vmatprep.subr.bf16.mxu0 %v5314
    %6957 = vmatpush1.bf16.msra.mxu0 %v5313
    %6958 = vmatprep.subr.bf16.mxu0 %v5330
    %6959 = vmatpush1.bf16.msra.mxu0 %v5329
    %6960 = vmatprep.subr.bf16.mxu0 %v5346
    %6961 = vmatpush1.bf16.msra.mxu0 %v5345
    %6962 = vmatprep.subr.bf16.mxu0 %v5362
    %6963 = vmatpush1.bf16.msra.mxu0 %v5361
    %6964 = vmatprep.subr.bf16.mxu0 %v5378
    %6965 = vmatpush1.bf16.msra.mxu0 %v5377
    %6966 = vmatprep.subr.bf16.mxu0 %v5394
    %6967 = vmatpush1.bf16.msra.mxu0 %v5393
    %6968 = vmatprep.subr.bf16.mxu0 %v5410
    %6969 = vmatpush1.bf16.msra.mxu0 %v5409
    %6970 = vmatprep.subr.bf16.mxu0 %v5426
    %6971 = vmatpush1.bf16.msra.mxu0 %v5425
    %6972 = vmatprep.subr.bf16.mxu0 %v5442
    %6973 = vmatpush1.bf16.msra.mxu0 %v5441
    %6974 = vmatprep.subr.bf16.mxu0 %v5458
    %6975 = vmatpush1.bf16.msra.mxu0 %v5457
    %6976 = vmatprep.mubr.bf16.mxu0 %v264
    %6977 = vmatmul.mubr.bf16.gmra.mrb[0].mxu0 %v263
    %v6978 = vpop.f32.mrb[0].mxu0
    %v6979 = vadd.f32 %v6938, %v6978
    %v6980 = vpop.f32.mrb[0].mxu0
    %v6981 = vadd.f32 %v6940, %v6980
    %v6982 = vpop.f32.mrb[0].mxu0
    %v6983 = vpop.f32.mrb[0].mxu0
    %6984 = vdwg.mxu0
    %6985 = vmatprep.subr.bf16.mxu0 %v4452
    %6986 = vmatpush1.bf16.msra.mxu0 %v4451
    %6987 = vmatprep.subr.bf16.mxu0 %v4468
    %6988 = vmatpush1.bf16.msra.mxu0 %v4467
    %6989 = vmatprep.subr.bf16.mxu0 %v4484
    %6990 = vmatpush1.bf16.msra.mxu0 %v4483
    %6991 = vmatprep.subr.bf16.mxu0 %v4500
    %6992 = vmatpush1.bf16.msra.mxu0 %v4499
    %6993 = vmatprep.subr.bf16.mxu0 %v4516
    %6994 = vmatpush1.bf16.msra.mxu0 %v4515
    %6995 = vmatprep.subr.bf16.mxu0 %v4532
    %6996 = vmatpush1.bf16.msra.mxu0 %v4531
    %6997 = vmatprep.subr.bf16.mxu0 %v4548
    %6998 = vmatpush1.bf16.msra.mxu0 %v4547
    %6999 = vmatprep.subr.bf16.mxu0 %v4564
    %7000 = vmatpush1.bf16.msra.mxu0 %v4563
    %7001 = vmatprep.subr.bf16.mxu0 %v4580
    %7002 = vmatpush1.bf16.msra.mxu0 %v4579
    %7003 = vmatprep.subr.bf16.mxu0 %v4596
    %7004 = vmatpush1.bf16.msra.mxu0 %v4595
    %7005 = vmatprep.subr.bf16.mxu0 %v4612
    %7006 = vmatpush1.bf16.msra.mxu0 %v4611
    %7007 = vmatprep.subr.bf16.mxu0 %v4628
    %7008 = vmatpush1.bf16.msra.mxu0 %v4627
    %7009 = vmatprep.subr.bf16.mxu0 %v4644
    %7010 = vmatpush1.bf16.msra.mxu0 %v4643
    %7011 = vmatprep.subr.bf16.mxu0 %v4660
    %7012 = vmatpush1.bf16.msra.mxu0 %v4659
    %7013 = vmatprep.subr.bf16.mxu0 %v4676
    %7014 = vmatpush1.bf16.msra.mxu0 %v4675
    %7015 = vmatprep.subr.bf16.mxu0 %v4692
    %7016 = vmatpush1.bf16.msra.mxu0 %v4691
    %7017 = vmatprep.mubr.bf16.mxu0 %v258
    %7018 = vmatmul.mubr.bf16.gmra.mrb[0].mxu0 %v257
    %v7019 = vpop.f32.mrb[0].mxu0
    %v7020 = vadd.f32 %v1320, %v7019
    %v7021 = vpop.f32.mrb[0].mxu0
    %v7022 = vadd.f32 %v1324, %v7021
    %v7023 = vpop.f32.mrb[0].mxu0
    %v7024 = vpop.f32.mrb[0].mxu0
    %7025 = vdwg.mxu0
    %7026 = vmatprep.subr.bf16.mxu0 %v4708
    %7027 = vmatpush1.bf16.msra.mxu0 %v4707
    %7028 = vmatprep.subr.bf16.mxu0 %v4724
    %7029 = vmatpush1.bf16.msra.mxu0 %v4723
    %7030 = vmatprep.subr.bf16.mxu0 %v4740
    %7031 = vmatpush1.bf16.msra.mxu0 %v4739
    %7032 = vmatprep.subr.bf16.mxu0 %v4756
    %7033 = vmatpush1.bf16.msra.mxu0 %v4755
    %7034 = vmatprep.subr.bf16.mxu0 %v4772
    %7035 = vmatpush1.bf16.msra.mxu0 %v4771
    %7036 = vmatprep.subr.bf16.mxu0 %v4788
    %7037 = vmatpush1.bf16.msra.mxu0 %v4787
    %7038 = vmatprep.subr.bf16.mxu0 %v4804
    %7039 = vmatpush1.bf16.msra.mxu0 %v4803
    %7040 = vmatprep.subr.bf16.mxu0 %v4820
    %7041 = vmatpush1.bf16.msra.mxu0 %v4819
    %7042 = vmatprep.subr.bf16.mxu0 %v4836
    %7043 = vmatpush1.bf16.msra.mxu0 %v4835
    %7044 = vmatprep.subr.bf16.mxu0 %v4852
    %7045 = vmatpush1.bf16.msra.mxu0 %v4851
    %7046 = vmatprep.subr.bf16.mxu0 %v4868
    %7047 = vmatpush1.bf16.msra.mxu0 %v4867
    %7048 = vmatprep.subr.bf16.mxu0 %v4884
    %7049 = vmatpush1.bf16.msra.mxu0 %v4883
    %7050 = vmatprep.subr.bf16.mxu0 %v4900
    %7051 = vmatpush1.bf16.msra.mxu0 %v4899
    %7052 = vmatprep.subr.bf16.mxu0 %v4916
    %7053 = vmatpush1.bf16.msra.mxu0 %v4915
    %7054 = vmatprep.subr.bf16.mxu0 %v4932
    %7055 = vmatpush1.bf16.msra.mxu0 %v4931
    %7056 = vmatprep.subr.bf16.mxu0 %v4948
    %7057 = vmatpush1.bf16.msra.mxu0 %v4947
    %7058 = vmatprep.mubr.bf16.mxu0 %v260
    %7059 = vmatmul.mubr.bf16.gmra.mrb[0].mxu0 %v259
    %v7060 = vpop.f32.mrb[0].mxu0
    %v7061 = vadd.f32 %v7020, %v7060
    %v7062 = vpop.f32.mrb[0].mxu0
    %v7063 = vadd.f32 %v7022, %v7062
    %v7064 = vpop.f32.mrb[0].mxu0
    %v7065 = vpop.f32.mrb[0].mxu0
    %7066 = vdwg.mxu0
    %7067 = vmatprep.subr.bf16.mxu0 %v4964
    %7068 = vmatpush1.bf16.msra.mxu0 %v4963
    %7069 = vmatprep.subr.bf16.mxu0 %v4980
    %7070 = vmatpush1.bf16.msra.mxu0 %v4979
    %7071 = vmatprep.subr.bf16.mxu0 %v4996
    %7072 = vmatpush1.bf16.msra.mxu0 %v4995
    %7073 = vmatprep.subr.bf16.mxu0 %v5012
    %7074 = vmatpush1.bf16.msra.mxu0 %v5011
    %7075 = vmatprep.subr.bf16.mxu0 %v5028
    %7076 = vmatpush1.bf16.msra.mxu0 %v5027
    %7077 = vmatprep.subr.bf16.mxu0 %v5044
    %7078 = vmatpush1.bf16.msra.mxu0 %v5043
    %7079 = vmatprep.subr.bf16.mxu0 %v5060
    %7080 = vmatpush1.bf16.msra.mxu0 %v5059
    %7081 = vmatprep.subr.bf16.mxu0 %v5076
    %7082 = vmatpush1.bf16.msra.mxu0 %v5075
    %7083 = vmatprep.subr.bf16.mxu0 %v5092
    %7084 = vmatpush1.bf16.msra.mxu0 %v5091
    %7085 = vmatprep.subr.bf16.mxu0 %v5108
    %7086 = vmatpush1.bf16.msra.mxu0 %v5107
    %7087 = vmatprep.subr.bf16.mxu0 %v5124
    %7088 = vmatpush1.bf16.msra.mxu0 %v5123
    %7089 = vmatprep.subr.bf16.mxu0 %v5140
    %7090 = vmatpush1.bf16.msra.mxu0 %v5139
    %7091 = vmatprep.subr.bf16.mxu0 %v5156
    %7092 = vmatpush1.bf16.msra.mxu0 %v5155
    %7093 = vmatprep.subr.bf16.mxu0 %v5172
    %7094 = vmatpush1.bf16.msra.mxu0 %v5171
    %7095 = vmatprep.subr.bf16.mxu0 %v5188
    %7096 = vmatpush1.bf16.msra.mxu0 %v5187
    %7097 = vmatprep.subr.bf16.mxu0 %v5204
    %7098 = vmatpush1.bf16.msra.mxu0 %v5203
    %7099 = vmatprep.mubr.bf16.mxu0 %v262
    %7100 = vmatmul.mubr.bf16.gmra.mrb[0].mxu0 %v261
    %v7101 = vpop.f32.mrb[0].mxu0
    %v7102 = vadd.f32 %v7061, %v7101
    %v7103 = vpop.f32.mrb[0].mxu0
    %v7104 = vadd.f32 %v7063, %v7103
    %v7105 = vpop.f32.mrb[0].mxu0
    %v7106 = vpop.f32.mrb[0].mxu0
    %7107 = vdwg.mxu0
    %7108 = vmatprep.subr.bf16.mxu0 %v5220
    %7109 = vmatpush1.bf16.msra.mxu0 %v5219
    %7110 = vmatprep.subr.bf16.mxu0 %v5236
    %7111 = vmatpush1.bf16.msra.mxu0 %v5235
    %7112 = vmatprep.subr.bf16.mxu0 %v5252
    %7113 = vmatpush1.bf16.msra.mxu0 %v5251
    %7114 = vmatprep.subr.bf16.mxu0 %v5268
    %7115 = vmatpush1.bf16.msra.mxu0 %v5267
    %7116 = vmatprep.subr.bf16.mxu0 %v5284
    %7117 = vmatpush1.bf16.msra.mxu0 %v5283
    %7118 = vmatprep.subr.bf16.mxu0 %v5300
    %7119 = vmatpush1.bf16.msra.mxu0 %v5299
    %7120 = vmatprep.subr.bf16.mxu0 %v5316
    %7121 = vmatpush1.bf16.msra.mxu0 %v5315
    %7122 = vmatprep.subr.bf16.mxu0 %v5332
    %7123 = vmatpush1.bf16.msra.mxu0 %v5331
    %7124 = vmatprep.subr.bf16.mxu0 %v5348
    %7125 = vmatpush1.bf16.msra.mxu0 %v5347
    %7126 = vmatprep.subr.bf16.mxu0 %v5364
    %7127 = vmatpush1.bf16.msra.mxu0 %v5363
    %7128 = vmatprep.subr.bf16.mxu0 %v5380
    %7129 = vmatpush1.bf16.msra.mxu0 %v5379
    %7130 = vmatprep.subr.bf16.mxu0 %v5396
    %7131 = vmatpush1.bf16.msra.mxu0 %v5395
    %7132 = vmatprep.subr.bf16.mxu0 %v5412
    %7133 = vmatpush1.bf16.msra.mxu0 %v5411
    %7134 = vmatprep.subr.bf16.mxu0 %v5428
    %7135 = vmatpush1.bf16.msra.mxu0 %v5427
    %7136 = vmatprep.subr.bf16.mxu0 %v5444
    %7137 = vmatpush1.bf16.msra.mxu0 %v5443
    %7138 = vmatprep.subr.bf16.mxu0 %v5460
    %7139 = vmatpush1.bf16.msra.mxu0 %v5459
    %7140 = vmatprep.mubr.bf16.mxu0 %v264
    %7141 = vmatmul.mubr.bf16.gmra.mrb[0].mxu0 %v263
    %v7142 = vpop.f32.mrb[0].mxu0
    %v7143 = vadd.f32 %v7102, %v7142
    %v7144 = vpop.f32.mrb[0].mxu0
    %v7145 = vadd.f32 %v7104, %v7144
    %v7146 = vpop.f32.mrb[0].mxu0
    %v7147 = vpop.f32.mrb[0].mxu0
    %7148 = vdwg.mxu0
    %7149 = vmatprep.subr.bf16.mxu0 %v4454
    %7150 = vmatpush1.bf16.msra.mxu0 %v4453
    %7151 = vmatprep.subr.bf16.mxu0 %v4470
    %7152 = vmatpush1.bf16.msra.mxu0 %v4469
    %7153 = vmatprep.subr.bf16.mxu0 %v4486
    %7154 = vmatpush1.bf16.msra.mxu0 %v4485
    %7155 = vmatprep.subr.bf16.mxu0 %v4502
    %7156 = vmatpush1.bf16.msra.mxu0 %v4501
    %7157 = vmatprep.subr.bf16.mxu0 %v4518
    %7158 = vmatpush1.bf16.msra.mxu0 %v4517
    %7159 = vmatprep.subr.bf16.mxu0 %v4534
    %7160 = vmatpush1.bf16.msra.mxu0 %v4533
    %7161 = vmatprep.subr.bf16.mxu0 %v4550
    %7162 = vmatpush1.bf16.msra.mxu0 %v4549
    %7163 = vmatprep.subr.bf16.mxu0 %v4566
    %7164 = vmatpush1.bf16.msra.mxu0 %v4565
    %7165 = vmatprep.subr.bf16.mxu0 %v4582
    %7166 = vmatpush1.bf16.msra.mxu0 %v4581
    %7167 = vmatprep.subr.bf16.mxu0 %v4598
    %7168 = vmatpush1.bf16.msra.mxu0 %v4597
    %7169 = vmatprep.subr.bf16.mxu0 %v4614
    %7170 = vmatpush1.bf16.msra.mxu0 %v4613
    %7171 = vmatprep.subr.bf16.mxu0 %v4630
    %7172 = vmatpush1.bf16.msra.mxu0 %v4629
    %7173 = vmatprep.subr.bf16.mxu0 %v4646
    %7174 = vmatpush1.bf16.msra.mxu0 %v4645
    %7175 = vmatprep.subr.bf16.mxu0 %v4662
    %7176 = vmatpush1.bf16.msra.mxu0 %v4661
    %7177 = vmatprep.subr.bf16.mxu0 %v4678
    %7178 = vmatpush1.bf16.msra.mxu0 %v4677
    %7179 = vmatprep.subr.bf16.mxu0 %v4694
    %7180 = vmatpush1.bf16.msra.mxu0 %v4693
    %7181 = vmatprep.mubr.bf16.mxu0 %v258
    %7182 = vmatmul.mubr.bf16.gmra.mrb[0].mxu0 %v257
    %v7183 = vpop.f32.mrb[0].mxu0
    %v7184 = vadd.f32 %v1328, %v7183
    %v7185 = vpop.f32.mrb[0].mxu0
    %v7186 = vadd.f32 %v1332, %v7185
    %v7187 = vpop.f32.mrb[0].mxu0
    %v7188 = vpop.f32.mrb[0].mxu0
    %7189 = vdwg.mxu0
    %7190 = vmatprep.subr.bf16.mxu0 %v4710
    %7191 = vmatpush1.bf16.msra.mxu0 %v4709
    %7192 = vmatprep.subr.bf16.mxu0 %v4726
    %7193 = vmatpush1.bf16.msra.mxu0 %v4725
    %7194 = vmatprep.subr.bf16.mxu0 %v4742
    %7195 = vmatpush1.bf16.msra.mxu0 %v4741
    %7196 = vmatprep.subr.bf16.mxu0 %v4758
    %7197 = vmatpush1.bf16.msra.mxu0 %v4757
    %7198 = vmatprep.subr.bf16.mxu0 %v4774
    %7199 = vmatpush1.bf16.msra.mxu0 %v4773
    %7200 = vmatprep.subr.bf16.mxu0 %v4790
    %7201 = vmatpush1.bf16.msra.mxu0 %v4789
    %7202 = vmatprep.subr.bf16.mxu0 %v4806
    %7203 = vmatpush1.bf16.msra.mxu0 %v4805
    %7204 = vmatprep.subr.bf16.mxu0 %v4822
    %7205 = vmatpush1.bf16.msra.mxu0 %v4821
    %7206 = vmatprep.subr.bf16.mxu0 %v4838
    %7207 = vmatpush1.bf16.msra.mxu0 %v4837
    %7208 = vmatprep.subr.bf16.mxu0 %v4854
    %7209 = vmatpush1.bf16.msra.mxu0 %v4853
    %7210 = vmatprep.subr.bf16.mxu0 %v4870
    %7211 = vmatpush1.bf16.msra.mxu0 %v4869
    %7212 = vmatprep.subr.bf16.mxu0 %v4886
    %7213 = vmatpush1.bf16.msra.mxu0 %v4885
    %7214 = vmatprep.subr.bf16.mxu0 %v4902
    %7215 = vmatpush1.bf16.msra.mxu0 %v4901
    %7216 = vmatprep.subr.bf16.mxu0 %v4918
    %7217 = vmatpush1.bf16.msra.mxu0 %v4917
    %7218 = vmatprep.subr.bf16.mxu0 %v4934
    %7219 = vmatpush1.bf16.msra.mxu0 %v4933
    %7220 = vmatprep.subr.bf16.mxu0 %v4950
    %7221 = vmatpush1.bf16.msra.mxu0 %v4949
    %7222 = vmatprep.mubr.bf16.mxu0 %v260
    %7223 = vmatmul.mubr.bf16.gmra.mrb[0].mxu0 %v259
    %v7224 = vpop.f32.mrb[0].mxu0
    %v7225 = vadd.f32 %v7184, %v7224
    %v7226 = vpop.f32.mrb[0].mxu0
    %v7227 = vadd.f32 %v7186, %v7226
    %v7228 = vpop.f32.mrb[0].mxu0
    %v7229 = vpop.f32.mrb[0].mxu0
    %7230 = vdwg.mxu0
    %7231 = vmatprep.subr.bf16.mxu0 %v4966
    %7232 = vmatpush1.bf16.msra.mxu0 %v4965
    %7233 = vmatprep.subr.bf16.mxu0 %v4982
    %7234 = vmatpush1.bf16.msra.mxu0 %v4981
    %7235 = vmatprep.subr.bf16.mxu0 %v4998
    %7236 = vmatpush1.bf16.msra.mxu0 %v4997
    %7237 = vmatprep.subr.bf16.mxu0 %v5014
    %7238 = vmatpush1.bf16.msra.mxu0 %v5013
    %7239 = vmatprep.subr.bf16.mxu0 %v5030
    %7240 = vmatpush1.bf16.msra.mxu0 %v5029
    %7241 = vmatprep.subr.bf16.mxu0 %v5046
    %7242 = vmatpush1.bf16.msra.mxu0 %v5045
    %7243 = vmatprep.subr.bf16.mxu0 %v5062
    %7244 = vmatpush1.bf16.msra.mxu0 %v5061
    %7245 = vmatprep.subr.bf16.mxu0 %v5078
    %7246 = vmatpush1.bf16.msra.mxu0 %v5077
    %7247 = vmatprep.subr.bf16.mxu0 %v5094
    %7248 = vmatpush1.bf16.msra.mxu0 %v5093
    %7249 = vmatprep.subr.bf16.mxu0 %v5110
    %7250 = vmatpush1.bf16.msra.mxu0 %v5109
    %7251 = vmatprep.subr.bf16.mxu0 %v5126
    %7252 = vmatpush1.bf16.msra.mxu0 %v5125
    %7253 = vmatprep.subr.bf16.mxu0 %v5142
    %7254 = vmatpush1.bf16.msra.mxu0 %v5141
    %7255 = vmatprep.subr.bf16.mxu0 %v5158
    %7256 = vmatpush1.bf16.msra.mxu0 %v5157
    %7257 = vmatprep.subr.bf16.mxu0 %v5174
    %7258 = vmatpush1.bf16.msra.mxu0 %v5173
    %7259 = vmatprep.subr.bf16.mxu0 %v5190
    %7260 = vmatpush1.bf16.msra.mxu0 %v5189
    %7261 = vmatprep.subr.bf16.mxu0 %v5206
    %7262 = vmatpush1.bf16.msra.mxu0 %v5205
    %7263 = vmatprep.mubr.bf16.mxu0 %v262
    %7264 = vmatmul.mubr.bf16.gmra.mrb[0].mxu0 %v261
    %v7265 = vpop.f32.mrb[0].mxu0
    %v7266 = vadd.f32 %v7225, %v7265
    %v7267 = vpop.f32.mrb[0].mxu0
    %v7268 = vadd.f32 %v7227, %v7267
    %v7269 = vpop.f32.mrb[0].mxu0
    %v7270 = vpop.f32.mrb[0].mxu0
    %7271 = vdwg.mxu0
    %7272 = vmatprep.subr.bf16.mxu0 %v5222
    %7273 = vmatpush1.bf16.msra.mxu0 %v5221
    %7274 = vmatprep.subr.bf16.mxu0 %v5238
    %7275 = vmatpush1.bf16.msra.mxu0 %v5237
    %7276 = vmatprep.subr.bf16.mxu0 %v5254
    %7277 = vmatpush1.bf16.msra.mxu0 %v5253
    %7278 = vmatprep.subr.bf16.mxu0 %v5270
    %7279 = vmatpush1.bf16.msra.mxu0 %v5269
    %7280 = vmatprep.subr.bf16.mxu0 %v5286
    %7281 = vmatpush1.bf16.msra.mxu0 %v5285
    %7282 = vmatprep.subr.bf16.mxu0 %v5302
    %7283 = vmatpush1.bf16.msra.mxu0 %v5301
    %7284 = vmatprep.subr.bf16.mxu0 %v5318
    %7285 = vmatpush1.bf16.msra.mxu0 %v5317
    %7286 = vmatprep.subr.bf16.mxu0 %v5334
    %7287 = vmatpush1.bf16.msra.mxu0 %v5333
    %7288 = vmatprep.subr.bf16.mxu0 %v5350
    %7289 = vmatpush1.bf16.msra.mxu0 %v5349
    %7290 = vmatprep.subr.bf16.mxu0 %v5366
    %7291 = vmatpush1.bf16.msra.mxu0 %v5365
    %7292 = vmatprep.subr.bf16.mxu0 %v5382
    %7293 = vmatpush1.bf16.msra.mxu0 %v5381
    %7294 = vmatprep.subr.bf16.mxu0 %v5398
    %7295 = vmatpush1.bf16.msra.mxu0 %v5397
    %7296 = vmatprep.subr.bf16.mxu0 %v5414
    %7297 = vmatpush1.bf16.msra.mxu0 %v5413
    %7298 = vmatprep.subr.bf16.mxu0 %v5430
    %7299 = vmatpush1.bf16.msra.mxu0 %v5429
    %7300 = vmatprep.subr.bf16.mxu0 %v5446
    %7301 = vmatpush1.bf16.msra.mxu0 %v5445
    %7302 = vmatprep.subr.bf16.mxu0 %v5462
    %7303 = vmatpush1.bf16.msra.mxu0 %v5461
    %7304 = vmatprep.mubr.bf16.mxu0 %v264
    %7305 = vmatmul.mubr.bf16.gmra.mrb[0].mxu0 %v263
    %v7306 = vpop.f32.mrb[0].mxu0
    %v7307 = vadd.f32 %v7266, %v7306
    %v7308 = vpop.f32.mrb[0].mxu0
    %v7309 = vadd.f32 %v7268, %v7308
    %v7310 = vpop.f32.mrb[0].mxu0
    %v7311 = vpop.f32.mrb[0].mxu0
    %7312 = vdwg.mxu0
    %7313 = vmatprep.subr.bf16.mxu0 %v4456
    %7314 = vmatpush1.bf16.msra.mxu0 %v4455
    %7315 = vmatprep.subr.bf16.mxu0 %v4472
    %7316 = vmatpush1.bf16.msra.mxu0 %v4471
    %7317 = vmatprep.subr.bf16.mxu0 %v4488
    %7318 = vmatpush1.bf16.msra.mxu0 %v4487
    %7319 = vmatprep.subr.bf16.mxu0 %v4504
    %7320 = vmatpush1.bf16.msra.mxu0 %v4503
    %7321 = vmatprep.subr.bf16.mxu0 %v4520
    %7322 = vmatpush1.bf16.msra.mxu0 %v4519
    %7323 = vmatprep.subr.bf16.mxu0 %v4536
    %7324 = vmatpush1.bf16.msra.mxu0 %v4535
    %7325 = vmatprep.subr.bf16.mxu0 %v4552
    %7326 = vmatpush1.bf16.msra.mxu0 %v4551
    %7327 = vmatprep.subr.bf16.mxu0 %v4568
    %7328 = vmatpush1.bf16.msra.mxu0 %v4567
    %7329 = vmatprep.subr.bf16.mxu0 %v4584
    %7330 = vmatpush1.bf16.msra.mxu0 %v4583
    %7331 = vmatprep.subr.bf16.mxu0 %v4600
    %7332 = vmatpush1.bf16.msra.mxu0 %v4599
    %7333 = vmatprep.subr.bf16.mxu0 %v4616
    %7334 = vmatpush1.bf16.msra.mxu0 %v4615
    %7335 = vmatprep.subr.bf16.mxu0 %v4632
    %7336 = vmatpush1.bf16.msra.mxu0 %v4631
    %7337 = vmatprep.subr.bf16.mxu0 %v4648
    %7338 = vmatpush1.bf16.msra.mxu0 %v4647
    %7339 = vmatprep.subr.bf16.mxu0 %v4664
    %7340 = vmatpush1.bf16.msra.mxu0 %v4663
    %7341 = vmatprep.subr.bf16.mxu0 %v4680
    %7342 = vmatpush1.bf16.msra.mxu0 %v4679
    %7343 = vmatprep.subr.bf16.mxu0 %v4696
    %7344 = vmatpush1.bf16.msra.mxu0 %v4695
    %7345 = vmatprep.mubr.bf16.mxu0 %v258
    %7346 = vmatmul.mubr.bf16.gmra.mrb[0].mxu0 %v257
    %v7347 = vpop.f32.mrb[0].mxu0
    %v7348 = vadd.f32 %v1336, %v7347
    %v7349 = vpop.f32.mrb[0].mxu0
    %v7350 = vadd.f32 %v1340, %v7349
    %v7351 = vpop.f32.mrb[0].mxu0
    %v7352 = vpop.f32.mrb[0].mxu0
    %7353 = vdwg.mxu0
    %7354 = vmatprep.subr.bf16.mxu0 %v4712
    %7355 = vmatpush1.bf16.msra.mxu0 %v4711
    %7356 = vmatprep.subr.bf16.mxu0 %v4728
    %7357 = vmatpush1.bf16.msra.mxu0 %v4727
    %7358 = vmatprep.subr.bf16.mxu0 %v4744
    %7359 = vmatpush1.bf16.msra.mxu0 %v4743
    %7360 = vmatprep.subr.bf16.mxu0 %v4760
    %7361 = vmatpush1.bf16.msra.mxu0 %v4759
    %7362 = vmatprep.subr.bf16.mxu0 %v4776
    %7363 = vmatpush1.bf16.msra.mxu0 %v4775
    %7364 = vmatprep.subr.bf16.mxu0 %v4792
    %7365 = vmatpush1.bf16.msra.mxu0 %v4791
    %7366 = vmatprep.subr.bf16.mxu0 %v4808
    %7367 = vmatpush1.bf16.msra.mxu0 %v4807
    %7368 = vmatprep.subr.bf16.mxu0 %v4824
    %7369 = vmatpush1.bf16.msra.mxu0 %v4823
    %7370 = vmatprep.subr.bf16.mxu0 %v4840
    %7371 = vmatpush1.bf16.msra.mxu0 %v4839
    %7372 = vmatprep.subr.bf16.mxu0 %v4856
    %7373 = vmatpush1.bf16.msra.mxu0 %v4855
    %7374 = vmatprep.subr.bf16.mxu0 %v4872
    %7375 = vmatpush1.bf16.msra.mxu0 %v4871
    %7376 = vmatprep.subr.bf16.mxu0 %v4888
    %7377 = vmatpush1.bf16.msra.mxu0 %v4887
    %7378 = vmatprep.subr.bf16.mxu0 %v4904
    %7379 = vmatpush1.bf16.msra.mxu0 %v4903
    %7380 = vmatprep.subr.bf16.mxu0 %v4920
    %7381 = vmatpush1.bf16.msra.mxu0 %v4919
    %7382 = vmatprep.subr.bf16.mxu0 %v4936
    %7383 = vmatpush1.bf16.msra.mxu0 %v4935
    %7384 = vmatprep.subr.bf16.mxu0 %v4952
    %7385 = vmatpush1.bf16.msra.mxu0 %v4951
    %7386 = vmatprep.mubr.bf16.mxu0 %v260
    %7387 = vmatmul.mubr.bf16.gmra.mrb[0].mxu0 %v259
    %v7388 = vpop.f32.mrb[0].mxu0
    %v7389 = vadd.f32 %v7348, %v7388
    %v7390 = vpop.f32.mrb[0].mxu0
    %v7391 = vadd.f32 %v7350, %v7390
    %v7392 = vpop.f32.mrb[0].mxu0
    %v7393 = vpop.f32.mrb[0].mxu0
    %7394 = vdwg.mxu0
    %7395 = vmatprep.subr.bf16.mxu0 %v4968
    %7396 = vmatpush1.bf16.msra.mxu0 %v4967
    %7397 = vmatprep.subr.bf16.mxu0 %v4984
    %7398 = vmatpush1.bf16.msra.mxu0 %v4983
    %7399 = vmatprep.subr.bf16.mxu0 %v5000
    %7400 = vmatpush1.bf16.msra.mxu0 %v4999
    %7401 = vmatprep.subr.bf16.mxu0 %v5016
    %7402 = vmatpush1.bf16.msra.mxu0 %v5015
    %7403 = vmatprep.subr.bf16.mxu0 %v5032
    %7404 = vmatpush1.bf16.msra.mxu0 %v5031
    %7405 = vmatprep.subr.bf16.mxu0 %v5048
    %7406 = vmatpush1.bf16.msra.mxu0 %v5047
    %7407 = vmatprep.subr.bf16.mxu0 %v5064
    %7408 = vmatpush1.bf16.msra.mxu0 %v5063
    %7409 = vmatprep.subr.bf16.mxu0 %v5080
    %7410 = vmatpush1.bf16.msra.mxu0 %v5079
    %7411 = vmatprep.subr.bf16.mxu0 %v5096
    %7412 = vmatpush1.bf16.msra.mxu0 %v5095
    %7413 = vmatprep.subr.bf16.mxu0 %v5112
    %7414 = vmatpush1.bf16.msra.mxu0 %v5111
    %7415 = vmatprep.subr.bf16.mxu0 %v5128
    %7416 = vmatpush1.bf16.msra.mxu0 %v5127
    %7417 = vmatprep.subr.bf16.mxu0 %v5144
    %7418 = vmatpush1.bf16.msra.mxu0 %v5143
    %7419 = vmatprep.subr.bf16.mxu0 %v5160
    %7420 = vmatpush1.bf16.msra.mxu0 %v5159
    %7421 = vmatprep.subr.bf16.mxu0 %v5176
    %7422 = vmatpush1.bf16.msra.mxu0 %v5175
    %7423 = vmatprep.subr.bf16.mxu0 %v5192
    %7424 = vmatpush1.bf16.msra.mxu0 %v5191
    %7425 = vmatprep.subr.bf16.mxu0 %v5208
    %7426 = vmatpush1.bf16.msra.mxu0 %v5207
    %7427 = vmatprep.mubr.bf16.mxu0 %v262
    %7428 = vmatmul.mubr.bf16.gmra.mrb[0].mxu0 %v261
    %v7429 = vpop.f32.mrb[0].mxu0
    %v7430 = vadd.f32 %v7389, %v7429
    %v7431 = vpop.f32.mrb[0].mxu0
    %v7432 = vadd.f32 %v7391, %v7431
    %v7433 = vpop.f32.mrb[0].mxu0
    %v7434 = vpop.f32.mrb[0].mxu0
    %7435 = vdwg.mxu0
    %7436 = vmatprep.subr.bf16.mxu0 %v5224
    %7437 = vmatpush1.bf16.msra.mxu0 %v5223
    %7438 = vmatprep.subr.bf16.mxu0 %v5240
    %7439 = vmatpush1.bf16.msra.mxu0 %v5239
    %7440 = vmatprep.subr.bf16.mxu0 %v5256
    %7441 = vmatpush1.bf16.msra.mxu0 %v5255
    %7442 = vmatprep.subr.bf16.mxu0 %v5272
    %7443 = vmatpush1.bf16.msra.mxu0 %v5271
    %7444 = vmatprep.subr.bf16.mxu0 %v5288
    %7445 = vmatpush1.bf16.msra.mxu0 %v5287
    %7446 = vmatprep.subr.bf16.mxu0 %v5304
    %7447 = vmatpush1.bf16.msra.mxu0 %v5303
    %7448 = vmatprep.subr.bf16.mxu0 %v5320
    %7449 = vmatpush1.bf16.msra.mxu0 %v5319
    %7450 = vmatprep.subr.bf16.mxu0 %v5336
    %7451 = vmatpush1.bf16.msra.mxu0 %v5335
    %7452 = vmatprep.subr.bf16.mxu0 %v5352
    %7453 = vmatpush1.bf16.msra.mxu0 %v5351
    %7454 = vmatprep.subr.bf16.mxu0 %v5368
    %7455 = vmatpush1.bf16.msra.mxu0 %v5367
    %7456 = vmatprep.subr.bf16.mxu0 %v5384
    %7457 = vmatpush1.bf16.msra.mxu0 %v5383
    %7458 = vmatprep.subr.bf16.mxu0 %v5400
    %7459 = vmatpush1.bf16.msra.mxu0 %v5399
    %7460 = vmatprep.subr.bf16.mxu0 %v5416
    %7461 = vmatpush1.bf16.msra.mxu0 %v5415
    %7462 = vmatprep.subr.bf16.mxu0 %v5432
    %7463 = vmatpush1.bf16.msra.mxu0 %v5431
    %7464 = vmatprep.subr.bf16.mxu0 %v5448
    %7465 = vmatpush1.bf16.msra.mxu0 %v5447
    %7466 = vmatprep.subr.bf16.mxu0 %v5464
    %7467 = vmatpush1.bf16.msra.mxu0 %v5463
    %7468 = vmatprep.mubr.bf16.mxu0 %v264
    %7469 = vmatmul.mubr.bf16.gmra.mrb[0].mxu0 %v263
    %v7470 = vpop.f32.mrb[0].mxu0
    %v7471 = vadd.f32 %v7430, %v7470
    %v7472 = vpop.f32.mrb[0].mxu0
    %v7473 = vadd.f32 %v7432, %v7472
    %v7474 = vpop.f32.mrb[0].mxu0
    %v7475 = vpop.f32.mrb[0].mxu0
    %7476 = vdwg.mxu0
    %7477 = vmatprep.subr.bf16.mxu0 %v4458
    %7478 = vmatpush1.bf16.msra.mxu0 %v4457
    %7479 = vmatprep.subr.bf16.mxu0 %v4474
    %7480 = vmatpush1.bf16.msra.mxu0 %v4473
    %7481 = vmatprep.subr.bf16.mxu0 %v4490
    %7482 = vmatpush1.bf16.msra.mxu0 %v4489
    %7483 = vmatprep.subr.bf16.mxu0 %v4506
    %7484 = vmatpush1.bf16.msra.mxu0 %v4505
    %7485 = vmatprep.subr.bf16.mxu0 %v4522
    %7486 = vmatpush1.bf16.msra.mxu0 %v4521
    %7487 = vmatprep.subr.bf16.mxu0 %v4538
    %7488 = vmatpush1.bf16.msra.mxu0 %v4537
    %7489 = vmatprep.subr.bf16.mxu0 %v4554
    %7490 = vmatpush1.bf16.msra.mxu0 %v4553
    %7491 = vmatprep.subr.bf16.mxu0 %v4570
    %7492 = vmatpush1.bf16.msra.mxu0 %v4569
    %7493 = vmatprep.subr.bf16.mxu0 %v4586
    %7494 = vmatpush1.bf16.msra.mxu0 %v4585
    %7495 = vmatprep.subr.bf16.mxu0 %v4602
    %7496 = vmatpush1.bf16.msra.mxu0 %v4601
    %7497 = vmatprep.subr.bf16.mxu0 %v4618
    %7498 = vmatpush1.bf16.msra.mxu0 %v4617
    %7499 = vmatprep.subr.bf16.mxu0 %v4634
    %7500 = vmatpush1.bf16.msra.mxu0 %v4633
    %7501 = vmatprep.subr.bf16.mxu0 %v4650
    %7502 = vmatpush1.bf16.msra.mxu0 %v4649
    %7503 = vmatprep.subr.bf16.mxu0 %v4666
    %7504 = vmatpush1.bf16.msra.mxu0 %v4665
    %7505 = vmatprep.subr.bf16.mxu0 %v4682
    %7506 = vmatpush1.bf16.msra.mxu0 %v4681
    %7507 = vmatprep.subr.bf16.mxu0 %v4698
    %7508 = vmatpush1.bf16.msra.mxu0 %v4697
    %7509 = vmatprep.mubr.bf16.mxu0 %v258
    %7510 = vmatmul.mubr.bf16.gmra.mrb[0].mxu0 %v257
    %v7511 = vpop.f32.mrb[0].mxu0
    %v7512 = vadd.f32 %v1344, %v7511
    %v7513 = vpop.f32.mrb[0].mxu0
    %v7514 = vadd.f32 %v1348, %v7513
    %v7515 = vpop.f32.mrb[0].mxu0
    %v7516 = vpop.f32.mrb[0].mxu0
    %7517 = vdwg.mxu0
    %7518 = vmatprep.subr.bf16.mxu0 %v4714
    %7519 = vmatpush1.bf16.msra.mxu0 %v4713
    %7520 = vmatprep.subr.bf16.mxu0 %v4730
    %7521 = vmatpush1.bf16.msra.mxu0 %v4729
    %7522 = vmatprep.subr.bf16.mxu0 %v4746
    %7523 = vmatpush1.bf16.msra.mxu0 %v4745
    %7524 = vmatprep.subr.bf16.mxu0 %v4762
    %7525 = vmatpush1.bf16.msra.mxu0 %v4761
    %7526 = vmatprep.subr.bf16.mxu0 %v4778
    %7527 = vmatpush1.bf16.msra.mxu0 %v4777
    %7528 = vmatprep.subr.bf16.mxu0 %v4794
    %7529 = vmatpush1.bf16.msra.mxu0 %v4793
    %7530 = vmatprep.subr.bf16.mxu0 %v4810
    %7531 = vmatpush1.bf16.msra.mxu0 %v4809
    %7532 = vmatprep.subr.bf16.mxu0 %v4826
    %7533 = vmatpush1.bf16.msra.mxu0 %v4825
    %7534 = vmatprep.subr.bf16.mxu0 %v4842
    %7535 = vmatpush1.bf16.msra.mxu0 %v4841
    %7536 = vmatprep.subr.bf16.mxu0 %v4858
    %7537 = vmatpush1.bf16.msra.mxu0 %v4857
    %7538 = vmatprep.subr.bf16.mxu0 %v4874
    %7539 = vmatpush1.bf16.msra.mxu0 %v4873
    %7540 = vmatprep.subr.bf16.mxu0 %v4890
    %7541 = vmatpush1.bf16.msra.mxu0 %v4889
    %7542 = vmatprep.subr.bf16.mxu0 %v4906
    %7543 = vmatpush1.bf16.msra.mxu0 %v4905
    %7544 = vmatprep.subr.bf16.mxu0 %v4922
    %7545 = vmatpush1.bf16.msra.mxu0 %v4921
    %7546 = vmatprep.subr.bf16.mxu0 %v4938
    %7547 = vmatpush1.bf16.msra.mxu0 %v4937
    %7548 = vmatprep.subr.bf16.mxu0 %v4954
    %7549 = vmatpush1.bf16.msra.mxu0 %v4953
    %7550 = vmatprep.mubr.bf16.mxu0 %v260
    %7551 = vmatmul.mubr.bf16.gmra.mrb[0].mxu0 %v259
    %v7552 = vpop.f32.mrb[0].mxu0
    %v7553 = vadd.f32 %v7512, %v7552
    %v7554 = vpop.f32.mrb[0].mxu0
    %v7555 = vadd.f32 %v7514, %v7554
    %v7556 = vpop.f32.mrb[0].mxu0
    %v7557 = vpop.f32.mrb[0].mxu0
    %7558 = vdwg.mxu0
    %7559 = vmatprep.subr.bf16.mxu0 %v4970
    %7560 = vmatpush1.bf16.msra.mxu0 %v4969
    %7561 = vmatprep.subr.bf16.mxu0 %v4986
    %7562 = vmatpush1.bf16.msra.mxu0 %v4985
    %7563 = vmatprep.subr.bf16.mxu0 %v5002
    %7564 = vmatpush1.bf16.msra.mxu0 %v5001
    %7565 = vmatprep.subr.bf16.mxu0 %v5018
    %7566 = vmatpush1.bf16.msra.mxu0 %v5017
    %7567 = vmatprep.subr.bf16.mxu0 %v5034
    %7568 = vmatpush1.bf16.msra.mxu0 %v5033
    %7569 = vmatprep.subr.bf16.mxu0 %v5050
    %7570 = vmatpush1.bf16.msra.mxu0 %v5049
    %7571 = vmatprep.subr.bf16.mxu0 %v5066
    %7572 = vmatpush1.bf16.msra.mxu0 %v5065
    %7573 = vmatprep.subr.bf16.mxu0 %v5082
    %7574 = vmatpush1.bf16.msra.mxu0 %v5081
    %7575 = vmatprep.subr.bf16.mxu0 %v5098
    %7576 = vmatpush1.bf16.msra.mxu0 %v5097
    %7577 = vmatprep.subr.bf16.mxu0 %v5114
    %7578 = vmatpush1.bf16.msra.mxu0 %v5113
    %7579 = vmatprep.subr.bf16.mxu0 %v5130
    %7580 = vmatpush1.bf16.msra.mxu0 %v5129
    %7581 = vmatprep.subr.bf16.mxu0 %v5146
    %7582 = vmatpush1.bf16.msra.mxu0 %v5145
    %7583 = vmatprep.subr.bf16.mxu0 %v5162
    %7584 = vmatpush1.bf16.msra.mxu0 %v5161
    %7585 = vmatprep.subr.bf16.mxu0 %v5178
    %7586 = vmatpush1.bf16.msra.mxu0 %v5177
    %7587 = vmatprep.subr.bf16.mxu0 %v5194
    %7588 = vmatpush1.bf16.msra.mxu0 %v5193
    %7589 = vmatprep.subr.bf16.mxu0 %v5210
    %7590 = vmatpush1.bf16.msra.mxu0 %v5209
    %7591 = vmatprep.mubr.bf16.mxu0 %v262
    %7592 = vmatmul.mubr.bf16.gmra.mrb[0].mxu0 %v261
    %v7593 = vpop.f32.mrb[0].mxu0
    %v7594 = vadd.f32 %v7553, %v7593
    %v7595 = vpop.f32.mrb[0].mxu0
    %v7596 = vadd.f32 %v7555, %v7595
    %v7597 = vpop.f32.mrb[0].mxu0
    %v7598 = vpop.f32.mrb[0].mxu0
    %7599 = vdwg.mxu0
    %7600 = vmatprep.subr.bf16.mxu0 %v5226
    %7601 = vmatpush1.bf16.msra.mxu0 %v5225
    %7602 = vmatprep.subr.bf16.mxu0 %v5242
    %7603 = vmatpush1.bf16.msra.mxu0 %v5241
    %7604 = vmatprep.subr.bf16.mxu0 %v5258
    %7605 = vmatpush1.bf16.msra.mxu0 %v5257
    %7606 = vmatprep.subr.bf16.mxu0 %v5274
    %7607 = vmatpush1.bf16.msra.mxu0 %v5273
    %7608 = vmatprep.subr.bf16.mxu0 %v5290
    %7609 = vmatpush1.bf16.msra.mxu0 %v5289
    %7610 = vmatprep.subr.bf16.mxu0 %v5306
    %7611 = vmatpush1.bf16.msra.mxu0 %v5305
    %7612 = vmatprep.subr.bf16.mxu0 %v5322
    %7613 = vmatpush1.bf16.msra.mxu0 %v5321
    %7614 = vmatprep.subr.bf16.mxu0 %v5338
    %7615 = vmatpush1.bf16.msra.mxu0 %v5337
    %7616 = vmatprep.subr.bf16.mxu0 %v5354
    %7617 = vmatpush1.bf16.msra.mxu0 %v5353
    %7618 = vmatprep.subr.bf16.mxu0 %v5370
    %7619 = vmatpush1.bf16.msra.mxu0 %v5369
    %7620 = vmatprep.subr.bf16.mxu0 %v5386
    %7621 = vmatpush1.bf16.msra.mxu0 %v5385
    %7622 = vmatprep.subr.bf16.mxu0 %v5402
    %7623 = vmatpush1.bf16.msra.mxu0 %v5401
    %7624 = vmatprep.subr.bf16.mxu0 %v5418
    %7625 = vmatpush1.bf16.msra.mxu0 %v5417
    %7626 = vmatprep.subr.bf16.mxu0 %v5434
    %7627 = vmatpush1.bf16.msra.mxu0 %v5433
    %7628 = vmatprep.subr.bf16.mxu0 %v5450
    %7629 = vmatpush1.bf16.msra.mxu0 %v5449
    %7630 = vmatprep.subr.bf16.mxu0 %v5466
    %7631 = vmatpush1.bf16.msra.mxu0 %v5465
    %7632 = vmatprep.mubr.bf16.mxu0 %v264
    %7633 = vmatmul.mubr.bf16.gmra.mrb[0].mxu0 %v263
    %v7634 = vpop.f32.mrb[0].mxu0
    %v7635 = vadd.f32 %v7594, %v7634
    %v7636 = vpop.f32.mrb[0].mxu0
    %v7637 = vadd.f32 %v7596, %v7636
    %v7638 = vpop.f32.mrb[0].mxu0
    %v7639 = vpop.f32.mrb[0].mxu0
    %7640 = vdwg.mxu0
    %7641 = vmatprep.subr.bf16.mxu0 %v4460
    %7642 = vmatpush1.bf16.msra.mxu0 %v4459
    %7643 = vmatprep.subr.bf16.mxu0 %v4476
    %7644 = vmatpush1.bf16.msra.mxu0 %v4475
    %7645 = vmatprep.subr.bf16.mxu0 %v4492
    %7646 = vmatpush1.bf16.msra.mxu0 %v4491
    %7647 = vmatprep.subr.bf16.mxu0 %v4508
    %7648 = vmatpush1.bf16.msra.mxu0 %v4507
    %7649 = vmatprep.subr.bf16.mxu0 %v4524
    %7650 = vmatpush1.bf16.msra.mxu0 %v4523
    %7651 = vmatprep.subr.bf16.mxu0 %v4540
    %7652 = vmatpush1.bf16.msra.mxu0 %v4539
    %7653 = vmatprep.subr.bf16.mxu0 %v4556
    %7654 = vmatpush1.bf16.msra.mxu0 %v4555
    %7655 = vmatprep.subr.bf16.mxu0 %v4572
    %7656 = vmatpush1.bf16.msra.mxu0 %v4571
    %7657 = vmatprep.subr.bf16.mxu0 %v4588
    %7658 = vmatpush1.bf16.msra.mxu0 %v4587
    %7659 = vmatprep.subr.bf16.mxu0 %v4604
    %7660 = vmatpush1.bf16.msra.mxu0 %v4603
    %7661 = vmatprep.subr.bf16.mxu0 %v4620
    %7662 = vmatpush1.bf16.msra.mxu0 %v4619
    %7663 = vmatprep.subr.bf16.mxu0 %v4636
    %7664 = vmatpush1.bf16.msra.mxu0 %v4635
    %7665 = vmatprep.subr.bf16.mxu0 %v4652
    %7666 = vmatpush1.bf16.msra.mxu0 %v4651
    %7667 = vmatprep.subr.bf16.mxu0 %v4668
    %7668 = vmatpush1.bf16.msra.mxu0 %v4667
    %7669 = vmatprep.subr.bf16.mxu0 %v4684
    %7670 = vmatpush1.bf16.msra.mxu0 %v4683
    %7671 = vmatprep.subr.bf16.mxu0 %v4700
    %7672 = vmatpush1.bf16.msra.mxu0 %v4699
    %7673 = vmatprep.mubr.bf16.mxu0 %v258
    %7674 = vmatmul.mubr.bf16.gmra.mrb[0].mxu0 %v257
    %v7675 = vpop.f32.mrb[0].mxu0
    %v7676 = vadd.f32 %v1352, %v7675
    %v7677 = vpop.f32.mrb[0].mxu0
    %v7678 = vadd.f32 %v1356, %v7677
    %v7679 = vpop.f32.mrb[0].mxu0
    %v7680 = vpop.f32.mrb[0].mxu0
    %7681 = vdwg.mxu0
    %7682 = vmatprep.subr.bf16.mxu0 %v4716
    %7683 = vmatpush1.bf16.msra.mxu0 %v4715
    %7684 = vmatprep.subr.bf16.mxu0 %v4732
    %7685 = vmatpush1.bf16.msra.mxu0 %v4731
    %7686 = vmatprep.subr.bf16.mxu0 %v4748
    %7687 = vmatpush1.bf16.msra.mxu0 %v4747
    %7688 = vmatprep.subr.bf16.mxu0 %v4764
    %7689 = vmatpush1.bf16.msra.mxu0 %v4763
    %7690 = vmatprep.subr.bf16.mxu0 %v4780
    %7691 = vmatpush1.bf16.msra.mxu0 %v4779
    %7692 = vmatprep.subr.bf16.mxu0 %v4796
    %7693 = vmatpush1.bf16.msra.mxu0 %v4795
    %7694 = vmatprep.subr.bf16.mxu0 %v4812
    %7695 = vmatpush1.bf16.msra.mxu0 %v4811
    %7696 = vmatprep.subr.bf16.mxu0 %v4828
    %7697 = vmatpush1.bf16.msra.mxu0 %v4827
    %7698 = vmatprep.subr.bf16.mxu0 %v4844
    %7699 = vmatpush1.bf16.msra.mxu0 %v4843
    %7700 = vmatprep.subr.bf16.mxu0 %v4860
    %7701 = vmatpush1.bf16.msra.mxu0 %v4859
    %7702 = vmatprep.subr.bf16.mxu0 %v4876
    %7703 = vmatpush1.bf16.msra.mxu0 %v4875
    %7704 = vmatprep.subr.bf16.mxu0 %v4892
    %7705 = vmatpush1.bf16.msra.mxu0 %v4891
    %7706 = vmatprep.subr.bf16.mxu0 %v4908
    %7707 = vmatpush1.bf16.msra.mxu0 %v4907
    %7708 = vmatprep.subr.bf16.mxu0 %v4924
    %7709 = vmatpush1.bf16.msra.mxu0 %v4923
    %7710 = vmatprep.subr.bf16.mxu0 %v4940
    %7711 = vmatpush1.bf16.msra.mxu0 %v4939
    %7712 = vmatprep.subr.bf16.mxu0 %v4956
    %7713 = vmatpush1.bf16.msra.mxu0 %v4955
    %7714 = vmatprep.mubr.bf16.mxu0 %v260
    %7715 = vmatmul.mubr.bf16.gmra.mrb[0].mxu0 %v259
    %v7716 = vpop.f32.mrb[0].mxu0
    %v7717 = vadd.f32 %v7676, %v7716
    %v7718 = vpop.f32.mrb[0].mxu0
    %v7719 = vadd.f32 %v7678, %v7718
    %v7720 = vpop.f32.mrb[0].mxu0
    %v7721 = vpop.f32.mrb[0].mxu0
    %7722 = vdwg.mxu0
    %7723 = vmatprep.subr.bf16.mxu0 %v4972
    %7724 = vmatpush1.bf16.msra.mxu0 %v4971
    %7725 = vmatprep.subr.bf16.mxu0 %v4988
    %7726 = vmatpush1.bf16.msra.mxu0 %v4987
    %7727 = vmatprep.subr.bf16.mxu0 %v5004
    %7728 = vmatpush1.bf16.msra.mxu0 %v5003
    %7729 = vmatprep.subr.bf16.mxu0 %v5020
    %7730 = vmatpush1.bf16.msra.mxu0 %v5019
    %7731 = vmatprep.subr.bf16.mxu0 %v5036
    %7732 = vmatpush1.bf16.msra.mxu0 %v5035
    %7733 = vmatprep.subr.bf16.mxu0 %v5052
    %7734 = vmatpush1.bf16.msra.mxu0 %v5051
    %7735 = vmatprep.subr.bf16.mxu0 %v5068
    %7736 = vmatpush1.bf16.msra.mxu0 %v5067
    %7737 = vmatprep.subr.bf16.mxu0 %v5084
    %7738 = vmatpush1.bf16.msra.mxu0 %v5083
    %7739 = vmatprep.subr.bf16.mxu0 %v5100
    %7740 = vmatpush1.bf16.msra.mxu0 %v5099
    %7741 = vmatprep.subr.bf16.mxu0 %v5116
    %7742 = vmatpush1.bf16.msra.mxu0 %v5115
    %7743 = vmatprep.subr.bf16.mxu0 %v5132
    %7744 = vmatpush1.bf16.msra.mxu0 %v5131
    %7745 = vmatprep.subr.bf16.mxu0 %v5148
    %7746 = vmatpush1.bf16.msra.mxu0 %v5147
    %7747 = vmatprep.subr.bf16.mxu0 %v5164
    %7748 = vmatpush1.bf16.msra.mxu0 %v5163
    %7749 = vmatprep.subr.bf16.mxu0 %v5180
    %7750 = vmatpush1.bf16.msra.mxu0 %v5179
    %7751 = vmatprep.subr.bf16.mxu0 %v5196
    %7752 = vmatpush1.bf16.msra.mxu0 %v5195
    %7753 = vmatprep.subr.bf16.mxu0 %v5212
    %7754 = vmatpush1.bf16.msra.mxu0 %v5211
    %7755 = vmatprep.mubr.bf16.mxu0 %v262
    %7756 = vmatmul.mubr.bf16.gmra.mrb[0].mxu0 %v261
    %v7757 = vpop.f32.mrb[0].mxu0
    %v7758 = vadd.f32 %v7717, %v7757
    %v7759 = vpop.f32.mrb[0].mxu0
    %v7760 = vadd.f32 %v7719, %v7759
    %v7761 = vpop.f32.mrb[0].mxu0
    %v7762 = vpop.f32.mrb[0].mxu0
    %7763 = vdwg.mxu0
    %7764 = vmatprep.subr.bf16.mxu0 %v5228
    %7765 = vmatpush1.bf16.msra.mxu0 %v5227
    %7766 = vmatprep.subr.bf16.mxu0 %v5244
    %7767 = vmatpush1.bf16.msra.mxu0 %v5243
    %7768 = vmatprep.subr.bf16.mxu0 %v5260
    %7769 = vmatpush1.bf16.msra.mxu0 %v5259
    %7770 = vmatprep.subr.bf16.mxu0 %v5276
    %7771 = vmatpush1.bf16.msra.mxu0 %v5275
    %7772 = vmatprep.subr.bf16.mxu0 %v5292
    %7773 = vmatpush1.bf16.msra.mxu0 %v5291
    %7774 = vmatprep.subr.bf16.mxu0 %v5308
    %7775 = vmatpush1.bf16.msra.mxu0 %v5307
    %7776 = vmatprep.subr.bf16.mxu0 %v5324
    %7777 = vmatpush1.bf16.msra.mxu0 %v5323
    %7778 = vmatprep.subr.bf16.mxu0 %v5340
    %7779 = vmatpush1.bf16.msra.mxu0 %v5339
    %7780 = vmatprep.subr.bf16.mxu0 %v5356
    %7781 = vmatpush1.bf16.msra.mxu0 %v5355
    %7782 = vmatprep.subr.bf16.mxu0 %v5372
    %7783 = vmatpush1.bf16.msra.mxu0 %v5371
    %7784 = vmatprep.subr.bf16.mxu0 %v5388
    %7785 = vmatpush1.bf16.msra.mxu0 %v5387
    %7786 = vmatprep.subr.bf16.mxu0 %v5404
    %7787 = vmatpush1.bf16.msra.mxu0 %v5403
    %7788 = vmatprep.subr.bf16.mxu0 %v5420
    %7789 = vmatpush1.bf16.msra.mxu0 %v5419
    %7790 = vmatprep.subr.bf16.mxu0 %v5436
    %7791 = vmatpush1.bf16.msra.mxu0 %v5435
    %7792 = vmatprep.subr.bf16.mxu0 %v5452
    %7793 = vmatpush1.bf16.msra.mxu0 %v5451
    %7794 = vmatprep.subr.bf16.mxu0 %v5468
    %7795 = vmatpush1.bf16.msra.mxu0 %v5467
    %7796 = vmatprep.mubr.bf16.mxu0 %v264
    %7797 = vmatmul.mubr.bf16.gmra.mrb[0].mxu0 %v263
    %v7798 = vpop.f32.mrb[0].mxu0
    %v7799 = vadd.f32 %v7758, %v7798
    %v7800 = vpop.f32.mrb[0].mxu0
    %v7801 = vadd.f32 %v7760, %v7800
    %v7802 = vpop.f32.mrb[0].mxu0
    %v7803 = vpop.f32.mrb[0].mxu0
    %7804 = vdwg.mxu0
    %v7805 = vmax.f32 %v6651, 0.0
    %v7806 = vmax.f32 %v6653, 0.0
    %v7807 = vmax.f32 %v6815, 0.0
    %v7808 = vmax.f32 %v6817, 0.0
    %v7809 = vmax.f32 %v6979, 0.0
    %v7810 = vmax.f32 %v6981, 0.0
    %v7811 = vmax.f32 %v7143, 0.0
    %v7812 = vmax.f32 %v7145, 0.0
    %v7813 = vmax.f32 %v7307, 0.0
    %v7814 = vmax.f32 %v7309, 0.0
    %v7815 = vmax.f32 %v7471, 0.0
    %v7816 = vmax.f32 %v7473, 0.0
    %v7817 = vmax.f32 %v7635, 0.0
    %v7818 = vmax.f32 %v7637, 0.0
    %v7819 = vmax.f32 %v7799, 0.0
    %v7820 = vmax.f32 %v7801, 0.0
    %v7821 = vpack.c.bf16 %v7805, %v7805
    %v7822 = vpack.c.bf16 %v7806, %v7806
    %v7823 = vpack.c.bf16 %v7807, %v7807
    %v7824 = vpack.c.bf16 %v7808, %v7808
    %v7825 = vpack.c.bf16 %v7809, %v7809
    %v7826 = vpack.c.bf16 %v7810, %v7810
    %v7827 = vpack.c.bf16 %v7811, %v7811
    %v7828 = vpack.c.bf16 %v7812, %v7812
    %v7829 = vpack.c.bf16 %v7813, %v7813
    %v7830 = vpack.c.bf16 %v7814, %v7814
    %v7831 = vpack.c.bf16 %v7815, %v7815
    %v7832 = vpack.c.bf16 %v7816, %v7816
    %v7833 = vpack.c.bf16 %v7817, %v7817
    %v7834 = vpack.c.bf16 %v7818, %v7818
    %v7835 = vpack.c.bf16 %v7819, %v7819
    %v7836 = vpack.c.bf16 %v7820, %v7820
    %v7837 = vld [vmem:[#allocation5] sm:$0x3]
    %v7838 = vpack.c.bf16 %v7837, %v7837
    %v7839 = vld [vmem:[#allocation11] sm:$0xf]
    %v7840 = vld [vmem:[#allocation11 + $0x4] sm:$0xf]
    %v7841 = vld [vmem:[#allocation11 + $0x8] sm:$0xf]
    %v7842 = vld [vmem:[#allocation11 + $0xc] sm:$0xf]
    %v7843 = vld [vmem:[#allocation11 + $0x10] sm:$0xf]
    %v7844 = vld [vmem:[#allocation11 + $0x14] sm:$0xf]
    %v7845 = vld [vmem:[#allocation11 + $0x18] sm:$0xf]
    %v7846 = vld [vmem:[#allocation11 + $0x1c] sm:$0xf]
    %v7847 = vld [vmem:[#allocation11 + $0x20] sm:$0xf]
    %v7848 = vld [vmem:[#allocation11 + $0x24] sm:$0xf]
    %v7849 = vld [vmem:[#allocation11 + $0x28] sm:$0xf]
    %v7850 = vld [vmem:[#allocation11 + $0x2c] sm:$0xf]
    %v7851 = vld [vmem:[#allocation11 + $0x30] sm:$0xf]
    %v7852 = vld [vmem:[#allocation11 + $0x34] sm:$0xf]
    %v7853 = vld [vmem:[#allocation11 + $0x38] sm:$0xf]
    %v7854 = vld [vmem:[#allocation11 + $0x3c] sm:$0xf]
    %v7855 = vld [vmem:[#allocation11 + $0x40] sm:$0xf]
    %v7856 = vld [vmem:[#allocation11 + $0x44] sm:$0xf]
    %v7857 = vld [vmem:[#allocation11 + $0x48] sm:$0xf]
    %v7858 = vld [vmem:[#allocation11 + $0x4c] sm:$0xf]
    %v7859 = vld [vmem:[#allocation11 + $0x50] sm:$0xf]
    %v7860 = vld [vmem:[#allocation11 + $0x54] sm:$0xf]
    %v7861 = vld [vmem:[#allocation11 + $0x58] sm:$0xf]
    %v7862 = vld [vmem:[#allocation11 + $0x5c] sm:$0xf]
    %v7863 = vld [vmem:[#allocation11 + $0x60] sm:$0xf]
    %v7864 = vld [vmem:[#allocation11 + $0x64] sm:$0xf]
    %v7865 = vld [vmem:[#allocation11 + $0x68] sm:$0xf]
    %v7866 = vld [vmem:[#allocation11 + $0x6c] sm:$0xf]
    %v7867 = vld [vmem:[#allocation11 + $0x70] sm:$0xf]
    %v7868 = vld [vmem:[#allocation11 + $0x74] sm:$0xf]
    %v7869 = vld [vmem:[#allocation11 + $0x78] sm:$0xf]
    %v7870 = vld [vmem:[#allocation11 + $0x7c] sm:$0xf]
    %v7871 = vld [vmem:[#allocation11 + $0x80] sm:$0xf]
    %v7872 = vld [vmem:[#allocation11 + $0x84] sm:$0xf]
    %v7873 = vld [vmem:[#allocation11 + $0x88] sm:$0xf]
    %v7874 = vld [vmem:[#allocation11 + $0x8c] sm:$0xf]
    %v7875 = vld [vmem:[#allocation11 + $0x90] sm:$0xf]
    %v7876 = vld [vmem:[#allocation11 + $0x94] sm:$0xf]
    %v7877 = vld [vmem:[#allocation11 + $0x98] sm:$0xf]
    %v7878 = vld [vmem:[#allocation11 + $0x9c] sm:$0xf]
    %v7879 = vld [vmem:[#allocation11 + $0xa0] sm:$0xf]
    %v7880 = vld [vmem:[#allocation11 + $0xa4] sm:$0xf]
    %v7881 = vld [vmem:[#allocation11 + $0xa8] sm:$0xf]
    %v7882 = vld [vmem:[#allocation11 + $0xac] sm:$0xf]
    %v7883 = vld [vmem:[#allocation11 + $0xb0] sm:$0xf]
    %v7884 = vld [vmem:[#allocation11 + $0xb4] sm:$0xf]
    %v7885 = vld [vmem:[#allocation11 + $0xb8] sm:$0xf]
    %v7886 = vld [vmem:[#allocation11 + $0xbc] sm:$0xf]
    %v7887 = vld [vmem:[#allocation11 + $0xc0] sm:$0xf]
    %v7888 = vld [vmem:[#allocation11 + $0xc4] sm:$0xf]
    %v7889 = vld [vmem:[#allocation11 + $0xc8] sm:$0xf]
    %v7890 = vld [vmem:[#allocation11 + $0xcc] sm:$0xf]
    %v7891 = vld [vmem:[#allocation11 + $0xd0] sm:$0xf]
    %v7892 = vld [vmem:[#allocation11 + $0xd4] sm:$0xf]
    %v7893 = vld [vmem:[#allocation11 + $0xd8] sm:$0xf]
    %v7894 = vld [vmem:[#allocation11 + $0xdc] sm:$0xf]
    %v7895 = vld [vmem:[#allocation11 + $0xe0] sm:$0xf]
    %v7896 = vld [vmem:[#allocation11 + $0xe4] sm:$0xf]
    %v7897 = vld [vmem:[#allocation11 + $0xe8] sm:$0xf]
    %v7898 = vld [vmem:[#allocation11 + $0xec] sm:$0xf]
    %v7899 = vld [vmem:[#allocation11 + $0xf0] sm:$0xf]
    %v7900 = vld [vmem:[#allocation11 + $0xf4] sm:$0xf]
    %v7901 = vld [vmem:[#allocation11 + $0xf8] sm:$0xf]
    %v7902 = vld [vmem:[#allocation11 + $0xfc] sm:$0xf]
    %v7903 = vld [vmem:[#allocation11 + $0x100] sm:$0xf]
    %v7904 = vld [vmem:[#allocation11 + $0x104] sm:$0xf]
    %v7905 = vld [vmem:[#allocation11 + $0x108] sm:$0xf]
    %v7906 = vld [vmem:[#allocation11 + $0x10c] sm:$0xf]
    %v7907 = vld [vmem:[#allocation11 + $0x110] sm:$0xf]
    %v7908 = vld [vmem:[#allocation11 + $0x114] sm:$0xf]
    %v7909 = vld [vmem:[#allocation11 + $0x118] sm:$0xf]
    %v7910 = vld [vmem:[#allocation11 + $0x11c] sm:$0xf]
    %v7911 = vld [vmem:[#allocation11 + $0x120] sm:$0xf]
    %v7912 = vld [vmem:[#allocation11 + $0x124] sm:$0xf]
    %v7913 = vld [vmem:[#allocation11 + $0x128] sm:$0xf]
    %v7914 = vld [vmem:[#allocation11 + $0x12c] sm:$0xf]
    %v7915 = vld [vmem:[#allocation11 + $0x130] sm:$0xf]
    %v7916 = vld [vmem:[#allocation11 + $0x134] sm:$0xf]
    %v7917 = vld [vmem:[#allocation11 + $0x138] sm:$0xf]
    %v7918 = vld [vmem:[#allocation11 + $0x13c] sm:$0xf]
    %v7919 = vld [vmem:[#allocation11 + $0x140] sm:$0xf]
    %v7920 = vld [vmem:[#allocation11 + $0x144] sm:$0xf]
    %v7921 = vld [vmem:[#allocation11 + $0x148] sm:$0xf]
    %v7922 = vld [vmem:[#allocation11 + $0x14c] sm:$0xf]
    %v7923 = vld [vmem:[#allocation11 + $0x150] sm:$0xf]
    %v7924 = vld [vmem:[#allocation11 + $0x154] sm:$0xf]
    %v7925 = vld [vmem:[#allocation11 + $0x158] sm:$0xf]
    %v7926 = vld [vmem:[#allocation11 + $0x15c] sm:$0xf]
    %v7927 = vld [vmem:[#allocation11 + $0x160] sm:$0xf]
    %v7928 = vld [vmem:[#allocation11 + $0x164] sm:$0xf]
    %v7929 = vld [vmem:[#allocation11 + $0x168] sm:$0xf]
    %v7930 = vld [vmem:[#allocation11 + $0x16c] sm:$0xf]
    %v7931 = vld [vmem:[#allocation11 + $0x170] sm:$0xf]
    %v7932 = vld [vmem:[#allocation11 + $0x174] sm:$0xf]
    %v7933 = vld [vmem:[#allocation11 + $0x178] sm:$0xf]
    %v7934 = vld [vmem:[#allocation11 + $0x17c] sm:$0xf]
    %v7935 = vld [vmem:[#allocation11 + $0x180] sm:$0xf]
    %v7936 = vld [vmem:[#allocation11 + $0x184] sm:$0xf]
    %v7937 = vld [vmem:[#allocation11 + $0x188] sm:$0xf]
    %v7938 = vld [vmem:[#allocation11 + $0x18c] sm:$0xf]
    %v7939 = vld [vmem:[#allocation11 + $0x190] sm:$0xf]
    %v7940 = vld [vmem:[#allocation11 + $0x194] sm:$0xf]
    %v7941 = vld [vmem:[#allocation11 + $0x198] sm:$0xf]
    %v7942 = vld [vmem:[#allocation11 + $0x19c] sm:$0xf]
    %v7943 = vld [vmem:[#allocation11 + $0x1a0] sm:$0xf]
    %v7944 = vld [vmem:[#allocation11 + $0x1a4] sm:$0xf]
    %v7945 = vld [vmem:[#allocation11 + $0x1a8] sm:$0xf]
    %v7946 = vld [vmem:[#allocation11 + $0x1ac] sm:$0xf]
    %v7947 = vld [vmem:[#allocation11 + $0x1b0] sm:$0xf]
    %v7948 = vld [vmem:[#allocation11 + $0x1b4] sm:$0xf]
    %v7949 = vld [vmem:[#allocation11 + $0x1b8] sm:$0xf]
    %v7950 = vld [vmem:[#allocation11 + $0x1bc] sm:$0xf]
    %v7951 = vld [vmem:[#allocation11 + $0x1c0] sm:$0xf]
    %v7952 = vld [vmem:[#allocation11 + $0x1c4] sm:$0xf]
    %v7953 = vld [vmem:[#allocation11 + $0x1c8] sm:$0xf]
    %v7954 = vld [vmem:[#allocation11 + $0x1cc] sm:$0xf]
    %v7955 = vld [vmem:[#allocation11 + $0x1d0] sm:$0xf]
    %v7956 = vld [vmem:[#allocation11 + $0x1d4] sm:$0xf]
    %v7957 = vld [vmem:[#allocation11 + $0x1d8] sm:$0xf]
    %v7958 = vld [vmem:[#allocation11 + $0x1dc] sm:$0xf]
    %v7959 = vld [vmem:[#allocation11 + $0x1e0] sm:$0xf]
    %v7960 = vld [vmem:[#allocation11 + $0x1e4] sm:$0xf]
    %v7961 = vld [vmem:[#allocation11 + $0x1e8] sm:$0xf]
    %v7962 = vld [vmem:[#allocation11 + $0x1ec] sm:$0xf]
    %v7963 = vld [vmem:[#allocation11 + $0x1f0] sm:$0xf]
    %v7964 = vld [vmem:[#allocation11 + $0x1f4] sm:$0xf]
    %v7965 = vld [vmem:[#allocation11 + $0x1f8] sm:$0xf]
    %v7966 = vld [vmem:[#allocation11 + $0x1fc] sm:$0xf]
    %v7967 = vld [vmem:[#allocation11 + $0x200] sm:$0xf]
    %v7968 = vld [vmem:[#allocation11 + $0x204] sm:$0xf]
    %v7969 = vld [vmem:[#allocation11 + $0x208] sm:$0xf]
    %v7970 = vld [vmem:[#allocation11 + $0x20c] sm:$0xf]
    %v7971 = vld [vmem:[#allocation11 + $0x210] sm:$0xf]
    %v7972 = vld [vmem:[#allocation11 + $0x214] sm:$0xf]
    %v7973 = vld [vmem:[#allocation11 + $0x218] sm:$0xf]
    %v7974 = vld [vmem:[#allocation11 + $0x21c] sm:$0xf]
    %v7975 = vld [vmem:[#allocation11 + $0x220] sm:$0xf]
    %v7976 = vld [vmem:[#allocation11 + $0x224] sm:$0xf]
    %v7977 = vld [vmem:[#allocation11 + $0x228] sm:$0xf]
    %v7978 = vld [vmem:[#allocation11 + $0x22c] sm:$0xf]
    %v7979 = vld [vmem:[#allocation11 + $0x230] sm:$0xf]
    %v7980 = vld [vmem:[#allocation11 + $0x234] sm:$0xf]
    %v7981 = vld [vmem:[#allocation11 + $0x238] sm:$0xf]
    %v7982 = vld [vmem:[#allocation11 + $0x23c] sm:$0xf]
    %v7983 = vld [vmem:[#allocation11 + $0x240] sm:$0xf]
    %v7984 = vld [vmem:[#allocation11 + $0x244] sm:$0xf]
    %v7985 = vld [vmem:[#allocation11 + $0x248] sm:$0xf]
    %v7986 = vld [vmem:[#allocation11 + $0x24c] sm:$0xf]
    %v7987 = vld [vmem:[#allocation11 + $0x250] sm:$0xf]
    %v7988 = vld [vmem:[#allocation11 + $0x254] sm:$0xf]
    %v7989 = vld [vmem:[#allocation11 + $0x258] sm:$0xf]
    %v7990 = vld [vmem:[#allocation11 + $0x25c] sm:$0xf]
    %v7991 = vld [vmem:[#allocation11 + $0x260] sm:$0xf]
    %v7992 = vld [vmem:[#allocation11 + $0x264] sm:$0xf]
    %v7993 = vld [vmem:[#allocation11 + $0x268] sm:$0xf]
    %v7994 = vld [vmem:[#allocation11 + $0x26c] sm:$0xf]
    %v7995 = vld [vmem:[#allocation11 + $0x270] sm:$0xf]
    %v7996 = vld [vmem:[#allocation11 + $0x274] sm:$0xf]
    %v7997 = vld [vmem:[#allocation11 + $0x278] sm:$0xf]
    %v7998 = vld [vmem:[#allocation11 + $0x27c] sm:$0xf]
    %v7999 = vld [vmem:[#allocation11 + $0x280] sm:$0xf]
    %v8000 = vld [vmem:[#allocation11 + $0x284] sm:$0xf]
    %v8001 = vld [vmem:[#allocation11 + $0x288] sm:$0xf]
    %v8002 = vld [vmem:[#allocation11 + $0x28c] sm:$0xf]
    %v8003 = vld [vmem:[#allocation11 + $0x290] sm:$0xf]
    %v8004 = vld [vmem:[#allocation11 + $0x294] sm:$0xf]
    %v8005 = vld [vmem:[#allocation11 + $0x298] sm:$0xf]
    %v8006 = vld [vmem:[#allocation11 + $0x29c] sm:$0xf]
    %v8007 = vld [vmem:[#allocation11 + $0x2a0] sm:$0xf]
    %v8008 = vld [vmem:[#allocation11 + $0x2a4] sm:$0xf]
    %v8009 = vld [vmem:[#allocation11 + $0x2a8] sm:$0xf]
    %v8010 = vld [vmem:[#allocation11 + $0x2ac] sm:$0xf]
    %v8011 = vld [vmem:[#allocation11 + $0x2b0] sm:$0xf]
    %v8012 = vld [vmem:[#allocation11 + $0x2b4] sm:$0xf]
    %v8013 = vld [vmem:[#allocation11 + $0x2b8] sm:$0xf]
    %v8014 = vld [vmem:[#allocation11 + $0x2bc] sm:$0xf]
    %v8015 = vld [vmem:[#allocation11 + $0x2c0] sm:$0xf]
    %v8016 = vld [vmem:[#allocation11 + $0x2c4] sm:$0xf]
    %v8017 = vld [vmem:[#allocation11 + $0x2c8] sm:$0xf]
    %v8018 = vld [vmem:[#allocation11 + $0x2cc] sm:$0xf]
    %v8019 = vld [vmem:[#allocation11 + $0x2d0] sm:$0xf]
    %v8020 = vld [vmem:[#allocation11 + $0x2d4] sm:$0xf]
    %v8021 = vld [vmem:[#allocation11 + $0x2d8] sm:$0xf]
    %v8022 = vld [vmem:[#allocation11 + $0x2dc] sm:$0xf]
    %v8023 = vld [vmem:[#allocation11 + $0x2e0] sm:$0xf]
    %v8024 = vld [vmem:[#allocation11 + $0x2e4] sm:$0xf]
    %v8025 = vld [vmem:[#allocation11 + $0x2e8] sm:$0xf]
    %v8026 = vld [vmem:[#allocation11 + $0x2ec] sm:$0xf]
    %v8027 = vld [vmem:[#allocation11 + $0x2f0] sm:$0xf]
    %v8028 = vld [vmem:[#allocation11 + $0x2f4] sm:$0xf]
    %v8029 = vld [vmem:[#allocation11 + $0x2f8] sm:$0xf]
    %v8030 = vld [vmem:[#allocation11 + $0x2fc] sm:$0xf]
    %v8031 = vld [vmem:[#allocation11 + $0x300] sm:$0xf]
    %v8032 = vld [vmem:[#allocation11 + $0x304] sm:$0xf]
    %v8033 = vld [vmem:[#allocation11 + $0x308] sm:$0xf]
    %v8034 = vld [vmem:[#allocation11 + $0x30c] sm:$0xf]
    %v8035 = vld [vmem:[#allocation11 + $0x310] sm:$0xf]
    %v8036 = vld [vmem:[#allocation11 + $0x314] sm:$0xf]
    %v8037 = vld [vmem:[#allocation11 + $0x318] sm:$0xf]
    %v8038 = vld [vmem:[#allocation11 + $0x31c] sm:$0xf]
    %v8039 = vld [vmem:[#allocation11 + $0x320] sm:$0xf]
    %v8040 = vld [vmem:[#allocation11 + $0x324] sm:$0xf]
    %v8041 = vld [vmem:[#allocation11 + $0x328] sm:$0xf]
    %v8042 = vld [vmem:[#allocation11 + $0x32c] sm:$0xf]
    %v8043 = vld [vmem:[#allocation11 + $0x330] sm:$0xf]
    %v8044 = vld [vmem:[#allocation11 + $0x334] sm:$0xf]
    %v8045 = vld [vmem:[#allocation11 + $0x338] sm:$0xf]
    %v8046 = vld [vmem:[#allocation11 + $0x33c] sm:$0xf]
    %v8047 = vld [vmem:[#allocation11 + $0x340] sm:$0xf]
    %v8048 = vld [vmem:[#allocation11 + $0x344] sm:$0xf]
    %v8049 = vld [vmem:[#allocation11 + $0x348] sm:$0xf]
    %v8050 = vld [vmem:[#allocation11 + $0x34c] sm:$0xf]
    %v8051 = vld [vmem:[#allocation11 + $0x350] sm:$0xf]
    %v8052 = vld [vmem:[#allocation11 + $0x354] sm:$0xf]
    %v8053 = vld [vmem:[#allocation11 + $0x358] sm:$0xf]
    %v8054 = vld [vmem:[#allocation11 + $0x35c] sm:$0xf]
    %v8055 = vld [vmem:[#allocation11 + $0x360] sm:$0xf]
    %v8056 = vld [vmem:[#allocation11 + $0x364] sm:$0xf]
    %v8057 = vld [vmem:[#allocation11 + $0x368] sm:$0xf]
    %v8058 = vld [vmem:[#allocation11 + $0x36c] sm:$0xf]
    %v8059 = vld [vmem:[#allocation11 + $0x370] sm:$0xf]
    %v8060 = vld [vmem:[#allocation11 + $0x374] sm:$0xf]
    %v8061 = vld [vmem:[#allocation11 + $0x378] sm:$0xf]
    %v8062 = vld [vmem:[#allocation11 + $0x37c] sm:$0xf]
    %v8063 = vld [vmem:[#allocation11 + $0x380] sm:$0xf]
    %v8064 = vld [vmem:[#allocation11 + $0x384] sm:$0xf]
    %v8065 = vld [vmem:[#allocation11 + $0x388] sm:$0xf]
    %v8066 = vld [vmem:[#allocation11 + $0x38c] sm:$0xf]
    %v8067 = vld [vmem:[#allocation11 + $0x390] sm:$0xf]
    %v8068 = vld [vmem:[#allocation11 + $0x394] sm:$0xf]
    %v8069 = vld [vmem:[#allocation11 + $0x398] sm:$0xf]
    %v8070 = vld [vmem:[#allocation11 + $0x39c] sm:$0xf]
    %v8071 = vld [vmem:[#allocation11 + $0x3a0] sm:$0xf]
    %v8072 = vld [vmem:[#allocation11 + $0x3a4] sm:$0xf]
    %v8073 = vld [vmem:[#allocation11 + $0x3a8] sm:$0xf]
    %v8074 = vld [vmem:[#allocation11 + $0x3ac] sm:$0xf]
    %v8075 = vld [vmem:[#allocation11 + $0x3b0] sm:$0xf]
    %v8076 = vld [vmem:[#allocation11 + $0x3b4] sm:$0xf]
    %v8077 = vld [vmem:[#allocation11 + $0x3b8] sm:$0xf]
    %v8078 = vld [vmem:[#allocation11 + $0x3bc] sm:$0xf]
    %v8079 = vld [vmem:[#allocation11 + $0x3c0] sm:$0xf]
    %v8080 = vld [vmem:[#allocation11 + $0x3c4] sm:$0xf]
    %v8081 = vld [vmem:[#allocation11 + $0x3c8] sm:$0xf]
    %v8082 = vld [vmem:[#allocation11 + $0x3cc] sm:$0xf]
    %v8083 = vld [vmem:[#allocation11 + $0x3d0] sm:$0xf]
    %v8084 = vld [vmem:[#allocation11 + $0x3d4] sm:$0xf]
    %v8085 = vld [vmem:[#allocation11 + $0x3d8] sm:$0xf]
    %v8086 = vld [vmem:[#allocation11 + $0x3dc] sm:$0xf]
    %v8087 = vld [vmem:[#allocation11 + $0x3e0] sm:$0xf]
    %v8088 = vld [vmem:[#allocation11 + $0x3e4] sm:$0xf]
    %v8089 = vld [vmem:[#allocation11 + $0x3e8] sm:$0xf]
    %v8090 = vld [vmem:[#allocation11 + $0x3ec] sm:$0xf]
    %v8091 = vld [vmem:[#allocation11 + $0x3f0] sm:$0xf]
    %v8092 = vld [vmem:[#allocation11 + $0x3f4] sm:$0xf]
    %v8093 = vld [vmem:[#allocation11 + $0x3f8] sm:$0xf]
    %v8094 = vld [vmem:[#allocation11 + $0x3fc] sm:$0xf]
    %v8095 = vld [vmem:[#allocation13] sm:$0xf]
    %v8096 = vld [vmem:[#allocation13 + $0x4] sm:$0xf]
    %v8097 = vld [vmem:[#allocation13 + $0x8] sm:$0xf]
    %v8098 = vld [vmem:[#allocation13 + $0xc] sm:$0xf]
    %v8099 = vld [vmem:[#allocation13 + $0x10] sm:$0xf]
    %v8100 = vld [vmem:[#allocation13 + $0x14] sm:$0xf]
    %v8101 = vld [vmem:[#allocation13 + $0x18] sm:$0xf]
    %v8102 = vld [vmem:[#allocation13 + $0x1c] sm:$0xf]
    %v8103 = vld [vmem:[#allocation13 + $0x20] sm:$0xf]
    %v8104 = vld [vmem:[#allocation13 + $0x24] sm:$0xf]
    %v8105 = vld [vmem:[#allocation13 + $0x28] sm:$0xf]
    %v8106 = vld [vmem:[#allocation13 + $0x2c] sm:$0xf]
    %v8107 = vld [vmem:[#allocation13 + $0x30] sm:$0xf]
    %v8108 = vld [vmem:[#allocation13 + $0x34] sm:$0xf]
    %v8109 = vld [vmem:[#allocation13 + $0x38] sm:$0xf]
    %v8110 = vld [vmem:[#allocation13 + $0x3c] sm:$0xf]
    %v8127 = vunpack.c.l.b16 %v8095
    %v8128 = vunpack.c.l.b16 %v8096
    %v8129 = vunpack.c.l.b16 %v8097
    %v8130 = vunpack.c.l.b16 %v8098
    %v8131 = vunpack.c.l.b16 %v8099
    %v8132 = vunpack.c.l.b16 %v8100
    %v8133 = vunpack.c.l.b16 %v8101
    %v8134 = vunpack.c.l.b16 %v8102
    %v8135 = vunpack.c.l.b16 %v8103
    %v8136 = vunpack.c.l.b16 %v8104
    %v8137 = vunpack.c.l.b16 %v8105
    %v8138 = vunpack.c.l.b16 %v8106
    %v8139 = vunpack.c.l.b16 %v8107
    %v8140 = vunpack.c.l.b16 %v8108
    %v8141 = vunpack.c.l.b16 %v8109
    %v8142 = vunpack.c.l.b16 %v8110
    %v8143 = vpack.c.b16 %v8128, %v8127
    %v8144 = vpack.c.b16 %v8130, %v8129
    %v8145 = vpack.c.b16 %v8132, %v8131
    %v8146 = vpack.c.b16 %v8134, %v8133
    %v8147 = vpack.c.b16 %v8136, %v8135
    %v8148 = vpack.c.b16 %v8138, %v8137
    %v8149 = vpack.c.b16 %v8140, %v8139
    %v8150 = vpack.c.b16 %v8142, %v8141
    %8159 = vmatprep.subr.bf16.mxu0 0
    %8160 = vmatpush1.bf16.msra.mxu0 %v8143
    %8161 = vmatprep.subr.bf16.mxu0 0
    %8162 = vmatpush1.bf16.msra.mxu0 %v8144
    %8163 = vmatprep.subr.bf16.mxu0 0
    %8164 = vmatpush1.bf16.msra.mxu0 %v8145
    %8165 = vmatprep.subr.bf16.mxu0 0
    %8166 = vmatpush1.bf16.msra.mxu0 %v8146
    %8167 = vmatprep.subr.bf16.mxu0 0
    %8168 = vmatpush1.bf16.msra.mxu0 %v8147
    %8169 = vmatprep.subr.bf16.mxu0 0
    %8170 = vmatpush1.bf16.msra.mxu0 %v8148
    %8171 = vmatprep.subr.bf16.mxu0 0
    %8172 = vmatpush1.bf16.msra.mxu0 %v8149
    %8173 = vmatprep.subr.bf16.mxu0 0
    %8174 = vmatpush1.bf16.msra.mxu0 %v8150
    %8175 = vmatprep.subr.bf16.mxu0 0
    %8176 = vmatpush1.bf16.msra.mxu0 0
    %8177 = vmatprep.subr.bf16.mxu0 0
    %8178 = vmatpush1.bf16.msra.mxu0 0
    %8179 = vmatprep.subr.bf16.mxu0 0
    %8180 = vmatpush1.bf16.msra.mxu0 0
    %8181 = vmatprep.subr.bf16.mxu0 0
    %8182 = vmatpush1.bf16.msra.mxu0 0
    %8183 = vmatprep.subr.bf16.mxu0 0
    %8184 = vmatpush1.bf16.msra.mxu0 0
    %8185 = vmatprep.subr.bf16.mxu0 0
    %8186 = vmatpush1.bf16.msra.mxu0 0
    %8187 = vmatprep.subr.bf16.mxu0 0
    %8188 = vmatpush1.bf16.msra.mxu0 0
    %8189 = vmatprep.subr.bf16.mxu0 0
    %8190 = vmatpush1.bf16.msra.mxu0 0
    %8191 = vmatprep.mubr.bf16.mxu0 0
    %8192 = vmatmul.mubr.bf16.gmra.mrb[0].mxu0 %v7838
    %v8193 = vpop.f32.mrb[0].mxu0
    %v8194 = vadd.f32 0.0, %v8193
    %v8195 = vpop.f32.mrb[0].mxu0
    %v8196 = vpop.f32.mrb[0].mxu0
    %v8197 = vpop.f32.mrb[0].mxu0
    %8198 = vdwg.mxu0
    %v8455 = vunpack.c.l.b16 %v7839
    %v8456 = vunpack.c.l.b16 %v7840
    %v8457 = vunpack.c.l.b16 %v7841
    %v8458 = vunpack.c.l.b16 %v7842
    %v8459 = vunpack.c.l.b16 %v7843
    %v8460 = vunpack.c.l.b16 %v7844
    %v8461 = vunpack.c.l.b16 %v7845
    %v8462 = vunpack.c.l.b16 %v7846
    %v8463 = vunpack.c.l.b16 %v7847
    %v8464 = vunpack.c.l.b16 %v7848
    %v8465 = vunpack.c.l.b16 %v7849
    %v8466 = vunpack.c.l.b16 %v7850
    %v8467 = vunpack.c.l.b16 %v7851
    %v8468 = vunpack.c.l.b16 %v7852
    %v8469 = vunpack.c.l.b16 %v7853
    %v8470 = vunpack.c.l.b16 %v7854
    %v8471 = vunpack.c.l.b16 %v7855
    %v8472 = vunpack.c.l.b16 %v7856
    %v8473 = vunpack.c.l.b16 %v7857
    %v8474 = vunpack.c.l.b16 %v7858
    %v8475 = vunpack.c.l.b16 %v7859
    %v8476 = vunpack.c.l.b16 %v7860
    %v8477 = vunpack.c.l.b16 %v7861
    %v8478 = vunpack.c.l.b16 %v7862
    %v8479 = vunpack.c.l.b16 %v7863
    %v8480 = vunpack.c.l.b16 %v7864
    %v8481 = vunpack.c.l.b16 %v7865
    %v8482 = vunpack.c.l.b16 %v7866
    %v8483 = vunpack.c.l.b16 %v7867
    %v8484 = vunpack.c.l.b16 %v7868
    %v8485 = vunpack.c.l.b16 %v7869
    %v8486 = vunpack.c.l.b16 %v7870
    %v8487 = vunpack.c.l.b16 %v7871
    %v8488 = vunpack.c.l.b16 %v7872
    %v8489 = vunpack.c.l.b16 %v7873
    %v8490 = vunpack.c.l.b16 %v7874
    %v8491 = vunpack.c.l.b16 %v7875
    %v8492 = vunpack.c.l.b16 %v7876
    %v8493 = vunpack.c.l.b16 %v7877
    %v8494 = vunpack.c.l.b16 %v7878
    %v8495 = vunpack.c.l.b16 %v7879
    %v8496 = vunpack.c.l.b16 %v7880
    %v8497 = vunpack.c.l.b16 %v7881
    %v8498 = vunpack.c.l.b16 %v7882
    %v8499 = vunpack.c.l.b16 %v7883
    %v8500 = vunpack.c.l.b16 %v7884
    %v8501 = vunpack.c.l.b16 %v7885
    %v8502 = vunpack.c.l.b16 %v7886
    %v8503 = vunpack.c.l.b16 %v7887
    %v8504 = vunpack.c.l.b16 %v7888
    %v8505 = vunpack.c.l.b16 %v7889
    %v8506 = vunpack.c.l.b16 %v7890
    %v8507 = vunpack.c.l.b16 %v7891
    %v8508 = vunpack.c.l.b16 %v7892
    %v8509 = vunpack.c.l.b16 %v7893
    %v8510 = vunpack.c.l.b16 %v7894
    %v8511 = vunpack.c.l.b16 %v7895
    %v8512 = vunpack.c.l.b16 %v7896
    %v8513 = vunpack.c.l.b16 %v7897
    %v8514 = vunpack.c.l.b16 %v7898
    %v8515 = vunpack.c.l.b16 %v7899
    %v8516 = vunpack.c.l.b16 %v7900
    %v8517 = vunpack.c.l.b16 %v7901
    %v8518 = vunpack.c.l.b16 %v7902
    %v8519 = vunpack.c.l.b16 %v7903
    %v8520 = vunpack.c.l.b16 %v7904
    %v8521 = vunpack.c.l.b16 %v7905
    %v8522 = vunpack.c.l.b16 %v7906
    %v8523 = vunpack.c.l.b16 %v7907
    %v8524 = vunpack.c.l.b16 %v7908
    %v8525 = vunpack.c.l.b16 %v7909
    %v8526 = vunpack.c.l.b16 %v7910
    %v8527 = vunpack.c.l.b16 %v7911
    %v8528 = vunpack.c.l.b16 %v7912
    %v8529 = vunpack.c.l.b16 %v7913
    %v8530 = vunpack.c.l.b16 %v7914
    %v8531 = vunpack.c.l.b16 %v7915
    %v8532 = vunpack.c.l.b16 %v7916
    %v8533 = vunpack.c.l.b16 %v7917
    %v8534 = vunpack.c.l.b16 %v7918
    %v8535 = vunpack.c.l.b16 %v7919
    %v8536 = vunpack.c.l.b16 %v7920
    %v8537 = vunpack.c.l.b16 %v7921
    %v8538 = vunpack.c.l.b16 %v7922
    %v8539 = vunpack.c.l.b16 %v7923
    %v8540 = vunpack.c.l.b16 %v7924
    %v8541 = vunpack.c.l.b16 %v7925
    %v8542 = vunpack.c.l.b16 %v7926
    %v8543 = vunpack.c.l.b16 %v7927
    %v8544 = vunpack.c.l.b16 %v7928
    %v8545 = vunpack.c.l.b16 %v7929
    %v8546 = vunpack.c.l.b16 %v7930
    %v8547 = vunpack.c.l.b16 %v7931
    %v8548 = vunpack.c.l.b16 %v7932
    %v8549 = vunpack.c.l.b16 %v7933
    %v8550 = vunpack.c.l.b16 %v7934
    %v8551 = vunpack.c.l.b16 %v7935
    %v8552 = vunpack.c.l.b16 %v7936
    %v8553 = vunpack.c.l.b16 %v7937
    %v8554 = vunpack.c.l.b16 %v7938
    %v8555 = vunpack.c.l.b16 %v7939
    %v8556 = vunpack.c.l.b16 %v7940
    %v8557 = vunpack.c.l.b16 %v7941
    %v8558 = vunpack.c.l.b16 %v7942
    %v8559 = vunpack.c.l.b16 %v7943
    %v8560 = vunpack.c.l.b16 %v7944
    %v8561 = vunpack.c.l.b16 %v7945
    %v8562 = vunpack.c.l.b16 %v7946
    %v8563 = vunpack.c.l.b16 %v7947
    %v8564 = vunpack.c.l.b16 %v7948
    %v8565 = vunpack.c.l.b16 %v7949
    %v8566 = vunpack.c.l.b16 %v7950
    %v8567 = vunpack.c.l.b16 %v7951
    %v8568 = vunpack.c.l.b16 %v7952
    %v8569 = vunpack.c.l.b16 %v7953
    %v8570 = vunpack.c.l.b16 %v7954
    %v8571 = vunpack.c.l.b16 %v7955
    %v8572 = vunpack.c.l.b16 %v7956
    %v8573 = vunpack.c.l.b16 %v7957
    %v8574 = vunpack.c.l.b16 %v7958
    %v8575 = vunpack.c.l.b16 %v7959
    %v8576 = vunpack.c.l.b16 %v7960
    %v8577 = vunpack.c.l.b16 %v7961
    %v8578 = vunpack.c.l.b16 %v7962
    %v8579 = vunpack.c.l.b16 %v7963
    %v8580 = vunpack.c.l.b16 %v7964
    %v8581 = vunpack.c.l.b16 %v7965
    %v8582 = vunpack.c.l.b16 %v7966
    %v8583 = vunpack.c.l.b16 %v7967
    %v8584 = vunpack.c.l.b16 %v7968
    %v8585 = vunpack.c.l.b16 %v7969
    %v8586 = vunpack.c.l.b16 %v7970
    %v8587 = vunpack.c.l.b16 %v7971
    %v8588 = vunpack.c.l.b16 %v7972
    %v8589 = vunpack.c.l.b16 %v7973
    %v8590 = vunpack.c.l.b16 %v7974
    %v8591 = vunpack.c.l.b16 %v7975
    %v8592 = vunpack.c.l.b16 %v7976
    %v8593 = vunpack.c.l.b16 %v7977
    %v8594 = vunpack.c.l.b16 %v7978
    %v8595 = vunpack.c.l.b16 %v7979
    %v8596 = vunpack.c.l.b16 %v7980
    %v8597 = vunpack.c.l.b16 %v7981
    %v8598 = vunpack.c.l.b16 %v7982
    %v8599 = vunpack.c.l.b16 %v7983
    %v8600 = vunpack.c.l.b16 %v7984
    %v8601 = vunpack.c.l.b16 %v7985
    %v8602 = vunpack.c.l.b16 %v7986
    %v8603 = vunpack.c.l.b16 %v7987
    %v8604 = vunpack.c.l.b16 %v7988
    %v8605 = vunpack.c.l.b16 %v7989
    %v8606 = vunpack.c.l.b16 %v7990
    %v8607 = vunpack.c.l.b16 %v7991
    %v8608 = vunpack.c.l.b16 %v7992
    %v8609 = vunpack.c.l.b16 %v7993
    %v8610 = vunpack.c.l.b16 %v7994
    %v8611 = vunpack.c.l.b16 %v7995
    %v8612 = vunpack.c.l.b16 %v7996
    %v8613 = vunpack.c.l.b16 %v7997
    %v8614 = vunpack.c.l.b16 %v7998
    %v8615 = vunpack.c.l.b16 %v7999
    %v8616 = vunpack.c.l.b16 %v8000
    %v8617 = vunpack.c.l.b16 %v8001
    %v8618 = vunpack.c.l.b16 %v8002
    %v8619 = vunpack.c.l.b16 %v8003
    %v8620 = vunpack.c.l.b16 %v8004
    %v8621 = vunpack.c.l.b16 %v8005
    %v8622 = vunpack.c.l.b16 %v8006
    %v8623 = vunpack.c.l.b16 %v8007
    %v8624 = vunpack.c.l.b16 %v8008
    %v8625 = vunpack.c.l.b16 %v8009
    %v8626 = vunpack.c.l.b16 %v8010
    %v8627 = vunpack.c.l.b16 %v8011
    %v8628 = vunpack.c.l.b16 %v8012
    %v8629 = vunpack.c.l.b16 %v8013
    %v8630 = vunpack.c.l.b16 %v8014
    %v8631 = vunpack.c.l.b16 %v8015
    %v8632 = vunpack.c.l.b16 %v8016
    %v8633 = vunpack.c.l.b16 %v8017
    %v8634 = vunpack.c.l.b16 %v8018
    %v8635 = vunpack.c.l.b16 %v8019
    %v8636 = vunpack.c.l.b16 %v8020
    %v8637 = vunpack.c.l.b16 %v8021
    %v8638 = vunpack.c.l.b16 %v8022
    %v8639 = vunpack.c.l.b16 %v8023
    %v8640 = vunpack.c.l.b16 %v8024
    %v8641 = vunpack.c.l.b16 %v8025
    %v8642 = vunpack.c.l.b16 %v8026
    %v8643 = vunpack.c.l.b16 %v8027
    %v8644 = vunpack.c.l.b16 %v8028
    %v8645 = vunpack.c.l.b16 %v8029
    %v8646 = vunpack.c.l.b16 %v8030
    %v8647 = vunpack.c.l.b16 %v8031
    %v8648 = vunpack.c.l.b16 %v8032
    %v8649 = vunpack.c.l.b16 %v8033
    %v8650 = vunpack.c.l.b16 %v8034
    %v8651 = vunpack.c.l.b16 %v8035
    %v8652 = vunpack.c.l.b16 %v8036
    %v8653 = vunpack.c.l.b16 %v8037
    %v8654 = vunpack.c.l.b16 %v8038
    %v8655 = vunpack.c.l.b16 %v8039
    %v8656 = vunpack.c.l.b16 %v8040
    %v8657 = vunpack.c.l.b16 %v8041
    %v8658 = vunpack.c.l.b16 %v8042
    %v8659 = vunpack.c.l.b16 %v8043
    %v8660 = vunpack.c.l.b16 %v8044
    %v8661 = vunpack.c.l.b16 %v8045
    %v8662 = vunpack.c.l.b16 %v8046
    %v8663 = vunpack.c.l.b16 %v8047
    %v8664 = vunpack.c.l.b16 %v8048
    %v8665 = vunpack.c.l.b16 %v8049
    %v8666 = vunpack.c.l.b16 %v8050
    %v8667 = vunpack.c.l.b16 %v8051
    %v8668 = vunpack.c.l.b16 %v8052
    %v8669 = vunpack.c.l.b16 %v8053
    %v8670 = vunpack.c.l.b16 %v8054
    %v8671 = vunpack.c.l.b16 %v8055
    %v8672 = vunpack.c.l.b16 %v8056
    %v8673 = vunpack.c.l.b16 %v8057
    %v8674 = vunpack.c.l.b16 %v8058
    %v8675 = vunpack.c.l.b16 %v8059
    %v8676 = vunpack.c.l.b16 %v8060
    %v8677 = vunpack.c.l.b16 %v8061
    %v8678 = vunpack.c.l.b16 %v8062
    %v8679 = vunpack.c.l.b16 %v8063
    %v8680 = vunpack.c.l.b16 %v8064
    %v8681 = vunpack.c.l.b16 %v8065
    %v8682 = vunpack.c.l.b16 %v8066
    %v8683 = vunpack.c.l.b16 %v8067
    %v8684 = vunpack.c.l.b16 %v8068
    %v8685 = vunpack.c.l.b16 %v8069
    %v8686 = vunpack.c.l.b16 %v8070
    %v8687 = vunpack.c.l.b16 %v8071
    %v8688 = vunpack.c.l.b16 %v8072
    %v8689 = vunpack.c.l.b16 %v8073
    %v8690 = vunpack.c.l.b16 %v8074
    %v8691 = vunpack.c.l.b16 %v8075
    %v8692 = vunpack.c.l.b16 %v8076
    %v8693 = vunpack.c.l.b16 %v8077
    %v8694 = vunpack.c.l.b16 %v8078
    %v8695 = vunpack.c.l.b16 %v8079
    %v8696 = vunpack.c.l.b16 %v8080
    %v8697 = vunpack.c.l.b16 %v8081
    %v8698 = vunpack.c.l.b16 %v8082
    %v8699 = vunpack.c.l.b16 %v8083
    %v8700 = vunpack.c.l.b16 %v8084
    %v8701 = vunpack.c.l.b16 %v8085
    %v8702 = vunpack.c.l.b16 %v8086
    %v8703 = vunpack.c.l.b16 %v8087
    %v8704 = vunpack.c.l.b16 %v8088
    %v8705 = vunpack.c.l.b16 %v8089
    %v8706 = vunpack.c.l.b16 %v8090
    %v8707 = vunpack.c.l.b16 %v8091
    %v8708 = vunpack.c.l.b16 %v8092
    %v8709 = vunpack.c.l.b16 %v8093
    %v8710 = vunpack.c.l.b16 %v8094
    %v8711 = vpack.c.b16 %v8456, %v8455
    %v8712 = vpack.c.b16 %v8458, %v8457
    %v8713 = vpack.c.b16 %v8460, %v8459
    %v8714 = vpack.c.b16 %v8462, %v8461
    %v8715 = vpack.c.b16 %v8464, %v8463
    %v8716 = vpack.c.b16 %v8466, %v8465
    %v8717 = vpack.c.b16 %v8468, %v8467
    %v8718 = vpack.c.b16 %v8470, %v8469
    %v8719 = vpack.c.b16 %v8472, %v8471
    %v8720 = vpack.c.b16 %v8474, %v8473
    %v8721 = vpack.c.b16 %v8476, %v8475
    %v8722 = vpack.c.b16 %v8478, %v8477
    %v8723 = vpack.c.b16 %v8480, %v8479
    %v8724 = vpack.c.b16 %v8482, %v8481
    %v8725 = vpack.c.b16 %v8484, %v8483
    %v8726 = vpack.c.b16 %v8486, %v8485
    %v8727 = vpack.c.b16 %v8488, %v8487
    %v8728 = vpack.c.b16 %v8490, %v8489
    %v8729 = vpack.c.b16 %v8492, %v8491
    %v8730 = vpack.c.b16 %v8494, %v8493
    %v8731 = vpack.c.b16 %v8496, %v8495
    %v8732 = vpack.c.b16 %v8498, %v8497
    %v8733 = vpack.c.b16 %v8500, %v8499
    %v8734 = vpack.c.b16 %v8502, %v8501
    %v8735 = vpack.c.b16 %v8504, %v8503
    %v8736 = vpack.c.b16 %v8506, %v8505
    %v8737 = vpack.c.b16 %v8508, %v8507
    %v8738 = vpack.c.b16 %v8510, %v8509
    %v8739 = vpack.c.b16 %v8512, %v8511
    %v8740 = vpack.c.b16 %v8514, %v8513
    %v8741 = vpack.c.b16 %v8516, %v8515
    %v8742 = vpack.c.b16 %v8518, %v8517
    %v8743 = vpack.c.b16 %v8520, %v8519
    %v8744 = vpack.c.b16 %v8522, %v8521
    %v8745 = vpack.c.b16 %v8524, %v8523
    %v8746 = vpack.c.b16 %v8526, %v8525
    %v8747 = vpack.c.b16 %v8528, %v8527
    %v8748 = vpack.c.b16 %v8530, %v8529
    %v8749 = vpack.c.b16 %v8532, %v8531
    %v8750 = vpack.c.b16 %v8534, %v8533
    %v8751 = vpack.c.b16 %v8536, %v8535
    %v8752 = vpack.c.b16 %v8538, %v8537
    %v8753 = vpack.c.b16 %v8540, %v8539
    %v8754 = vpack.c.b16 %v8542, %v8541
    %v8755 = vpack.c.b16 %v8544, %v8543
    %v8756 = vpack.c.b16 %v8546, %v8545
    %v8757 = vpack.c.b16 %v8548, %v8547
    %v8758 = vpack.c.b16 %v8550, %v8549
    %v8759 = vpack.c.b16 %v8552, %v8551
    %v8760 = vpack.c.b16 %v8554, %v8553
    %v8761 = vpack.c.b16 %v8556, %v8555
    %v8762 = vpack.c.b16 %v8558, %v8557
    %v8763 = vpack.c.b16 %v8560, %v8559
    %v8764 = vpack.c.b16 %v8562, %v8561
    %v8765 = vpack.c.b16 %v8564, %v8563
    %v8766 = vpack.c.b16 %v8566, %v8565
    %v8767 = vpack.c.b16 %v8568, %v8567
    %v8768 = vpack.c.b16 %v8570, %v8569
    %v8769 = vpack.c.b16 %v8572, %v8571
    %v8770 = vpack.c.b16 %v8574, %v8573
    %v8771 = vpack.c.b16 %v8576, %v8575
    %v8772 = vpack.c.b16 %v8578, %v8577
    %v8773 = vpack.c.b16 %v8580, %v8579
    %v8774 = vpack.c.b16 %v8582, %v8581
    %v8775 = vpack.c.b16 %v8584, %v8583
    %v8776 = vpack.c.b16 %v8586, %v8585
    %v8777 = vpack.c.b16 %v8588, %v8587
    %v8778 = vpack.c.b16 %v8590, %v8589
    %v8779 = vpack.c.b16 %v8592, %v8591
    %v8780 = vpack.c.b16 %v8594, %v8593
    %v8781 = vpack.c.b16 %v8596, %v8595
    %v8782 = vpack.c.b16 %v8598, %v8597
    %v8783 = vpack.c.b16 %v8600, %v8599
    %v8784 = vpack.c.b16 %v8602, %v8601
    %v8785 = vpack.c.b16 %v8604, %v8603
    %v8786 = vpack.c.b16 %v8606, %v8605
    %v8787 = vpack.c.b16 %v8608, %v8607
    %v8788 = vpack.c.b16 %v8610, %v8609
    %v8789 = vpack.c.b16 %v8612, %v8611
    %v8790 = vpack.c.b16 %v8614, %v8613
    %v8791 = vpack.c.b16 %v8616, %v8615
    %v8792 = vpack.c.b16 %v8618, %v8617
    %v8793 = vpack.c.b16 %v8620, %v8619
    %v8794 = vpack.c.b16 %v8622, %v8621
    %v8795 = vpack.c.b16 %v8624, %v8623
    %v8796 = vpack.c.b16 %v8626, %v8625
    %v8797 = vpack.c.b16 %v8628, %v8627
    %v8798 = vpack.c.b16 %v8630, %v8629
    %v8799 = vpack.c.b16 %v8632, %v8631
    %v8800 = vpack.c.b16 %v8634, %v8633
    %v8801 = vpack.c.b16 %v8636, %v8635
    %v8802 = vpack.c.b16 %v8638, %v8637
    %v8803 = vpack.c.b16 %v8640, %v8639
    %v8804 = vpack.c.b16 %v8642, %v8641
    %v8805 = vpack.c.b16 %v8644, %v8643
    %v8806 = vpack.c.b16 %v8646, %v8645
    %v8807 = vpack.c.b16 %v8648, %v8647
    %v8808 = vpack.c.b16 %v8650, %v8649
    %v8809 = vpack.c.b16 %v8652, %v8651
    %v8810 = vpack.c.b16 %v8654, %v8653
    %v8811 = vpack.c.b16 %v8656, %v8655
    %v8812 = vpack.c.b16 %v8658, %v8657
    %v8813 = vpack.c.b16 %v8660, %v8659
    %v8814 = vpack.c.b16 %v8662, %v8661
    %v8815 = vpack.c.b16 %v8664, %v8663
    %v8816 = vpack.c.b16 %v8666, %v8665
    %v8817 = vpack.c.b16 %v8668, %v8667
    %v8818 = vpack.c.b16 %v8670, %v8669
    %v8819 = vpack.c.b16 %v8672, %v8671
    %v8820 = vpack.c.b16 %v8674, %v8673
    %v8821 = vpack.c.b16 %v8676, %v8675
    %v8822 = vpack.c.b16 %v8678, %v8677
    %v8823 = vpack.c.b16 %v8680, %v8679
    %v8824 = vpack.c.b16 %v8682, %v8681
    %v8825 = vpack.c.b16 %v8684, %v8683
    %v8826 = vpack.c.b16 %v8686, %v8685
    %v8827 = vpack.c.b16 %v8688, %v8687
    %v8828 = vpack.c.b16 %v8690, %v8689
    %v8829 = vpack.c.b16 %v8692, %v8691
    %v8830 = vpack.c.b16 %v8694, %v8693
    %v8831 = vpack.c.b16 %v8696, %v8695
    %v8832 = vpack.c.b16 %v8698, %v8697
    %v8833 = vpack.c.b16 %v8700, %v8699
    %v8834 = vpack.c.b16 %v8702, %v8701
    %v8835 = vpack.c.b16 %v8704, %v8703
    %v8836 = vpack.c.b16 %v8706, %v8705
    %v8837 = vpack.c.b16 %v8708, %v8707
    %v8838 = vpack.c.b16 %v8710, %v8709
    %8967 = vmatprep.subr.bf16.mxu0 0
    %8968 = vmatpush1.bf16.msra.mxu0 %v8711
    %8969 = vmatprep.subr.bf16.mxu0 0
    %8970 = vmatpush1.bf16.msra.mxu0 %v8712
    %8971 = vmatprep.subr.bf16.mxu0 0
    %8972 = vmatpush1.bf16.msra.mxu0 %v8713
    %8973 = vmatprep.subr.bf16.mxu0 0
    %8974 = vmatpush1.bf16.msra.mxu0 %v8714
    %8975 = vmatprep.subr.bf16.mxu0 0
    %8976 = vmatpush1.bf16.msra.mxu0 %v8715
    %8977 = vmatprep.subr.bf16.mxu0 0
    %8978 = vmatpush1.bf16.msra.mxu0 %v8716
    %8979 = vmatprep.subr.bf16.mxu0 0
    %8980 = vmatpush1.bf16.msra.mxu0 %v8717
    %8981 = vmatprep.subr.bf16.mxu0 0
    %8982 = vmatpush1.bf16.msra.mxu0 %v8718
    %8983 = vmatprep.subr.bf16.mxu0 0
    %8984 = vmatpush1.bf16.msra.mxu0 %v8719
    %8985 = vmatprep.subr.bf16.mxu0 0
    %8986 = vmatpush1.bf16.msra.mxu0 %v8720
    %8987 = vmatprep.subr.bf16.mxu0 0
    %8988 = vmatpush1.bf16.msra.mxu0 %v8721
    %8989 = vmatprep.subr.bf16.mxu0 0
    %8990 = vmatpush1.bf16.msra.mxu0 %v8722
    %8991 = vmatprep.subr.bf16.mxu0 0
    %8992 = vmatpush1.bf16.msra.mxu0 %v8723
    %8993 = vmatprep.subr.bf16.mxu0 0
    %8994 = vmatpush1.bf16.msra.mxu0 %v8724
    %8995 = vmatprep.subr.bf16.mxu0 0
    %8996 = vmatpush1.bf16.msra.mxu0 %v8725
    %8997 = vmatprep.subr.bf16.mxu0 0
    %8998 = vmatpush1.bf16.msra.mxu0 %v8726
    %8999 = vmatprep.mubr.bf16.mxu0 %v7822
    %9000 = vmatmul.mubr.bf16.gmra.mrb[0].mxu0 %v7821
    %v9001 = vpop.f32.mrb[0].mxu0
    %v9002 = vadd.f32 %v8194, %v9001
    %v9003 = vpop.f32.mrb[0].mxu0
    %v9004 = vpop.f32.mrb[0].mxu0
    %v9005 = vpop.f32.mrb[0].mxu0
    %9006 = vdwg.mxu0
    %9007 = vmatprep.subr.bf16.mxu0 0
    %9008 = vmatpush1.bf16.msra.mxu0 %v8727
    %9009 = vmatprep.subr.bf16.mxu0 0
    %9010 = vmatpush1.bf16.msra.mxu0 %v8728
    %9011 = vmatprep.subr.bf16.mxu0 0
    %9012 = vmatpush1.bf16.msra.mxu0 %v8729
    %9013 = vmatprep.subr.bf16.mxu0 0
    %9014 = vmatpush1.bf16.msra.mxu0 %v8730
    %9015 = vmatprep.subr.bf16.mxu0 0
    %9016 = vmatpush1.bf16.msra.mxu0 %v8731
    %9017 = vmatprep.subr.bf16.mxu0 0
    %9018 = vmatpush1.bf16.msra.mxu0 %v8732
    %9019 = vmatprep.subr.bf16.mxu0 0
    %9020 = vmatpush1.bf16.msra.mxu0 %v8733
    %9021 = vmatprep.subr.bf16.mxu0 0
    %9022 = vmatpush1.bf16.msra.mxu0 %v8734
    %9023 = vmatprep.subr.bf16.mxu0 0
    %9024 = vmatpush1.bf16.msra.mxu0 %v8735
    %9025 = vmatprep.subr.bf16.mxu0 0
    %9026 = vmatpush1.bf16.msra.mxu0 %v8736
    %9027 = vmatprep.subr.bf16.mxu0 0
    %9028 = vmatpush1.bf16.msra.mxu0 %v8737
    %9029 = vmatprep.subr.bf16.mxu0 0
    %9030 = vmatpush1.bf16.msra.mxu0 %v8738
    %9031 = vmatprep.subr.bf16.mxu0 0
    %9032 = vmatpush1.bf16.msra.mxu0 %v8739
    %9033 = vmatprep.subr.bf16.mxu0 0
    %9034 = vmatpush1.bf16.msra.mxu0 %v8740
    %9035 = vmatprep.subr.bf16.mxu0 0
    %9036 = vmatpush1.bf16.msra.mxu0 %v8741
    %9037 = vmatprep.subr.bf16.mxu0 0
    %9038 = vmatpush1.bf16.msra.mxu0 %v8742
    %9039 = vmatprep.mubr.bf16.mxu0 %v7824
    %9040 = vmatmul.mubr.bf16.gmra.mrb[0].mxu0 %v7823
    %v9041 = vpop.f32.mrb[0].mxu0
    %v9042 = vadd.f32 %v9002, %v9041
    %v9043 = vpop.f32.mrb[0].mxu0
    %v9044 = vpop.f32.mrb[0].mxu0
    %v9045 = vpop.f32.mrb[0].mxu0
    %9046 = vdwg.mxu0
    %9047 = vmatprep.subr.bf16.mxu0 0
    %9048 = vmatpush1.bf16.msra.mxu0 %v8743
    %9049 = vmatprep.subr.bf16.mxu0 0
    %9050 = vmatpush1.bf16.msra.mxu0 %v8744
    %9051 = vmatprep.subr.bf16.mxu0 0
    %9052 = vmatpush1.bf16.msra.mxu0 %v8745
    %9053 = vmatprep.subr.bf16.mxu0 0
    %9054 = vmatpush1.bf16.msra.mxu0 %v8746
    %9055 = vmatprep.subr.bf16.mxu0 0
    %9056 = vmatpush1.bf16.msra.mxu0 %v8747
    %9057 = vmatprep.subr.bf16.mxu0 0
    %9058 = vmatpush1.bf16.msra.mxu0 %v8748
    %9059 = vmatprep.subr.bf16.mxu0 0
    %9060 = vmatpush1.bf16.msra.mxu0 %v8749
    %9061 = vmatprep.subr.bf16.mxu0 0
    %9062 = vmatpush1.bf16.msra.mxu0 %v8750
    %9063 = vmatprep.subr.bf16.mxu0 0
    %9064 = vmatpush1.bf16.msra.mxu0 %v8751
    %9065 = vmatprep.subr.bf16.mxu0 0
    %9066 = vmatpush1.bf16.msra.mxu0 %v8752
    %9067 = vmatprep.subr.bf16.mxu0 0
    %9068 = vmatpush1.bf16.msra.mxu0 %v8753
    %9069 = vmatprep.subr.bf16.mxu0 0
    %9070 = vmatpush1.bf16.msra.mxu0 %v8754
    %9071 = vmatprep.subr.bf16.mxu0 0
    %9072 = vmatpush1.bf16.msra.mxu0 %v8755
    %9073 = vmatprep.subr.bf16.mxu0 0
    %9074 = vmatpush1.bf16.msra.mxu0 %v8756
    %9075 = vmatprep.subr.bf16.mxu0 0
    %9076 = vmatpush1.bf16.msra.mxu0 %v8757
    %9077 = vmatprep.subr.bf16.mxu0 0
    %9078 = vmatpush1.bf16.msra.mxu0 %v8758
    %9079 = vmatprep.mubr.bf16.mxu0 %v7826
    %9080 = vmatmul.mubr.bf16.gmra.mrb[0].mxu0 %v7825
    %v9081 = vpop.f32.mrb[0].mxu0
    %v9082 = vadd.f32 %v9042, %v9081
    %v9083 = vpop.f32.mrb[0].mxu0
    %v9084 = vpop.f32.mrb[0].mxu0
    %v9085 = vpop.f32.mrb[0].mxu0
    %9086 = vdwg.mxu0
    %9087 = vmatprep.subr.bf16.mxu0 0
    %9088 = vmatpush1.bf16.msra.mxu0 %v8759
    %9089 = vmatprep.subr.bf16.mxu0 0
    %9090 = vmatpush1.bf16.msra.mxu0 %v8760
    %9091 = vmatprep.subr.bf16.mxu0 0
    %9092 = vmatpush1.bf16.msra.mxu0 %v8761
    %9093 = vmatprep.subr.bf16.mxu0 0
    %9094 = vmatpush1.bf16.msra.mxu0 %v8762
    %9095 = vmatprep.subr.bf16.mxu0 0
    %9096 = vmatpush1.bf16.msra.mxu0 %v8763
    %9097 = vmatprep.subr.bf16.mxu0 0
    %9098 = vmatpush1.bf16.msra.mxu0 %v8764
    %9099 = vmatprep.subr.bf16.mxu0 0
    %9100 = vmatpush1.bf16.msra.mxu0 %v8765
    %9101 = vmatprep.subr.bf16.mxu0 0
    %9102 = vmatpush1.bf16.msra.mxu0 %v8766
    %9103 = vmatprep.subr.bf16.mxu0 0
    %9104 = vmatpush1.bf16.msra.mxu0 %v8767
    %9105 = vmatprep.subr.bf16.mxu0 0
    %9106 = vmatpush1.bf16.msra.mxu0 %v8768
    %9107 = vmatprep.subr.bf16.mxu0 0
    %9108 = vmatpush1.bf16.msra.mxu0 %v8769
    %9109 = vmatprep.subr.bf16.mxu0 0
    %9110 = vmatpush1.bf16.msra.mxu0 %v8770
    %9111 = vmatprep.subr.bf16.mxu0 0
    %9112 = vmatpush1.bf16.msra.mxu0 %v8771
    %9113 = vmatprep.subr.bf16.mxu0 0
    %9114 = vmatpush1.bf16.msra.mxu0 %v8772
    %9115 = vmatprep.subr.bf16.mxu0 0
    %9116 = vmatpush1.bf16.msra.mxu0 %v8773
    %9117 = vmatprep.subr.bf16.mxu0 0
    %9118 = vmatpush1.bf16.msra.mxu0 %v8774
    %9119 = vmatprep.mubr.bf16.mxu0 %v7828
    %9120 = vmatmul.mubr.bf16.gmra.mrb[0].mxu0 %v7827
    %v9121 = vpop.f32.mrb[0].mxu0
    %v9122 = vadd.f32 %v9082, %v9121
    %v9123 = vpop.f32.mrb[0].mxu0
    %v9124 = vpop.f32.mrb[0].mxu0
    %v9125 = vpop.f32.mrb[0].mxu0
    %9126 = vdwg.mxu0
    %9127 = vmatprep.subr.bf16.mxu0 0
    %9128 = vmatpush1.bf16.msra.mxu0 %v8775
    %9129 = vmatprep.subr.bf16.mxu0 0
    %9130 = vmatpush1.bf16.msra.mxu0 %v8776
    %9131 = vmatprep.subr.bf16.mxu0 0
    %9132 = vmatpush1.bf16.msra.mxu0 %v8777
    %9133 = vmatprep.subr.bf16.mxu0 0
    %9134 = vmatpush1.bf16.msra.mxu0 %v8778
    %9135 = vmatprep.subr.bf16.mxu0 0
    %9136 = vmatpush1.bf16.msra.mxu0 %v8779
    %9137 = vmatprep.subr.bf16.mxu0 0
    %9138 = vmatpush1.bf16.msra.mxu0 %v8780
    %9139 = vmatprep.subr.bf16.mxu0 0
    %9140 = vmatpush1.bf16.msra.mxu0 %v8781
    %9141 = vmatprep.subr.bf16.mxu0 0
    %9142 = vmatpush1.bf16.msra.mxu0 %v8782
    %9143 = vmatprep.subr.bf16.mxu0 0
    %9144 = vmatpush1.bf16.msra.mxu0 %v8783
    %9145 = vmatprep.subr.bf16.mxu0 0
    %9146 = vmatpush1.bf16.msra.mxu0 %v8784
    %9147 = vmatprep.subr.bf16.mxu0 0
    %9148 = vmatpush1.bf16.msra.mxu0 %v8785
    %9149 = vmatprep.subr.bf16.mxu0 0
    %9150 = vmatpush1.bf16.msra.mxu0 %v8786
    %9151 = vmatprep.subr.bf16.mxu0 0
    %9152 = vmatpush1.bf16.msra.mxu0 %v8787
    %9153 = vmatprep.subr.bf16.mxu0 0
    %9154 = vmatpush1.bf16.msra.mxu0 %v8788
    %9155 = vmatprep.subr.bf16.mxu0 0
    %9156 = vmatpush1.bf16.msra.mxu0 %v8789
    %9157 = vmatprep.subr.bf16.mxu0 0
    %9158 = vmatpush1.bf16.msra.mxu0 %v8790
    %9159 = vmatprep.mubr.bf16.mxu0 %v7830
    %9160 = vmatmul.mubr.bf16.gmra.mrb[0].mxu0 %v7829
    %v9161 = vpop.f32.mrb[0].mxu0
    %v9162 = vadd.f32 %v9122, %v9161
    %v9163 = vpop.f32.mrb[0].mxu0
    %v9164 = vpop.f32.mrb[0].mxu0
    %v9165 = vpop.f32.mrb[0].mxu0
    %9166 = vdwg.mxu0
    %9167 = vmatprep.subr.bf16.mxu0 0
    %9168 = vmatpush1.bf16.msra.mxu0 %v8791
    %9169 = vmatprep.subr.bf16.mxu0 0
    %9170 = vmatpush1.bf16.msra.mxu0 %v8792
    %9171 = vmatprep.subr.bf16.mxu0 0
    %9172 = vmatpush1.bf16.msra.mxu0 %v8793
    %9173 = vmatprep.subr.bf16.mxu0 0
    %9174 = vmatpush1.bf16.msra.mxu0 %v8794
    %9175 = vmatprep.subr.bf16.mxu0 0
    %9176 = vmatpush1.bf16.msra.mxu0 %v8795
    %9177 = vmatprep.subr.bf16.mxu0 0
    %9178 = vmatpush1.bf16.msra.mxu0 %v8796
    %9179 = vmatprep.subr.bf16.mxu0 0
    %9180 = vmatpush1.bf16.msra.mxu0 %v8797
    %9181 = vmatprep.subr.bf16.mxu0 0
    %9182 = vmatpush1.bf16.msra.mxu0 %v8798
    %9183 = vmatprep.subr.bf16.mxu0 0
    %9184 = vmatpush1.bf16.msra.mxu0 %v8799
    %9185 = vmatprep.subr.bf16.mxu0 0
    %9186 = vmatpush1.bf16.msra.mxu0 %v8800
    %9187 = vmatprep.subr.bf16.mxu0 0
    %9188 = vmatpush1.bf16.msra.mxu0 %v8801
    %9189 = vmatprep.subr.bf16.mxu0 0
    %9190 = vmatpush1.bf16.msra.mxu0 %v8802
    %9191 = vmatprep.subr.bf16.mxu0 0
    %9192 = vmatpush1.bf16.msra.mxu0 %v8803
    %9193 = vmatprep.subr.bf16.mxu0 0
    %9194 = vmatpush1.bf16.msra.mxu0 %v8804
    %9195 = vmatprep.subr.bf16.mxu0 0
    %9196 = vmatpush1.bf16.msra.mxu0 %v8805
    %9197 = vmatprep.subr.bf16.mxu0 0
    %9198 = vmatpush1.bf16.msra.mxu0 %v8806
    %9199 = vmatprep.mubr.bf16.mxu0 %v7832
    %9200 = vmatmul.mubr.bf16.gmra.mrb[0].mxu0 %v7831
    %v9201 = vpop.f32.mrb[0].mxu0
    %v9202 = vadd.f32 %v9162, %v9201
    %v9203 = vpop.f32.mrb[0].mxu0
    %v9204 = vpop.f32.mrb[0].mxu0
    %v9205 = vpop.f32.mrb[0].mxu0
    %9206 = vdwg.mxu0
    %9207 = vmatprep.subr.bf16.mxu0 0
    %9208 = vmatpush1.bf16.msra.mxu0 %v8807
    %9209 = vmatprep.subr.bf16.mxu0 0
    %9210 = vmatpush1.bf16.msra.mxu0 %v8808
    %9211 = vmatprep.subr.bf16.mxu0 0
    %9212 = vmatpush1.bf16.msra.mxu0 %v8809
    %9213 = vmatprep.subr.bf16.mxu0 0
    %9214 = vmatpush1.bf16.msra.mxu0 %v8810
    %9215 = vmatprep.subr.bf16.mxu0 0
    %9216 = vmatpush1.bf16.msra.mxu0 %v8811
    %9217 = vmatprep.subr.bf16.mxu0 0
    %9218 = vmatpush1.bf16.msra.mxu0 %v8812
    %9219 = vmatprep.subr.bf16.mxu0 0
    %9220 = vmatpush1.bf16.msra.mxu0 %v8813
    %9221 = vmatprep.subr.bf16.mxu0 0
    %9222 = vmatpush1.bf16.msra.mxu0 %v8814
    %9223 = vmatprep.subr.bf16.mxu0 0
    %9224 = vmatpush1.bf16.msra.mxu0 %v8815
    %9225 = vmatprep.subr.bf16.mxu0 0
    %9226 = vmatpush1.bf16.msra.mxu0 %v8816
    %9227 = vmatprep.subr.bf16.mxu0 0
    %9228 = vmatpush1.bf16.msra.mxu0 %v8817
    %9229 = vmatprep.subr.bf16.mxu0 0
    %9230 = vmatpush1.bf16.msra.mxu0 %v8818
    %9231 = vmatprep.subr.bf16.mxu0 0
    %9232 = vmatpush1.bf16.msra.mxu0 %v8819
    %9233 = vmatprep.subr.bf16.mxu0 0
    %9234 = vmatpush1.bf16.msra.mxu0 %v8820
    %9235 = vmatprep.subr.bf16.mxu0 0
    %9236 = vmatpush1.bf16.msra.mxu0 %v8821
    %9237 = vmatprep.subr.bf16.mxu0 0
    %9238 = vmatpush1.bf16.msra.mxu0 %v8822
    %9239 = vmatprep.mubr.bf16.mxu0 %v7834
    %9240 = vmatmul.mubr.bf16.gmra.mrb[0].mxu0 %v7833
    %v9241 = vpop.f32.mrb[0].mxu0
    %v9242 = vadd.f32 %v9202, %v9241
    %v9243 = vpop.f32.mrb[0].mxu0
    %v9244 = vpop.f32.mrb[0].mxu0
    %v9245 = vpop.f32.mrb[0].mxu0
    %9246 = vdwg.mxu0
    %9247 = vmatprep.subr.bf16.mxu0 0
    %9248 = vmatpush1.bf16.msra.mxu0 %v8823
    %9249 = vmatprep.subr.bf16.mxu0 0
    %9250 = vmatpush1.bf16.msra.mxu0 %v8824
    %9251 = vmatprep.subr.bf16.mxu0 0
    %9252 = vmatpush1.bf16.msra.mxu0 %v8825
    %9253 = vmatprep.subr.bf16.mxu0 0
    %9254 = vmatpush1.bf16.msra.mxu0 %v8826
    %9255 = vmatprep.subr.bf16.mxu0 0
    %9256 = vmatpush1.bf16.msra.mxu0 %v8827
    %9257 = vmatprep.subr.bf16.mxu0 0
    %9258 = vmatpush1.bf16.msra.mxu0 %v8828
    %9259 = vmatprep.subr.bf16.mxu0 0
    %9260 = vmatpush1.bf16.msra.mxu0 %v8829
    %9261 = vmatprep.subr.bf16.mxu0 0
    %9262 = vmatpush1.bf16.msra.mxu0 %v8830
    %9263 = vmatprep.subr.bf16.mxu0 0
    %9264 = vmatpush1.bf16.msra.mxu0 %v8831
    %9265 = vmatprep.subr.bf16.mxu0 0
    %9266 = vmatpush1.bf16.msra.mxu0 %v8832
    %9267 = vmatprep.subr.bf16.mxu0 0
    %9268 = vmatpush1.bf16.msra.mxu0 %v8833
    %9269 = vmatprep.subr.bf16.mxu0 0
    %9270 = vmatpush1.bf16.msra.mxu0 %v8834
    %9271 = vmatprep.subr.bf16.mxu0 0
    %9272 = vmatpush1.bf16.msra.mxu0 %v8835
    %9273 = vmatprep.subr.bf16.mxu0 0
    %9274 = vmatpush1.bf16.msra.mxu0 %v8836
    %9275 = vmatprep.subr.bf16.mxu0 0
    %9276 = vmatpush1.bf16.msra.mxu0 %v8837
    %9277 = vmatprep.subr.bf16.mxu0 0
    %9278 = vmatpush1.bf16.msra.mxu0 %v8838
    %9279 = vmatprep.mubr.bf16.mxu0 %v7836
    %9280 = vmatmul.mubr.bf16.gmra.mrb[0].mxu0 %v7835
    %v9281 = vpop.f32.mrb[0].mxu0
    %v9282 = vadd.f32 %v9242, %v9281
    %v9283 = vpop.f32.mrb[0].mxu0
    %v9284 = vpop.f32.mrb[0].mxu0
    %v9285 = vpop.f32.mrb[0].mxu0
    %9286 = vdwg.mxu0
    %v9287 = vld [vmem:[#allocation14] sm:$0x1]
    %v9289 = vlaneseq
    %v9290 = vshrl.u32 %v9289, 7
    %v9291 = vsub.s32 0, %v9290
    %v9292 = vrot.slane %v9287, %v9291
    %v9294 = vadd.f32 %v9282, %v9292
    %v9295 = vmax.f32 %v9294, -50.0
    %v9296 = vmin.f32 %v9295, 50.0
    %v9297 = vmul.f32 %v9296, 1.442695
    %v9298 = vpow.pop %v9297
    %v9299 = vadd.f32 %v9298, 1e-08
    %v9300 = vrsqrt.pop %v9299
    %v9301 = vmul.f32 %v9299, %v9300
    %vm9302 = vcmp.eq.f32.partialorder %v9299, inf
    %v9303 = vsel %vm9302, %v9299, %v9301
    %vm9304 = vcmp.eq.f32.partialorder %v9299, 0.0
    %v9305 = vand.u32 %v9299, 2147483648
    %v9306 = vsel %vm9304, %v9305, %v9303
    %v9307 = vld [vmem:[#allocation7] sm:$0x3]
    %9309 = vrot.lane.b32.xlu0 %v9306, 64
    %v9310 = vpop.permute.xlu0 %9309
    %v9312 = vmul.f32 %v9307, %v9310
    %v9313 = vadd.f32 %v9312, %v9294
    %v9314 = vpack.c.bf16 %v9313, %v9313
    %v9315 = vld [vmem:[#allocation16] sm:$0xf]
    %v9316 = vld [vmem:[#allocation16 + $0x4] sm:$0xf]
    %v9317 = vld [vmem:[#allocation16 + $0x8] sm:$0xf]
    %v9318 = vld [vmem:[#allocation16 + $0xc] sm:$0xf]
    %v9319 = vld [vmem:[#allocation16 + $0x10] sm:$0xf]
    %v9320 = vld [vmem:[#allocation16 + $0x14] sm:$0xf]
    %v9321 = vld [vmem:[#allocation16 + $0x18] sm:$0xf]
    %v9322 = vld [vmem:[#allocation16 + $0x1c] sm:$0xf]
    %v9323 = vld [vmem:[#allocation17] sm:$0x1]
    %v9325 = vlaneseq
    %v9326 = vshrl.u32 %v9325, 7
    %v9327 = vsub.s32 0, %v9326
    %v9328 = vrot.slane %v9323, %v9327
    %v9338 = vunpack.c.l.b16 %v9315
    %v9339 = vunpack.c.l.b16 %v9316
    %v9340 = vunpack.c.l.b16 %v9317
    %v9341 = vunpack.c.l.b16 %v9318
    %v9342 = vunpack.c.l.b16 %v9319
    %v9343 = vunpack.c.l.b16 %v9320
    %v9344 = vunpack.c.l.b16 %v9321
    %v9345 = vunpack.c.l.b16 %v9322
    %v9346 = vpack.c.b16 %v9339, %v9338
    %v9347 = vpack.c.b16 %v9341, %v9340
    %v9348 = vpack.c.b16 %v9343, %v9342
    %v9349 = vpack.c.b16 %v9345, %v9344
    %vm9354 = vcmask 523264
    %v9356 = vsel %vm9354, %v9314, 0
    %9358 = vmatprep.subr.bf16.mxu0 0
    %9359 = vmatpush1.bf16.msra.mxu0 %v9346
    %9360 = vmatprep.subr.bf16.mxu0 0
    %9361 = vmatpush1.bf16.msra.mxu0 %v9347
    %9362 = vmatprep.subr.bf16.mxu0 0
    %9363 = vmatpush1.bf16.msra.mxu0 %v9348
    %9364 = vmatprep.subr.bf16.mxu0 0
    %9365 = vmatpush1.bf16.msra.mxu0 %v9349
    %9366 = vmatprep.subr.bf16.mxu0 0
    %9367 = vmatpush1.bf16.msra.mxu0 0
    %9368 = vmatprep.subr.bf16.mxu0 0
    %9369 = vmatpush1.bf16.msra.mxu0 0
    %9370 = vmatprep.subr.bf16.mxu0 0
    %9371 = vmatpush1.bf16.msra.mxu0 0
    %9372 = vmatprep.subr.bf16.mxu0 0
    %9373 = vmatpush1.bf16.msra.mxu0 0
    %9374 = vmatprep.subr.bf16.mxu0 0
    %9375 = vmatpush1.bf16.msra.mxu0 0
    %9376 = vmatprep.subr.bf16.mxu0 0
    %9377 = vmatpush1.bf16.msra.mxu0 0
    %9378 = vmatprep.subr.bf16.mxu0 0
    %9379 = vmatpush1.bf16.msra.mxu0 0
    %9380 = vmatprep.subr.bf16.mxu0 0
    %9381 = vmatpush1.bf16.msra.mxu0 0
    %9382 = vmatprep.subr.bf16.mxu0 0
    %9383 = vmatpush1.bf16.msra.mxu0 0
    %9384 = vmatprep.subr.bf16.mxu0 0
    %9385 = vmatpush1.bf16.msra.mxu0 0
    %9386 = vmatprep.subr.bf16.mxu0 0
    %9387 = vmatpush1.bf16.msra.mxu0 0
    %9388 = vmatprep.subr.bf16.mxu0 0
    %9389 = vmatpush1.bf16.msra.mxu0 0
    %9390 = vmatprep.mubr.bf16.mxu0 0
    %9391 = vmatmul.mubr.bf16.gmra.mrb[0].mxu0 %v9356
    %v9392 = vpop.f32.mrb[0].mxu0
    %v9393 = vadd.f32 %v9328, %v9392
    %v9394 = vpop.f32.mrb[0].mxu0
    %v9395 = vpop.f32.mrb[0].mxu0
    %v9396 = vpop.f32.mrb[0].mxu0
    %9397 = vdwg.mxu0
    %v9398 = vld [vmem:[#allocation19] sm:$0xff]
    %v9399 = vld [vmem:[#allocation19 + $0x8] sm:$0xff]
    %v9400 = vld [vmem:[#allocation19 + $0x10] sm:$0xff]
    %v9401 = vld [vmem:[#allocation19 + $0x18] sm:$0xff]
    %v9402 = vld [vmem:[#allocation19 + $0x20] sm:$0xff]
    %v9403 = vld [vmem:[#allocation19 + $0x28] sm:$0xff]
    %v9404 = vld [vmem:[#allocation19 + $0x30] sm:$0xff]
    %v9405 = vld [vmem:[#allocation19 + $0x38] sm:$0xff]
    %v9406 = vld [vmem:[#allocation19 + $0x40] sm:$0xff]
    %v9407 = vld [vmem:[#allocation19 + $0x48] sm:$0xff]
    %v9408 = vld [vmem:[#allocation19 + $0x50] sm:$0xff]
    %v9409 = vld [vmem:[#allocation19 + $0x58] sm:$0xff]
    %v9410 = vld [vmem:[#allocation19 + $0x60] sm:$0xff]
    %v9411 = vld [vmem:[#allocation19 + $0x68] sm:$0xff]
    %v9412 = vld [vmem:[#allocation19 + $0x70] sm:$0xff]
    %v9413 = vld [vmem:[#allocation19 + $0x78] sm:$0xff]
    %v9414 = vld [vmem:[#allocation19 + $0x80] sm:$0xff]
    %v9415 = vld [vmem:[#allocation19 + $0x88] sm:$0xff]
    %v9416 = vld [vmem:[#allocation19 + $0x90] sm:$0xff]
    %v9417 = vld [vmem:[#allocation19 + $0x98] sm:$0xff]
    %v9418 = vld [vmem:[#allocation19 + $0xa0] sm:$0xff]
    %v9419 = vld [vmem:[#allocation19 + $0xa8] sm:$0xff]
    %v9420 = vld [vmem:[#allocation19 + $0xb0] sm:$0xff]
    %v9421 = vld [vmem:[#allocation19 + $0xb8] sm:$0xff]
    %v9422 = vld [vmem:[#allocation19 + $0xc0] sm:$0xff]
    %v9423 = vld [vmem:[#allocation19 + $0xc8] sm:$0xff]
    %v9424 = vld [vmem:[#allocation19 + $0xd0] sm:$0xff]
    %v9425 = vld [vmem:[#allocation19 + $0xd8] sm:$0xff]
    %v9426 = vld [vmem:[#allocation19 + $0xe0] sm:$0xff]
    %v9427 = vld [vmem:[#allocation19 + $0xe8] sm:$0xff]
    %v9428 = vld [vmem:[#allocation19 + $0xf0] sm:$0xff]
    %v9429 = vld [vmem:[#allocation19 + $0xf8] sm:$0xff]
    %v9430 = vld [vmem:[#allocation20] sm:$0xff]
    %v9431 = vld [vmem:[#allocation20 + $0x8] sm:$0xff]
    %v9432 = vld [vmem:[#allocation20 + $0x10] sm:$0xff]
    %v9433 = vld [vmem:[#allocation20 + $0x18] sm:$0xff]
    %v9434 = vld [vmem:[#allocation20 + $0x20] sm:$0xff]
    %v9435 = vld [vmem:[#allocation20 + $0x28] sm:$0xff]
    %v9436 = vld [vmem:[#allocation20 + $0x30] sm:$0xff]
    %v9437 = vld [vmem:[#allocation20 + $0x38] sm:$0xff]
    %v9438 = vld [vmem:[#allocation20 + $0x40] sm:$0xff]
    %v9439 = vld [vmem:[#allocation20 + $0x48] sm:$0xff]
    %v9440 = vld [vmem:[#allocation20 + $0x50] sm:$0xff]
    %v9441 = vld [vmem:[#allocation20 + $0x58] sm:$0xff]
    %v9442 = vld [vmem:[#allocation20 + $0x60] sm:$0xff]
    %v9443 = vld [vmem:[#allocation20 + $0x68] sm:$0xff]
    %v9444 = vld [vmem:[#allocation20 + $0x70] sm:$0xff]
    %v9445 = vld [vmem:[#allocation20 + $0x78] sm:$0xff]
    %v9446 = vld [vmem:[#allocation20 + $0x80] sm:$0xff]
    %v9447 = vld [vmem:[#allocation20 + $0x88] sm:$0xff]
    %v9448 = vld [vmem:[#allocation20 + $0x90] sm:$0xff]
    %v9449 = vld [vmem:[#allocation20 + $0x98] sm:$0xff]
    %v9450 = vld [vmem:[#allocation20 + $0xa0] sm:$0xff]
    %v9451 = vld [vmem:[#allocation20 + $0xa8] sm:$0xff]
    %v9452 = vld [vmem:[#allocation20 + $0xb0] sm:$0xff]
    %v9453 = vld [vmem:[#allocation20 + $0xb8] sm:$0xff]
    %v9454 = vld [vmem:[#allocation20 + $0xc0] sm:$0xff]
    %v9455 = vld [vmem:[#allocation20 + $0xc8] sm:$0xff]
    %v9456 = vld [vmem:[#allocation20 + $0xd0] sm:$0xff]
    %v9457 = vld [vmem:[#allocation20 + $0xd8] sm:$0xff]
    %v9458 = vld [vmem:[#allocation20 + $0xe0] sm:$0xff]
    %v9459 = vld [vmem:[#allocation20 + $0xe8] sm:$0xff]
    %v9460 = vld [vmem:[#allocation20 + $0xf0] sm:$0xff]
    %v9461 = vld [vmem:[#allocation20 + $0xf8] sm:$0xff]
    %v9462 = vld [vmem:[#allocation20 + $0x100] sm:$0xff]
    %v9463 = vld [vmem:[#allocation20 + $0x108] sm:$0xff]
    %v9464 = vld [vmem:[#allocation20 + $0x110] sm:$0xff]
    %v9465 = vld [vmem:[#allocation20 + $0x118] sm:$0xff]
    %v9466 = vld [vmem:[#allocation20 + $0x120] sm:$0xff]
    %v9467 = vld [vmem:[#allocation20 + $0x128] sm:$0xff]
    %v9468 = vld [vmem:[#allocation20 + $0x130] sm:$0xff]
    %v9469 = vld [vmem:[#allocation20 + $0x138] sm:$0xff]
    %v9470 = vld [vmem:[#allocation20 + $0x140] sm:$0xff]
    %v9471 = vld [vmem:[#allocation20 + $0x148] sm:$0xff]
    %v9472 = vld [vmem:[#allocation20 + $0x150] sm:$0xff]
    %v9473 = vld [vmem:[#allocation20 + $0x158] sm:$0xff]
    %v9474 = vld [vmem:[#allocation20 + $0x160] sm:$0xff]
    %v9475 = vld [vmem:[#allocation20 + $0x168] sm:$0xff]
    %v9476 = vld [vmem:[#allocation20 + $0x170] sm:$0xff]
    %v9477 = vld [vmem:[#allocation20 + $0x178] sm:$0xff]
    %v9478 = vld [vmem:[#allocation20 + $0x180] sm:$0xff]
    %v9479 = vld [vmem:[#allocation20 + $0x188] sm:$0xff]
    %v9480 = vld [vmem:[#allocation20 + $0x190] sm:$0xff]
    %v9481 = vld [vmem:[#allocation20 + $0x198] sm:$0xff]
    %v9482 = vld [vmem:[#allocation20 + $0x1a0] sm:$0xff]
    %v9483 = vld [vmem:[#allocation20 + $0x1a8] sm:$0xff]
    %v9484 = vld [vmem:[#allocation20 + $0x1b0] sm:$0xff]
    %v9485 = vld [vmem:[#allocation20 + $0x1b8] sm:$0xff]
    %v9486 = vld [vmem:[#allocation20 + $0x1c0] sm:$0xff]
    %v9487 = vld [vmem:[#allocation20 + $0x1c8] sm:$0xff]
    %v9488 = vld [vmem:[#allocation20 + $0x1d0] sm:$0xff]
    %v9489 = vld [vmem:[#allocation20 + $0x1d8] sm:$0xff]
    %v9490 = vld [vmem:[#allocation20 + $0x1e0] sm:$0xff]
    %v9491 = vld [vmem:[#allocation20 + $0x1e8] sm:$0xff]
    %v9492 = vld [vmem:[#allocation20 + $0x1f0] sm:$0xff]
    %v9493 = vld [vmem:[#allocation20 + $0x1f8] sm:$0xff]
    %v9558 = vunpack.c.l.b16 %v9430
    %v9559 = vunpack.c.h.b16 %v9430
    %v9560 = vunpack.c.l.b16 %v9431
    %v9561 = vunpack.c.h.b16 %v9431
    %v9562 = vunpack.c.l.b16 %v9432
    %v9563 = vunpack.c.h.b16 %v9432
    %v9564 = vunpack.c.l.b16 %v9433
    %v9565 = vunpack.c.h.b16 %v9433
    %v9566 = vunpack.c.l.b16 %v9434
    %v9567 = vunpack.c.h.b16 %v9434
    %v9568 = vunpack.c.l.b16 %v9435
    %v9569 = vunpack.c.h.b16 %v9435
    %v9570 = vunpack.c.l.b16 %v9436
    %v9571 = vunpack.c.h.b16 %v9436
    %v9572 = vunpack.c.l.b16 %v9437
    %v9573 = vunpack.c.h.b16 %v9437
    %v9574 = vunpack.c.l.b16 %v9438
    %v9575 = vunpack.c.h.b16 %v9438
    %v9576 = vunpack.c.l.b16 %v9439
    %v9577 = vunpack.c.h.b16 %v9439
    %v9578 = vunpack.c.l.b16 %v9440
    %v9579 = vunpack.c.h.b16 %v9440
    %v9580 = vunpack.c.l.b16 %v9441
    %v9581 = vunpack.c.h.b16 %v9441
    %v9582 = vunpack.c.l.b16 %v9442
    %v9583 = vunpack.c.h.b16 %v9442
    %v9584 = vunpack.c.l.b16 %v9443
    %v9585 = vunpack.c.h.b16 %v9443
    %v9586 = vunpack.c.l.b16 %v9444
    %v9587 = vunpack.c.h.b16 %v9444
    %v9588 = vunpack.c.l.b16 %v9445
    %v9589 = vunpack.c.h.b16 %v9445
    %v9590 = vunpack.c.l.b16 %v9446
    %v9591 = vunpack.c.h.b16 %v9446
    %v9592 = vunpack.c.l.b16 %v9447
    %v9593 = vunpack.c.h.b16 %v9447
    %v9594 = vunpack.c.l.b16 %v9448
    %v9595 = vunpack.c.h.b16 %v9448
    %v9596 = vunpack.c.l.b16 %v9449
    %v9597 = vunpack.c.h.b16 %v9449
    %v9598 = vunpack.c.l.b16 %v9450
    %v9599 = vunpack.c.h.b16 %v9450
    %v9600 = vunpack.c.l.b16 %v9451
    %v9601 = vunpack.c.h.b16 %v9451
    %v9602 = vunpack.c.l.b16 %v9452
    %v9603 = vunpack.c.h.b16 %v9452
    %v9604 = vunpack.c.l.b16 %v9453
    %v9605 = vunpack.c.h.b16 %v9453
    %v9606 = vunpack.c.l.b16 %v9454
    %v9607 = vunpack.c.h.b16 %v9454
    %v9608 = vunpack.c.l.b16 %v9455
    %v9609 = vunpack.c.h.b16 %v9455
    %v9610 = vunpack.c.l.b16 %v9456
    %v9611 = vunpack.c.h.b16 %v9456
    %v9612 = vunpack.c.l.b16 %v9457
    %v9613 = vunpack.c.h.b16 %v9457
    %v9614 = vunpack.c.l.b16 %v9458
    %v9615 = vunpack.c.h.b16 %v9458
    %v9616 = vunpack.c.l.b16 %v9459
    %v9617 = vunpack.c.h.b16 %v9459
    %v9618 = vunpack.c.l.b16 %v9460
    %v9619 = vunpack.c.h.b16 %v9460
    %v9620 = vunpack.c.l.b16 %v9461
    %v9621 = vunpack.c.h.b16 %v9461
    %v9622 = vunpack.c.l.b16 %v9462
    %v9623 = vunpack.c.h.b16 %v9462
    %v9624 = vunpack.c.l.b16 %v9463
    %v9625 = vunpack.c.h.b16 %v9463
    %v9626 = vunpack.c.l.b16 %v9464
    %v9627 = vunpack.c.h.b16 %v9464
    %v9628 = vunpack.c.l.b16 %v9465
    %v9629 = vunpack.c.h.b16 %v9465
    %v9630 = vunpack.c.l.b16 %v9466
    %v9631 = vunpack.c.h.b16 %v9466
    %v9632 = vunpack.c.l.b16 %v9467
    %v9633 = vunpack.c.h.b16 %v9467
    %v9634 = vunpack.c.l.b16 %v9468
    %v9635 = vunpack.c.h.b16 %v9468
    %v9636 = vunpack.c.l.b16 %v9469
    %v9637 = vunpack.c.h.b16 %v9469
    %v9638 = vunpack.c.l.b16 %v9470
    %v9639 = vunpack.c.h.b16 %v9470
    %v9640 = vunpack.c.l.b16 %v9471
    %v9641 = vunpack.c.h.b16 %v9471
    %v9642 = vunpack.c.l.b16 %v9472
    %v9643 = vunpack.c.h.b16 %v9472
    %v9644 = vunpack.c.l.b16 %v9473
    %v9645 = vunpack.c.h.b16 %v9473
    %v9646 = vunpack.c.l.b16 %v9474
    %v9647 = vunpack.c.h.b16 %v9474
    %v9648 = vunpack.c.l.b16 %v9475
    %v9649 = vunpack.c.h.b16 %v9475
    %v9650 = vunpack.c.l.b16 %v9476
    %v9651 = vunpack.c.h.b16 %v9476
    %v9652 = vunpack.c.l.b16 %v9477
    %v9653 = vunpack.c.h.b16 %v9477
    %v9654 = vunpack.c.l.b16 %v9478
    %v9655 = vunpack.c.h.b16 %v9478
    %v9656 = vunpack.c.l.b16 %v9479
    %v9657 = vunpack.c.h.b16 %v9479
    %v9658 = vunpack.c.l.b16 %v9480
    %v9659 = vunpack.c.h.b16 %v9480
    %v9660 = vunpack.c.l.b16 %v9481
    %v9661 = vunpack.c.h.b16 %v9481
    %v9662 = vunpack.c.l.b16 %v9482
    %v9663 = vunpack.c.h.b16 %v9482
    %v9664 = vunpack.c.l.b16 %v9483
    %v9665 = vunpack.c.h.b16 %v9483
    %v9666 = vunpack.c.l.b16 %v9484
    %v9667 = vunpack.c.h.b16 %v9484
    %v9668 = vunpack.c.l.b16 %v9485
    %v9669 = vunpack.c.h.b16 %v9485
    %v9670 = vunpack.c.l.b16 %v9486
    %v9671 = vunpack.c.h.b16 %v9486
    %v9672 = vunpack.c.l.b16 %v9487
    %v9673 = vunpack.c.h.b16 %v9487
    %v9674 = vunpack.c.l.b16 %v9488
    %v9675 = vunpack.c.h.b16 %v9488
    %v9676 = vunpack.c.l.b16 %v9489
    %v9677 = vunpack.c.h.b16 %v9489
    %v9678 = vunpack.c.l.b16 %v9490
    %v9679 = vunpack.c.h.b16 %v9490
    %v9680 = vunpack.c.l.b16 %v9491
    %v9681 = vunpack.c.h.b16 %v9491
    %v9682 = vunpack.c.l.b16 %v9492
    %v9683 = vunpack.c.h.b16 %v9492
    %v9684 = vunpack.c.l.b16 %v9493
    %v9685 = vunpack.c.h.b16 %v9493
    %v9686 = vpack.c.b16 %v9566, %v9558
    %v9687 = vpack.c.b16 %v9567, %v9559
    %v9688 = vpack.c.b16 %v9568, %v9560
    %v9689 = vpack.c.b16 %v9569, %v9561
    %v9690 = vpack.c.b16 %v9570, %v9562
    %v9691 = vpack.c.b16 %v9571, %v9563
    %v9692 = vpack.c.b16 %v9572, %v9564
    %v9693 = vpack.c.b16 %v9573, %v9565
    %v9694 = vpack.c.b16 %v9582, %v9574
    %v9695 = vpack.c.b16 %v9583, %v9575
    %v9696 = vpack.c.b16 %v9584, %v9576
    %v9697 = vpack.c.b16 %v9585, %v9577
    %v9698 = vpack.c.b16 %v9586, %v9578
    %v9699 = vpack.c.b16 %v9587, %v9579
    %v9700 = vpack.c.b16 %v9588, %v9580
    %v9701 = vpack.c.b16 %v9589, %v9581
    %v9702 = vpack.c.b16 %v9598, %v9590
    %v9703 = vpack.c.b16 %v9599, %v9591
    %v9704 = vpack.c.b16 %v9600, %v9592
    %v9705 = vpack.c.b16 %v9601, %v9593
    %v9706 = vpack.c.b16 %v9602, %v9594
    %v9707 = vpack.c.b16 %v9603, %v9595
    %v9708 = vpack.c.b16 %v9604, %v9596
    %v9709 = vpack.c.b16 %v9605, %v9597
    %v9710 = vpack.c.b16 %v9614, %v9606
    %v9711 = vpack.c.b16 %v9615, %v9607
    %v9712 = vpack.c.b16 %v9616, %v9608
    %v9713 = vpack.c.b16 %v9617, %v9609
    %v9714 = vpack.c.b16 %v9618, %v9610
    %v9715 = vpack.c.b16 %v9619, %v9611
    %v9716 = vpack.c.b16 %v9620, %v9612
    %v9717 = vpack.c.b16 %v9621, %v9613
    %v9718 = vpack.c.b16 %v9630, %v9622
    %v9719 = vpack.c.b16 %v9631, %v9623
    %v9720 = vpack.c.b16 %v9632, %v9624
    %v9721 = vpack.c.b16 %v9633, %v9625
    %v9722 = vpack.c.b16 %v9634, %v9626
    %v9723 = vpack.c.b16 %v9635, %v9627
    %v9724 = vpack.c.b16 %v9636, %v9628
    %v9725 = vpack.c.b16 %v9637, %v9629
    %v9726 = vpack.c.b16 %v9646, %v9638
    %v9727 = vpack.c.b16 %v9647, %v9639
    %v9728 = vpack.c.b16 %v9648, %v9640
    %v9729 = vpack.c.b16 %v9649, %v9641
    %v9730 = vpack.c.b16 %v9650, %v9642
    %v9731 = vpack.c.b16 %v9651, %v9643
    %v9732 = vpack.c.b16 %v9652, %v9644
    %v9733 = vpack.c.b16 %v9653, %v9645
    %v9734 = vpack.c.b16 %v9662, %v9654
    %v9735 = vpack.c.b16 %v9663, %v9655
    %v9736 = vpack.c.b16 %v9664, %v9656
    %v9737 = vpack.c.b16 %v9665, %v9657
    %v9738 = vpack.c.b16 %v9666, %v9658
    %v9739 = vpack.c.b16 %v9667, %v9659
    %v9740 = vpack.c.b16 %v9668, %v9660
    %v9741 = vpack.c.b16 %v9669, %v9661
    %v9742 = vpack.c.b16 %v9678, %v9670
    %v9743 = vpack.c.b16 %v9679, %v9671
    %v9744 = vpack.c.b16 %v9680, %v9672
    %v9745 = vpack.c.b16 %v9681, %v9673
    %v9746 = vpack.c.b16 %v9682, %v9674
    %v9747 = vpack.c.b16 %v9683, %v9675
    %v9748 = vpack.c.b16 %v9684, %v9676
    %v9749 = vpack.c.b16 %v9685, %v9677
    %9814 = vmatprep.subr.bf16.mxu0 %v9687
    %9815 = vmatpush1.bf16.msra.mxu0 %v9686
    %9816 = vmatprep.subr.bf16.mxu0 %v9695
    %9817 = vmatpush1.bf16.msra.mxu0 %v9694
    %9818 = vmatprep.subr.bf16.mxu0 %v9703
    %9819 = vmatpush1.bf16.msra.mxu0 %v9702
    %9820 = vmatprep.subr.bf16.mxu0 %v9711
    %9821 = vmatpush1.bf16.msra.mxu0 %v9710
    %9822 = vmatprep.subr.bf16.mxu0 %v9719
    %9823 = vmatpush1.bf16.msra.mxu0 %v9718
    %9824 = vmatprep.subr.bf16.mxu0 %v9727
    %9825 = vmatpush1.bf16.msra.mxu0 %v9726
    %9826 = vmatprep.subr.bf16.mxu0 %v9735
    %9827 = vmatpush1.bf16.msra.mxu0 %v9734
    %9828 = vmatprep.subr.bf16.mxu0 %v9743
    %9829 = vmatpush1.bf16.msra.mxu0 %v9742
    %9830 = vmatprep.subr.bf16.mxu0 0
    %9831 = vmatpush1.bf16.msra.mxu0 0
    %9832 = vmatprep.subr.bf16.mxu0 0
    %9833 = vmatpush1.bf16.msra.mxu0 0
    %9834 = vmatprep.subr.bf16.mxu0 0
    %9835 = vmatpush1.bf16.msra.mxu0 0
    %9836 = vmatprep.subr.bf16.mxu0 0
    %9837 = vmatpush1.bf16.msra.mxu0 0
    %9838 = vmatprep.subr.bf16.mxu0 0
    %9839 = vmatpush1.bf16.msra.mxu0 0
    %9840 = vmatprep.subr.bf16.mxu0 0
    %9841 = vmatpush1.bf16.msra.mxu0 0
    %9842 = vmatprep.subr.bf16.mxu0 0
    %9843 = vmatpush1.bf16.msra.mxu0 0
    %9844 = vmatprep.subr.bf16.mxu0 0
    %9845 = vmatpush1.bf16.msra.mxu0 0
    %9846 = vmatprep.mubr.bf16.mxu0 0
    %9847 = vmatmul.mubr.bf16.gmra.mrb[0].mxu0 %v7838
    %v9848 = vpop.f32.mrb[0].mxu0
    %v9849 = vadd.f32 0.0, %v9848
    %v9850 = vpop.f32.mrb[0].mxu0
    %v9851 = vadd.f32 0.0, %v9850
    %v9852 = vpop.f32.mrb[0].mxu0
    %v9853 = vpop.f32.mrb[0].mxu0
    %9854 = vdwg.mxu0
    %9855 = vmatprep.subr.bf16.mxu0 %v9689
    %9856 = vmatpush1.bf16.msra.mxu0 %v9688
    %9857 = vmatprep.subr.bf16.mxu0 %v9697
    %9858 = vmatpush1.bf16.msra.mxu0 %v9696
    %9859 = vmatprep.subr.bf16.mxu0 %v9705
    %9860 = vmatpush1.bf16.msra.mxu0 %v9704
    %9861 = vmatprep.subr.bf16.mxu0 %v9713
    %9862 = vmatpush1.bf16.msra.mxu0 %v9712
    %9863 = vmatprep.subr.bf16.mxu0 %v9721
    %9864 = vmatpush1.bf16.msra.mxu0 %v9720
    %9865 = vmatprep.subr.bf16.mxu0 %v9729
    %9866 = vmatpush1.bf16.msra.mxu0 %v9728
    %9867 = vmatprep.subr.bf16.mxu0 %v9737
    %9868 = vmatpush1.bf16.msra.mxu0 %v9736
    %9869 = vmatprep.subr.bf16.mxu0 %v9745
    %9870 = vmatpush1.bf16.msra.mxu0 %v9744
    %9871 = vmatprep.subr.bf16.mxu0 0
    %9872 = vmatpush1.bf16.msra.mxu0 0
    %9873 = vmatprep.subr.bf16.mxu0 0
    %9874 = vmatpush1.bf16.msra.mxu0 0
    %9875 = vmatprep.subr.bf16.mxu0 0
    %9876 = vmatpush1.bf16.msra.mxu0 0
    %9877 = vmatprep.subr.bf16.mxu0 0
    %9878 = vmatpush1.bf16.msra.mxu0 0
    %9879 = vmatprep.subr.bf16.mxu0 0
    %9880 = vmatpush1.bf16.msra.mxu0 0
    %9881 = vmatprep.subr.bf16.mxu0 0
    %9882 = vmatpush1.bf16.msra.mxu0 0
    %9883 = vmatprep.subr.bf16.mxu0 0
    %9884 = vmatpush1.bf16.msra.mxu0 0
    %9885 = vmatprep.subr.bf16.mxu0 0
    %9886 = vmatpush1.bf16.msra.mxu0 0
    %9887 = vmatprep.mubr.bf16.mxu0 0
    %9888 = vmatmul.mubr.bf16.gmra.mrb[0].mxu0 %v7838
    %v9889 = vpop.f32.mrb[0].mxu0
    %v9890 = vadd.f32 0.0, %v9889
    %v9891 = vpop.f32.mrb[0].mxu0
    %v9892 = vadd.f32 0.0, %v9891
    %v9893 = vpop.f32.mrb[0].mxu0
    %v9894 = vpop.f32.mrb[0].mxu0
    %9895 = vdwg.mxu0
    %9896 = vmatprep.subr.bf16.mxu0 %v9691
    %9897 = vmatpush1.bf16.msra.mxu0 %v9690
    %9898 = vmatprep.subr.bf16.mxu0 %v9699
    %9899 = vmatpush1.bf16.msra.mxu0 %v9698
    %9900 = vmatprep.subr.bf16.mxu0 %v9707
    %9901 = vmatpush1.bf16.msra.mxu0 %v9706
    %9902 = vmatprep.subr.bf16.mxu0 %v9715
    %9903 = vmatpush1.bf16.msra.mxu0 %v9714
    %9904 = vmatprep.subr.bf16.mxu0 %v9723
    %9905 = vmatpush1.bf16.msra.mxu0 %v9722
    %9906 = vmatprep.subr.bf16.mxu0 %v9731
    %9907 = vmatpush1.bf16.msra.mxu0 %v9730
    %9908 = vmatprep.subr.bf16.mxu0 %v9739
    %9909 = vmatpush1.bf16.msra.mxu0 %v9738
    %9910 = vmatprep.subr.bf16.mxu0 %v9747
    %9911 = vmatpush1.bf16.msra.mxu0 %v9746
    %9912 = vmatprep.subr.bf16.mxu0 0
    %9913 = vmatpush1.bf16.msra.mxu0 0
    %9914 = vmatprep.subr.bf16.mxu0 0
    %9915 = vmatpush1.bf16.msra.mxu0 0
    %9916 = vmatprep.subr.bf16.mxu0 0
    %9917 = vmatpush1.bf16.msra.mxu0 0
    %9918 = vmatprep.subr.bf16.mxu0 0
    %9919 = vmatpush1.bf16.msra.mxu0 0
    %9920 = vmatprep.subr.bf16.mxu0 0
    %9921 = vmatpush1.bf16.msra.mxu0 0
    %9922 = vmatprep.subr.bf16.mxu0 0
    %9923 = vmatpush1.bf16.msra.mxu0 0
    %9924 = vmatprep.subr.bf16.mxu0 0
    %9925 = vmatpush1.bf16.msra.mxu0 0
    %9926 = vmatprep.subr.bf16.mxu0 0
    %9927 = vmatpush1.bf16.msra.mxu0 0
    %9928 = vmatprep.mubr.bf16.mxu0 0
    %9929 = vmatmul.mubr.bf16.gmra.mrb[0].mxu0 %v7838
    %v9930 = vpop.f32.mrb[0].mxu0
    %v9931 = vadd.f32 0.0, %v9930
    %v9932 = vpop.f32.mrb[0].mxu0
    %v9933 = vadd.f32 0.0, %v9932
    %v9934 = vpop.f32.mrb[0].mxu0
    %v9935 = vpop.f32.mrb[0].mxu0
    %9936 = vdwg.mxu0
    %9937 = vmatprep.subr.bf16.mxu0 %v9693
    %9938 = vmatpush1.bf16.msra.mxu0 %v9692
    %9939 = vmatprep.subr.bf16.mxu0 %v9701
    %9940 = vmatpush1.bf16.msra.mxu0 %v9700
    %9941 = vmatprep.subr.bf16.mxu0 %v9709
    %9942 = vmatpush1.bf16.msra.mxu0 %v9708
    %9943 = vmatprep.subr.bf16.mxu0 %v9717
    %9944 = vmatpush1.bf16.msra.mxu0 %v9716
    %9945 = vmatprep.subr.bf16.mxu0 %v9725
    %9946 = vmatpush1.bf16.msra.mxu0 %v9724
    %9947 = vmatprep.subr.bf16.mxu0 %v9733
    %9948 = vmatpush1.bf16.msra.mxu0 %v9732
    %9949 = vmatprep.subr.bf16.mxu0 %v9741
    %9950 = vmatpush1.bf16.msra.mxu0 %v9740
    %9951 = vmatprep.subr.bf16.mxu0 %v9749
    %9952 = vmatpush1.bf16.msra.mxu0 %v9748
    %9953 = vmatprep.subr.bf16.mxu0 0
    %9954 = vmatpush1.bf16.msra.mxu0 0
    %9955 = vmatprep.subr.bf16.mxu0 0
    %9956 = vmatpush1.bf16.msra.mxu0 0
    %9957 = vmatprep.subr.bf16.mxu0 0
    %9958 = vmatpush1.bf16.msra.mxu0 0
    %9959 = vmatprep.subr.bf16.mxu0 0
    %9960 = vmatpush1.bf16.msra.mxu0 0
    %9961 = vmatprep.subr.bf16.mxu0 0
    %9962 = vmatpush1.bf16.msra.mxu0 0
    %9963 = vmatprep.subr.bf16.mxu0 0
    %9964 = vmatpush1.bf16.msra.mxu0 0
    %9965 = vmatprep.subr.bf16.mxu0 0
    %9966 = vmatpush1.bf16.msra.mxu0 0
    %9967 = vmatprep.subr.bf16.mxu0 0
    %9968 = vmatpush1.bf16.msra.mxu0 0
    %9969 = vmatprep.mubr.bf16.mxu0 0
    %9970 = vmatmul.mubr.bf16.gmra.mrb[0].mxu0 %v7838
    %v9971 = vpop.f32.mrb[0].mxu0
    %v9972 = vadd.f32 0.0, %v9971
    %v9973 = vpop.f32.mrb[0].mxu0
    %v9974 = vadd.f32 0.0, %v9973
    %v9975 = vpop.f32.mrb[0].mxu0
    %v9976 = vpop.f32.mrb[0].mxu0
    %9977 = vdwg.mxu0
    %v10010 = vunpack.c.l.b16 %v9398
    %v10011 = vunpack.c.h.b16 %v9398
    %v10012 = vunpack.c.l.b16 %v9399
    %v10013 = vunpack.c.h.b16 %v9399
    %v10014 = vunpack.c.l.b16 %v9400
    %v10015 = vunpack.c.h.b16 %v9400
    %v10016 = vunpack.c.l.b16 %v9401
    %v10017 = vunpack.c.h.b16 %v9401
    %v10018 = vunpack.c.l.b16 %v9402
    %v10019 = vunpack.c.h.b16 %v9402
    %v10020 = vunpack.c.l.b16 %v9403
    %v10021 = vunpack.c.h.b16 %v9403
    %v10022 = vunpack.c.l.b16 %v9404
    %v10023 = vunpack.c.h.b16 %v9404
    %v10024 = vunpack.c.l.b16 %v9405
    %v10025 = vunpack.c.h.b16 %v9405
    %v10026 = vunpack.c.l.b16 %v9406
    %v10027 = vunpack.c.h.b16 %v9406
    %v10028 = vunpack.c.l.b16 %v9407
    %v10029 = vunpack.c.h.b16 %v9407
    %v10030 = vunpack.c.l.b16 %v9408
    %v10031 = vunpack.c.h.b16 %v9408
    %v10032 = vunpack.c.l.b16 %v9409
    %v10033 = vunpack.c.h.b16 %v9409
    %v10034 = vunpack.c.l.b16 %v9410
    %v10035 = vunpack.c.h.b16 %v9410
    %v10036 = vunpack.c.l.b16 %v9411
    %v10037 = vunpack.c.h.b16 %v9411
    %v10038 = vunpack.c.l.b16 %v9412
    %v10039 = vunpack.c.h.b16 %v9412
    %v10040 = vunpack.c.l.b16 %v9413
    %v10041 = vunpack.c.h.b16 %v9413
    %v10042 = vunpack.c.l.b16 %v9414
    %v10043 = vunpack.c.h.b16 %v9414
    %v10044 = vunpack.c.l.b16 %v9415
    %v10045 = vunpack.c.h.b16 %v9415
    %v10046 = vunpack.c.l.b16 %v9416
    %v10047 = vunpack.c.h.b16 %v9416
    %v10048 = vunpack.c.l.b16 %v9417
    %v10049 = vunpack.c.h.b16 %v9417
    %v10050 = vunpack.c.l.b16 %v9418
    %v10051 = vunpack.c.h.b16 %v9418
    %v10052 = vunpack.c.l.b16 %v9419
    %v10053 = vunpack.c.h.b16 %v9419
    %v10054 = vunpack.c.l.b16 %v9420
    %v10055 = vunpack.c.h.b16 %v9420
    %v10056 = vunpack.c.l.b16 %v9421
    %v10057 = vunpack.c.h.b16 %v9421
    %v10058 = vunpack.c.l.b16 %v9422
    %v10059 = vunpack.c.h.b16 %v9422
    %v10060 = vunpack.c.l.b16 %v9423
    %v10061 = vunpack.c.h.b16 %v9423
    %v10062 = vunpack.c.l.b16 %v9424
    %v10063 = vunpack.c.h.b16 %v9424
    %v10064 = vunpack.c.l.b16 %v9425
    %v10065 = vunpack.c.h.b16 %v9425
    %v10066 = vunpack.c.l.b16 %v9426
    %v10067 = vunpack.c.h.b16 %v9426
    %v10068 = vunpack.c.l.b16 %v9427
    %v10069 = vunpack.c.h.b16 %v9427
    %v10070 = vunpack.c.l.b16 %v9428
    %v10071 = vunpack.c.h.b16 %v9428
    %v10072 = vunpack.c.l.b16 %v9429
    %v10073 = vunpack.c.h.b16 %v9429
    %v10074 = vpack.c.b16 %v10018, %v10010
    %v10075 = vpack.c.b16 %v10019, %v10011
    %v10076 = vpack.c.b16 %v10020, %v10012
    %v10077 = vpack.c.b16 %v10021, %v10013
    %v10078 = vpack.c.b16 %v10022, %v10014
    %v10079 = vpack.c.b16 %v10023, %v10015
    %v10080 = vpack.c.b16 %v10024, %v10016
    %v10081 = vpack.c.b16 %v10025, %v10017
    %v10082 = vpack.c.b16 %v10034, %v10026
    %v10083 = vpack.c.b16 %v10035, %v10027
    %v10084 = vpack.c.b16 %v10036, %v10028
    %v10085 = vpack.c.b16 %v10037, %v10029
    %v10086 = vpack.c.b16 %v10038, %v10030
    %v10087 = vpack.c.b16 %v10039, %v10031
    %v10088 = vpack.c.b16 %v10040, %v10032
    %v10089 = vpack.c.b16 %v10041, %v10033
    %v10090 = vpack.c.b16 %v10050, %v10042
    %v10091 = vpack.c.b16 %v10051, %v10043
    %v10092 = vpack.c.b16 %v10052, %v10044
    %v10093 = vpack.c.b16 %v10053, %v10045
    %v10094 = vpack.c.b16 %v10054, %v10046
    %v10095 = vpack.c.b16 %v10055, %v10047
    %v10096 = vpack.c.b16 %v10056, %v10048
    %v10097 = vpack.c.b16 %v10057, %v10049
    %v10098 = vpack.c.b16 %v10066, %v10058
    %v10099 = vpack.c.b16 %v10067, %v10059
    %v10100 = vpack.c.b16 %v10068, %v10060
    %v10101 = vpack.c.b16 %v10069, %v10061
    %v10102 = vpack.c.b16 %v10070, %v10062
    %v10103 = vpack.c.b16 %v10071, %v10063
    %v10104 = vpack.c.b16 %v10072, %v10064
    %v10105 = vpack.c.b16 %v10073, %v10065
    %10138 = vmatprep.subr.bf16.mxu0 %v10075
    %10139 = vmatpush1.bf16.msra.mxu0 %v10074
    %10140 = vmatprep.subr.bf16.mxu0 %v10083
    %10141 = vmatpush1.bf16.msra.mxu0 %v10082
    %10142 = vmatprep.subr.bf16.mxu0 %v10091
    %10143 = vmatpush1.bf16.msra.mxu0 %v10090
    %10144 = vmatprep.subr.bf16.mxu0 %v10099
    %10145 = vmatpush1.bf16.msra.mxu0 %v10098
    %10146 = vmatprep.subr.bf16.mxu0 0
    %10147 = vmatpush1.bf16.msra.mxu0 0
    %10148 = vmatprep.subr.bf16.mxu0 0
    %10149 = vmatpush1.bf16.msra.mxu0 0
    %10150 = vmatprep.subr.bf16.mxu0 0
    %10151 = vmatpush1.bf16.msra.mxu0 0
    %10152 = vmatprep.subr.bf16.mxu0 0
    %10153 = vmatpush1.bf16.msra.mxu0 0
    %10154 = vmatprep.subr.bf16.mxu0 0
    %10155 = vmatpush1.bf16.msra.mxu0 0
    %10156 = vmatprep.subr.bf16.mxu0 0
    %10157 = vmatpush1.bf16.msra.mxu0 0
    %10158 = vmatprep.subr.bf16.mxu0 0
    %10159 = vmatpush1.bf16.msra.mxu0 0
    %10160 = vmatprep.subr.bf16.mxu0 0
    %10161 = vmatpush1.bf16.msra.mxu0 0
    %10162 = vmatprep.subr.bf16.mxu0 0
    %10163 = vmatpush1.bf16.msra.mxu0 0
    %10164 = vmatprep.subr.bf16.mxu0 0
    %10165 = vmatpush1.bf16.msra.mxu0 0
    %10166 = vmatprep.subr.bf16.mxu0 0
    %10167 = vmatpush1.bf16.msra.mxu0 0
    %10168 = vmatprep.subr.bf16.mxu0 0
    %10169 = vmatpush1.bf16.msra.mxu0 0
    %10170 = vmatprep.mubr.bf16.mxu0 0
    %10171 = vmatmul.mubr.bf16.gmra.mrb[0].mxu0 %v9356
    %v10172 = vpop.f32.mrb[0].mxu0
    %v10173 = vadd.f32 %v9849, %v10172
    %v10174 = vpop.f32.mrb[0].mxu0
    %v10175 = vadd.f32 %v9851, %v10174
    %v10176 = vpop.f32.mrb[0].mxu0
    %v10177 = vpop.f32.mrb[0].mxu0
    %10178 = vdwg.mxu0
    %10179 = vmatprep.subr.bf16.mxu0 %v10077
    %10180 = vmatpush1.bf16.msra.mxu0 %v10076
    %10181 = vmatprep.subr.bf16.mxu0 %v10085
    %10182 = vmatpush1.bf16.msra.mxu0 %v10084
    %10183 = vmatprep.subr.bf16.mxu0 %v10093
    %10184 = vmatpush1.bf16.msra.mxu0 %v10092
    %10185 = vmatprep.subr.bf16.mxu0 %v10101
    %10186 = vmatpush1.bf16.msra.mxu0 %v10100
    %10187 = vmatprep.subr.bf16.mxu0 0
    %10188 = vmatpush1.bf16.msra.mxu0 0
    %10189 = vmatprep.subr.bf16.mxu0 0
    %10190 = vmatpush1.bf16.msra.mxu0 0
    %10191 = vmatprep.subr.bf16.mxu0 0
    %10192 = vmatpush1.bf16.msra.mxu0 0
    %10193 = vmatprep.subr.bf16.mxu0 0
    %10194 = vmatpush1.bf16.msra.mxu0 0
    %10195 = vmatprep.subr.bf16.mxu0 0
    %10196 = vmatpush1.bf16.msra.mxu0 0
    %10197 = vmatprep.subr.bf16.mxu0 0
    %10198 = vmatpush1.bf16.msra.mxu0 0
    %10199 = vmatprep.subr.bf16.mxu0 0
    %10200 = vmatpush1.bf16.msra.mxu0 0
    %10201 = vmatprep.subr.bf16.mxu0 0
    %10202 = vmatpush1.bf16.msra.mxu0 0
    %10203 = vmatprep.subr.bf16.mxu0 0
    %10204 = vmatpush1.bf16.msra.mxu0 0
    %10205 = vmatprep.subr.bf16.mxu0 0
    %10206 = vmatpush1.bf16.msra.mxu0 0
    %10207 = vmatprep.subr.bf16.mxu0 0
    %10208 = vmatpush1.bf16.msra.mxu0 0
    %10209 = vmatprep.subr.bf16.mxu0 0
    %10210 = vmatpush1.bf16.msra.mxu0 0
    %10211 = vmatprep.mubr.bf16.mxu0 0
    %10212 = vmatmul.mubr.bf16.gmra.mrb[0].mxu0 %v9356
    %v10213 = vpop.f32.mrb[0].mxu0
    %v10214 = vadd.f32 %v9890, %v10213
    %v10215 = vpop.f32.mrb[0].mxu0
    %v10216 = vadd.f32 %v9892, %v10215
    %v10217 = vpop.f32.mrb[0].mxu0
    %v10218 = vpop.f32.mrb[0].mxu0
    %10219 = vdwg.mxu0
    %10220 = vmatprep.subr.bf16.mxu0 %v10079
    %10221 = vmatpush1.bf16.msra.mxu0 %v10078
    %10222 = vmatprep.subr.bf16.mxu0 %v10087
    %10223 = vmatpush1.bf16.msra.mxu0 %v10086
    %10224 = vmatprep.subr.bf16.mxu0 %v10095
    %10225 = vmatpush1.bf16.msra.mxu0 %v10094
    %10226 = vmatprep.subr.bf16.mxu0 %v10103
    %10227 = vmatpush1.bf16.msra.mxu0 %v10102
    %10228 = vmatprep.subr.bf16.mxu0 0
    %10229 = vmatpush1.bf16.msra.mxu0 0
    %10230 = vmatprep.subr.bf16.mxu0 0
    %10231 = vmatpush1.bf16.msra.mxu0 0
    %10232 = vmatprep.subr.bf16.mxu0 0
    %10233 = vmatpush1.bf16.msra.mxu0 0
    %10234 = vmatprep.subr.bf16.mxu0 0
    %10235 = vmatpush1.bf16.msra.mxu0 0
    %10236 = vmatprep.subr.bf16.mxu0 0
    %10237 = vmatpush1.bf16.msra.mxu0 0
    %10238 = vmatprep.subr.bf16.mxu0 0
    %10239 = vmatpush1.bf16.msra.mxu0 0
    %10240 = vmatprep.subr.bf16.mxu0 0
    %10241 = vmatpush1.bf16.msra.mxu0 0
    %10242 = vmatprep.subr.bf16.mxu0 0
    %10243 = vmatpush1.bf16.msra.mxu0 0
    %10244 = vmatprep.subr.bf16.mxu0 0
    %10245 = vmatpush1.bf16.msra.mxu0 0
    %10246 = vmatprep.subr.bf16.mxu0 0
    %10247 = vmatpush1.bf16.msra.mxu0 0
    %10248 = vmatprep.subr.bf16.mxu0 0
    %10249 = vmatpush1.bf16.msra.mxu0 0
    %10250 = vmatprep.subr.bf16.mxu0 0
    %10251 = vmatpush1.bf16.msra.mxu0 0
    %10252 = vmatprep.mubr.bf16.mxu0 0
    %10253 = vmatmul.mubr.bf16.gmra.mrb[0].mxu0 %v9356
    %v10254 = vpop.f32.mrb[0].mxu0
    %v10255 = vadd.f32 %v9931, %v10254
    %v10256 = vpop.f32.mrb[0].mxu0
    %v10257 = vadd.f32 %v9933, %v10256
    %v10258 = vpop.f32.mrb[0].mxu0
    %v10259 = vpop.f32.mrb[0].mxu0
    %10260 = vdwg.mxu0
    %10261 = vmatprep.subr.bf16.mxu0 %v10081
    %10262 = vmatpush1.bf16.msra.mxu0 %v10080
    %10263 = vmatprep.subr.bf16.mxu0 %v10089
    %10264 = vmatpush1.bf16.msra.mxu0 %v10088
    %10265 = vmatprep.subr.bf16.mxu0 %v10097
    %10266 = vmatpush1.bf16.msra.mxu0 %v10096
    %10267 = vmatprep.subr.bf16.mxu0 %v10105
    %10268 = vmatpush1.bf16.msra.mxu0 %v10104
    %10269 = vmatprep.subr.bf16.mxu0 0
    %10270 = vmatpush1.bf16.msra.mxu0 0
    %10271 = vmatprep.subr.bf16.mxu0 0
    %10272 = vmatpush1.bf16.msra.mxu0 0
    %10273 = vmatprep.subr.bf16.mxu0 0
    %10274 = vmatpush1.bf16.msra.mxu0 0
    %10275 = vmatprep.subr.bf16.mxu0 0
    %10276 = vmatpush1.bf16.msra.mxu0 0
    %10277 = vmatprep.subr.bf16.mxu0 0
    %10278 = vmatpush1.bf16.msra.mxu0 0
    %10279 = vmatprep.subr.bf16.mxu0 0
    %10280 = vmatpush1.bf16.msra.mxu0 0
    %10281 = vmatprep.subr.bf16.mxu0 0
    %10282 = vmatpush1.bf16.msra.mxu0 0
    %10283 = vmatprep.subr.bf16.mxu0 0
    %10284 = vmatpush1.bf16.msra.mxu0 0
    %10285 = vmatprep.subr.bf16.mxu0 0
    %10286 = vmatpush1.bf16.msra.mxu0 0
    %10287 = vmatprep.subr.bf16.mxu0 0
    %10288 = vmatpush1.bf16.msra.mxu0 0
    %10289 = vmatprep.subr.bf16.mxu0 0
    %10290 = vmatpush1.bf16.msra.mxu0 0
    %10291 = vmatprep.subr.bf16.mxu0 0
    %10292 = vmatpush1.bf16.msra.mxu0 0
    %10293 = vmatprep.mubr.bf16.mxu0 0
    %10294 = vmatmul.mubr.bf16.gmra.mrb[0].mxu0 %v9356
    %v10295 = vpop.f32.mrb[0].mxu0
    %v10296 = vadd.f32 %v9972, %v10295
    %v10297 = vpop.f32.mrb[0].mxu0
    %v10298 = vadd.f32 %v9974, %v10297
    %v10299 = vpop.f32.mrb[0].mxu0
    %v10300 = vpop.f32.mrb[0].mxu0
    %10301 = vdwg.mxu0
    %v10302 = vld [vmem:[#allocation22] sm:$0xff]
    %v10304 = vlaneseq
    %v10305 = vshrl.u32 %v10304, 7
    %v10306 = vsub.s32 0, %v10305
    %v10307 = vrot.slane %v10302, %v10306
    %v10308 = vlaneseq
    %v10309 = vshrl.u32 %v10308, 7
    %v10310 = vsub.s32 1, %v10309
    %v10311 = vrot.slane %v10302, %v10310
    %v10312 = vlaneseq
    %v10313 = vshrl.u32 %v10312, 7
    %v10314 = vsub.s32 2, %v10313
    %v10315 = vrot.slane %v10302, %v10314
    %v10316 = vlaneseq
    %v10317 = vshrl.u32 %v10316, 7
    %v10318 = vsub.s32 3, %v10317
    %v10319 = vrot.slane %v10302, %v10318
    %v10320 = vlaneseq
    %v10321 = vshrl.u32 %v10320, 7
    %v10322 = vsub.s32 4, %v10321
    %v10323 = vrot.slane %v10302, %v10322
    %v10324 = vlaneseq
    %v10325 = vshrl.u32 %v10324, 7
    %v10326 = vsub.s32 5, %v10325
    %v10327 = vrot.slane %v10302, %v10326
    %v10328 = vlaneseq
    %v10329 = vshrl.u32 %v10328, 7
    %v10330 = vsub.s32 6, %v10329
    %v10331 = vrot.slane %v10302, %v10330
    %v10332 = vlaneseq
    %v10333 = vshrl.u32 %v10332, 7
    %v10334 = vsub.s32 7, %v10333
    %v10335 = vrot.slane %v10302, %v10334
    %v10344 = vadd.f32 %v10173, %v10307
    %v10345 = vadd.f32 %v10175, %v10311
    %v10346 = vadd.f32 %v10214, %v10315
    %v10347 = vadd.f32 %v10216, %v10319
    %v10348 = vadd.f32 %v10255, %v10323
    %v10349 = vadd.f32 %v10257, %v10327
    %v10350 = vadd.f32 %v10296, %v10331
    %v10351 = vadd.f32 %v10298, %v10335
    %10353 = vrot.lane.b32.xlu0 %v9393, 64
    %v10354 = vpop.permute.xlu0 %10353
    %v10356 = vsel %vm9354, %v9313, %v10354
    %v10359 = vcombine.low %v9294, %v10356
    %v10361 = vunpack.c.l.s4 1983009808
    %v10362 = vunpack.c.0.s8 %v10361
    %v10363 = vlaneseq
    %v10364 = vshrl.u32 %v10363, 7
    %v10365 = vsub.s32 %v10362, %v10364
    %v10366 = vrot.slane %v10359, %v10365
    %10368 = vst [vmem:[#allocation23] sm:$0xf] %v10366
    %v10377 = vcombine.low %v10344, %v10345
    %v10378 = vcombine.low %v10346, %v10347
    %v10380 = vunpack.c.l.s4 1983009808
    %v10381 = vunpack.c.0.s8 %v10380
    %v10382 = vlaneseq
    %v10383 = vshrl.u32 %v10382, 7
    %v10384 = vsub.s32 %v10381, %v10383
    %v10385 = vrot.slane %v10377, %v10384
    %v10387 = vunpack.c.l.s4 1983009808
    %v10388 = vunpack.c.0.s8 %v10387
    %v10389 = vlaneseq
    %v10390 = vshrl.u32 %v10389, 7
    %v10391 = vsub.s32 %v10388, %v10390
    %v10392 = vrot.slane %v10378, %v10391
    %v10393 = vcombine.low %v10385, %v10392
    %v10394 = vcombine.low %v10348, %v10349
    %v10395 = vcombine.low %v10350, %v10351
    %v10397 = vunpack.c.l.s4 1983009808
    %v10398 = vunpack.c.0.s8 %v10397
    %v10399 = vlaneseq
    %v10400 = vshrl.u32 %v10399, 7
    %v10401 = vsub.s32 %v10398, %v10400
    %v10402 = vrot.slane %v10394, %v10401
    %v10404 = vunpack.c.l.s4 1983009808
    %v10405 = vunpack.c.0.s8 %v10404
    %v10406 = vlaneseq
    %v10407 = vshrl.u32 %v10406, 7
    %v10408 = vsub.s32 %v10405, %v10407
    %v10409 = vrot.slane %v10395, %v10408
    %v10410 = vcombine.low %v10402, %v10409
    %10413 = vst [vmem:[#allocation24] sm:$0xff] %v10393
    %10414 = vst [vmem:[#allocation24 + $0x8] sm:$0xff] %v10410
    // Predicated region
    $region106: #{tpu_custom_call.1} parent=1 // pred_check
      _
    $region107: #{tpu_custom_call.1} parent=1 // pred_check_branch
      %10416 = sbr.rel (0) target = $region109
    $region108: #{tpu_custom_call.1} parent=1 // pred_region
      %s10418 = ssub.s32 64, 64
      %10419 = vsyncadd [#allocation4], %s10418
      %s10421 = sshll.u32 [#allocation23], 4
      %s10422 = int_to_ptr.vmem [resolvable:$true] %s10421
      %10424 = dma.vmem_to_hbm [thread:$0]  %s10422, 64, %s13, [#allocation4]
    $region109: #{tpu_custom_call.1} parent=1 // pred_fallthru
      _
    // Predicated region
    $region110: #{tpu_custom_call.1} parent=1 // pred_check
      _
    $region111: #{tpu_custom_call.1} parent=1 // pred_check_branch
      %10426 = sbr.rel (0) target = $region113
    $region112: #{tpu_custom_call.1} parent=1 // pred_region
      %s10428 = ssub.s32 256, 256
      %10429 = vsyncadd [#allocation25], %s10428
      %s10431 = sshll.u32 [#allocation24], 4
      %s10432 = int_to_ptr.vmem [resolvable:$true] %s10431
      %10434 = dma.vmem_to_hbm [thread:$0]  %s10432, 256, %s14, [#allocation25]
    $region113: #{tpu_custom_call.1} parent=1 // pred_fallthru
      _
    // Predicated region
    $region114: #{tpu_custom_call.1} parent=1 // pred_check
      _
    $region115: #{tpu_custom_call.1} parent=1 // pred_check_branch
      %10436 = sbr.rel (0) target = $region117
    $region116: #{tpu_custom_call.1} parent=1 // pred_region
      %10437 = dma.done [#allocation4], 64
    $region117: #{tpu_custom_call.1} parent=1 // pred_fallthru
      _
    // Predicated region
    $region118: #{tpu_custom_call.1} parent=1 // pred_check
      _
    $region119: #{tpu_custom_call.1} parent=1 // pred_check_branch
      %10439 = sbr.rel (0) target = $region121
    $region120: #{tpu_custom_call.1} parent=1 // pred_region
      %10440 = dma.done [#allocation25], 256
    $region121: #{tpu_custom_call.1} parent=1 // pred_fallthru
      _
    %10441 = vsyncpa [#allocation3], 1
    %10442 = vsyncpa [#allocation6], 1
    %10443 = vsyncpa [#allocation9], 1
    %10444 = vsyncpa [#allocation12], 1
    %10445 = vsyncpa [#allocation15], 1
    %10446 = vsyncpa [#allocation18], 1
    %10447 = vsyncpa [#allocation21], 1
    %10448 = vsyncpa [#allocation4], 1
    %10449 = vsyncpa [#allocation25], 1

</llo_original>
